<compile_context>
chip_gen: v7x
topology: tpu7x:2x2x1
jax: 0.10.0
libtpu: 0.0.40
codegen_flags: <defaults>
</compile_context>

<pallas_src>
import functools

import numpy as np
import jax
import jax.numpy as jnp
from jax.experimental import pallas as pl
from jax.experimental.pallas import tpu as pltpu

VMEM_SPEC = pl.BlockSpec(memory_space=pltpu.MemorySpace.VMEM)
BN_EPS = 1e-5
COMPUTE_DTYPE = jnp.bfloat16  # MXU operand dtype (f32 accumulate)


# ----------------------------------------------------------------------------
# Fused Pallas kernel: the entire decoder forward
# ----------------------------------------------------------------------------
def _decoder_fused_kernel(x_ref, w1_ref, b1_ref, w2_ref, b2_ref,
                          wd1_ref, t1_ref, wd2_ref, t2_ref,
                          wc0_ref, t3_ref, wc1_ref, t4_ref,
                          wc2_ref, t5_ref, o_ref):
    """7 chained (matmul -> +shift -> ReLU) stages, all VMEM-resident."""
    cdt = w1_ref.dtype

    def dense(h, w_ref, t_ref, relu):
        y = jnp.dot(h.astype(cdt), w_ref[...],
                    preferred_element_type=jnp.float32) + t_ref[...]
        return jnp.maximum(y, 0.0) if relu else y

    h = dense(x_ref[...], w1_ref, b1_ref, True)     # Linear(feat,512)   + ReLU
    h = dense(h, w2_ref, b2_ref, True)              # Linear(512,32*h*w) + ReLU
    h = dense(h, wd1_ref, t1_ref, True)             # ConvT2x2 s2 + BN   + ReLU
    h = dense(h, wd2_ref, t2_ref, True)             # ConvT2x2 s2 + BN   + ReLU
    h = dense(h, wc0_ref, t3_ref, True)             # Conv3x3 + BN       + ReLU
    h = dense(h, wc1_ref, t4_ref, True)             # Conv3x3 + BN       + ReLU
    o_ref[...] = dense(h, wc2_ref, t5_ref, False)   # Conv3x3 (NCHW-flat cols)


def decoder_forward(x, w, out_h, out_w):
    """x: (B, feature_dim) -> (B, 3, out_h, out_w) NCHW, matching PyTorch."""
    B = x.shape[0]
    n_out = 3 * out_h * out_w
    out_flat = pl.pallas_call(
        _decoder_fused_kernel,
        out_shape=jax.ShapeDtypeStruct((B, n_out), jnp.float32),
        in_specs=[VMEM_SPEC] * 15,
        out_specs=VMEM_SPEC,
        compiler_params=pltpu.CompilerParams(vmem_limit_bytes=32 * 1024 * 1024),
    )(x, w["w1"], w["b1"], w["w2"], w["b2"],
      w["wd1"], w["t1"], w["wd2"], w["t2"],
      w["wc0"], w["t3"], w["wc1"], w["t4"], w["wc2"], w["t5"])
    # Pure reshape: kernel already emits lane-dense NCHW-flat rows.
    return out_flat.reshape(B, 3, out_h, out_w)


# ----------------------------------------------------------------------------
# One-time host-side parameter preparation (layout plumbing only)
# ----------------------------------------------------------------------------
def prepare_decoder_params(p, in_c, in_h, in_w):
    """Convert PyTorch-layout params into dense per-layer operators.

    Each layer becomes  h_out = relu?(h_in @ W + t)  with BN scale folded into
    W's columns and (conv bias, BN shift) folded into t.  All spatial
    bookkeeping (ConvTranspose depth-to-space, 3x3 same-pad neighborhoods,
    final NCHW ordering) is baked into the operator matrices so the kernel has
    no in-kernel reshapes/transposes at all.
    """
    f32 = np.float32
    npa = lambda a: np.asarray(a, dtype=f32)
    P = in_h * in_w
    H2, W2 = 4 * in_h, 4 * in_w

    def bn_fold(gamma, beta, bias):
        # eval-mode BN, fresh running stats (mean=0, var=1)
        scale = npa(gamma) / np.sqrt(1.0 + BN_EPS)
        shift = npa(beta) + scale * npa(bias)
        return scale, shift

    # ---- ConvTranspose2d(in_c, c1, 2, stride=2) + BN + ReLU ------------------
    # input layout: PyTorch unflatten (c, y, x) flat = c*P + y*in_w + x
    # output layout: q = ((y*in_w+x)*4 + di*2+dj)*c1 + co   (spatial Y=2y+di, X=2x+dj)
    wd1 = npa(p["dconv1_w"])                                # (in_c, c1, 2, 2)
    c1 = wd1.shape[1]
    wd1_mat = np.transpose(wd1, (0, 2, 3, 1)).reshape(in_c, 4 * c1)
    Wd1 = np.zeros((in_c * P, P * 4 * c1), f32)
    for pix in range(P):                                    # block-diagonal over pixels
        Wd1[np.arange(in_c) * P + pix, pix * 4 * c1:(pix + 1) * 4 * c1] = wd1_mat
    s1, t1 = bn_fold(p["bn1_g"], p["bn1_b"], p["dconv1_b"])
    Wd1 *= np.tile(s1, P * 4)[None, :]
    t1_full = np.tile(t1, P * 4)

    # ---- ConvTranspose2d(c1, c2, 2, stride=2) + BN + ReLU --------------------
    # output layout: NHWC-flat of the (H2, W2, c2) image
    wd2 = npa(p["dconv2_w"])                                # (c1, c2, 2, 2)
    c2 = wd2.shape[1]
    wd2_mat = np.transpose(wd2, (0, 2, 3, 1)).reshape(c1, 4 * c2)
    Wd2 = np.zeros((P * 4 * c1, H2 * W2 * c2), f32)
    for y in range(in_h):
        for x in range(in_w):
            for di in range(2):
                for dj in range(2):
                    q0 = ((y * in_w + x) * 4 + di * 2 + dj) * c1
                    Y1, X1 = 2 * y + di, 2 * x + dj
                    for d2 in range(4):
                        di2, dj2 = d2 // 2, d2 % 2
                        Y2, X2 = 2 * Y1 + di2, 2 * X1 + dj2
                        cols = (Y2 * W2 + X2) * c2 + np.arange(c2)
                        Wd2[q0:q0 + c1, cols] = wd2_mat[:, d2 * c2:(d2 + 1) * c2]
    s2, t2 = bn_fold(p["bn2_g"], p["bn2_b"], p["dconv2_b"])
    Wd2 *= np.tile(s2, H2 * W2)[None, :]
    t2_full = np.tile(t2, H2 * W2)

    # ---- Conv2d(3x3, padding=1) as dense operator (NHWC-flat input) ----------
    def conv3x3_op(w, out_nchw):
        w = npa(w)                                          # (Co, Ci, 3, 3)
        co_n, ci_n = w.shape[0], w.shape[1]
        M = np.zeros((H2 * W2 * ci_n, H2 * W2 * co_n), f32)
        for ho in range(H2):
            for wo in range(W2):
                if out_nchw:
                    cols = np.arange(co_n) * (H2 * W2) + ho * W2 + wo
                else:
                    cols = (ho * W2 + wo) * co_n + np.arange(co_n)
                for dy in range(3):
                    hi = ho + dy - 1
                    if not 0 <= hi < H2:
                        continue
                    for dx in range(3):
                        wi = wo + dx - 1
                        if not 0 <= wi < W2:
                            continue
                        rows = (hi * W2 + wi) * ci_n + np.arange(ci_n)
                        M[np.ix_(rows, cols)] += w[:, :, dy, dx].T   # [ci, co]
        return M

    Wc0 = conv3x3_op(p["conv0_w"], out_nchw=False)
    s3, t3 = bn_fold(p["bn3_g"], p["bn3_b"], p["conv0_b"])
    Wc0 *= np.tile(s3, H2 * W2)[None, :]
    t3_full = np.tile(t3, H2 * W2)

    Wc1 = conv3x3_op(p["conv1_w"], out_nchw=False)
    s4, t4 = bn_fold(p["bn4_g"], p["bn4_b"], p["conv1_b"])
    Wc1 *= np.tile(s4, H2 * W2)[None, :]
    t4_full = np.tile(t4, H2 * W2)

    # Final Conv2d: no BN/ReLU; NCHW-flat output columns so no final transpose.
    Wc2 = conv3x3_op(p["conv2_w"], out_nchw=True)
    t5_full = np.repeat(npa(p["conv2_b"]), H2 * W2)

    as_w = lambda a: jnp.asarray(a, COMPUTE_DTYPE)          # bf16 MXU operands
    as_b = lambda a: jnp.asarray(np.reshape(a, (1, -1)), jnp.float32)
    return {
        "w1": as_w(npa(p["lin1_w"])), "b1": as_b(npa(p["lin1_b"])),
        "w2": as_w(npa(p["lin2_w"])), "b2": as_b(npa(p["lin2_b"])),
        "wd1": as_w(Wd1), "t1": as_b(t1_full),
        "wd2": as_w(Wd2), "t2": as_b(t2_full),
        "wc0": as_w(Wc0), "t3": as_b(t3_full),
        "wc1": as_w(Wc1), "t4": as_b(t4_full),
        "wc2": as_w(Wc2), "t5": as_b(t5_full),
    }


# ----------------------------------------------------------------------------
# Parameter init (deterministic, synthetic; Linear weights stored (in, out))
# ----------------------------------------------------------------------------
def init_decoder_params(key, feature_dim, in_c, in_h, in_w):
    ks = jax.random.split(key, 24)
    n = lambda k, shape, s=0.1: jax.random.normal(k, shape, jnp.float32) * s
    M = in_c * in_h * in_w
    return {
        "lin1_w": n(ks[0], (feature_dim, 512)), "lin1_b": n(ks[1], (512,)),
        "lin2_w": n(ks[2], (512, M)), "lin2_b": n(ks[3], (M,)),
        "dconv1_w": n(ks[4], (in_c, 16, 2, 2)), "dconv1_b": n(ks[5], (16,)),
        "bn1_g": 1.0 + n(ks[6], (16,)), "bn1_b": n(ks[7], (16,)),
        "dconv2_w": n(ks[8], (16, 3, 2, 2)), "dconv2_b": n(ks[9], (3,)),
        "bn2_g": 1.0 + n(ks[10], (3,)), "bn2_b": n(ks[11], (3,)),
        "conv0_w": n(ks[12], (3, 3, 3, 3)), "conv0_b": n(ks[13], (3,)),
        "bn3_g": 1.0 + n(ks[14], (3,)), "bn3_b": n(ks[15], (3,)),
        "conv1_w": n(ks[16], (3, 3, 3, 3)), "conv1_b": n(ks[17], (3,)),
        "bn4_g": 1.0 + n(ks[18], (3,)), "bn4_b": n(ks[19], (3,)),
        "conv2_w": n(ks[20], (3, 3, 3, 3)), "conv2_b": n(ks[21], (3,)),
    }


# ----------------------------------------------------------------------------
# Pure-JAX f32 reference (test only), mirroring the PyTorch module (eval BN)
# ----------------------------------------------------------------------------
def decoder_reference(x, p, in_c, in_h, in_w):
    B = x.shape[0]
    hp = "highest"
    h = jnp.maximum(jnp.dot(x, p["lin1_w"], precision=hp) + p["lin1_b"], 0.0)
    h = jnp.maximum(jnp.dot(h, p["lin2_w"], precision=hp) + p["lin2_b"], 0.0)
    h = h.reshape(B, in_c, in_h, in_w)                       # NCHW

    inv = 1.0 / float(np.sqrt(1.0 + BN_EPS))

    def bn(z, gamma, beta):
        return gamma[None, :, None, None] * z * inv + beta[None, :, None, None]

    def deconv2x2(z, w, b):                                  # w: (Ci, Co, 2, 2)
        y = jnp.einsum("bchw,cokl->bohkwl", z, w, precision=hp)
        Bb, Co, H, _, W, _ = y.shape
        return y.reshape(Bb, Co, 2 * H, 2 * W) + b[None, :, None, None]

    def conv3x3(z, w, b):                                    # w: (Co, Ci, 3, 3)
        H, W = z.shape[2], z.shape[3]
        zp = jnp.pad(z, ((0, 0), (0, 0), (1, 1), (1, 1)))
        acc = jnp.zeros((z.shape[0], w.shape[0], H, W), jnp.float32)
        for dy in range(3):
            for dx in range(3):
                acc = acc + jnp.einsum("bchw,oc->bohw",
                                       zp[:, :, dy:dy + H, dx:dx + W],
                                       w[:, :, dy, dx], precision=hp)
        return acc + b[None, :, None, None]

    h = jnp.maximum(bn(deconv2x2(h, p["dconv1_w"], p["dconv1_b"]), p["bn1_g"], p["bn1_b"]), 0.0)
    h = jnp.maximum(bn(deconv2x2(h, p["dconv2_w"], p["dconv2_b"]), p["bn2_g"], p["bn2_b"]), 0.0)
    h = jnp.maximum(bn(conv3x3(h, p["conv0_w"], p["conv0_b"]), p["bn3_g"], p["bn3_b"]), 0.0)
    h = jnp.maximum(bn(conv3x3(h, p["conv1_w"], p["conv1_b"]), p["bn4_g"], p["bn4_b"]), 0.0)
    return conv3x3(h, p["conv2_w"], p["conv2_b"])


if __name__ == "__main__":
    # Module config: params = {'type': 'rgb', 'rgb_size': (16, 16), 'feature_dim': 32}
    rgb_h, rgb_w = 16, 16
    feature_dim = 32
    in_c = 32
    in_h, in_w = rgb_h // 4, rgb_w // 4        # 4, 4 (pad=[0,0], unused in forward)
    batch = 2

    key = jax.random.PRNGKey(0)
    k_params, k_x = jax.random.split(key)
    params = init_decoder_params(k_params, feature_dim, in_c, in_h, in_w)
    x = jax.random.normal(k_x, (batch, feature_dim), jnp.float32)

    prepped = prepare_decoder_params(params, in_c, in_h, in_w)   # one-time, host-side
    fwd = jax.jit(functools.partial(decoder_forward, out_h=4 * in_h, out_w=4 * in_w))
    out = fwd(x, prepped)
    jax.block_until_ready(out)

    assert out.shape == (batch, 3, rgb_h, rgb_w), out.shape
    assert out.dtype == jnp.float32

    ref = decoder_reference(x, params, in_c, in_h, in_w)
    np.testing.assert_allclose(np.asarray(out), np.asarray(ref), rtol=5e-2, atol=2e-2)
    print("KERNEL_OK")
</pallas_src>

<mosaic_0001>
module attributes {stable_mosaic.version = 11 : i64} {
  func.func @_decoder_fused_kernel(%arg0: memref<2x32xf32, #tpu.memory_space<vmem>>, %arg1: memref<32x512xbf16, #tpu.memory_space<vmem>>, %arg2: memref<1x512xf32, #tpu.memory_space<vmem>>, %arg3: memref<512x512xbf16, #tpu.memory_space<vmem>>, %arg4: memref<1x512xf32, #tpu.memory_space<vmem>>, %arg5: memref<512x1024xbf16, #tpu.memory_space<vmem>>, %arg6: memref<1x1024xf32, #tpu.memory_space<vmem>>, %arg7: memref<1024x768xbf16, #tpu.memory_space<vmem>>, %arg8: memref<1x768xf32, #tpu.memory_space<vmem>>, %arg9: memref<768x768xbf16, #tpu.memory_space<vmem>>, %arg10: memref<1x768xf32, #tpu.memory_space<vmem>>, %arg11: memref<768x768xbf16, #tpu.memory_space<vmem>>, %arg12: memref<1x768xf32, #tpu.memory_space<vmem>>, %arg13: memref<768x768xbf16, #tpu.memory_space<vmem>>, %arg14: memref<1x768xf32, #tpu.memory_space<vmem>>, %arg15: memref<2x768xf32, #tpu.memory_space<vmem>>) attributes {dimension_semantics = [], scalar_prefetch = 0 : i64, scratch_operands = 0 : i64, tpu.core_type = #tpu.core_type<tc>} {
    %c0 = arith.constant 0 : index
    %c0_0 = arith.constant 0 : index
    %0 = vector.load %arg0[%c0, %c0_0] : memref<2x32xf32, #tpu.memory_space<vmem>>, vector<2x32xf32>
    %1 = arith.truncf %0 : vector<2x32xf32> to vector<2x32xbf16>
    %c0_1 = arith.constant 0 : index
    %c0_2 = arith.constant 0 : index
    %2 = vector.load %arg1[%c0_1, %c0_2] : memref<32x512xbf16, #tpu.memory_space<vmem>>, vector<32x512xbf16>
    %cst = arith.constant dense<0.000000e+00> : vector<2x512xf32>
    %3 = tpu.matmul %1, %2, %cst {dimension_numbers = #tpu.dot_dimension_numbers<[1], [0], [0], [1], [0, 0, 1, 1], [], []>} : vector<2x32xbf16>, vector<32x512xbf16>, vector<2x512xf32> -> vector<2x512xf32>
    %c0_3 = arith.constant 0 : index
    %c0_4 = arith.constant 0 : index
    %4 = vector.load %arg2[%c0_3, %c0_4] : memref<1x512xf32, #tpu.memory_space<vmem>>, vector<1x512xf32>
    %5 = vector.broadcast %4 : vector<1x512xf32> to vector<2x512xf32>
    %6 = arith.addf %3, %5 : vector<2x512xf32>
    %cst_5 = arith.constant 0.000000e+00 : f32
    %7 = vector.broadcast %cst_5 : f32 to vector<2x512xf32>
    %8 = arith.maximumf %6, %7 : vector<2x512xf32>
    %9 = arith.truncf %8 : vector<2x512xf32> to vector<2x512xbf16>
    %c0_6 = arith.constant 0 : index
    %c0_7 = arith.constant 0 : index
    %10 = vector.load %arg3[%c0_6, %c0_7] : memref<512x512xbf16, #tpu.memory_space<vmem>>, vector<512x512xbf16>
    %cst_8 = arith.constant dense<0.000000e+00> : vector<2x512xf32>
    %11 = tpu.matmul %9, %10, %cst_8 {dimension_numbers = #tpu.dot_dimension_numbers<[1], [0], [0], [1], [0, 0, 1, 1], [], []>} : vector<2x512xbf16>, vector<512x512xbf16>, vector<2x512xf32> -> vector<2x512xf32>
    %c0_9 = arith.constant 0 : index
    %c0_10 = arith.constant 0 : index
    %12 = vector.load %arg4[%c0_9, %c0_10] : memref<1x512xf32, #tpu.memory_space<vmem>>, vector<1x512xf32>
    %13 = vector.broadcast %12 : vector<1x512xf32> to vector<2x512xf32>
    %14 = arith.addf %11, %13 : vector<2x512xf32>
    %cst_11 = arith.constant 0.000000e+00 : f32
    %15 = vector.broadcast %cst_11 : f32 to vector<2x512xf32>
    %16 = arith.maximumf %14, %15 : vector<2x512xf32>
    %17 = arith.truncf %16 : vector<2x512xf32> to vector<2x512xbf16>
    %c0_12 = arith.constant 0 : index
    %c0_13 = arith.constant 0 : index
    %18 = vector.load %arg5[%c0_12, %c0_13] : memref<512x1024xbf16, #tpu.memory_space<vmem>>, vector<512x1024xbf16>
    %cst_14 = arith.constant dense<0.000000e+00> : vector<2x1024xf32>
    %19 = tpu.matmul %17, %18, %cst_14 {dimension_numbers = #tpu.dot_dimension_numbers<[1], [0], [0], [1], [0, 0, 1, 1], [], []>} : vector<2x512xbf16>, vector<512x1024xbf16>, vector<2x1024xf32> -> vector<2x1024xf32>
    %c0_15 = arith.constant 0 : index
    %c0_16 = arith.constant 0 : index
    %20 = vector.load %arg6[%c0_15, %c0_16] : memref<1x1024xf32, #tpu.memory_space<vmem>>, vector<1x1024xf32>
    %21 = vector.broadcast %20 : vector<1x1024xf32> to vector<2x1024xf32>
    %22 = arith.addf %19, %21 : vector<2x1024xf32>
    %cst_17 = arith.constant 0.000000e+00 : f32
    %23 = vector.broadcast %cst_17 : f32 to vector<2x1024xf32>
    %24 = arith.maximumf %22, %23 : vector<2x1024xf32>
    %25 = arith.truncf %24 : vector<2x1024xf32> to vector<2x1024xbf16>
    %c0_18 = arith.constant 0 : index
    %c0_19 = arith.constant 0 : index
    %26 = vector.load %arg7[%c0_18, %c0_19] : memref<1024x768xbf16, #tpu.memory_space<vmem>>, vector<1024x768xbf16>
    %cst_20 = arith.constant dense<0.000000e+00> : vector<2x768xf32>
    %27 = tpu.matmul %25, %26, %cst_20 {dimension_numbers = #tpu.dot_dimension_numbers<[1], [0], [0], [1], [0, 0, 1, 1], [], []>} : vector<2x1024xbf16>, vector<1024x768xbf16>, vector<2x768xf32> -> vector<2x768xf32>
    %c0_21 = arith.constant 0 : index
    %c0_22 = arith.constant 0 : index
    %28 = vector.load %arg8[%c0_21, %c0_22] : memref<1x768xf32, #tpu.memory_space<vmem>>, vector<1x768xf32>
    %29 = vector.broadcast %28 : vector<1x768xf32> to vector<2x768xf32>
    %30 = arith.addf %27, %29 : vector<2x768xf32>
    %cst_23 = arith.constant 0.000000e+00 : f32
    %31 = vector.broadcast %cst_23 : f32 to vector<2x768xf32>
    %32 = arith.maximumf %30, %31 : vector<2x768xf32>
    %33 = arith.truncf %32 : vector<2x768xf32> to vector<2x768xbf16>
    %c0_24 = arith.constant 0 : index
    %c0_25 = arith.constant 0 : index
    %34 = vector.load %arg9[%c0_24, %c0_25] : memref<768x768xbf16, #tpu.memory_space<vmem>>, vector<768x768xbf16>
    %cst_26 = arith.constant dense<0.000000e+00> : vector<2x768xf32>
    %35 = tpu.matmul %33, %34, %cst_26 {dimension_numbers = #tpu.dot_dimension_numbers<[1], [0], [0], [1], [0, 0, 1, 1], [], []>} : vector<2x768xbf16>, vector<768x768xbf16>, vector<2x768xf32> -> vector<2x768xf32>
    %c0_27 = arith.constant 0 : index
    %c0_28 = arith.constant 0 : index
    %36 = vector.load %arg10[%c0_27, %c0_28] : memref<1x768xf32, #tpu.memory_space<vmem>>, vector<1x768xf32>
    %37 = vector.broadcast %36 : vector<1x768xf32> to vector<2x768xf32>
    %38 = arith.addf %35, %37 : vector<2x768xf32>
    %cst_29 = arith.constant 0.000000e+00 : f32
    %39 = vector.broadcast %cst_29 : f32 to vector<2x768xf32>
    %40 = arith.maximumf %38, %39 : vector<2x768xf32>
    %41 = arith.truncf %40 : vector<2x768xf32> to vector<2x768xbf16>
    %c0_30 = arith.constant 0 : index
    %c0_31 = arith.constant 0 : index
    %42 = vector.load %arg11[%c0_30, %c0_31] : memref<768x768xbf16, #tpu.memory_space<vmem>>, vector<768x768xbf16>
    %cst_32 = arith.constant dense<0.000000e+00> : vector<2x768xf32>
    %43 = tpu.matmul %41, %42, %cst_32 {dimension_numbers = #tpu.dot_dimension_numbers<[1], [0], [0], [1], [0, 0, 1, 1], [], []>} : vector<2x768xbf16>, vector<768x768xbf16>, vector<2x768xf32> -> vector<2x768xf32>
    %c0_33 = arith.constant 0 : index
    %c0_34 = arith.constant 0 : index
    %44 = vector.load %arg12[%c0_33, %c0_34] : memref<1x768xf32, #tpu.memory_space<vmem>>, vector<1x768xf32>
    %45 = vector.broadcast %44 : vector<1x768xf32> to vector<2x768xf32>
    %46 = arith.addf %43, %45 : vector<2x768xf32>
    %cst_35 = arith.constant 0.000000e+00 : f32
    %47 = vector.broadcast %cst_35 : f32 to vector<2x768xf32>
    %48 = arith.maximumf %46, %47 : vector<2x768xf32>
    %49 = arith.truncf %48 : vector<2x768xf32> to vector<2x768xbf16>
    %c0_36 = arith.constant 0 : index
    %c0_37 = arith.constant 0 : index
    %50 = vector.load %arg13[%c0_36, %c0_37] : memref<768x768xbf16, #tpu.memory_space<vmem>>, vector<768x768xbf16>
    %cst_38 = arith.constant dense<0.000000e+00> : vector<2x768xf32>
    %51 = tpu.matmul %49, %50, %cst_38 {dimension_numbers = #tpu.dot_dimension_numbers<[1], [0], [0], [1], [0, 0, 1, 1], [], []>} : vector<2x768xbf16>, vector<768x768xbf16>, vector<2x768xf32> -> vector<2x768xf32>
    %c0_39 = arith.constant 0 : index
    %c0_40 = arith.constant 0 : index
    %52 = vector.load %arg14[%c0_39, %c0_40] : memref<1x768xf32, #tpu.memory_space<vmem>>, vector<1x768xf32>
    %53 = vector.broadcast %52 : vector<1x768xf32> to vector<2x768xf32>
    %54 = arith.addf %51, %53 : vector<2x768xf32>
    %c0_41 = arith.constant 0 : index
    %c0_42 = arith.constant 0 : index
    %55 = vector.load %arg15[%c0_41, %c0_42] : memref<2x768xf32, #tpu.memory_space<vmem>>, vector<2x768xf32>
    tpu.vector_store %arg15[%c0_41, %c0_42], %54 {strides = array<i32>} : memref<2x768xf32, #tpu.memory_space<vmem>>, vector<2x768xf32>,
    return
  }
}

</mosaic_0001>

<llo_original>
// kernel: decoder_forward.1
$region0: #{decoder_forward.1}
  #allocation0 [shape = 'u32[]', space=smem, size = 0x4, offset = 0x4, fixed_abs, tag = 'smem constant byte address 0x4 - core index']
  #allocation1 [shape = 'u32[144,128]{1,0:T(1,128)}', space=vmem, size = 0x12000, scoped, tag = 'internal scratch']
  %s0 = inlined_call_operand.hbm [shape: f32[2,32], index: 0, kind: input, shape index: {}]
  %s1 = inlined_call_operand.hbm [shape: bf16[32,512], index: 1, kind: input, shape index: {}]
  %s2 = inlined_call_operand.hbm [shape: f32[1,512], index: 2, kind: input, shape index: {}]
  %s3 = inlined_call_operand.hbm [shape: bf16[512,512], index: 3, kind: input, shape index: {}]
  %s4 = inlined_call_operand.hbm [shape: f32[1,512], index: 4, kind: input, shape index: {}]
  %s5 = inlined_call_operand.hbm [shape: bf16[512,1024], index: 5, kind: input, shape index: {}]
  %s6 = inlined_call_operand.hbm [shape: f32[1,1024], index: 6, kind: input, shape index: {}]
  %s7 = inlined_call_operand.hbm [shape: bf16[1024,768], index: 7, kind: input, shape index: {}]
  %s8 = inlined_call_operand.hbm [shape: f32[1,768], index: 8, kind: input, shape index: {}]
  %s9 = inlined_call_operand.hbm [shape: bf16[768,768], index: 9, kind: input, shape index: {}]
  %s10 = inlined_call_operand.hbm [shape: f32[1,768], index: 10, kind: input, shape index: {}]
  %s11 = inlined_call_operand.hbm [shape: bf16[768,768], index: 11, kind: input, shape index: {}]
  %s12 = inlined_call_operand.hbm [shape: f32[1,768], index: 12, kind: input, shape index: {}]
  %s13 = inlined_call_operand.hbm [shape: bf16[768,768], index: 13, kind: input, shape index: {}]
  %s14 = inlined_call_operand.hbm [shape: f32[1,768], index: 14, kind: input, shape index: {}]
  %s15 = inlined_call_operand.vmem [shape: f32[2,768], index: 15, kind: output, shape index: {}]
  %s16 = sld [smem:[#allocation0]]
  $region130: #{decoder_forward.1} parent=0
    _
  %s18 = ssub.s32 1, %s16
  %s19 = scalar_select 0, %s18, %s16
  $region1: #{decoder_forward.1} parent=0
    #allocation2 [shape = 'u8[1024]{0}', space=vmem, size = 0x400, scoped, tag = 'input window, operand 0, single buffered']
    #allocation3 [shape = 's32[1]{0}', space=sflag, size = 0x4, scoped, tag = 'scoped memory for decoder_forward.1']
    #allocation4 [shape = 'u8[32768]{0}', space=vmem, size = 0x8000, scoped, tag = 'input window, operand 1, single buffered']
    #allocation5 [shape = 's32[1]{0}', space=sflag, size = 0x4, scoped, tag = 'scoped memory for decoder_forward.1']
    #allocation6 [shape = 'u8[2048]{0}', space=vmem, size = 0x800, scoped, tag = 'input window, operand 2, single buffered']
    #allocation7 [shape = 'u8[524288]{0}', space=vmem, size = 0x80000, scoped, tag = 'input window, operand 3, single buffered']
    #allocation8 [shape = 's32[1]{0}', space=sflag, size = 0x4, scoped, tag = 'scoped memory for decoder_forward.1']
    #allocation9 [shape = 'u8[2048]{0}', space=vmem, size = 0x800, scoped, tag = 'input window, operand 4, single buffered']
    #allocation10 [shape = 'u8[1048576]{0}', space=vmem, size = 0x100000, scoped, tag = 'input window, operand 5, single buffered']
    #allocation11 [shape = 's32[1]{0}', space=sflag, size = 0x4, scoped, tag = 'scoped memory for decoder_forward.1']
    #allocation12 [shape = 'u8[4096]{0}', space=vmem, size = 0x1000, scoped, tag = 'input window, operand 6, single buffered']
    #allocation13 [shape = 'u8[1572864]{0}', space=vmem, size = 0x180000, scoped, tag = 'input window, operand 7, single buffered']
    #allocation14 [shape = 's32[1]{0}', space=sflag, size = 0x4, scoped, tag = 'scoped memory for decoder_forward.1']
    #allocation15 [shape = 'u8[3072]{0}', space=vmem, size = 0xc00, scoped, tag = 'input window, operand 8, single buffered']
    #allocation16 [shape = 'u8[1179648]{0}', space=vmem, size = 0x120000, scoped, tag = 'input window, operand 9, single buffered']
    #allocation17 [shape = 's32[1]{0}', space=sflag, size = 0x4, scoped, tag = 'scoped memory for decoder_forward.1']
    #allocation18 [shape = 'u8[3072]{0}', space=vmem, size = 0xc00, scoped, tag = 'input window, operand 10, single buffered']
    #allocation19 [shape = 'u8[1179648]{0}', space=vmem, size = 0x120000, scoped, tag = 'input window, operand 11, single buffered']
    #allocation20 [shape = 's32[1]{0}', space=sflag, size = 0x4, scoped, tag = 'scoped memory for decoder_forward.1']
    #allocation21 [shape = 'u8[3072]{0}', space=vmem, size = 0xc00, scoped, tag = 'input window, operand 12, single buffered']
    #allocation22 [shape = 'u8[1179648]{0}', space=vmem, size = 0x120000, scoped, tag = 'input window, operand 13, single buffered']
    #allocation23 [shape = 's32[1]{0}', space=sflag, size = 0x4, scoped, tag = 'scoped memory for decoder_forward.1']
    #allocation24 [shape = 'u8[3072]{0}', space=vmem, size = 0xc00, scoped, tag = 'input window, operand 14, single buffered']
    %20 = vsyncpa [#allocation3], 0
    %21 = vsyncpa [#allocation5], 0
    %22 = vsyncpa [#allocation8], 0
    %23 = vsyncpa [#allocation11], 0
    %24 = vsyncpa [#allocation14], 0
    %25 = vsyncpa [#allocation17], 0
    %26 = vsyncpa [#allocation20], 0
    %27 = vsyncpa [#allocation23], 0
    // Predicated region
    $region2: #{decoder_forward.1} parent=1 // pred_check
      _
    $region3: #{decoder_forward.1} parent=1 // pred_check_branch
      %29 = sbr.rel (0) target = $region5
    $region4: #{decoder_forward.1} parent=1 // pred_region
      %s31 = ssub.s32 32, 32
      %32 = vsyncadd [#allocation3], %s31
      %s34 = sshll.u32 [#allocation2], 4
      %s35 = int_to_ptr.vmem [resolvable:$true] %s34
      %37 = dma.hbm_to_vmem [thread:$0]  %s0, 32, %s35, [#allocation3]
    $region5: #{decoder_forward.1} parent=1 // pred_fallthru
      _
    // Predicated region
    $region6: #{decoder_forward.1} parent=1 // pred_check
      _
    $region7: #{decoder_forward.1} parent=1 // pred_check_branch
      %39 = sbr.rel (0) target = $region9
    $region8: #{decoder_forward.1} parent=1 // pred_region
      %s41 = ssub.s32 1024, 1024
      %42 = vsyncadd [#allocation5], %s41
      %s43 = sshll.u32 [#allocation4], 4
      %s44 = int_to_ptr.vmem [resolvable:$true] %s43
      %49 = dma.hbm_to_vmem [thread:$0]  %s1, 1024, %s44, [#allocation5], 256, 256, 16
    $region9: #{decoder_forward.1} parent=1 // pred_fallthru
      _
    // Predicated region
    $region10: #{decoder_forward.1} parent=1 // pred_check
      _
    $region11: #{decoder_forward.1} parent=1 // pred_check_branch
      %51 = sbr.rel (0) target = $region13
    $region12: #{decoder_forward.1} parent=1 // pred_region
      %s53 = ssub.s32 64, 64
      %54 = vsyncadd [#allocation5], %s53
      %s56 = sshll.u32 [#allocation6], 4
      %s57 = int_to_ptr.vmem [resolvable:$true] %s56
      %59 = dma.hbm_to_vmem [thread:$0]  %s2, 64, %s57, [#allocation5]
    $region13: #{decoder_forward.1} parent=1 // pred_fallthru
      _
    // Predicated region
    $region14: #{decoder_forward.1} parent=1 // pred_check
      _
    $region15: #{decoder_forward.1} parent=1 // pred_check_branch
      %61 = sbr.rel (0) target = $region17
    $region16: #{decoder_forward.1} parent=1 // pred_region
      %s63 = ssub.s32 16384, 16384
      %64 = vsyncadd [#allocation8], %s63
      %s65 = sshll.u32 [#allocation7], 4
      %s66 = int_to_ptr.vmem [resolvable:$true] %s65
      %71 = dma.hbm_to_vmem [thread:$0]  %s3, 16384, %s66, [#allocation8], 256, 256, 16
    $region17: #{decoder_forward.1} parent=1 // pred_fallthru
      _
    // Predicated region
    $region18: #{decoder_forward.1} parent=1 // pred_check
      _
    $region19: #{decoder_forward.1} parent=1 // pred_check_branch
      %73 = sbr.rel (0) target = $region21
    $region20: #{decoder_forward.1} parent=1 // pred_region
      %s75 = ssub.s32 64, 64
      %76 = vsyncadd [#allocation8], %s75
      %s78 = sshll.u32 [#allocation9], 4
      %s79 = int_to_ptr.vmem [resolvable:$true] %s78
      %81 = dma.hbm_to_vmem [thread:$0]  %s4, 64, %s79, [#allocation8]
    $region21: #{decoder_forward.1} parent=1 // pred_fallthru
      _
    // Predicated region
    $region22: #{decoder_forward.1} parent=1 // pred_check
      _
    $region23: #{decoder_forward.1} parent=1 // pred_check_branch
      %83 = sbr.rel (0) target = $region25
    $region24: #{decoder_forward.1} parent=1 // pred_region
      %s85 = ssub.s32 32768, 32768
      %86 = vsyncadd [#allocation11], %s85
      %s87 = sshll.u32 [#allocation10], 4
      %s88 = int_to_ptr.vmem [resolvable:$true] %s87
      %93 = dma.hbm_to_vmem [thread:$0]  %s5, 32768, %s88, [#allocation11], 512, 512, 32
    $region25: #{decoder_forward.1} parent=1 // pred_fallthru
      _
    // Predicated region
    $region26: #{decoder_forward.1} parent=1 // pred_check
      _
    $region27: #{decoder_forward.1} parent=1 // pred_check_branch
      %95 = sbr.rel (0) target = $region29
    $region28: #{decoder_forward.1} parent=1 // pred_region
      %s97 = ssub.s32 128, 128
      %98 = vsyncadd [#allocation11], %s97
      %s100 = sshll.u32 [#allocation12], 4
      %s101 = int_to_ptr.vmem [resolvable:$true] %s100
      %103 = dma.hbm_to_vmem [thread:$0]  %s6, 128, %s101, [#allocation11]
    $region29: #{decoder_forward.1} parent=1 // pred_fallthru
      _
    // Predicated region
    $region30: #{decoder_forward.1} parent=1 // pred_check
      _
    $region31: #{decoder_forward.1} parent=1 // pred_check_branch
      %105 = sbr.rel (0) target = $region33
    $region32: #{decoder_forward.1} parent=1 // pred_region
      %s107 = ssub.s32 49152, 49152
      %108 = vsyncadd [#allocation14], %s107
      %s109 = sshll.u32 [#allocation13], 4
      %s110 = int_to_ptr.vmem [resolvable:$true] %s109
      %115 = dma.hbm_to_vmem [thread:$0]  %s7, 49152, %s110, [#allocation14], 384, 384, 24
    $region33: #{decoder_forward.1} parent=1 // pred_fallthru
      _
    // Predicated region
    $region34: #{decoder_forward.1} parent=1 // pred_check
      _
    $region35: #{decoder_forward.1} parent=1 // pred_check_branch
      %117 = sbr.rel (0) target = $region37
    $region36: #{decoder_forward.1} parent=1 // pred_region
      %s119 = ssub.s32 96, 96
      %120 = vsyncadd [#allocation14], %s119
      %s122 = sshll.u32 [#allocation15], 4
      %s123 = int_to_ptr.vmem [resolvable:$true] %s122
      %125 = dma.hbm_to_vmem [thread:$0]  %s8, 96, %s123, [#allocation14]
    $region37: #{decoder_forward.1} parent=1 // pred_fallthru
      _
    // Predicated region
    $region38: #{decoder_forward.1} parent=1 // pred_check
      _
    $region39: #{decoder_forward.1} parent=1 // pred_check_branch
      %127 = sbr.rel (0) target = $region41
    $region40: #{decoder_forward.1} parent=1 // pred_region
      %s129 = ssub.s32 36864, 36864
      %130 = vsyncadd [#allocation17], %s129
      %s131 = sshll.u32 [#allocation16], 4
      %s132 = int_to_ptr.vmem [resolvable:$true] %s131
      %137 = dma.hbm_to_vmem [thread:$0]  %s9, 36864, %s132, [#allocation17], 384, 384, 24
    $region41: #{decoder_forward.1} parent=1 // pred_fallthru
      _
    // Predicated region
    $region42: #{decoder_forward.1} parent=1 // pred_check
      _
    $region43: #{decoder_forward.1} parent=1 // pred_check_branch
      %139 = sbr.rel (0) target = $region45
    $region44: #{decoder_forward.1} parent=1 // pred_region
      %s141 = ssub.s32 96, 96
      %142 = vsyncadd [#allocation17], %s141
      %s144 = sshll.u32 [#allocation18], 4
      %s145 = int_to_ptr.vmem [resolvable:$true] %s144
      %147 = dma.hbm_to_vmem [thread:$0]  %s10, 96, %s145, [#allocation17]
    $region45: #{decoder_forward.1} parent=1 // pred_fallthru
      _
    // Predicated region
    $region46: #{decoder_forward.1} parent=1 // pred_check
      _
    $region47: #{decoder_forward.1} parent=1 // pred_check_branch
      %149 = sbr.rel (0) target = $region49
    $region48: #{decoder_forward.1} parent=1 // pred_region
      %s151 = ssub.s32 36864, 36864
      %152 = vsyncadd [#allocation20], %s151
      %s153 = sshll.u32 [#allocation19], 4
      %s154 = int_to_ptr.vmem [resolvable:$true] %s153
      %159 = dma.hbm_to_vmem [thread:$0]  %s11, 36864, %s154, [#allocation20], 384, 384, 24
    $region49: #{decoder_forward.1} parent=1 // pred_fallthru
      _
    // Predicated region
    $region50: #{decoder_forward.1} parent=1 // pred_check
      _
    $region51: #{decoder_forward.1} parent=1 // pred_check_branch
      %161 = sbr.rel (0) target = $region53
    $region52: #{decoder_forward.1} parent=1 // pred_region
      %s163 = ssub.s32 96, 96
      %164 = vsyncadd [#allocation20], %s163
      %s166 = sshll.u32 [#allocation21], 4
      %s167 = int_to_ptr.vmem [resolvable:$true] %s166
      %169 = dma.hbm_to_vmem [thread:$0]  %s12, 96, %s167, [#allocation20]
    $region53: #{decoder_forward.1} parent=1 // pred_fallthru
      _
    // Predicated region
    $region54: #{decoder_forward.1} parent=1 // pred_check
      _
    $region55: #{decoder_forward.1} parent=1 // pred_check_branch
      %171 = sbr.rel (0) target = $region57
    $region56: #{decoder_forward.1} parent=1 // pred_region
      %s173 = ssub.s32 36864, 36864
      %174 = vsyncadd [#allocation23], %s173
      %s175 = sshll.u32 [#allocation22], 4
      %s176 = int_to_ptr.vmem [resolvable:$true] %s175
      %181 = dma.hbm_to_vmem [thread:$0]  %s13, 36864, %s176, [#allocation23], 384, 384, 24
    $region57: #{decoder_forward.1} parent=1 // pred_fallthru
      _
    // Predicated region
    $region58: #{decoder_forward.1} parent=1 // pred_check
      _
    $region59: #{decoder_forward.1} parent=1 // pred_check_branch
      %183 = sbr.rel (0) target = $region61
    $region60: #{decoder_forward.1} parent=1 // pred_region
      %s185 = ssub.s32 96, 96
      %186 = vsyncadd [#allocation23], %s185
      %s188 = sshll.u32 [#allocation24], 4
      %s189 = int_to_ptr.vmem [resolvable:$true] %s188
      %191 = dma.hbm_to_vmem [thread:$0]  %s14, 96, %s189, [#allocation23]
    $region61: #{decoder_forward.1} parent=1 // pred_fallthru
      _
    // Predicated region
    $region62: #{decoder_forward.1} parent=1 // pred_check
      _
    $region63: #{decoder_forward.1} parent=1 // pred_check_branch
      %193 = sbr.rel (0) target = $region65
    $region64: #{decoder_forward.1} parent=1 // pred_region
      %194 = dma.done [#allocation3], 32
    $region65: #{decoder_forward.1} parent=1 // pred_fallthru
      _
    // Predicated region
    $region66: #{decoder_forward.1} parent=1 // pred_check
      _
    $region67: #{decoder_forward.1} parent=1 // pred_check_branch
      %196 = sbr.rel (0) target = $region69
    $region68: #{decoder_forward.1} parent=1 // pred_region
      %197 = dma.done [#allocation5], 1024
    $region69: #{decoder_forward.1} parent=1 // pred_fallthru
      _
    // Predicated region
    $region70: #{decoder_forward.1} parent=1 // pred_check
      _
    $region71: #{decoder_forward.1} parent=1 // pred_check_branch
      %199 = sbr.rel (0) target = $region73
    $region72: #{decoder_forward.1} parent=1 // pred_region
      %200 = dma.done [#allocation5], 64
    $region73: #{decoder_forward.1} parent=1 // pred_fallthru
      _
    // Predicated region
    $region74: #{decoder_forward.1} parent=1 // pred_check
      _
    $region75: #{decoder_forward.1} parent=1 // pred_check_branch
      %202 = sbr.rel (0) target = $region77
    $region76: #{decoder_forward.1} parent=1 // pred_region
      %203 = dma.done [#allocation8], 16384
    $region77: #{decoder_forward.1} parent=1 // pred_fallthru
      _
    // Predicated region
    $region78: #{decoder_forward.1} parent=1 // pred_check
      _
    $region79: #{decoder_forward.1} parent=1 // pred_check_branch
      %205 = sbr.rel (0) target = $region81
    $region80: #{decoder_forward.1} parent=1 // pred_region
      %206 = dma.done [#allocation8], 64
    $region81: #{decoder_forward.1} parent=1 // pred_fallthru
      _
    // Predicated region
    $region82: #{decoder_forward.1} parent=1 // pred_check
      _
    $region83: #{decoder_forward.1} parent=1 // pred_check_branch
      %208 = sbr.rel (0) target = $region85
    $region84: #{decoder_forward.1} parent=1 // pred_region
      %209 = dma.done [#allocation11], 32768
    $region85: #{decoder_forward.1} parent=1 // pred_fallthru
      _
    // Predicated region
    $region86: #{decoder_forward.1} parent=1 // pred_check
      _
    $region87: #{decoder_forward.1} parent=1 // pred_check_branch
      %211 = sbr.rel (0) target = $region89
    $region88: #{decoder_forward.1} parent=1 // pred_region
      %212 = dma.done [#allocation11], 128
    $region89: #{decoder_forward.1} parent=1 // pred_fallthru
      _
    // Predicated region
    $region90: #{decoder_forward.1} parent=1 // pred_check
      _
    $region91: #{decoder_forward.1} parent=1 // pred_check_branch
      %214 = sbr.rel (0) target = $region93
    $region92: #{decoder_forward.1} parent=1 // pred_region
      %215 = dma.done [#allocation14], 49152
    $region93: #{decoder_forward.1} parent=1 // pred_fallthru
      _
    // Predicated region
    $region94: #{decoder_forward.1} parent=1 // pred_check
      _
    $region95: #{decoder_forward.1} parent=1 // pred_check_branch
      %217 = sbr.rel (0) target = $region97
    $region96: #{decoder_forward.1} parent=1 // pred_region
      %218 = dma.done [#allocation14], 96
    $region97: #{decoder_forward.1} parent=1 // pred_fallthru
      _
    // Predicated region
    $region98: #{decoder_forward.1} parent=1 // pred_check
      _
    $region99: #{decoder_forward.1} parent=1 // pred_check_branch
      %220 = sbr.rel (0) target = $region101
    $region100: #{decoder_forward.1} parent=1 // pred_region
      %221 = dma.done [#allocation17], 36864
    $region101: #{decoder_forward.1} parent=1 // pred_fallthru
      _
    // Predicated region
    $region102: #{decoder_forward.1} parent=1 // pred_check
      _
    $region103: #{decoder_forward.1} parent=1 // pred_check_branch
      %223 = sbr.rel (0) target = $region105
    $region104: #{decoder_forward.1} parent=1 // pred_region
      %224 = dma.done [#allocation17], 96
    $region105: #{decoder_forward.1} parent=1 // pred_fallthru
      _
    // Predicated region
    $region106: #{decoder_forward.1} parent=1 // pred_check
      _
    $region107: #{decoder_forward.1} parent=1 // pred_check_branch
      %226 = sbr.rel (0) target = $region109
    $region108: #{decoder_forward.1} parent=1 // pred_region
      %227 = dma.done [#allocation20], 36864
    $region109: #{decoder_forward.1} parent=1 // pred_fallthru
      _
    // Predicated region
    $region110: #{decoder_forward.1} parent=1 // pred_check
      _
    $region111: #{decoder_forward.1} parent=1 // pred_check_branch
      %229 = sbr.rel (0) target = $region113
    $region112: #{decoder_forward.1} parent=1 // pred_region
      %230 = dma.done [#allocation20], 96
    $region113: #{decoder_forward.1} parent=1 // pred_fallthru
      _
    // Predicated region
    $region114: #{decoder_forward.1} parent=1 // pred_check
      _
    $region115: #{decoder_forward.1} parent=1 // pred_check_branch
      %232 = sbr.rel (0) target = $region117
    $region116: #{decoder_forward.1} parent=1 // pred_region
      %233 = dma.done [#allocation23], 36864
    $region117: #{decoder_forward.1} parent=1 // pred_fallthru
      _
    // Predicated region
    $region118: #{decoder_forward.1} parent=1 // pred_check
      _
    $region119: #{decoder_forward.1} parent=1 // pred_check_branch
      %235 = sbr.rel (0) target = $region121
    $region120: #{decoder_forward.1} parent=1 // pred_region
      %236 = dma.done [#allocation23], 96
    $region121: #{decoder_forward.1} parent=1 // pred_fallthru
      _
    %v238 = vld [vmem:[#allocation2] sm:$0x3]
    %v239 = vpack.c.bf16 %v238, %v238
    %v240 = vld [vmem:[#allocation4] sm:$0xff]
    %v241 = vld [vmem:[#allocation4 + $0x8] sm:$0xff]
    %v242 = vld [vmem:[#allocation4 + $0x10] sm:$0xff]
    %v243 = vld [vmem:[#allocation4 + $0x18] sm:$0xff]
    %v244 = vld [vmem:[#allocation4 + $0x20] sm:$0xff]
    %v245 = vld [vmem:[#allocation4 + $0x28] sm:$0xff]
    %v246 = vld [vmem:[#allocation4 + $0x30] sm:$0xff]
    %v247 = vld [vmem:[#allocation4 + $0x38] sm:$0xff]
    %v248 = vld [vmem:[#allocation6] sm:$0xf]
    %v250 = vlaneseq
    %v251 = vshrl.u32 %v250, 7
    %v252 = vsub.s32 0, %v251
    %v253 = vrot.slane %v248, %v252
    %v254 = vlaneseq
    %v255 = vshrl.u32 %v254, 7
    %v256 = vsub.s32 1, %v255
    %v257 = vrot.slane %v248, %v256
    %v258 = vlaneseq
    %v259 = vshrl.u32 %v258, 7
    %v260 = vsub.s32 2, %v259
    %v261 = vrot.slane %v248, %v260
    %v262 = vlaneseq
    %v263 = vshrl.u32 %v262, 7
    %v264 = vsub.s32 3, %v263
    %v265 = vrot.slane %v248, %v264
    %v278 = vunpack.c.l.b16 %v240
    %v279 = vunpack.c.h.b16 %v240
    %v280 = vunpack.c.l.b16 %v241
    %v281 = vunpack.c.h.b16 %v241
    %v282 = vunpack.c.l.b16 %v242
    %v283 = vunpack.c.h.b16 %v242
    %v284 = vunpack.c.l.b16 %v243
    %v285 = vunpack.c.h.b16 %v243
    %v286 = vunpack.c.l.b16 %v244
    %v287 = vunpack.c.h.b16 %v244
    %v288 = vunpack.c.l.b16 %v245
    %v289 = vunpack.c.h.b16 %v245
    %v290 = vunpack.c.l.b16 %v246
    %v291 = vunpack.c.h.b16 %v246
    %v292 = vunpack.c.l.b16 %v247
    %v293 = vunpack.c.h.b16 %v247
    %v294 = vpack.c.b16 %v282, %v278
    %v295 = vpack.c.b16 %v283, %v279
    %v296 = vpack.c.b16 %v284, %v280
    %v297 = vpack.c.b16 %v285, %v281
    %v298 = vpack.c.b16 %v290, %v286
    %v299 = vpack.c.b16 %v291, %v287
    %v300 = vpack.c.b16 %v292, %v288
    %v301 = vpack.c.b16 %v293, %v289
    %vm310 = vcmask 261120
    %v312 = vsel %vm310, %v239, 0
    %314 = vmatprep.subr.bf16.mxu0 %v295
    %315 = vmatpush1.bf16.msra.mxu0 %v294
    %316 = vmatprep.subr.bf16.mxu0 %v299
    %317 = vmatpush1.bf16.msra.mxu0 %v298
    %318 = vmatprep.subr.bf16.mxu0 0
    %319 = vmatpush1.bf16.msra.mxu0 0
    %320 = vmatprep.subr.bf16.mxu0 0
    %321 = vmatpush1.bf16.msra.mxu0 0
    %322 = vmatprep.subr.bf16.mxu0 0
    %323 = vmatpush1.bf16.msra.mxu0 0
    %324 = vmatprep.subr.bf16.mxu0 0
    %325 = vmatpush1.bf16.msra.mxu0 0
    %326 = vmatprep.subr.bf16.mxu0 0
    %327 = vmatpush1.bf16.msra.mxu0 0
    %328 = vmatprep.subr.bf16.mxu0 0
    %329 = vmatpush1.bf16.msra.mxu0 0
    %330 = vmatprep.subr.bf16.mxu0 0
    %331 = vmatpush1.bf16.msra.mxu0 0
    %332 = vmatprep.subr.bf16.mxu0 0
    %333 = vmatpush1.bf16.msra.mxu0 0
    %334 = vmatprep.subr.bf16.mxu0 0
    %335 = vmatpush1.bf16.msra.mxu0 0
    %336 = vmatprep.subr.bf16.mxu0 0
    %337 = vmatpush1.bf16.msra.mxu0 0
    %338 = vmatprep.subr.bf16.mxu0 0
    %339 = vmatpush1.bf16.msra.mxu0 0
    %340 = vmatprep.subr.bf16.mxu0 0
    %341 = vmatpush1.bf16.msra.mxu0 0
    %342 = vmatprep.subr.bf16.mxu0 0
    %343 = vmatpush1.bf16.msra.mxu0 0
    %344 = vmatprep.subr.bf16.mxu0 0
    %345 = vmatpush1.bf16.msra.mxu0 0
    %346 = vmatprep.mubr.bf16.mxu0 0
    %347 = vmatmul.mubr.bf16.gmra.mrb[0].mxu0 %v312
    %v348 = vpop.f32.mrb[0].mxu0
    %v349 = vadd.f32 %v253, %v348
    %v350 = vpop.f32.mrb[0].mxu0
    %v351 = vadd.f32 %v257, %v350
    %v352 = vpop.f32.mrb[0].mxu0
    %v353 = vpop.f32.mrb[0].mxu0
    %354 = vdwg.mxu0
    %355 = vmatprep.subr.bf16.mxu0 %v297
    %356 = vmatpush1.bf16.msra.mxu0 %v296
    %357 = vmatprep.subr.bf16.mxu0 %v301
    %358 = vmatpush1.bf16.msra.mxu0 %v300
    %359 = vmatprep.subr.bf16.mxu0 0
    %360 = vmatpush1.bf16.msra.mxu0 0
    %361 = vmatprep.subr.bf16.mxu0 0
    %362 = vmatpush1.bf16.msra.mxu0 0
    %363 = vmatprep.subr.bf16.mxu0 0
    %364 = vmatpush1.bf16.msra.mxu0 0
    %365 = vmatprep.subr.bf16.mxu0 0
    %366 = vmatpush1.bf16.msra.mxu0 0
    %367 = vmatprep.subr.bf16.mxu0 0
    %368 = vmatpush1.bf16.msra.mxu0 0
    %369 = vmatprep.subr.bf16.mxu0 0
    %370 = vmatpush1.bf16.msra.mxu0 0
    %371 = vmatprep.subr.bf16.mxu0 0
    %372 = vmatpush1.bf16.msra.mxu0 0
    %373 = vmatprep.subr.bf16.mxu0 0
    %374 = vmatpush1.bf16.msra.mxu0 0
    %375 = vmatprep.subr.bf16.mxu0 0
    %376 = vmatpush1.bf16.msra.mxu0 0
    %377 = vmatprep.subr.bf16.mxu0 0
    %378 = vmatpush1.bf16.msra.mxu0 0
    %379 = vmatprep.subr.bf16.mxu0 0
    %380 = vmatpush1.bf16.msra.mxu0 0
    %381 = vmatprep.subr.bf16.mxu0 0
    %382 = vmatpush1.bf16.msra.mxu0 0
    %383 = vmatprep.subr.bf16.mxu0 0
    %384 = vmatpush1.bf16.msra.mxu0 0
    %385 = vmatprep.subr.bf16.mxu0 0
    %386 = vmatpush1.bf16.msra.mxu0 0
    %387 = vmatprep.mubr.bf16.mxu0 0
    %388 = vmatmul.mubr.bf16.gmra.mrb[0].mxu0 %v312
    %v389 = vpop.f32.mrb[0].mxu0
    %v390 = vadd.f32 %v261, %v389
    %v391 = vpop.f32.mrb[0].mxu0
    %v392 = vadd.f32 %v265, %v391
    %v393 = vpop.f32.mrb[0].mxu0
    %v394 = vpop.f32.mrb[0].mxu0
    %395 = vdwg.mxu0
    %v396 = vmax.f32 %v349, 0.0
    %v397 = vmax.f32 %v351, 0.0
    %v398 = vmax.f32 %v390, 0.0
    %v399 = vmax.f32 %v392, 0.0
    %v400 = vpack.c.bf16 %v396, %v396
    %v401 = vpack.c.bf16 %v397, %v397
    %v402 = vpack.c.bf16 %v398, %v398
    %v403 = vpack.c.bf16 %v399, %v399
    %v404 = vld [vmem:[#allocation7] sm:$0xff]
    %v405 = vld [vmem:[#allocation7 + $0x8] sm:$0xff]
    %v406 = vld [vmem:[#allocation7 + $0x10] sm:$0xff]
    %v407 = vld [vmem:[#allocation7 + $0x18] sm:$0xff]
    %v408 = vld [vmem:[#allocation7 + $0x20] sm:$0xff]
    %v409 = vld [vmem:[#allocation7 + $0x28] sm:$0xff]
    %v410 = vld [vmem:[#allocation7 + $0x30] sm:$0xff]
    %v411 = vld [vmem:[#allocation7 + $0x38] sm:$0xff]
    %v412 = vld [vmem:[#allocation7 + $0x40] sm:$0xff]
    %v413 = vld [vmem:[#allocation7 + $0x48] sm:$0xff]
    %v414 = vld [vmem:[#allocation7 + $0x50] sm:$0xff]
    %v415 = vld [vmem:[#allocation7 + $0x58] sm:$0xff]
    %v416 = vld [vmem:[#allocation7 + $0x60] sm:$0xff]
    %v417 = vld [vmem:[#allocation7 + $0x68] sm:$0xff]
    %v418 = vld [vmem:[#allocation7 + $0x70] sm:$0xff]
    %v419 = vld [vmem:[#allocation7 + $0x78] sm:$0xff]
    %v420 = vld [vmem:[#allocation7 + $0x80] sm:$0xff]
    %v421 = vld [vmem:[#allocation7 + $0x88] sm:$0xff]
    %v422 = vld [vmem:[#allocation7 + $0x90] sm:$0xff]
    %v423 = vld [vmem:[#allocation7 + $0x98] sm:$0xff]
    %v424 = vld [vmem:[#allocation7 + $0xa0] sm:$0xff]
    %v425 = vld [vmem:[#allocation7 + $0xa8] sm:$0xff]
    %v426 = vld [vmem:[#allocation7 + $0xb0] sm:$0xff]
    %v427 = vld [vmem:[#allocation7 + $0xb8] sm:$0xff]
    %v428 = vld [vmem:[#allocation7 + $0xc0] sm:$0xff]
    %v429 = vld [vmem:[#allocation7 + $0xc8] sm:$0xff]
    %v430 = vld [vmem:[#allocation7 + $0xd0] sm:$0xff]
    %v431 = vld [vmem:[#allocation7 + $0xd8] sm:$0xff]
    %v432 = vld [vmem:[#allocation7 + $0xe0] sm:$0xff]
    %v433 = vld [vmem:[#allocation7 + $0xe8] sm:$0xff]
    %v434 = vld [vmem:[#allocation7 + $0xf0] sm:$0xff]
    %v435 = vld [vmem:[#allocation7 + $0xf8] sm:$0xff]
    %v436 = vld [vmem:[#allocation7 + $0x100] sm:$0xff]
    %v437 = vld [vmem:[#allocation7 + $0x108] sm:$0xff]
    %v438 = vld [vmem:[#allocation7 + $0x110] sm:$0xff]
    %v439 = vld [vmem:[#allocation7 + $0x118] sm:$0xff]
    %v440 = vld [vmem:[#allocation7 + $0x120] sm:$0xff]
    %v441 = vld [vmem:[#allocation7 + $0x128] sm:$0xff]
    %v442 = vld [vmem:[#allocation7 + $0x130] sm:$0xff]
    %v443 = vld [vmem:[#allocation7 + $0x138] sm:$0xff]
    %v444 = vld [vmem:[#allocation7 + $0x140] sm:$0xff]
    %v445 = vld [vmem:[#allocation7 + $0x148] sm:$0xff]
    %v446 = vld [vmem:[#allocation7 + $0x150] sm:$0xff]
    %v447 = vld [vmem:[#allocation7 + $0x158] sm:$0xff]
    %v448 = vld [vmem:[#allocation7 + $0x160] sm:$0xff]
    %v449 = vld [vmem:[#allocation7 + $0x168] sm:$0xff]
    %v450 = vld [vmem:[#allocation7 + $0x170] sm:$0xff]
    %v451 = vld [vmem:[#allocation7 + $0x178] sm:$0xff]
    %v452 = vld [vmem:[#allocation7 + $0x180] sm:$0xff]
    %v453 = vld [vmem:[#allocation7 + $0x188] sm:$0xff]
    %v454 = vld [vmem:[#allocation7 + $0x190] sm:$0xff]
    %v455 = vld [vmem:[#allocation7 + $0x198] sm:$0xff]
    %v456 = vld [vmem:[#allocation7 + $0x1a0] sm:$0xff]
    %v457 = vld [vmem:[#allocation7 + $0x1a8] sm:$0xff]
    %v458 = vld [vmem:[#allocation7 + $0x1b0] sm:$0xff]
    %v459 = vld [vmem:[#allocation7 + $0x1b8] sm:$0xff]
    %v460 = vld [vmem:[#allocation7 + $0x1c0] sm:$0xff]
    %v461 = vld [vmem:[#allocation7 + $0x1c8] sm:$0xff]
    %v462 = vld [vmem:[#allocation7 + $0x1d0] sm:$0xff]
    %v463 = vld [vmem:[#allocation7 + $0x1d8] sm:$0xff]
    %v464 = vld [vmem:[#allocation7 + $0x1e0] sm:$0xff]
    %v465 = vld [vmem:[#allocation7 + $0x1e8] sm:$0xff]
    %v466 = vld [vmem:[#allocation7 + $0x1f0] sm:$0xff]
    %v467 = vld [vmem:[#allocation7 + $0x1f8] sm:$0xff]
    %v468 = vld [vmem:[#allocation7 + $0x200] sm:$0xff]
    %v469 = vld [vmem:[#allocation7 + $0x208] sm:$0xff]
    %v470 = vld [vmem:[#allocation7 + $0x210] sm:$0xff]
    %v471 = vld [vmem:[#allocation7 + $0x218] sm:$0xff]
    %v472 = vld [vmem:[#allocation7 + $0x220] sm:$0xff]
    %v473 = vld [vmem:[#allocation7 + $0x228] sm:$0xff]
    %v474 = vld [vmem:[#allocation7 + $0x230] sm:$0xff]
    %v475 = vld [vmem:[#allocation7 + $0x238] sm:$0xff]
    %v476 = vld [vmem:[#allocation7 + $0x240] sm:$0xff]
    %v477 = vld [vmem:[#allocation7 + $0x248] sm:$0xff]
    %v478 = vld [vmem:[#allocation7 + $0x250] sm:$0xff]
    %v479 = vld [vmem:[#allocation7 + $0x258] sm:$0xff]
    %v480 = vld [vmem:[#allocation7 + $0x260] sm:$0xff]
    %v481 = vld [vmem:[#allocation7 + $0x268] sm:$0xff]
    %v482 = vld [vmem:[#allocation7 + $0x270] sm:$0xff]
    %v483 = vld [vmem:[#allocation7 + $0x278] sm:$0xff]
    %v484 = vld [vmem:[#allocation7 + $0x280] sm:$0xff]
    %v485 = vld [vmem:[#allocation7 + $0x288] sm:$0xff]
    %v486 = vld [vmem:[#allocation7 + $0x290] sm:$0xff]
    %v487 = vld [vmem:[#allocation7 + $0x298] sm:$0xff]
    %v488 = vld [vmem:[#allocation7 + $0x2a0] sm:$0xff]
    %v489 = vld [vmem:[#allocation7 + $0x2a8] sm:$0xff]
    %v490 = vld [vmem:[#allocation7 + $0x2b0] sm:$0xff]
    %v491 = vld [vmem:[#allocation7 + $0x2b8] sm:$0xff]
    %v492 = vld [vmem:[#allocation7 + $0x2c0] sm:$0xff]
    %v493 = vld [vmem:[#allocation7 + $0x2c8] sm:$0xff]
    %v494 = vld [vmem:[#allocation7 + $0x2d0] sm:$0xff]
    %v495 = vld [vmem:[#allocation7 + $0x2d8] sm:$0xff]
    %v496 = vld [vmem:[#allocation7 + $0x2e0] sm:$0xff]
    %v497 = vld [vmem:[#allocation7 + $0x2e8] sm:$0xff]
    %v498 = vld [vmem:[#allocation7 + $0x2f0] sm:$0xff]
    %v499 = vld [vmem:[#allocation7 + $0x2f8] sm:$0xff]
    %v500 = vld [vmem:[#allocation7 + $0x300] sm:$0xff]
    %v501 = vld [vmem:[#allocation7 + $0x308] sm:$0xff]
    %v502 = vld [vmem:[#allocation7 + $0x310] sm:$0xff]
    %v503 = vld [vmem:[#allocation7 + $0x318] sm:$0xff]
    %v504 = vld [vmem:[#allocation7 + $0x320] sm:$0xff]
    %v505 = vld [vmem:[#allocation7 + $0x328] sm:$0xff]
    %v506 = vld [vmem:[#allocation7 + $0x330] sm:$0xff]
    %v507 = vld [vmem:[#allocation7 + $0x338] sm:$0xff]
    %v508 = vld [vmem:[#allocation7 + $0x340] sm:$0xff]
    %v509 = vld [vmem:[#allocation7 + $0x348] sm:$0xff]
    %v510 = vld [vmem:[#allocation7 + $0x350] sm:$0xff]
    %v511 = vld [vmem:[#allocation7 + $0x358] sm:$0xff]
    %v512 = vld [vmem:[#allocation7 + $0x360] sm:$0xff]
    %v513 = vld [vmem:[#allocation7 + $0x368] sm:$0xff]
    %v514 = vld [vmem:[#allocation7 + $0x370] sm:$0xff]
    %v515 = vld [vmem:[#allocation7 + $0x378] sm:$0xff]
    %v516 = vld [vmem:[#allocation7 + $0x380] sm:$0xff]
    %v517 = vld [vmem:[#allocation7 + $0x388] sm:$0xff]
    %v518 = vld [vmem:[#allocation7 + $0x390] sm:$0xff]
    %v519 = vld [vmem:[#allocation7 + $0x398] sm:$0xff]
    %v520 = vld [vmem:[#allocation7 + $0x3a0] sm:$0xff]
    %v521 = vld [vmem:[#allocation7 + $0x3a8] sm:$0xff]
    %v522 = vld [vmem:[#allocation7 + $0x3b0] sm:$0xff]
    %v523 = vld [vmem:[#allocation7 + $0x3b8] sm:$0xff]
    %v524 = vld [vmem:[#allocation7 + $0x3c0] sm:$0xff]
    %v525 = vld [vmem:[#allocation7 + $0x3c8] sm:$0xff]
    %v526 = vld [vmem:[#allocation7 + $0x3d0] sm:$0xff]
    %v527 = vld [vmem:[#allocation7 + $0x3d8] sm:$0xff]
    %v528 = vld [vmem:[#allocation7 + $0x3e0] sm:$0xff]
    %v529 = vld [vmem:[#allocation7 + $0x3e8] sm:$0xff]
    %v530 = vld [vmem:[#allocation7 + $0x3f0] sm:$0xff]
    %v531 = vld [vmem:[#allocation7 + $0x3f8] sm:$0xff]
    %v532 = vld [vmem:[#allocation9] sm:$0xf]
    %v534 = vlaneseq
    %v535 = vshrl.u32 %v534, 7
    %v536 = vsub.s32 0, %v535
    %v537 = vrot.slane %v532, %v536
    %v538 = vlaneseq
    %v539 = vshrl.u32 %v538, 7
    %v540 = vsub.s32 1, %v539
    %v541 = vrot.slane %v532, %v540
    %v542 = vlaneseq
    %v543 = vshrl.u32 %v542, 7
    %v544 = vsub.s32 2, %v543
    %v545 = vrot.slane %v532, %v544
    %v546 = vlaneseq
    %v547 = vshrl.u32 %v546, 7
    %v548 = vsub.s32 3, %v547
    %v549 = vrot.slane %v532, %v548
    %v682 = vunpack.c.l.b16 %v404
    %v683 = vunpack.c.h.b16 %v404
    %v684 = vunpack.c.l.b16 %v405
    %v685 = vunpack.c.h.b16 %v405
    %v686 = vunpack.c.l.b16 %v406
    %v687 = vunpack.c.h.b16 %v406
    %v688 = vunpack.c.l.b16 %v407
    %v689 = vunpack.c.h.b16 %v407
    %v690 = vunpack.c.l.b16 %v408
    %v691 = vunpack.c.h.b16 %v408
    %v692 = vunpack.c.l.b16 %v409
    %v693 = vunpack.c.h.b16 %v409
    %v694 = vunpack.c.l.b16 %v410
    %v695 = vunpack.c.h.b16 %v410
    %v696 = vunpack.c.l.b16 %v411
    %v697 = vunpack.c.h.b16 %v411
    %v698 = vunpack.c.l.b16 %v412
    %v699 = vunpack.c.h.b16 %v412
    %v700 = vunpack.c.l.b16 %v413
    %v701 = vunpack.c.h.b16 %v413
    %v702 = vunpack.c.l.b16 %v414
    %v703 = vunpack.c.h.b16 %v414
    %v704 = vunpack.c.l.b16 %v415
    %v705 = vunpack.c.h.b16 %v415
    %v706 = vunpack.c.l.b16 %v416
    %v707 = vunpack.c.h.b16 %v416
    %v708 = vunpack.c.l.b16 %v417
    %v709 = vunpack.c.h.b16 %v417
    %v710 = vunpack.c.l.b16 %v418
    %v711 = vunpack.c.h.b16 %v418
    %v712 = vunpack.c.l.b16 %v419
    %v713 = vunpack.c.h.b16 %v419
    %v714 = vunpack.c.l.b16 %v420
    %v715 = vunpack.c.h.b16 %v420
    %v716 = vunpack.c.l.b16 %v421
    %v717 = vunpack.c.h.b16 %v421
    %v718 = vunpack.c.l.b16 %v422
    %v719 = vunpack.c.h.b16 %v422
    %v720 = vunpack.c.l.b16 %v423
    %v721 = vunpack.c.h.b16 %v423
    %v722 = vunpack.c.l.b16 %v424
    %v723 = vunpack.c.h.b16 %v424
    %v724 = vunpack.c.l.b16 %v425
    %v725 = vunpack.c.h.b16 %v425
    %v726 = vunpack.c.l.b16 %v426
    %v727 = vunpack.c.h.b16 %v426
    %v728 = vunpack.c.l.b16 %v427
    %v729 = vunpack.c.h.b16 %v427
    %v730 = vunpack.c.l.b16 %v428
    %v731 = vunpack.c.h.b16 %v428
    %v732 = vunpack.c.l.b16 %v429
    %v733 = vunpack.c.h.b16 %v429
    %v734 = vunpack.c.l.b16 %v430
    %v735 = vunpack.c.h.b16 %v430
    %v736 = vunpack.c.l.b16 %v431
    %v737 = vunpack.c.h.b16 %v431
    %v738 = vunpack.c.l.b16 %v432
    %v739 = vunpack.c.h.b16 %v432
    %v740 = vunpack.c.l.b16 %v433
    %v741 = vunpack.c.h.b16 %v433
    %v742 = vunpack.c.l.b16 %v434
    %v743 = vunpack.c.h.b16 %v434
    %v744 = vunpack.c.l.b16 %v435
    %v745 = vunpack.c.h.b16 %v435
    %v746 = vunpack.c.l.b16 %v436
    %v747 = vunpack.c.h.b16 %v436
    %v748 = vunpack.c.l.b16 %v437
    %v749 = vunpack.c.h.b16 %v437
    %v750 = vunpack.c.l.b16 %v438
    %v751 = vunpack.c.h.b16 %v438
    %v752 = vunpack.c.l.b16 %v439
    %v753 = vunpack.c.h.b16 %v439
    %v754 = vunpack.c.l.b16 %v440
    %v755 = vunpack.c.h.b16 %v440
    %v756 = vunpack.c.l.b16 %v441
    %v757 = vunpack.c.h.b16 %v441
    %v758 = vunpack.c.l.b16 %v442
    %v759 = vunpack.c.h.b16 %v442
    %v760 = vunpack.c.l.b16 %v443
    %v761 = vunpack.c.h.b16 %v443
    %v762 = vunpack.c.l.b16 %v444
    %v763 = vunpack.c.h.b16 %v444
    %v764 = vunpack.c.l.b16 %v445
    %v765 = vunpack.c.h.b16 %v445
    %v766 = vunpack.c.l.b16 %v446
    %v767 = vunpack.c.h.b16 %v446
    %v768 = vunpack.c.l.b16 %v447
    %v769 = vunpack.c.h.b16 %v447
    %v770 = vunpack.c.l.b16 %v448
    %v771 = vunpack.c.h.b16 %v448
    %v772 = vunpack.c.l.b16 %v449
    %v773 = vunpack.c.h.b16 %v449
    %v774 = vunpack.c.l.b16 %v450
    %v775 = vunpack.c.h.b16 %v450
    %v776 = vunpack.c.l.b16 %v451
    %v777 = vunpack.c.h.b16 %v451
    %v778 = vunpack.c.l.b16 %v452
    %v779 = vunpack.c.h.b16 %v452
    %v780 = vunpack.c.l.b16 %v453
    %v781 = vunpack.c.h.b16 %v453
    %v782 = vunpack.c.l.b16 %v454
    %v783 = vunpack.c.h.b16 %v454
    %v784 = vunpack.c.l.b16 %v455
    %v785 = vunpack.c.h.b16 %v455
    %v786 = vunpack.c.l.b16 %v456
    %v787 = vunpack.c.h.b16 %v456
    %v788 = vunpack.c.l.b16 %v457
    %v789 = vunpack.c.h.b16 %v457
    %v790 = vunpack.c.l.b16 %v458
    %v791 = vunpack.c.h.b16 %v458
    %v792 = vunpack.c.l.b16 %v459
    %v793 = vunpack.c.h.b16 %v459
    %v794 = vunpack.c.l.b16 %v460
    %v795 = vunpack.c.h.b16 %v460
    %v796 = vunpack.c.l.b16 %v461
    %v797 = vunpack.c.h.b16 %v461
    %v798 = vunpack.c.l.b16 %v462
    %v799 = vunpack.c.h.b16 %v462
    %v800 = vunpack.c.l.b16 %v463
    %v801 = vunpack.c.h.b16 %v463
    %v802 = vunpack.c.l.b16 %v464
    %v803 = vunpack.c.h.b16 %v464
    %v804 = vunpack.c.l.b16 %v465
    %v805 = vunpack.c.h.b16 %v465
    %v806 = vunpack.c.l.b16 %v466
    %v807 = vunpack.c.h.b16 %v466
    %v808 = vunpack.c.l.b16 %v467
    %v809 = vunpack.c.h.b16 %v467
    %v810 = vunpack.c.l.b16 %v468
    %v811 = vunpack.c.h.b16 %v468
    %v812 = vunpack.c.l.b16 %v469
    %v813 = vunpack.c.h.b16 %v469
    %v814 = vunpack.c.l.b16 %v470
    %v815 = vunpack.c.h.b16 %v470
    %v816 = vunpack.c.l.b16 %v471
    %v817 = vunpack.c.h.b16 %v471
    %v818 = vunpack.c.l.b16 %v472
    %v819 = vunpack.c.h.b16 %v472
    %v820 = vunpack.c.l.b16 %v473
    %v821 = vunpack.c.h.b16 %v473
    %v822 = vunpack.c.l.b16 %v474
    %v823 = vunpack.c.h.b16 %v474
    %v824 = vunpack.c.l.b16 %v475
    %v825 = vunpack.c.h.b16 %v475
    %v826 = vunpack.c.l.b16 %v476
    %v827 = vunpack.c.h.b16 %v476
    %v828 = vunpack.c.l.b16 %v477
    %v829 = vunpack.c.h.b16 %v477
    %v830 = vunpack.c.l.b16 %v478
    %v831 = vunpack.c.h.b16 %v478
    %v832 = vunpack.c.l.b16 %v479
    %v833 = vunpack.c.h.b16 %v479
    %v834 = vunpack.c.l.b16 %v480
    %v835 = vunpack.c.h.b16 %v480
    %v836 = vunpack.c.l.b16 %v481
    %v837 = vunpack.c.h.b16 %v481
    %v838 = vunpack.c.l.b16 %v482
    %v839 = vunpack.c.h.b16 %v482
    %v840 = vunpack.c.l.b16 %v483
    %v841 = vunpack.c.h.b16 %v483
    %v842 = vunpack.c.l.b16 %v484
    %v843 = vunpack.c.h.b16 %v484
    %v844 = vunpack.c.l.b16 %v485
    %v845 = vunpack.c.h.b16 %v485
    %v846 = vunpack.c.l.b16 %v486
    %v847 = vunpack.c.h.b16 %v486
    %v848 = vunpack.c.l.b16 %v487
    %v849 = vunpack.c.h.b16 %v487
    %v850 = vunpack.c.l.b16 %v488
    %v851 = vunpack.c.h.b16 %v488
    %v852 = vunpack.c.l.b16 %v489
    %v853 = vunpack.c.h.b16 %v489
    %v854 = vunpack.c.l.b16 %v490
    %v855 = vunpack.c.h.b16 %v490
    %v856 = vunpack.c.l.b16 %v491
    %v857 = vunpack.c.h.b16 %v491
    %v858 = vunpack.c.l.b16 %v492
    %v859 = vunpack.c.h.b16 %v492
    %v860 = vunpack.c.l.b16 %v493
    %v861 = vunpack.c.h.b16 %v493
    %v862 = vunpack.c.l.b16 %v494
    %v863 = vunpack.c.h.b16 %v494
    %v864 = vunpack.c.l.b16 %v495
    %v865 = vunpack.c.h.b16 %v495
    %v866 = vunpack.c.l.b16 %v496
    %v867 = vunpack.c.h.b16 %v496
    %v868 = vunpack.c.l.b16 %v497
    %v869 = vunpack.c.h.b16 %v497
    %v870 = vunpack.c.l.b16 %v498
    %v871 = vunpack.c.h.b16 %v498
    %v872 = vunpack.c.l.b16 %v499
    %v873 = vunpack.c.h.b16 %v499
    %v874 = vunpack.c.l.b16 %v500
    %v875 = vunpack.c.h.b16 %v500
    %v876 = vunpack.c.l.b16 %v501
    %v877 = vunpack.c.h.b16 %v501
    %v878 = vunpack.c.l.b16 %v502
    %v879 = vunpack.c.h.b16 %v502
    %v880 = vunpack.c.l.b16 %v503
    %v881 = vunpack.c.h.b16 %v503
    %v882 = vunpack.c.l.b16 %v504
    %v883 = vunpack.c.h.b16 %v504
    %v884 = vunpack.c.l.b16 %v505
    %v885 = vunpack.c.h.b16 %v505
    %v886 = vunpack.c.l.b16 %v506
    %v887 = vunpack.c.h.b16 %v506
    %v888 = vunpack.c.l.b16 %v507
    %v889 = vunpack.c.h.b16 %v507
    %v890 = vunpack.c.l.b16 %v508
    %v891 = vunpack.c.h.b16 %v508
    %v892 = vunpack.c.l.b16 %v509
    %v893 = vunpack.c.h.b16 %v509
    %v894 = vunpack.c.l.b16 %v510
    %v895 = vunpack.c.h.b16 %v510
    %v896 = vunpack.c.l.b16 %v511
    %v897 = vunpack.c.h.b16 %v511
    %v898 = vunpack.c.l.b16 %v512
    %v899 = vunpack.c.h.b16 %v512
    %v900 = vunpack.c.l.b16 %v513
    %v901 = vunpack.c.h.b16 %v513
    %v902 = vunpack.c.l.b16 %v514
    %v903 = vunpack.c.h.b16 %v514
    %v904 = vunpack.c.l.b16 %v515
    %v905 = vunpack.c.h.b16 %v515
    %v906 = vunpack.c.l.b16 %v516
    %v907 = vunpack.c.h.b16 %v516
    %v908 = vunpack.c.l.b16 %v517
    %v909 = vunpack.c.h.b16 %v517
    %v910 = vunpack.c.l.b16 %v518
    %v911 = vunpack.c.h.b16 %v518
    %v912 = vunpack.c.l.b16 %v519
    %v913 = vunpack.c.h.b16 %v519
    %v914 = vunpack.c.l.b16 %v520
    %v915 = vunpack.c.h.b16 %v520
    %v916 = vunpack.c.l.b16 %v521
    %v917 = vunpack.c.h.b16 %v521
    %v918 = vunpack.c.l.b16 %v522
    %v919 = vunpack.c.h.b16 %v522
    %v920 = vunpack.c.l.b16 %v523
    %v921 = vunpack.c.h.b16 %v523
    %v922 = vunpack.c.l.b16 %v524
    %v923 = vunpack.c.h.b16 %v524
    %v924 = vunpack.c.l.b16 %v525
    %v925 = vunpack.c.h.b16 %v525
    %v926 = vunpack.c.l.b16 %v526
    %v927 = vunpack.c.h.b16 %v526
    %v928 = vunpack.c.l.b16 %v527
    %v929 = vunpack.c.h.b16 %v527
    %v930 = vunpack.c.l.b16 %v528
    %v931 = vunpack.c.h.b16 %v528
    %v932 = vunpack.c.l.b16 %v529
    %v933 = vunpack.c.h.b16 %v529
    %v934 = vunpack.c.l.b16 %v530
    %v935 = vunpack.c.h.b16 %v530
    %v936 = vunpack.c.l.b16 %v531
    %v937 = vunpack.c.h.b16 %v531
    %v938 = vpack.c.b16 %v686, %v682
    %v939 = vpack.c.b16 %v687, %v683
    %v940 = vpack.c.b16 %v688, %v684
    %v941 = vpack.c.b16 %v689, %v685
    %v942 = vpack.c.b16 %v694, %v690
    %v943 = vpack.c.b16 %v695, %v691
    %v944 = vpack.c.b16 %v696, %v692
    %v945 = vpack.c.b16 %v697, %v693
    %v946 = vpack.c.b16 %v702, %v698
    %v947 = vpack.c.b16 %v703, %v699
    %v948 = vpack.c.b16 %v704, %v700
    %v949 = vpack.c.b16 %v705, %v701
    %v950 = vpack.c.b16 %v710, %v706
    %v951 = vpack.c.b16 %v711, %v707
    %v952 = vpack.c.b16 %v712, %v708
    %v953 = vpack.c.b16 %v713, %v709
    %v954 = vpack.c.b16 %v718, %v714
    %v955 = vpack.c.b16 %v719, %v715
    %v956 = vpack.c.b16 %v720, %v716
    %v957 = vpack.c.b16 %v721, %v717
    %v958 = vpack.c.b16 %v726, %v722
    %v959 = vpack.c.b16 %v727, %v723
    %v960 = vpack.c.b16 %v728, %v724
    %v961 = vpack.c.b16 %v729, %v725
    %v962 = vpack.c.b16 %v734, %v730
    %v963 = vpack.c.b16 %v735, %v731
    %v964 = vpack.c.b16 %v736, %v732
    %v965 = vpack.c.b16 %v737, %v733
    %v966 = vpack.c.b16 %v742, %v738
    %v967 = vpack.c.b16 %v743, %v739
    %v968 = vpack.c.b16 %v744, %v740
    %v969 = vpack.c.b16 %v745, %v741
    %v970 = vpack.c.b16 %v750, %v746
    %v971 = vpack.c.b16 %v751, %v747
    %v972 = vpack.c.b16 %v752, %v748
    %v973 = vpack.c.b16 %v753, %v749
    %v974 = vpack.c.b16 %v758, %v754
    %v975 = vpack.c.b16 %v759, %v755
    %v976 = vpack.c.b16 %v760, %v756
    %v977 = vpack.c.b16 %v761, %v757
    %v978 = vpack.c.b16 %v766, %v762
    %v979 = vpack.c.b16 %v767, %v763
    %v980 = vpack.c.b16 %v768, %v764
    %v981 = vpack.c.b16 %v769, %v765
    %v982 = vpack.c.b16 %v774, %v770
    %v983 = vpack.c.b16 %v775, %v771
    %v984 = vpack.c.b16 %v776, %v772
    %v985 = vpack.c.b16 %v777, %v773
    %v986 = vpack.c.b16 %v782, %v778
    %v987 = vpack.c.b16 %v783, %v779
    %v988 = vpack.c.b16 %v784, %v780
    %v989 = vpack.c.b16 %v785, %v781
    %v990 = vpack.c.b16 %v790, %v786
    %v991 = vpack.c.b16 %v791, %v787
    %v992 = vpack.c.b16 %v792, %v788
    %v993 = vpack.c.b16 %v793, %v789
    %v994 = vpack.c.b16 %v798, %v794
    %v995 = vpack.c.b16 %v799, %v795
    %v996 = vpack.c.b16 %v800, %v796
    %v997 = vpack.c.b16 %v801, %v797
    %v998 = vpack.c.b16 %v806, %v802
    %v999 = vpack.c.b16 %v807, %v803
    %v1000 = vpack.c.b16 %v808, %v804
    %v1001 = vpack.c.b16 %v809, %v805
    %v1002 = vpack.c.b16 %v814, %v810
    %v1003 = vpack.c.b16 %v815, %v811
    %v1004 = vpack.c.b16 %v816, %v812
    %v1005 = vpack.c.b16 %v817, %v813
    %v1006 = vpack.c.b16 %v822, %v818
    %v1007 = vpack.c.b16 %v823, %v819
    %v1008 = vpack.c.b16 %v824, %v820
    %v1009 = vpack.c.b16 %v825, %v821
    %v1010 = vpack.c.b16 %v830, %v826
    %v1011 = vpack.c.b16 %v831, %v827
    %v1012 = vpack.c.b16 %v832, %v828
    %v1013 = vpack.c.b16 %v833, %v829
    %v1014 = vpack.c.b16 %v838, %v834
    %v1015 = vpack.c.b16 %v839, %v835
    %v1016 = vpack.c.b16 %v840, %v836
    %v1017 = vpack.c.b16 %v841, %v837
    %v1018 = vpack.c.b16 %v846, %v842
    %v1019 = vpack.c.b16 %v847, %v843
    %v1020 = vpack.c.b16 %v848, %v844
    %v1021 = vpack.c.b16 %v849, %v845
    %v1022 = vpack.c.b16 %v854, %v850
    %v1023 = vpack.c.b16 %v855, %v851
    %v1024 = vpack.c.b16 %v856, %v852
    %v1025 = vpack.c.b16 %v857, %v853
    %v1026 = vpack.c.b16 %v862, %v858
    %v1027 = vpack.c.b16 %v863, %v859
    %v1028 = vpack.c.b16 %v864, %v860
    %v1029 = vpack.c.b16 %v865, %v861
    %v1030 = vpack.c.b16 %v870, %v866
    %v1031 = vpack.c.b16 %v871, %v867
    %v1032 = vpack.c.b16 %v872, %v868
    %v1033 = vpack.c.b16 %v873, %v869
    %v1034 = vpack.c.b16 %v878, %v874
    %v1035 = vpack.c.b16 %v879, %v875
    %v1036 = vpack.c.b16 %v880, %v876
    %v1037 = vpack.c.b16 %v881, %v877
    %v1038 = vpack.c.b16 %v886, %v882
    %v1039 = vpack.c.b16 %v887, %v883
    %v1040 = vpack.c.b16 %v888, %v884
    %v1041 = vpack.c.b16 %v889, %v885
    %v1042 = vpack.c.b16 %v894, %v890
    %v1043 = vpack.c.b16 %v895, %v891
    %v1044 = vpack.c.b16 %v896, %v892
    %v1045 = vpack.c.b16 %v897, %v893
    %v1046 = vpack.c.b16 %v902, %v898
    %v1047 = vpack.c.b16 %v903, %v899
    %v1048 = vpack.c.b16 %v904, %v900
    %v1049 = vpack.c.b16 %v905, %v901
    %v1050 = vpack.c.b16 %v910, %v906
    %v1051 = vpack.c.b16 %v911, %v907
    %v1052 = vpack.c.b16 %v912, %v908
    %v1053 = vpack.c.b16 %v913, %v909
    %v1054 = vpack.c.b16 %v918, %v914
    %v1055 = vpack.c.b16 %v919, %v915
    %v1056 = vpack.c.b16 %v920, %v916
    %v1057 = vpack.c.b16 %v921, %v917
    %v1058 = vpack.c.b16 %v926, %v922
    %v1059 = vpack.c.b16 %v927, %v923
    %v1060 = vpack.c.b16 %v928, %v924
    %v1061 = vpack.c.b16 %v929, %v925
    %v1062 = vpack.c.b16 %v934, %v930
    %v1063 = vpack.c.b16 %v935, %v931
    %v1064 = vpack.c.b16 %v936, %v932
    %v1065 = vpack.c.b16 %v937, %v933
    %1194 = vmatprep.subr.bf16.mxu0 %v939
    %1195 = vmatpush1.bf16.msra.mxu0 %v938
    %1196 = vmatprep.subr.bf16.mxu0 %v943
    %1197 = vmatpush1.bf16.msra.mxu0 %v942
    %1198 = vmatprep.subr.bf16.mxu0 %v947
    %1199 = vmatpush1.bf16.msra.mxu0 %v946
    %1200 = vmatprep.subr.bf16.mxu0 %v951
    %1201 = vmatpush1.bf16.msra.mxu0 %v950
    %1202 = vmatprep.subr.bf16.mxu0 %v955
    %1203 = vmatpush1.bf16.msra.mxu0 %v954
    %1204 = vmatprep.subr.bf16.mxu0 %v959
    %1205 = vmatpush1.bf16.msra.mxu0 %v958
    %1206 = vmatprep.subr.bf16.mxu0 %v963
    %1207 = vmatpush1.bf16.msra.mxu0 %v962
    %1208 = vmatprep.subr.bf16.mxu0 %v967
    %1209 = vmatpush1.bf16.msra.mxu0 %v966
    %1210 = vmatprep.subr.bf16.mxu0 %v971
    %1211 = vmatpush1.bf16.msra.mxu0 %v970
    %1212 = vmatprep.subr.bf16.mxu0 %v975
    %1213 = vmatpush1.bf16.msra.mxu0 %v974
    %1214 = vmatprep.subr.bf16.mxu0 %v979
    %1215 = vmatpush1.bf16.msra.mxu0 %v978
    %1216 = vmatprep.subr.bf16.mxu0 %v983
    %1217 = vmatpush1.bf16.msra.mxu0 %v982
    %1218 = vmatprep.subr.bf16.mxu0 %v987
    %1219 = vmatpush1.bf16.msra.mxu0 %v986
    %1220 = vmatprep.subr.bf16.mxu0 %v991
    %1221 = vmatpush1.bf16.msra.mxu0 %v990
    %1222 = vmatprep.subr.bf16.mxu0 %v995
    %1223 = vmatpush1.bf16.msra.mxu0 %v994
    %1224 = vmatprep.subr.bf16.mxu0 %v999
    %1225 = vmatpush1.bf16.msra.mxu0 %v998
    %1226 = vmatprep.mubr.bf16.mxu0 %v401
    %1227 = vmatmul.mubr.bf16.gmra.mrb[0].mxu0 %v400
    %v1228 = vpop.f32.mrb[0].mxu0
    %v1229 = vadd.f32 %v537, %v1228
    %v1230 = vpop.f32.mrb[0].mxu0
    %v1231 = vadd.f32 %v541, %v1230
    %v1232 = vpop.f32.mrb[0].mxu0
    %v1233 = vpop.f32.mrb[0].mxu0
    %1234 = vdwg.mxu0
    %1235 = vmatprep.subr.bf16.mxu0 %v1003
    %1236 = vmatpush1.bf16.msra.mxu0 %v1002
    %1237 = vmatprep.subr.bf16.mxu0 %v1007
    %1238 = vmatpush1.bf16.msra.mxu0 %v1006
    %1239 = vmatprep.subr.bf16.mxu0 %v1011
    %1240 = vmatpush1.bf16.msra.mxu0 %v1010
    %1241 = vmatprep.subr.bf16.mxu0 %v1015
    %1242 = vmatpush1.bf16.msra.mxu0 %v1014
    %1243 = vmatprep.subr.bf16.mxu0 %v1019
    %1244 = vmatpush1.bf16.msra.mxu0 %v1018
    %1245 = vmatprep.subr.bf16.mxu0 %v1023
    %1246 = vmatpush1.bf16.msra.mxu0 %v1022
    %1247 = vmatprep.subr.bf16.mxu0 %v1027
    %1248 = vmatpush1.bf16.msra.mxu0 %v1026
    %1249 = vmatprep.subr.bf16.mxu0 %v1031
    %1250 = vmatpush1.bf16.msra.mxu0 %v1030
    %1251 = vmatprep.subr.bf16.mxu0 %v1035
    %1252 = vmatpush1.bf16.msra.mxu0 %v1034
    %1253 = vmatprep.subr.bf16.mxu0 %v1039
    %1254 = vmatpush1.bf16.msra.mxu0 %v1038
    %1255 = vmatprep.subr.bf16.mxu0 %v1043
    %1256 = vmatpush1.bf16.msra.mxu0 %v1042
    %1257 = vmatprep.subr.bf16.mxu0 %v1047
    %1258 = vmatpush1.bf16.msra.mxu0 %v1046
    %1259 = vmatprep.subr.bf16.mxu0 %v1051
    %1260 = vmatpush1.bf16.msra.mxu0 %v1050
    %1261 = vmatprep.subr.bf16.mxu0 %v1055
    %1262 = vmatpush1.bf16.msra.mxu0 %v1054
    %1263 = vmatprep.subr.bf16.mxu0 %v1059
    %1264 = vmatpush1.bf16.msra.mxu0 %v1058
    %1265 = vmatprep.subr.bf16.mxu0 %v1063
    %1266 = vmatpush1.bf16.msra.mxu0 %v1062
    %1267 = vmatprep.mubr.bf16.mxu0 %v403
    %1268 = vmatmul.mubr.bf16.gmra.mrb[0].mxu0 %v402
    %v1269 = vpop.f32.mrb[0].mxu0
    %v1270 = vadd.f32 %v1229, %v1269
    %v1271 = vpop.f32.mrb[0].mxu0
    %v1272 = vadd.f32 %v1231, %v1271
    %v1273 = vpop.f32.mrb[0].mxu0
    %v1274 = vpop.f32.mrb[0].mxu0
    %1275 = vdwg.mxu0
    %1276 = vmatprep.subr.bf16.mxu0 %v941
    %1277 = vmatpush1.bf16.msra.mxu0 %v940
    %1278 = vmatprep.subr.bf16.mxu0 %v945
    %1279 = vmatpush1.bf16.msra.mxu0 %v944
    %1280 = vmatprep.subr.bf16.mxu0 %v949
    %1281 = vmatpush1.bf16.msra.mxu0 %v948
    %1282 = vmatprep.subr.bf16.mxu0 %v953
    %1283 = vmatpush1.bf16.msra.mxu0 %v952
    %1284 = vmatprep.subr.bf16.mxu0 %v957
    %1285 = vmatpush1.bf16.msra.mxu0 %v956
    %1286 = vmatprep.subr.bf16.mxu0 %v961
    %1287 = vmatpush1.bf16.msra.mxu0 %v960
    %1288 = vmatprep.subr.bf16.mxu0 %v965
    %1289 = vmatpush1.bf16.msra.mxu0 %v964
    %1290 = vmatprep.subr.bf16.mxu0 %v969
    %1291 = vmatpush1.bf16.msra.mxu0 %v968
    %1292 = vmatprep.subr.bf16.mxu0 %v973
    %1293 = vmatpush1.bf16.msra.mxu0 %v972
    %1294 = vmatprep.subr.bf16.mxu0 %v977
    %1295 = vmatpush1.bf16.msra.mxu0 %v976
    %1296 = vmatprep.subr.bf16.mxu0 %v981
    %1297 = vmatpush1.bf16.msra.mxu0 %v980
    %1298 = vmatprep.subr.bf16.mxu0 %v985
    %1299 = vmatpush1.bf16.msra.mxu0 %v984
    %1300 = vmatprep.subr.bf16.mxu0 %v989
    %1301 = vmatpush1.bf16.msra.mxu0 %v988
    %1302 = vmatprep.subr.bf16.mxu0 %v993
    %1303 = vmatpush1.bf16.msra.mxu0 %v992
    %1304 = vmatprep.subr.bf16.mxu0 %v997
    %1305 = vmatpush1.bf16.msra.mxu0 %v996
    %1306 = vmatprep.subr.bf16.mxu0 %v1001
    %1307 = vmatpush1.bf16.msra.mxu0 %v1000
    %1308 = vmatprep.mubr.bf16.mxu0 %v401
    %1309 = vmatmul.mubr.bf16.gmra.mrb[0].mxu0 %v400
    %v1310 = vpop.f32.mrb[0].mxu0
    %v1311 = vadd.f32 %v545, %v1310
    %v1312 = vpop.f32.mrb[0].mxu0
    %v1313 = vadd.f32 %v549, %v1312
    %v1314 = vpop.f32.mrb[0].mxu0
    %v1315 = vpop.f32.mrb[0].mxu0
    %1316 = vdwg.mxu0
    %1317 = vmatprep.subr.bf16.mxu0 %v1005
    %1318 = vmatpush1.bf16.msra.mxu0 %v1004
    %1319 = vmatprep.subr.bf16.mxu0 %v1009
    %1320 = vmatpush1.bf16.msra.mxu0 %v1008
    %1321 = vmatprep.subr.bf16.mxu0 %v1013
    %1322 = vmatpush1.bf16.msra.mxu0 %v1012
    %1323 = vmatprep.subr.bf16.mxu0 %v1017
    %1324 = vmatpush1.bf16.msra.mxu0 %v1016
    %1325 = vmatprep.subr.bf16.mxu0 %v1021
    %1326 = vmatpush1.bf16.msra.mxu0 %v1020
    %1327 = vmatprep.subr.bf16.mxu0 %v1025
    %1328 = vmatpush1.bf16.msra.mxu0 %v1024
    %1329 = vmatprep.subr.bf16.mxu0 %v1029
    %1330 = vmatpush1.bf16.msra.mxu0 %v1028
    %1331 = vmatprep.subr.bf16.mxu0 %v1033
    %1332 = vmatpush1.bf16.msra.mxu0 %v1032
    %1333 = vmatprep.subr.bf16.mxu0 %v1037
    %1334 = vmatpush1.bf16.msra.mxu0 %v1036
    %1335 = vmatprep.subr.bf16.mxu0 %v1041
    %1336 = vmatpush1.bf16.msra.mxu0 %v1040
    %1337 = vmatprep.subr.bf16.mxu0 %v1045
    %1338 = vmatpush1.bf16.msra.mxu0 %v1044
    %1339 = vmatprep.subr.bf16.mxu0 %v1049
    %1340 = vmatpush1.bf16.msra.mxu0 %v1048
    %1341 = vmatprep.subr.bf16.mxu0 %v1053
    %1342 = vmatpush1.bf16.msra.mxu0 %v1052
    %1343 = vmatprep.subr.bf16.mxu0 %v1057
    %1344 = vmatpush1.bf16.msra.mxu0 %v1056
    %1345 = vmatprep.subr.bf16.mxu0 %v1061
    %1346 = vmatpush1.bf16.msra.mxu0 %v1060
    %1347 = vmatprep.subr.bf16.mxu0 %v1065
    %1348 = vmatpush1.bf16.msra.mxu0 %v1064
    %1349 = vmatprep.mubr.bf16.mxu0 %v403
    %1350 = vmatmul.mubr.bf16.gmra.mrb[0].mxu0 %v402
    %v1351 = vpop.f32.mrb[0].mxu0
    %v1352 = vadd.f32 %v1311, %v1351
    %v1353 = vpop.f32.mrb[0].mxu0
    %v1354 = vadd.f32 %v1313, %v1353
    %v1355 = vpop.f32.mrb[0].mxu0
    %v1356 = vpop.f32.mrb[0].mxu0
    %1357 = vdwg.mxu0
    %v1358 = vmax.f32 %v1270, 0.0
    %v1359 = vmax.f32 %v1272, 0.0
    %v1360 = vmax.f32 %v1352, 0.0
    %v1361 = vmax.f32 %v1354, 0.0
    %v1362 = vpack.c.bf16 %v1358, %v1358
    %v1363 = vpack.c.bf16 %v1359, %v1359
    %v1364 = vpack.c.bf16 %v1360, %v1360
    %v1365 = vpack.c.bf16 %v1361, %v1361
    %v1366 = vld [vmem:[#allocation10] sm:$0xff]
    %v1367 = vld [vmem:[#allocation10 + $0x8] sm:$0xff]
    %v1368 = vld [vmem:[#allocation10 + $0x10] sm:$0xff]
    %v1369 = vld [vmem:[#allocation10 + $0x18] sm:$0xff]
    %v1370 = vld [vmem:[#allocation10 + $0x20] sm:$0xff]
    %v1371 = vld [vmem:[#allocation10 + $0x28] sm:$0xff]
    %v1372 = vld [vmem:[#allocation10 + $0x30] sm:$0xff]
    %v1373 = vld [vmem:[#allocation10 + $0x38] sm:$0xff]
    %v1374 = vld [vmem:[#allocation10 + $0x40] sm:$0xff]
    %v1375 = vld [vmem:[#allocation10 + $0x48] sm:$0xff]
    %v1376 = vld [vmem:[#allocation10 + $0x50] sm:$0xff]
    %v1377 = vld [vmem:[#allocation10 + $0x58] sm:$0xff]
    %v1378 = vld [vmem:[#allocation10 + $0x60] sm:$0xff]
    %v1379 = vld [vmem:[#allocation10 + $0x68] sm:$0xff]
    %v1380 = vld [vmem:[#allocation10 + $0x70] sm:$0xff]
    %v1381 = vld [vmem:[#allocation10 + $0x78] sm:$0xff]
    %v1382 = vld [vmem:[#allocation10 + $0x80] sm:$0xff]
    %v1383 = vld [vmem:[#allocation10 + $0x88] sm:$0xff]
    %v1384 = vld [vmem:[#allocation10 + $0x90] sm:$0xff]
    %v1385 = vld [vmem:[#allocation10 + $0x98] sm:$0xff]
    %v1386 = vld [vmem:[#allocation10 + $0xa0] sm:$0xff]
    %v1387 = vld [vmem:[#allocation10 + $0xa8] sm:$0xff]
    %v1388 = vld [vmem:[#allocation10 + $0xb0] sm:$0xff]
    %v1389 = vld [vmem:[#allocation10 + $0xb8] sm:$0xff]
    %v1390 = vld [vmem:[#allocation10 + $0xc0] sm:$0xff]
    %v1391 = vld [vmem:[#allocation10 + $0xc8] sm:$0xff]
    %v1392 = vld [vmem:[#allocation10 + $0xd0] sm:$0xff]
    %v1393 = vld [vmem:[#allocation10 + $0xd8] sm:$0xff]
    %v1394 = vld [vmem:[#allocation10 + $0xe0] sm:$0xff]
    %v1395 = vld [vmem:[#allocation10 + $0xe8] sm:$0xff]
    %v1396 = vld [vmem:[#allocation10 + $0xf0] sm:$0xff]
    %v1397 = vld [vmem:[#allocation10 + $0xf8] sm:$0xff]
    %v1398 = vld [vmem:[#allocation10 + $0x100] sm:$0xff]
    %v1399 = vld [vmem:[#allocation10 + $0x108] sm:$0xff]
    %v1400 = vld [vmem:[#allocation10 + $0x110] sm:$0xff]
    %v1401 = vld [vmem:[#allocation10 + $0x118] sm:$0xff]
    %v1402 = vld [vmem:[#allocation10 + $0x120] sm:$0xff]
    %v1403 = vld [vmem:[#allocation10 + $0x128] sm:$0xff]
    %v1404 = vld [vmem:[#allocation10 + $0x130] sm:$0xff]
    %v1405 = vld [vmem:[#allocation10 + $0x138] sm:$0xff]
    %v1406 = vld [vmem:[#allocation10 + $0x140] sm:$0xff]
    %v1407 = vld [vmem:[#allocation10 + $0x148] sm:$0xff]
    %v1408 = vld [vmem:[#allocation10 + $0x150] sm:$0xff]
    %v1409 = vld [vmem:[#allocation10 + $0x158] sm:$0xff]
    %v1410 = vld [vmem:[#allocation10 + $0x160] sm:$0xff]
    %v1411 = vld [vmem:[#allocation10 + $0x168] sm:$0xff]
    %v1412 = vld [vmem:[#allocation10 + $0x170] sm:$0xff]
    %v1413 = vld [vmem:[#allocation10 + $0x178] sm:$0xff]
    %v1414 = vld [vmem:[#allocation10 + $0x180] sm:$0xff]
    %v1415 = vld [vmem:[#allocation10 + $0x188] sm:$0xff]
    %v1416 = vld [vmem:[#allocation10 + $0x190] sm:$0xff]
    %v1417 = vld [vmem:[#allocation10 + $0x198] sm:$0xff]
    %v1418 = vld [vmem:[#allocation10 + $0x1a0] sm:$0xff]
    %v1419 = vld [vmem:[#allocation10 + $0x1a8] sm:$0xff]
    %v1420 = vld [vmem:[#allocation10 + $0x1b0] sm:$0xff]
    %v1421 = vld [vmem:[#allocation10 + $0x1b8] sm:$0xff]
    %v1422 = vld [vmem:[#allocation10 + $0x1c0] sm:$0xff]
    %v1423 = vld [vmem:[#allocation10 + $0x1c8] sm:$0xff]
    %v1424 = vld [vmem:[#allocation10 + $0x1d0] sm:$0xff]
    %v1425 = vld [vmem:[#allocation10 + $0x1d8] sm:$0xff]
    %v1426 = vld [vmem:[#allocation10 + $0x1e0] sm:$0xff]
    %v1427 = vld [vmem:[#allocation10 + $0x1e8] sm:$0xff]
    %v1428 = vld [vmem:[#allocation10 + $0x1f0] sm:$0xff]
    %v1429 = vld [vmem:[#allocation10 + $0x1f8] sm:$0xff]
    %v1430 = vld [vmem:[#allocation10 + $0x200] sm:$0xff]
    %v1431 = vld [vmem:[#allocation10 + $0x208] sm:$0xff]
    %v1432 = vld [vmem:[#allocation10 + $0x210] sm:$0xff]
    %v1433 = vld [vmem:[#allocation10 + $0x218] sm:$0xff]
    %v1434 = vld [vmem:[#allocation10 + $0x220] sm:$0xff]
    %v1435 = vld [vmem:[#allocation10 + $0x228] sm:$0xff]
    %v1436 = vld [vmem:[#allocation10 + $0x230] sm:$0xff]
    %v1437 = vld [vmem:[#allocation10 + $0x238] sm:$0xff]
    %v1438 = vld [vmem:[#allocation10 + $0x240] sm:$0xff]
    %v1439 = vld [vmem:[#allocation10 + $0x248] sm:$0xff]
    %v1440 = vld [vmem:[#allocation10 + $0x250] sm:$0xff]
    %v1441 = vld [vmem:[#allocation10 + $0x258] sm:$0xff]
    %v1442 = vld [vmem:[#allocation10 + $0x260] sm:$0xff]
    %v1443 = vld [vmem:[#allocation10 + $0x268] sm:$0xff]
    %v1444 = vld [vmem:[#allocation10 + $0x270] sm:$0xff]
    %v1445 = vld [vmem:[#allocation10 + $0x278] sm:$0xff]
    %v1446 = vld [vmem:[#allocation10 + $0x280] sm:$0xff]
    %v1447 = vld [vmem:[#allocation10 + $0x288] sm:$0xff]
    %v1448 = vld [vmem:[#allocation10 + $0x290] sm:$0xff]
    %v1449 = vld [vmem:[#allocation10 + $0x298] sm:$0xff]
    %v1450 = vld [vmem:[#allocation10 + $0x2a0] sm:$0xff]
    %v1451 = vld [vmem:[#allocation10 + $0x2a8] sm:$0xff]
    %v1452 = vld [vmem:[#allocation10 + $0x2b0] sm:$0xff]
    %v1453 = vld [vmem:[#allocation10 + $0x2b8] sm:$0xff]
    %v1454 = vld [vmem:[#allocation10 + $0x2c0] sm:$0xff]
    %v1455 = vld [vmem:[#allocation10 + $0x2c8] sm:$0xff]
    %v1456 = vld [vmem:[#allocation10 + $0x2d0] sm:$0xff]
    %v1457 = vld [vmem:[#allocation10 + $0x2d8] sm:$0xff]
    %v1458 = vld [vmem:[#allocation10 + $0x2e0] sm:$0xff]
    %v1459 = vld [vmem:[#allocation10 + $0x2e8] sm:$0xff]
    %v1460 = vld [vmem:[#allocation10 + $0x2f0] sm:$0xff]
    %v1461 = vld [vmem:[#allocation10 + $0x2f8] sm:$0xff]
    %v1462 = vld [vmem:[#allocation10 + $0x300] sm:$0xff]
    %v1463 = vld [vmem:[#allocation10 + $0x308] sm:$0xff]
    %v1464 = vld [vmem:[#allocation10 + $0x310] sm:$0xff]
    %v1465 = vld [vmem:[#allocation10 + $0x318] sm:$0xff]
    %v1466 = vld [vmem:[#allocation10 + $0x320] sm:$0xff]
    %v1467 = vld [vmem:[#allocation10 + $0x328] sm:$0xff]
    %v1468 = vld [vmem:[#allocation10 + $0x330] sm:$0xff]
    %v1469 = vld [vmem:[#allocation10 + $0x338] sm:$0xff]
    %v1470 = vld [vmem:[#allocation10 + $0x340] sm:$0xff]
    %v1471 = vld [vmem:[#allocation10 + $0x348] sm:$0xff]
    %v1472 = vld [vmem:[#allocation10 + $0x350] sm:$0xff]
    %v1473 = vld [vmem:[#allocation10 + $0x358] sm:$0xff]
    %v1474 = vld [vmem:[#allocation10 + $0x360] sm:$0xff]
    %v1475 = vld [vmem:[#allocation10 + $0x368] sm:$0xff]
    %v1476 = vld [vmem:[#allocation10 + $0x370] sm:$0xff]
    %v1477 = vld [vmem:[#allocation10 + $0x378] sm:$0xff]
    %v1478 = vld [vmem:[#allocation10 + $0x380] sm:$0xff]
    %v1479 = vld [vmem:[#allocation10 + $0x388] sm:$0xff]
    %v1480 = vld [vmem:[#allocation10 + $0x390] sm:$0xff]
    %v1481 = vld [vmem:[#allocation10 + $0x398] sm:$0xff]
    %v1482 = vld [vmem:[#allocation10 + $0x3a0] sm:$0xff]
    %v1483 = vld [vmem:[#allocation10 + $0x3a8] sm:$0xff]
    %v1484 = vld [vmem:[#allocation10 + $0x3b0] sm:$0xff]
    %v1485 = vld [vmem:[#allocation10 + $0x3b8] sm:$0xff]
    %v1486 = vld [vmem:[#allocation10 + $0x3c0] sm:$0xff]
    %v1487 = vld [vmem:[#allocation10 + $0x3c8] sm:$0xff]
    %v1488 = vld [vmem:[#allocation10 + $0x3d0] sm:$0xff]
    %v1489 = vld [vmem:[#allocation10 + $0x3d8] sm:$0xff]
    %v1490 = vld [vmem:[#allocation10 + $0x3e0] sm:$0xff]
    %v1491 = vld [vmem:[#allocation10 + $0x3e8] sm:$0xff]
    %v1492 = vld [vmem:[#allocation10 + $0x3f0] sm:$0xff]
    %v1493 = vld [vmem:[#allocation10 + $0x3f8] sm:$0xff]
    %v1494 = vld [vmem:[#allocation10 + $0x400] sm:$0xff]
    %v1495 = vld [vmem:[#allocation10 + $0x408] sm:$0xff]
    %v1496 = vld [vmem:[#allocation10 + $0x410] sm:$0xff]
    %v1497 = vld [vmem:[#allocation10 + $0x418] sm:$0xff]
    %v1498 = vld [vmem:[#allocation10 + $0x420] sm:$0xff]
    %v1499 = vld [vmem:[#allocation10 + $0x428] sm:$0xff]
    %v1500 = vld [vmem:[#allocation10 + $0x430] sm:$0xff]
    %v1501 = vld [vmem:[#allocation10 + $0x438] sm:$0xff]
    %v1502 = vld [vmem:[#allocation10 + $0x440] sm:$0xff]
    %v1503 = vld [vmem:[#allocation10 + $0x448] sm:$0xff]
    %v1504 = vld [vmem:[#allocation10 + $0x450] sm:$0xff]
    %v1505 = vld [vmem:[#allocation10 + $0x458] sm:$0xff]
    %v1506 = vld [vmem:[#allocation10 + $0x460] sm:$0xff]
    %v1507 = vld [vmem:[#allocation10 + $0x468] sm:$0xff]
    %v1508 = vld [vmem:[#allocation10 + $0x470] sm:$0xff]
    %v1509 = vld [vmem:[#allocation10 + $0x478] sm:$0xff]
    %v1510 = vld [vmem:[#allocation10 + $0x480] sm:$0xff]
    %v1511 = vld [vmem:[#allocation10 + $0x488] sm:$0xff]
    %v1512 = vld [vmem:[#allocation10 + $0x490] sm:$0xff]
    %v1513 = vld [vmem:[#allocation10 + $0x498] sm:$0xff]
    %v1514 = vld [vmem:[#allocation10 + $0x4a0] sm:$0xff]
    %v1515 = vld [vmem:[#allocation10 + $0x4a8] sm:$0xff]
    %v1516 = vld [vmem:[#allocation10 + $0x4b0] sm:$0xff]
    %v1517 = vld [vmem:[#allocation10 + $0x4b8] sm:$0xff]
    %v1518 = vld [vmem:[#allocation10 + $0x4c0] sm:$0xff]
    %v1519 = vld [vmem:[#allocation10 + $0x4c8] sm:$0xff]
    %v1520 = vld [vmem:[#allocation10 + $0x4d0] sm:$0xff]
    %v1521 = vld [vmem:[#allocation10 + $0x4d8] sm:$0xff]
    %v1522 = vld [vmem:[#allocation10 + $0x4e0] sm:$0xff]
    %v1523 = vld [vmem:[#allocation10 + $0x4e8] sm:$0xff]
    %v1524 = vld [vmem:[#allocation10 + $0x4f0] sm:$0xff]
    %v1525 = vld [vmem:[#allocation10 + $0x4f8] sm:$0xff]
    %v1526 = vld [vmem:[#allocation10 + $0x500] sm:$0xff]
    %v1527 = vld [vmem:[#allocation10 + $0x508] sm:$0xff]
    %v1528 = vld [vmem:[#allocation10 + $0x510] sm:$0xff]
    %v1529 = vld [vmem:[#allocation10 + $0x518] sm:$0xff]
    %v1530 = vld [vmem:[#allocation10 + $0x520] sm:$0xff]
    %v1531 = vld [vmem:[#allocation10 + $0x528] sm:$0xff]
    %v1532 = vld [vmem:[#allocation10 + $0x530] sm:$0xff]
    %v1533 = vld [vmem:[#allocation10 + $0x538] sm:$0xff]
    %v1534 = vld [vmem:[#allocation10 + $0x540] sm:$0xff]
    %v1535 = vld [vmem:[#allocation10 + $0x548] sm:$0xff]
    %v1536 = vld [vmem:[#allocation10 + $0x550] sm:$0xff]
    %v1537 = vld [vmem:[#allocation10 + $0x558] sm:$0xff]
    %v1538 = vld [vmem:[#allocation10 + $0x560] sm:$0xff]
    %v1539 = vld [vmem:[#allocation10 + $0x568] sm:$0xff]
    %v1540 = vld [vmem:[#allocation10 + $0x570] sm:$0xff]
    %v1541 = vld [vmem:[#allocation10 + $0x578] sm:$0xff]
    %v1542 = vld [vmem:[#allocation10 + $0x580] sm:$0xff]
    %v1543 = vld [vmem:[#allocation10 + $0x588] sm:$0xff]
    %v1544 = vld [vmem:[#allocation10 + $0x590] sm:$0xff]
    %v1545 = vld [vmem:[#allocation10 + $0x598] sm:$0xff]
    %v1546 = vld [vmem:[#allocation10 + $0x5a0] sm:$0xff]
    %v1547 = vld [vmem:[#allocation10 + $0x5a8] sm:$0xff]
    %v1548 = vld [vmem:[#allocation10 + $0x5b0] sm:$0xff]
    %v1549 = vld [vmem:[#allocation10 + $0x5b8] sm:$0xff]
    %v1550 = vld [vmem:[#allocation10 + $0x5c0] sm:$0xff]
    %v1551 = vld [vmem:[#allocation10 + $0x5c8] sm:$0xff]
    %v1552 = vld [vmem:[#allocation10 + $0x5d0] sm:$0xff]
    %v1553 = vld [vmem:[#allocation10 + $0x5d8] sm:$0xff]
    %v1554 = vld [vmem:[#allocation10 + $0x5e0] sm:$0xff]
    %v1555 = vld [vmem:[#allocation10 + $0x5e8] sm:$0xff]
    %v1556 = vld [vmem:[#allocation10 + $0x5f0] sm:$0xff]
    %v1557 = vld [vmem:[#allocation10 + $0x5f8] sm:$0xff]
    %v1558 = vld [vmem:[#allocation10 + $0x600] sm:$0xff]
    %v1559 = vld [vmem:[#allocation10 + $0x608] sm:$0xff]
    %v1560 = vld [vmem:[#allocation10 + $0x610] sm:$0xff]
    %v1561 = vld [vmem:[#allocation10 + $0x618] sm:$0xff]
    %v1562 = vld [vmem:[#allocation10 + $0x620] sm:$0xff]
    %v1563 = vld [vmem:[#allocation10 + $0x628] sm:$0xff]
    %v1564 = vld [vmem:[#allocation10 + $0x630] sm:$0xff]
    %v1565 = vld [vmem:[#allocation10 + $0x638] sm:$0xff]
    %v1566 = vld [vmem:[#allocation10 + $0x640] sm:$0xff]
    %v1567 = vld [vmem:[#allocation10 + $0x648] sm:$0xff]
    %v1568 = vld [vmem:[#allocation10 + $0x650] sm:$0xff]
    %v1569 = vld [vmem:[#allocation10 + $0x658] sm:$0xff]
    %v1570 = vld [vmem:[#allocation10 + $0x660] sm:$0xff]
    %v1571 = vld [vmem:[#allocation10 + $0x668] sm:$0xff]
    %v1572 = vld [vmem:[#allocation10 + $0x670] sm:$0xff]
    %v1573 = vld [vmem:[#allocation10 + $0x678] sm:$0xff]
    %v1574 = vld [vmem:[#allocation10 + $0x680] sm:$0xff]
    %v1575 = vld [vmem:[#allocation10 + $0x688] sm:$0xff]
    %v1576 = vld [vmem:[#allocation10 + $0x690] sm:$0xff]
    %v1577 = vld [vmem:[#allocation10 + $0x698] sm:$0xff]
    %v1578 = vld [vmem:[#allocation10 + $0x6a0] sm:$0xff]
    %v1579 = vld [vmem:[#allocation10 + $0x6a8] sm:$0xff]
    %v1580 = vld [vmem:[#allocation10 + $0x6b0] sm:$0xff]
    %v1581 = vld [vmem:[#allocation10 + $0x6b8] sm:$0xff]
    %v1582 = vld [vmem:[#allocation10 + $0x6c0] sm:$0xff]
    %v1583 = vld [vmem:[#allocation10 + $0x6c8] sm:$0xff]
    %v1584 = vld [vmem:[#allocation10 + $0x6d0] sm:$0xff]
    %v1585 = vld [vmem:[#allocation10 + $0x6d8] sm:$0xff]
    %v1586 = vld [vmem:[#allocation10 + $0x6e0] sm:$0xff]
    %v1587 = vld [vmem:[#allocation10 + $0x6e8] sm:$0xff]
    %v1588 = vld [vmem:[#allocation10 + $0x6f0] sm:$0xff]
    %v1589 = vld [vmem:[#allocation10 + $0x6f8] sm:$0xff]
    %v1590 = vld [vmem:[#allocation10 + $0x700] sm:$0xff]
    %v1591 = vld [vmem:[#allocation10 + $0x708] sm:$0xff]
    %v1592 = vld [vmem:[#allocation10 + $0x710] sm:$0xff]
    %v1593 = vld [vmem:[#allocation10 + $0x718] sm:$0xff]
    %v1594 = vld [vmem:[#allocation10 + $0x720] sm:$0xff]
    %v1595 = vld [vmem:[#allocation10 + $0x728] sm:$0xff]
    %v1596 = vld [vmem:[#allocation10 + $0x730] sm:$0xff]
    %v1597 = vld [vmem:[#allocation10 + $0x738] sm:$0xff]
    %v1598 = vld [vmem:[#allocation10 + $0x740] sm:$0xff]
    %v1599 = vld [vmem:[#allocation10 + $0x748] sm:$0xff]
    %v1600 = vld [vmem:[#allocation10 + $0x750] sm:$0xff]
    %v1601 = vld [vmem:[#allocation10 + $0x758] sm:$0xff]
    %v1602 = vld [vmem:[#allocation10 + $0x760] sm:$0xff]
    %v1603 = vld [vmem:[#allocation10 + $0x768] sm:$0xff]
    %v1604 = vld [vmem:[#allocation10 + $0x770] sm:$0xff]
    %v1605 = vld [vmem:[#allocation10 + $0x778] sm:$0xff]
    %v1606 = vld [vmem:[#allocation10 + $0x780] sm:$0xff]
    %v1607 = vld [vmem:[#allocation10 + $0x788] sm:$0xff]
    %v1608 = vld [vmem:[#allocation10 + $0x790] sm:$0xff]
    %v1609 = vld [vmem:[#allocation10 + $0x798] sm:$0xff]
    %v1610 = vld [vmem:[#allocation10 + $0x7a0] sm:$0xff]
    %v1611 = vld [vmem:[#allocation10 + $0x7a8] sm:$0xff]
    %v1612 = vld [vmem:[#allocation10 + $0x7b0] sm:$0xff]
    %v1613 = vld [vmem:[#allocation10 + $0x7b8] sm:$0xff]
    %v1614 = vld [vmem:[#allocation10 + $0x7c0] sm:$0xff]
    %v1615 = vld [vmem:[#allocation10 + $0x7c8] sm:$0xff]
    %v1616 = vld [vmem:[#allocation10 + $0x7d0] sm:$0xff]
    %v1617 = vld [vmem:[#allocation10 + $0x7d8] sm:$0xff]
    %v1618 = vld [vmem:[#allocation10 + $0x7e0] sm:$0xff]
    %v1619 = vld [vmem:[#allocation10 + $0x7e8] sm:$0xff]
    %v1620 = vld [vmem:[#allocation10 + $0x7f0] sm:$0xff]
    %v1621 = vld [vmem:[#allocation10 + $0x7f8] sm:$0xff]
    %v1622 = vld [vmem:[#allocation12] sm:$0xff]
    %v1624 = vlaneseq
    %v1625 = vshrl.u32 %v1624, 7
    %v1626 = vsub.s32 0, %v1625
    %v1627 = vrot.slane %v1622, %v1626
    %v1628 = vlaneseq
    %v1629 = vshrl.u32 %v1628, 7
    %v1630 = vsub.s32 1, %v1629
    %v1631 = vrot.slane %v1622, %v1630
    %v1632 = vlaneseq
    %v1633 = vshrl.u32 %v1632, 7
    %v1634 = vsub.s32 2, %v1633
    %v1635 = vrot.slane %v1622, %v1634
    %v1636 = vlaneseq
    %v1637 = vshrl.u32 %v1636, 7
    %v1638 = vsub.s32 3, %v1637
    %v1639 = vrot.slane %v1622, %v1638
    %v1640 = vlaneseq
    %v1641 = vshrl.u32 %v1640, 7
    %v1642 = vsub.s32 4, %v1641
    %v1643 = vrot.slane %v1622, %v1642
    %v1644 = vlaneseq
    %v1645 = vshrl.u32 %v1644, 7
    %v1646 = vsub.s32 5, %v1645
    %v1647 = vrot.slane %v1622, %v1646
    %v1648 = vlaneseq
    %v1649 = vshrl.u32 %v1648, 7
    %v1650 = vsub.s32 6, %v1649
    %v1651 = vrot.slane %v1622, %v1650
    %v1652 = vlaneseq
    %v1653 = vshrl.u32 %v1652, 7
    %v1654 = vsub.s32 7, %v1653
    %v1655 = vrot.slane %v1622, %v1654
    %v1920 = vunpack.c.l.b16 %v1366
    %v1921 = vunpack.c.h.b16 %v1366
    %v1922 = vunpack.c.l.b16 %v1367
    %v1923 = vunpack.c.h.b16 %v1367
    %v1924 = vunpack.c.l.b16 %v1368
    %v1925 = vunpack.c.h.b16 %v1368
    %v1926 = vunpack.c.l.b16 %v1369
    %v1927 = vunpack.c.h.b16 %v1369
    %v1928 = vunpack.c.l.b16 %v1370
    %v1929 = vunpack.c.h.b16 %v1370
    %v1930 = vunpack.c.l.b16 %v1371
    %v1931 = vunpack.c.h.b16 %v1371
    %v1932 = vunpack.c.l.b16 %v1372
    %v1933 = vunpack.c.h.b16 %v1372
    %v1934 = vunpack.c.l.b16 %v1373
    %v1935 = vunpack.c.h.b16 %v1373
    %v1936 = vunpack.c.l.b16 %v1374
    %v1937 = vunpack.c.h.b16 %v1374
    %v1938 = vunpack.c.l.b16 %v1375
    %v1939 = vunpack.c.h.b16 %v1375
    %v1940 = vunpack.c.l.b16 %v1376
    %v1941 = vunpack.c.h.b16 %v1376
    %v1942 = vunpack.c.l.b16 %v1377
    %v1943 = vunpack.c.h.b16 %v1377
    %v1944 = vunpack.c.l.b16 %v1378
    %v1945 = vunpack.c.h.b16 %v1378
    %v1946 = vunpack.c.l.b16 %v1379
    %v1947 = vunpack.c.h.b16 %v1379
    %v1948 = vunpack.c.l.b16 %v1380
    %v1949 = vunpack.c.h.b16 %v1380
    %v1950 = vunpack.c.l.b16 %v1381
    %v1951 = vunpack.c.h.b16 %v1381
    %v1952 = vunpack.c.l.b16 %v1382
    %v1953 = vunpack.c.h.b16 %v1382
    %v1954 = vunpack.c.l.b16 %v1383
    %v1955 = vunpack.c.h.b16 %v1383
    %v1956 = vunpack.c.l.b16 %v1384
    %v1957 = vunpack.c.h.b16 %v1384
    %v1958 = vunpack.c.l.b16 %v1385
    %v1959 = vunpack.c.h.b16 %v1385
    %v1960 = vunpack.c.l.b16 %v1386
    %v1961 = vunpack.c.h.b16 %v1386
    %v1962 = vunpack.c.l.b16 %v1387
    %v1963 = vunpack.c.h.b16 %v1387
    %v1964 = vunpack.c.l.b16 %v1388
    %v1965 = vunpack.c.h.b16 %v1388
    %v1966 = vunpack.c.l.b16 %v1389
    %v1967 = vunpack.c.h.b16 %v1389
    %v1968 = vunpack.c.l.b16 %v1390
    %v1969 = vunpack.c.h.b16 %v1390
    %v1970 = vunpack.c.l.b16 %v1391
    %v1971 = vunpack.c.h.b16 %v1391
    %v1972 = vunpack.c.l.b16 %v1392
    %v1973 = vunpack.c.h.b16 %v1392
    %v1974 = vunpack.c.l.b16 %v1393
    %v1975 = vunpack.c.h.b16 %v1393
    %v1976 = vunpack.c.l.b16 %v1394
    %v1977 = vunpack.c.h.b16 %v1394
    %v1978 = vunpack.c.l.b16 %v1395
    %v1979 = vunpack.c.h.b16 %v1395
    %v1980 = vunpack.c.l.b16 %v1396
    %v1981 = vunpack.c.h.b16 %v1396
    %v1982 = vunpack.c.l.b16 %v1397
    %v1983 = vunpack.c.h.b16 %v1397
    %v1984 = vunpack.c.l.b16 %v1398
    %v1985 = vunpack.c.h.b16 %v1398
    %v1986 = vunpack.c.l.b16 %v1399
    %v1987 = vunpack.c.h.b16 %v1399
    %v1988 = vunpack.c.l.b16 %v1400
    %v1989 = vunpack.c.h.b16 %v1400
    %v1990 = vunpack.c.l.b16 %v1401
    %v1991 = vunpack.c.h.b16 %v1401
    %v1992 = vunpack.c.l.b16 %v1402
    %v1993 = vunpack.c.h.b16 %v1402
    %v1994 = vunpack.c.l.b16 %v1403
    %v1995 = vunpack.c.h.b16 %v1403
    %v1996 = vunpack.c.l.b16 %v1404
    %v1997 = vunpack.c.h.b16 %v1404
    %v1998 = vunpack.c.l.b16 %v1405
    %v1999 = vunpack.c.h.b16 %v1405
    %v2000 = vunpack.c.l.b16 %v1406
    %v2001 = vunpack.c.h.b16 %v1406
    %v2002 = vunpack.c.l.b16 %v1407
    %v2003 = vunpack.c.h.b16 %v1407
    %v2004 = vunpack.c.l.b16 %v1408
    %v2005 = vunpack.c.h.b16 %v1408
    %v2006 = vunpack.c.l.b16 %v1409
    %v2007 = vunpack.c.h.b16 %v1409
    %v2008 = vunpack.c.l.b16 %v1410
    %v2009 = vunpack.c.h.b16 %v1410
    %v2010 = vunpack.c.l.b16 %v1411
    %v2011 = vunpack.c.h.b16 %v1411
    %v2012 = vunpack.c.l.b16 %v1412
    %v2013 = vunpack.c.h.b16 %v1412
    %v2014 = vunpack.c.l.b16 %v1413
    %v2015 = vunpack.c.h.b16 %v1413
    %v2016 = vunpack.c.l.b16 %v1414
    %v2017 = vunpack.c.h.b16 %v1414
    %v2018 = vunpack.c.l.b16 %v1415
    %v2019 = vunpack.c.h.b16 %v1415
    %v2020 = vunpack.c.l.b16 %v1416
    %v2021 = vunpack.c.h.b16 %v1416
    %v2022 = vunpack.c.l.b16 %v1417
    %v2023 = vunpack.c.h.b16 %v1417
    %v2024 = vunpack.c.l.b16 %v1418
    %v2025 = vunpack.c.h.b16 %v1418
    %v2026 = vunpack.c.l.b16 %v1419
    %v2027 = vunpack.c.h.b16 %v1419
    %v2028 = vunpack.c.l.b16 %v1420
    %v2029 = vunpack.c.h.b16 %v1420
    %v2030 = vunpack.c.l.b16 %v1421
    %v2031 = vunpack.c.h.b16 %v1421
    %v2032 = vunpack.c.l.b16 %v1422
    %v2033 = vunpack.c.h.b16 %v1422
    %v2034 = vunpack.c.l.b16 %v1423
    %v2035 = vunpack.c.h.b16 %v1423
    %v2036 = vunpack.c.l.b16 %v1424
    %v2037 = vunpack.c.h.b16 %v1424
    %v2038 = vunpack.c.l.b16 %v1425
    %v2039 = vunpack.c.h.b16 %v1425
    %v2040 = vunpack.c.l.b16 %v1426
    %v2041 = vunpack.c.h.b16 %v1426
    %v2042 = vunpack.c.l.b16 %v1427
    %v2043 = vunpack.c.h.b16 %v1427
    %v2044 = vunpack.c.l.b16 %v1428
    %v2045 = vunpack.c.h.b16 %v1428
    %v2046 = vunpack.c.l.b16 %v1429
    %v2047 = vunpack.c.h.b16 %v1429
    %v2048 = vunpack.c.l.b16 %v1430
    %v2049 = vunpack.c.h.b16 %v1430
    %v2050 = vunpack.c.l.b16 %v1431
    %v2051 = vunpack.c.h.b16 %v1431
    %v2052 = vunpack.c.l.b16 %v1432
    %v2053 = vunpack.c.h.b16 %v1432
    %v2054 = vunpack.c.l.b16 %v1433
    %v2055 = vunpack.c.h.b16 %v1433
    %v2056 = vunpack.c.l.b16 %v1434
    %v2057 = vunpack.c.h.b16 %v1434
    %v2058 = vunpack.c.l.b16 %v1435
    %v2059 = vunpack.c.h.b16 %v1435
    %v2060 = vunpack.c.l.b16 %v1436
    %v2061 = vunpack.c.h.b16 %v1436
    %v2062 = vunpack.c.l.b16 %v1437
    %v2063 = vunpack.c.h.b16 %v1437
    %v2064 = vunpack.c.l.b16 %v1438
    %v2065 = vunpack.c.h.b16 %v1438
    %v2066 = vunpack.c.l.b16 %v1439
    %v2067 = vunpack.c.h.b16 %v1439
    %v2068 = vunpack.c.l.b16 %v1440
    %v2069 = vunpack.c.h.b16 %v1440
    %v2070 = vunpack.c.l.b16 %v1441
    %v2071 = vunpack.c.h.b16 %v1441
    %v2072 = vunpack.c.l.b16 %v1442
    %v2073 = vunpack.c.h.b16 %v1442
    %v2074 = vunpack.c.l.b16 %v1443
    %v2075 = vunpack.c.h.b16 %v1443
    %v2076 = vunpack.c.l.b16 %v1444
    %v2077 = vunpack.c.h.b16 %v1444
    %v2078 = vunpack.c.l.b16 %v1445
    %v2079 = vunpack.c.h.b16 %v1445
    %v2080 = vunpack.c.l.b16 %v1446
    %v2081 = vunpack.c.h.b16 %v1446
    %v2082 = vunpack.c.l.b16 %v1447
    %v2083 = vunpack.c.h.b16 %v1447
    %v2084 = vunpack.c.l.b16 %v1448
    %v2085 = vunpack.c.h.b16 %v1448
    %v2086 = vunpack.c.l.b16 %v1449
    %v2087 = vunpack.c.h.b16 %v1449
    %v2088 = vunpack.c.l.b16 %v1450
    %v2089 = vunpack.c.h.b16 %v1450
    %v2090 = vunpack.c.l.b16 %v1451
    %v2091 = vunpack.c.h.b16 %v1451
    %v2092 = vunpack.c.l.b16 %v1452
    %v2093 = vunpack.c.h.b16 %v1452
    %v2094 = vunpack.c.l.b16 %v1453
    %v2095 = vunpack.c.h.b16 %v1453
    %v2096 = vunpack.c.l.b16 %v1454
    %v2097 = vunpack.c.h.b16 %v1454
    %v2098 = vunpack.c.l.b16 %v1455
    %v2099 = vunpack.c.h.b16 %v1455
    %v2100 = vunpack.c.l.b16 %v1456
    %v2101 = vunpack.c.h.b16 %v1456
    %v2102 = vunpack.c.l.b16 %v1457
    %v2103 = vunpack.c.h.b16 %v1457
    %v2104 = vunpack.c.l.b16 %v1458
    %v2105 = vunpack.c.h.b16 %v1458
    %v2106 = vunpack.c.l.b16 %v1459
    %v2107 = vunpack.c.h.b16 %v1459
    %v2108 = vunpack.c.l.b16 %v1460
    %v2109 = vunpack.c.h.b16 %v1460
    %v2110 = vunpack.c.l.b16 %v1461
    %v2111 = vunpack.c.h.b16 %v1461
    %v2112 = vunpack.c.l.b16 %v1462
    %v2113 = vunpack.c.h.b16 %v1462
    %v2114 = vunpack.c.l.b16 %v1463
    %v2115 = vunpack.c.h.b16 %v1463
    %v2116 = vunpack.c.l.b16 %v1464
    %v2117 = vunpack.c.h.b16 %v1464
    %v2118 = vunpack.c.l.b16 %v1465
    %v2119 = vunpack.c.h.b16 %v1465
    %v2120 = vunpack.c.l.b16 %v1466
    %v2121 = vunpack.c.h.b16 %v1466
    %v2122 = vunpack.c.l.b16 %v1467
    %v2123 = vunpack.c.h.b16 %v1467
    %v2124 = vunpack.c.l.b16 %v1468
    %v2125 = vunpack.c.h.b16 %v1468
    %v2126 = vunpack.c.l.b16 %v1469
    %v2127 = vunpack.c.h.b16 %v1469
    %v2128 = vunpack.c.l.b16 %v1470
    %v2129 = vunpack.c.h.b16 %v1470
    %v2130 = vunpack.c.l.b16 %v1471
    %v2131 = vunpack.c.h.b16 %v1471
    %v2132 = vunpack.c.l.b16 %v1472
    %v2133 = vunpack.c.h.b16 %v1472
    %v2134 = vunpack.c.l.b16 %v1473
    %v2135 = vunpack.c.h.b16 %v1473
    %v2136 = vunpack.c.l.b16 %v1474
    %v2137 = vunpack.c.h.b16 %v1474
    %v2138 = vunpack.c.l.b16 %v1475
    %v2139 = vunpack.c.h.b16 %v1475
    %v2140 = vunpack.c.l.b16 %v1476
    %v2141 = vunpack.c.h.b16 %v1476
    %v2142 = vunpack.c.l.b16 %v1477
    %v2143 = vunpack.c.h.b16 %v1477
    %v2144 = vunpack.c.l.b16 %v1478
    %v2145 = vunpack.c.h.b16 %v1478
    %v2146 = vunpack.c.l.b16 %v1479
    %v2147 = vunpack.c.h.b16 %v1479
    %v2148 = vunpack.c.l.b16 %v1480
    %v2149 = vunpack.c.h.b16 %v1480
    %v2150 = vunpack.c.l.b16 %v1481
    %v2151 = vunpack.c.h.b16 %v1481
    %v2152 = vunpack.c.l.b16 %v1482
    %v2153 = vunpack.c.h.b16 %v1482
    %v2154 = vunpack.c.l.b16 %v1483
    %v2155 = vunpack.c.h.b16 %v1483
    %v2156 = vunpack.c.l.b16 %v1484
    %v2157 = vunpack.c.h.b16 %v1484
    %v2158 = vunpack.c.l.b16 %v1485
    %v2159 = vunpack.c.h.b16 %v1485
    %v2160 = vunpack.c.l.b16 %v1486
    %v2161 = vunpack.c.h.b16 %v1486
    %v2162 = vunpack.c.l.b16 %v1487
    %v2163 = vunpack.c.h.b16 %v1487
    %v2164 = vunpack.c.l.b16 %v1488
    %v2165 = vunpack.c.h.b16 %v1488
    %v2166 = vunpack.c.l.b16 %v1489
    %v2167 = vunpack.c.h.b16 %v1489
    %v2168 = vunpack.c.l.b16 %v1490
    %v2169 = vunpack.c.h.b16 %v1490
    %v2170 = vunpack.c.l.b16 %v1491
    %v2171 = vunpack.c.h.b16 %v1491
    %v2172 = vunpack.c.l.b16 %v1492
    %v2173 = vunpack.c.h.b16 %v1492
    %v2174 = vunpack.c.l.b16 %v1493
    %v2175 = vunpack.c.h.b16 %v1493
    %v2176 = vunpack.c.l.b16 %v1494
    %v2177 = vunpack.c.h.b16 %v1494
    %v2178 = vunpack.c.l.b16 %v1495
    %v2179 = vunpack.c.h.b16 %v1495
    %v2180 = vunpack.c.l.b16 %v1496
    %v2181 = vunpack.c.h.b16 %v1496
    %v2182 = vunpack.c.l.b16 %v1497
    %v2183 = vunpack.c.h.b16 %v1497
    %v2184 = vunpack.c.l.b16 %v1498
    %v2185 = vunpack.c.h.b16 %v1498
    %v2186 = vunpack.c.l.b16 %v1499
    %v2187 = vunpack.c.h.b16 %v1499
    %v2188 = vunpack.c.l.b16 %v1500
    %v2189 = vunpack.c.h.b16 %v1500
    %v2190 = vunpack.c.l.b16 %v1501
    %v2191 = vunpack.c.h.b16 %v1501
    %v2192 = vunpack.c.l.b16 %v1502
    %v2193 = vunpack.c.h.b16 %v1502
    %v2194 = vunpack.c.l.b16 %v1503
    %v2195 = vunpack.c.h.b16 %v1503
    %v2196 = vunpack.c.l.b16 %v1504
    %v2197 = vunpack.c.h.b16 %v1504
    %v2198 = vunpack.c.l.b16 %v1505
    %v2199 = vunpack.c.h.b16 %v1505
    %v2200 = vunpack.c.l.b16 %v1506
    %v2201 = vunpack.c.h.b16 %v1506
    %v2202 = vunpack.c.l.b16 %v1507
    %v2203 = vunpack.c.h.b16 %v1507
    %v2204 = vunpack.c.l.b16 %v1508
    %v2205 = vunpack.c.h.b16 %v1508
    %v2206 = vunpack.c.l.b16 %v1509
    %v2207 = vunpack.c.h.b16 %v1509
    %v2208 = vunpack.c.l.b16 %v1510
    %v2209 = vunpack.c.h.b16 %v1510
    %v2210 = vunpack.c.l.b16 %v1511
    %v2211 = vunpack.c.h.b16 %v1511
    %v2212 = vunpack.c.l.b16 %v1512
    %v2213 = vunpack.c.h.b16 %v1512
    %v2214 = vunpack.c.l.b16 %v1513
    %v2215 = vunpack.c.h.b16 %v1513
    %v2216 = vunpack.c.l.b16 %v1514
    %v2217 = vunpack.c.h.b16 %v1514
    %v2218 = vunpack.c.l.b16 %v1515
    %v2219 = vunpack.c.h.b16 %v1515
    %v2220 = vunpack.c.l.b16 %v1516
    %v2221 = vunpack.c.h.b16 %v1516
    %v2222 = vunpack.c.l.b16 %v1517
    %v2223 = vunpack.c.h.b16 %v1517
    %v2224 = vunpack.c.l.b16 %v1518
    %v2225 = vunpack.c.h.b16 %v1518
    %v2226 = vunpack.c.l.b16 %v1519
    %v2227 = vunpack.c.h.b16 %v1519
    %v2228 = vunpack.c.l.b16 %v1520
    %v2229 = vunpack.c.h.b16 %v1520
    %v2230 = vunpack.c.l.b16 %v1521
    %v2231 = vunpack.c.h.b16 %v1521
    %v2232 = vunpack.c.l.b16 %v1522
    %v2233 = vunpack.c.h.b16 %v1522
    %v2234 = vunpack.c.l.b16 %v1523
    %v2235 = vunpack.c.h.b16 %v1523
    %v2236 = vunpack.c.l.b16 %v1524
    %v2237 = vunpack.c.h.b16 %v1524
    %v2238 = vunpack.c.l.b16 %v1525
    %v2239 = vunpack.c.h.b16 %v1525
    %v2240 = vunpack.c.l.b16 %v1526
    %v2241 = vunpack.c.h.b16 %v1526
    %v2242 = vunpack.c.l.b16 %v1527
    %v2243 = vunpack.c.h.b16 %v1527
    %v2244 = vunpack.c.l.b16 %v1528
    %v2245 = vunpack.c.h.b16 %v1528
    %v2246 = vunpack.c.l.b16 %v1529
    %v2247 = vunpack.c.h.b16 %v1529
    %v2248 = vunpack.c.l.b16 %v1530
    %v2249 = vunpack.c.h.b16 %v1530
    %v2250 = vunpack.c.l.b16 %v1531
    %v2251 = vunpack.c.h.b16 %v1531
    %v2252 = vunpack.c.l.b16 %v1532
    %v2253 = vunpack.c.h.b16 %v1532
    %v2254 = vunpack.c.l.b16 %v1533
    %v2255 = vunpack.c.h.b16 %v1533
    %v2256 = vunpack.c.l.b16 %v1534
    %v2257 = vunpack.c.h.b16 %v1534
    %v2258 = vunpack.c.l.b16 %v1535
    %v2259 = vunpack.c.h.b16 %v1535
    %v2260 = vunpack.c.l.b16 %v1536
    %v2261 = vunpack.c.h.b16 %v1536
    %v2262 = vunpack.c.l.b16 %v1537
    %v2263 = vunpack.c.h.b16 %v1537
    %v2264 = vunpack.c.l.b16 %v1538
    %v2265 = vunpack.c.h.b16 %v1538
    %v2266 = vunpack.c.l.b16 %v1539
    %v2267 = vunpack.c.h.b16 %v1539
    %v2268 = vunpack.c.l.b16 %v1540
    %v2269 = vunpack.c.h.b16 %v1540
    %v2270 = vunpack.c.l.b16 %v1541
    %v2271 = vunpack.c.h.b16 %v1541
    %v2272 = vunpack.c.l.b16 %v1542
    %v2273 = vunpack.c.h.b16 %v1542
    %v2274 = vunpack.c.l.b16 %v1543
    %v2275 = vunpack.c.h.b16 %v1543
    %v2276 = vunpack.c.l.b16 %v1544
    %v2277 = vunpack.c.h.b16 %v1544
    %v2278 = vunpack.c.l.b16 %v1545
    %v2279 = vunpack.c.h.b16 %v1545
    %v2280 = vunpack.c.l.b16 %v1546
    %v2281 = vunpack.c.h.b16 %v1546
    %v2282 = vunpack.c.l.b16 %v1547
    %v2283 = vunpack.c.h.b16 %v1547
    %v2284 = vunpack.c.l.b16 %v1548
    %v2285 = vunpack.c.h.b16 %v1548
    %v2286 = vunpack.c.l.b16 %v1549
    %v2287 = vunpack.c.h.b16 %v1549
    %v2288 = vunpack.c.l.b16 %v1550
    %v2289 = vunpack.c.h.b16 %v1550
    %v2290 = vunpack.c.l.b16 %v1551
    %v2291 = vunpack.c.h.b16 %v1551
    %v2292 = vunpack.c.l.b16 %v1552
    %v2293 = vunpack.c.h.b16 %v1552
    %v2294 = vunpack.c.l.b16 %v1553
    %v2295 = vunpack.c.h.b16 %v1553
    %v2296 = vunpack.c.l.b16 %v1554
    %v2297 = vunpack.c.h.b16 %v1554
    %v2298 = vunpack.c.l.b16 %v1555
    %v2299 = vunpack.c.h.b16 %v1555
    %v2300 = vunpack.c.l.b16 %v1556
    %v2301 = vunpack.c.h.b16 %v1556
    %v2302 = vunpack.c.l.b16 %v1557
    %v2303 = vunpack.c.h.b16 %v1557
    %v2304 = vunpack.c.l.b16 %v1558
    %v2305 = vunpack.c.h.b16 %v1558
    %v2306 = vunpack.c.l.b16 %v1559
    %v2307 = vunpack.c.h.b16 %v1559
    %v2308 = vunpack.c.l.b16 %v1560
    %v2309 = vunpack.c.h.b16 %v1560
    %v2310 = vunpack.c.l.b16 %v1561
    %v2311 = vunpack.c.h.b16 %v1561
    %v2312 = vunpack.c.l.b16 %v1562
    %v2313 = vunpack.c.h.b16 %v1562
    %v2314 = vunpack.c.l.b16 %v1563
    %v2315 = vunpack.c.h.b16 %v1563
    %v2316 = vunpack.c.l.b16 %v1564
    %v2317 = vunpack.c.h.b16 %v1564
    %v2318 = vunpack.c.l.b16 %v1565
    %v2319 = vunpack.c.h.b16 %v1565
    %v2320 = vunpack.c.l.b16 %v1566
    %v2321 = vunpack.c.h.b16 %v1566
    %v2322 = vunpack.c.l.b16 %v1567
    %v2323 = vunpack.c.h.b16 %v1567
    %v2324 = vunpack.c.l.b16 %v1568
    %v2325 = vunpack.c.h.b16 %v1568
    %v2326 = vunpack.c.l.b16 %v1569
    %v2327 = vunpack.c.h.b16 %v1569
    %v2328 = vunpack.c.l.b16 %v1570
    %v2329 = vunpack.c.h.b16 %v1570
    %v2330 = vunpack.c.l.b16 %v1571
    %v2331 = vunpack.c.h.b16 %v1571
    %v2332 = vunpack.c.l.b16 %v1572
    %v2333 = vunpack.c.h.b16 %v1572
    %v2334 = vunpack.c.l.b16 %v1573
    %v2335 = vunpack.c.h.b16 %v1573
    %v2336 = vunpack.c.l.b16 %v1574
    %v2337 = vunpack.c.h.b16 %v1574
    %v2338 = vunpack.c.l.b16 %v1575
    %v2339 = vunpack.c.h.b16 %v1575
    %v2340 = vunpack.c.l.b16 %v1576
    %v2341 = vunpack.c.h.b16 %v1576
    %v2342 = vunpack.c.l.b16 %v1577
    %v2343 = vunpack.c.h.b16 %v1577
    %v2344 = vunpack.c.l.b16 %v1578
    %v2345 = vunpack.c.h.b16 %v1578
    %v2346 = vunpack.c.l.b16 %v1579
    %v2347 = vunpack.c.h.b16 %v1579
    %v2348 = vunpack.c.l.b16 %v1580
    %v2349 = vunpack.c.h.b16 %v1580
    %v2350 = vunpack.c.l.b16 %v1581
    %v2351 = vunpack.c.h.b16 %v1581
    %v2352 = vunpack.c.l.b16 %v1582
    %v2353 = vunpack.c.h.b16 %v1582
    %v2354 = vunpack.c.l.b16 %v1583
    %v2355 = vunpack.c.h.b16 %v1583
    %v2356 = vunpack.c.l.b16 %v1584
    %v2357 = vunpack.c.h.b16 %v1584
    %v2358 = vunpack.c.l.b16 %v1585
    %v2359 = vunpack.c.h.b16 %v1585
    %v2360 = vunpack.c.l.b16 %v1586
    %v2361 = vunpack.c.h.b16 %v1586
    %v2362 = vunpack.c.l.b16 %v1587
    %v2363 = vunpack.c.h.b16 %v1587
    %v2364 = vunpack.c.l.b16 %v1588
    %v2365 = vunpack.c.h.b16 %v1588
    %v2366 = vunpack.c.l.b16 %v1589
    %v2367 = vunpack.c.h.b16 %v1589
    %v2368 = vunpack.c.l.b16 %v1590
    %v2369 = vunpack.c.h.b16 %v1590
    %v2370 = vunpack.c.l.b16 %v1591
    %v2371 = vunpack.c.h.b16 %v1591
    %v2372 = vunpack.c.l.b16 %v1592
    %v2373 = vunpack.c.h.b16 %v1592
    %v2374 = vunpack.c.l.b16 %v1593
    %v2375 = vunpack.c.h.b16 %v1593
    %v2376 = vunpack.c.l.b16 %v1594
    %v2377 = vunpack.c.h.b16 %v1594
    %v2378 = vunpack.c.l.b16 %v1595
    %v2379 = vunpack.c.h.b16 %v1595
    %v2380 = vunpack.c.l.b16 %v1596
    %v2381 = vunpack.c.h.b16 %v1596
    %v2382 = vunpack.c.l.b16 %v1597
    %v2383 = vunpack.c.h.b16 %v1597
    %v2384 = vunpack.c.l.b16 %v1598
    %v2385 = vunpack.c.h.b16 %v1598
    %v2386 = vunpack.c.l.b16 %v1599
    %v2387 = vunpack.c.h.b16 %v1599
    %v2388 = vunpack.c.l.b16 %v1600
    %v2389 = vunpack.c.h.b16 %v1600
    %v2390 = vunpack.c.l.b16 %v1601
    %v2391 = vunpack.c.h.b16 %v1601
    %v2392 = vunpack.c.l.b16 %v1602
    %v2393 = vunpack.c.h.b16 %v1602
    %v2394 = vunpack.c.l.b16 %v1603
    %v2395 = vunpack.c.h.b16 %v1603
    %v2396 = vunpack.c.l.b16 %v1604
    %v2397 = vunpack.c.h.b16 %v1604
    %v2398 = vunpack.c.l.b16 %v1605
    %v2399 = vunpack.c.h.b16 %v1605
    %v2400 = vunpack.c.l.b16 %v1606
    %v2401 = vunpack.c.h.b16 %v1606
    %v2402 = vunpack.c.l.b16 %v1607
    %v2403 = vunpack.c.h.b16 %v1607
    %v2404 = vunpack.c.l.b16 %v1608
    %v2405 = vunpack.c.h.b16 %v1608
    %v2406 = vunpack.c.l.b16 %v1609
    %v2407 = vunpack.c.h.b16 %v1609
    %v2408 = vunpack.c.l.b16 %v1610
    %v2409 = vunpack.c.h.b16 %v1610
    %v2410 = vunpack.c.l.b16 %v1611
    %v2411 = vunpack.c.h.b16 %v1611
    %v2412 = vunpack.c.l.b16 %v1612
    %v2413 = vunpack.c.h.b16 %v1612
    %v2414 = vunpack.c.l.b16 %v1613
    %v2415 = vunpack.c.h.b16 %v1613
    %v2416 = vunpack.c.l.b16 %v1614
    %v2417 = vunpack.c.h.b16 %v1614
    %v2418 = vunpack.c.l.b16 %v1615
    %v2419 = vunpack.c.h.b16 %v1615
    %v2420 = vunpack.c.l.b16 %v1616
    %v2421 = vunpack.c.h.b16 %v1616
    %v2422 = vunpack.c.l.b16 %v1617
    %v2423 = vunpack.c.h.b16 %v1617
    %v2424 = vunpack.c.l.b16 %v1618
    %v2425 = vunpack.c.h.b16 %v1618
    %v2426 = vunpack.c.l.b16 %v1619
    %v2427 = vunpack.c.h.b16 %v1619
    %v2428 = vunpack.c.l.b16 %v1620
    %v2429 = vunpack.c.h.b16 %v1620
    %v2430 = vunpack.c.l.b16 %v1621
    %v2431 = vunpack.c.h.b16 %v1621
    %v2432 = vpack.c.b16 %v1928, %v1920
    %v2433 = vpack.c.b16 %v1929, %v1921
    %v2434 = vpack.c.b16 %v1930, %v1922
    %v2435 = vpack.c.b16 %v1931, %v1923
    %v2436 = vpack.c.b16 %v1932, %v1924
    %v2437 = vpack.c.b16 %v1933, %v1925
    %v2438 = vpack.c.b16 %v1934, %v1926
    %v2439 = vpack.c.b16 %v1935, %v1927
    %v2440 = vpack.c.b16 %v1944, %v1936
    %v2441 = vpack.c.b16 %v1945, %v1937
    %v2442 = vpack.c.b16 %v1946, %v1938
    %v2443 = vpack.c.b16 %v1947, %v1939
    %v2444 = vpack.c.b16 %v1948, %v1940
    %v2445 = vpack.c.b16 %v1949, %v1941
    %v2446 = vpack.c.b16 %v1950, %v1942
    %v2447 = vpack.c.b16 %v1951, %v1943
    %v2448 = vpack.c.b16 %v1960, %v1952
    %v2449 = vpack.c.b16 %v1961, %v1953
    %v2450 = vpack.c.b16 %v1962, %v1954
    %v2451 = vpack.c.b16 %v1963, %v1955
    %v2452 = vpack.c.b16 %v1964, %v1956
    %v2453 = vpack.c.b16 %v1965, %v1957
    %v2454 = vpack.c.b16 %v1966, %v1958
    %v2455 = vpack.c.b16 %v1967, %v1959
    %v2456 = vpack.c.b16 %v1976, %v1968
    %v2457 = vpack.c.b16 %v1977, %v1969
    %v2458 = vpack.c.b16 %v1978, %v1970
    %v2459 = vpack.c.b16 %v1979, %v1971
    %v2460 = vpack.c.b16 %v1980, %v1972
    %v2461 = vpack.c.b16 %v1981, %v1973
    %v2462 = vpack.c.b16 %v1982, %v1974
    %v2463 = vpack.c.b16 %v1983, %v1975
    %v2464 = vpack.c.b16 %v1992, %v1984
    %v2465 = vpack.c.b16 %v1993, %v1985
    %v2466 = vpack.c.b16 %v1994, %v1986
    %v2467 = vpack.c.b16 %v1995, %v1987
    %v2468 = vpack.c.b16 %v1996, %v1988
    %v2469 = vpack.c.b16 %v1997, %v1989
    %v2470 = vpack.c.b16 %v1998, %v1990
    %v2471 = vpack.c.b16 %v1999, %v1991
    %v2472 = vpack.c.b16 %v2008, %v2000
    %v2473 = vpack.c.b16 %v2009, %v2001
    %v2474 = vpack.c.b16 %v2010, %v2002
    %v2475 = vpack.c.b16 %v2011, %v2003
    %v2476 = vpack.c.b16 %v2012, %v2004
    %v2477 = vpack.c.b16 %v2013, %v2005
    %v2478 = vpack.c.b16 %v2014, %v2006
    %v2479 = vpack.c.b16 %v2015, %v2007
    %v2480 = vpack.c.b16 %v2024, %v2016
    %v2481 = vpack.c.b16 %v2025, %v2017
    %v2482 = vpack.c.b16 %v2026, %v2018
    %v2483 = vpack.c.b16 %v2027, %v2019
    %v2484 = vpack.c.b16 %v2028, %v2020
    %v2485 = vpack.c.b16 %v2029, %v2021
    %v2486 = vpack.c.b16 %v2030, %v2022
    %v2487 = vpack.c.b16 %v2031, %v2023
    %v2488 = vpack.c.b16 %v2040, %v2032
    %v2489 = vpack.c.b16 %v2041, %v2033
    %v2490 = vpack.c.b16 %v2042, %v2034
    %v2491 = vpack.c.b16 %v2043, %v2035
    %v2492 = vpack.c.b16 %v2044, %v2036
    %v2493 = vpack.c.b16 %v2045, %v2037
    %v2494 = vpack.c.b16 %v2046, %v2038
    %v2495 = vpack.c.b16 %v2047, %v2039
    %v2496 = vpack.c.b16 %v2056, %v2048
    %v2497 = vpack.c.b16 %v2057, %v2049
    %v2498 = vpack.c.b16 %v2058, %v2050
    %v2499 = vpack.c.b16 %v2059, %v2051
    %v2500 = vpack.c.b16 %v2060, %v2052
    %v2501 = vpack.c.b16 %v2061, %v2053
    %v2502 = vpack.c.b16 %v2062, %v2054
    %v2503 = vpack.c.b16 %v2063, %v2055
    %v2504 = vpack.c.b16 %v2072, %v2064
    %v2505 = vpack.c.b16 %v2073, %v2065
    %v2506 = vpack.c.b16 %v2074, %v2066
    %v2507 = vpack.c.b16 %v2075, %v2067
    %v2508 = vpack.c.b16 %v2076, %v2068
    %v2509 = vpack.c.b16 %v2077, %v2069
    %v2510 = vpack.c.b16 %v2078, %v2070
    %v2511 = vpack.c.b16 %v2079, %v2071
    %v2512 = vpack.c.b16 %v2088, %v2080
    %v2513 = vpack.c.b16 %v2089, %v2081
    %v2514 = vpack.c.b16 %v2090, %v2082
    %v2515 = vpack.c.b16 %v2091, %v2083
    %v2516 = vpack.c.b16 %v2092, %v2084
    %v2517 = vpack.c.b16 %v2093, %v2085
    %v2518 = vpack.c.b16 %v2094, %v2086
    %v2519 = vpack.c.b16 %v2095, %v2087
    %v2520 = vpack.c.b16 %v2104, %v2096
    %v2521 = vpack.c.b16 %v2105, %v2097
    %v2522 = vpack.c.b16 %v2106, %v2098
    %v2523 = vpack.c.b16 %v2107, %v2099
    %v2524 = vpack.c.b16 %v2108, %v2100
    %v2525 = vpack.c.b16 %v2109, %v2101
    %v2526 = vpack.c.b16 %v2110, %v2102
    %v2527 = vpack.c.b16 %v2111, %v2103
    %v2528 = vpack.c.b16 %v2120, %v2112
    %v2529 = vpack.c.b16 %v2121, %v2113
    %v2530 = vpack.c.b16 %v2122, %v2114
    %v2531 = vpack.c.b16 %v2123, %v2115
    %v2532 = vpack.c.b16 %v2124, %v2116
    %v2533 = vpack.c.b16 %v2125, %v2117
    %v2534 = vpack.c.b16 %v2126, %v2118
    %v2535 = vpack.c.b16 %v2127, %v2119
    %v2536 = vpack.c.b16 %v2136, %v2128
    %v2537 = vpack.c.b16 %v2137, %v2129
    %v2538 = vpack.c.b16 %v2138, %v2130
    %v2539 = vpack.c.b16 %v2139, %v2131
    %v2540 = vpack.c.b16 %v2140, %v2132
    %v2541 = vpack.c.b16 %v2141, %v2133
    %v2542 = vpack.c.b16 %v2142, %v2134
    %v2543 = vpack.c.b16 %v2143, %v2135
    %v2544 = vpack.c.b16 %v2152, %v2144
    %v2545 = vpack.c.b16 %v2153, %v2145
    %v2546 = vpack.c.b16 %v2154, %v2146
    %v2547 = vpack.c.b16 %v2155, %v2147
    %v2548 = vpack.c.b16 %v2156, %v2148
    %v2549 = vpack.c.b16 %v2157, %v2149
    %v2550 = vpack.c.b16 %v2158, %v2150
    %v2551 = vpack.c.b16 %v2159, %v2151
    %v2552 = vpack.c.b16 %v2168, %v2160
    %v2553 = vpack.c.b16 %v2169, %v2161
    %v2554 = vpack.c.b16 %v2170, %v2162
    %v2555 = vpack.c.b16 %v2171, %v2163
    %v2556 = vpack.c.b16 %v2172, %v2164
    %v2557 = vpack.c.b16 %v2173, %v2165
    %v2558 = vpack.c.b16 %v2174, %v2166
    %v2559 = vpack.c.b16 %v2175, %v2167
    %v2560 = vpack.c.b16 %v2184, %v2176
    %v2561 = vpack.c.b16 %v2185, %v2177
    %v2562 = vpack.c.b16 %v2186, %v2178
    %v2563 = vpack.c.b16 %v2187, %v2179
    %v2564 = vpack.c.b16 %v2188, %v2180
    %v2565 = vpack.c.b16 %v2189, %v2181
    %v2566 = vpack.c.b16 %v2190, %v2182
    %v2567 = vpack.c.b16 %v2191, %v2183
    %v2568 = vpack.c.b16 %v2200, %v2192
    %v2569 = vpack.c.b16 %v2201, %v2193
    %v2570 = vpack.c.b16 %v2202, %v2194
    %v2571 = vpack.c.b16 %v2203, %v2195
    %v2572 = vpack.c.b16 %v2204, %v2196
    %v2573 = vpack.c.b16 %v2205, %v2197
    %v2574 = vpack.c.b16 %v2206, %v2198
    %v2575 = vpack.c.b16 %v2207, %v2199
    %v2576 = vpack.c.b16 %v2216, %v2208
    %v2577 = vpack.c.b16 %v2217, %v2209
    %v2578 = vpack.c.b16 %v2218, %v2210
    %v2579 = vpack.c.b16 %v2219, %v2211
    %v2580 = vpack.c.b16 %v2220, %v2212
    %v2581 = vpack.c.b16 %v2221, %v2213
    %v2582 = vpack.c.b16 %v2222, %v2214
    %v2583 = vpack.c.b16 %v2223, %v2215
    %v2584 = vpack.c.b16 %v2232, %v2224
    %v2585 = vpack.c.b16 %v2233, %v2225
    %v2586 = vpack.c.b16 %v2234, %v2226
    %v2587 = vpack.c.b16 %v2235, %v2227
    %v2588 = vpack.c.b16 %v2236, %v2228
    %v2589 = vpack.c.b16 %v2237, %v2229
    %v2590 = vpack.c.b16 %v2238, %v2230
    %v2591 = vpack.c.b16 %v2239, %v2231
    %v2592 = vpack.c.b16 %v2248, %v2240
    %v2593 = vpack.c.b16 %v2249, %v2241
    %v2594 = vpack.c.b16 %v2250, %v2242
    %v2595 = vpack.c.b16 %v2251, %v2243
    %v2596 = vpack.c.b16 %v2252, %v2244
    %v2597 = vpack.c.b16 %v2253, %v2245
    %v2598 = vpack.c.b16 %v2254, %v2246
    %v2599 = vpack.c.b16 %v2255, %v2247
    %v2600 = vpack.c.b16 %v2264, %v2256
    %v2601 = vpack.c.b16 %v2265, %v2257
    %v2602 = vpack.c.b16 %v2266, %v2258
    %v2603 = vpack.c.b16 %v2267, %v2259
    %v2604 = vpack.c.b16 %v2268, %v2260
    %v2605 = vpack.c.b16 %v2269, %v2261
    %v2606 = vpack.c.b16 %v2270, %v2262
    %v2607 = vpack.c.b16 %v2271, %v2263
    %v2608 = vpack.c.b16 %v2280, %v2272
    %v2609 = vpack.c.b16 %v2281, %v2273
    %v2610 = vpack.c.b16 %v2282, %v2274
    %v2611 = vpack.c.b16 %v2283, %v2275
    %v2612 = vpack.c.b16 %v2284, %v2276
    %v2613 = vpack.c.b16 %v2285, %v2277
    %v2614 = vpack.c.b16 %v2286, %v2278
    %v2615 = vpack.c.b16 %v2287, %v2279
    %v2616 = vpack.c.b16 %v2296, %v2288
    %v2617 = vpack.c.b16 %v2297, %v2289
    %v2618 = vpack.c.b16 %v2298, %v2290
    %v2619 = vpack.c.b16 %v2299, %v2291
    %v2620 = vpack.c.b16 %v2300, %v2292
    %v2621 = vpack.c.b16 %v2301, %v2293
    %v2622 = vpack.c.b16 %v2302, %v2294
    %v2623 = vpack.c.b16 %v2303, %v2295
    %v2624 = vpack.c.b16 %v2312, %v2304
    %v2625 = vpack.c.b16 %v2313, %v2305
    %v2626 = vpack.c.b16 %v2314, %v2306
    %v2627 = vpack.c.b16 %v2315, %v2307
    %v2628 = vpack.c.b16 %v2316, %v2308
    %v2629 = vpack.c.b16 %v2317, %v2309
    %v2630 = vpack.c.b16 %v2318, %v2310
    %v2631 = vpack.c.b16 %v2319, %v2311
    %v2632 = vpack.c.b16 %v2328, %v2320
    %v2633 = vpack.c.b16 %v2329, %v2321
    %v2634 = vpack.c.b16 %v2330, %v2322
    %v2635 = vpack.c.b16 %v2331, %v2323
    %v2636 = vpack.c.b16 %v2332, %v2324
    %v2637 = vpack.c.b16 %v2333, %v2325
    %v2638 = vpack.c.b16 %v2334, %v2326
    %v2639 = vpack.c.b16 %v2335, %v2327
    %v2640 = vpack.c.b16 %v2344, %v2336
    %v2641 = vpack.c.b16 %v2345, %v2337
    %v2642 = vpack.c.b16 %v2346, %v2338
    %v2643 = vpack.c.b16 %v2347, %v2339
    %v2644 = vpack.c.b16 %v2348, %v2340
    %v2645 = vpack.c.b16 %v2349, %v2341
    %v2646 = vpack.c.b16 %v2350, %v2342
    %v2647 = vpack.c.b16 %v2351, %v2343
    %v2648 = vpack.c.b16 %v2360, %v2352
    %v2649 = vpack.c.b16 %v2361, %v2353
    %v2650 = vpack.c.b16 %v2362, %v2354
    %v2651 = vpack.c.b16 %v2363, %v2355
    %v2652 = vpack.c.b16 %v2364, %v2356
    %v2653 = vpack.c.b16 %v2365, %v2357
    %v2654 = vpack.c.b16 %v2366, %v2358
    %v2655 = vpack.c.b16 %v2367, %v2359
    %v2656 = vpack.c.b16 %v2376, %v2368
    %v2657 = vpack.c.b16 %v2377, %v2369
    %v2658 = vpack.c.b16 %v2378, %v2370
    %v2659 = vpack.c.b16 %v2379, %v2371
    %v2660 = vpack.c.b16 %v2380, %v2372
    %v2661 = vpack.c.b16 %v2381, %v2373
    %v2662 = vpack.c.b16 %v2382, %v2374
    %v2663 = vpack.c.b16 %v2383, %v2375
    %v2664 = vpack.c.b16 %v2392, %v2384
    %v2665 = vpack.c.b16 %v2393, %v2385
    %v2666 = vpack.c.b16 %v2394, %v2386
    %v2667 = vpack.c.b16 %v2395, %v2387
    %v2668 = vpack.c.b16 %v2396, %v2388
    %v2669 = vpack.c.b16 %v2397, %v2389
    %v2670 = vpack.c.b16 %v2398, %v2390
    %v2671 = vpack.c.b16 %v2399, %v2391
    %v2672 = vpack.c.b16 %v2408, %v2400
    %v2673 = vpack.c.b16 %v2409, %v2401
    %v2674 = vpack.c.b16 %v2410, %v2402
    %v2675 = vpack.c.b16 %v2411, %v2403
    %v2676 = vpack.c.b16 %v2412, %v2404
    %v2677 = vpack.c.b16 %v2413, %v2405
    %v2678 = vpack.c.b16 %v2414, %v2406
    %v2679 = vpack.c.b16 %v2415, %v2407
    %v2680 = vpack.c.b16 %v2424, %v2416
    %v2681 = vpack.c.b16 %v2425, %v2417
    %v2682 = vpack.c.b16 %v2426, %v2418
    %v2683 = vpack.c.b16 %v2427, %v2419
    %v2684 = vpack.c.b16 %v2428, %v2420
    %v2685 = vpack.c.b16 %v2429, %v2421
    %v2686 = vpack.c.b16 %v2430, %v2422
    %v2687 = vpack.c.b16 %v2431, %v2423
    %2944 = vmatprep.subr.bf16.mxu0 %v2433
    %2945 = vmatpush1.bf16.msra.mxu0 %v2432
    %2946 = vmatprep.subr.bf16.mxu0 %v2441
    %2947 = vmatpush1.bf16.msra.mxu0 %v2440
    %2948 = vmatprep.subr.bf16.mxu0 %v2449
    %2949 = vmatpush1.bf16.msra.mxu0 %v2448
    %2950 = vmatprep.subr.bf16.mxu0 %v2457
    %2951 = vmatpush1.bf16.msra.mxu0 %v2456
    %2952 = vmatprep.subr.bf16.mxu0 %v2465
    %2953 = vmatpush1.bf16.msra.mxu0 %v2464
    %2954 = vmatprep.subr.bf16.mxu0 %v2473
    %2955 = vmatpush1.bf16.msra.mxu0 %v2472
    %2956 = vmatprep.subr.bf16.mxu0 %v2481
    %2957 = vmatpush1.bf16.msra.mxu0 %v2480
    %2958 = vmatprep.subr.bf16.mxu0 %v2489
    %2959 = vmatpush1.bf16.msra.mxu0 %v2488
    %2960 = vmatprep.subr.bf16.mxu0 %v2497
    %2961 = vmatpush1.bf16.msra.mxu0 %v2496
    %2962 = vmatprep.subr.bf16.mxu0 %v2505
    %2963 = vmatpush1.bf16.msra.mxu0 %v2504
    %2964 = vmatprep.subr.bf16.mxu0 %v2513
    %2965 = vmatpush1.bf16.msra.mxu0 %v2512
    %2966 = vmatprep.subr.bf16.mxu0 %v2521
    %2967 = vmatpush1.bf16.msra.mxu0 %v2520
    %2968 = vmatprep.subr.bf16.mxu0 %v2529
    %2969 = vmatpush1.bf16.msra.mxu0 %v2528
    %2970 = vmatprep.subr.bf16.mxu0 %v2537
    %2971 = vmatpush1.bf16.msra.mxu0 %v2536
    %2972 = vmatprep.subr.bf16.mxu0 %v2545
    %2973 = vmatpush1.bf16.msra.mxu0 %v2544
    %2974 = vmatprep.subr.bf16.mxu0 %v2553
    %2975 = vmatpush1.bf16.msra.mxu0 %v2552
    %2976 = vmatprep.mubr.bf16.mxu0 %v1363
    %2977 = vmatmul.mubr.bf16.gmra.mrb[0].mxu0 %v1362
    %v2978 = vpop.f32.mrb[0].mxu0
    %v2979 = vadd.f32 %v1627, %v2978
    %v2980 = vpop.f32.mrb[0].mxu0
    %v2981 = vadd.f32 %v1631, %v2980
    %v2982 = vpop.f32.mrb[0].mxu0
    %v2983 = vpop.f32.mrb[0].mxu0
    %2984 = vdwg.mxu0
    %2985 = vmatprep.subr.bf16.mxu0 %v2561
    %2986 = vmatpush1.bf16.msra.mxu0 %v2560
    %2987 = vmatprep.subr.bf16.mxu0 %v2569
    %2988 = vmatpush1.bf16.msra.mxu0 %v2568
    %2989 = vmatprep.subr.bf16.mxu0 %v2577
    %2990 = vmatpush1.bf16.msra.mxu0 %v2576
    %2991 = vmatprep.subr.bf16.mxu0 %v2585
    %2992 = vmatpush1.bf16.msra.mxu0 %v2584
    %2993 = vmatprep.subr.bf16.mxu0 %v2593
    %2994 = vmatpush1.bf16.msra.mxu0 %v2592
    %2995 = vmatprep.subr.bf16.mxu0 %v2601
    %2996 = vmatpush1.bf16.msra.mxu0 %v2600
    %2997 = vmatprep.subr.bf16.mxu0 %v2609
    %2998 = vmatpush1.bf16.msra.mxu0 %v2608
    %2999 = vmatprep.subr.bf16.mxu0 %v2617
    %3000 = vmatpush1.bf16.msra.mxu0 %v2616
    %3001 = vmatprep.subr.bf16.mxu0 %v2625
    %3002 = vmatpush1.bf16.msra.mxu0 %v2624
    %3003 = vmatprep.subr.bf16.mxu0 %v2633
    %3004 = vmatpush1.bf16.msra.mxu0 %v2632
    %3005 = vmatprep.subr.bf16.mxu0 %v2641
    %3006 = vmatpush1.bf16.msra.mxu0 %v2640
    %3007 = vmatprep.subr.bf16.mxu0 %v2649
    %3008 = vmatpush1.bf16.msra.mxu0 %v2648
    %3009 = vmatprep.subr.bf16.mxu0 %v2657
    %3010 = vmatpush1.bf16.msra.mxu0 %v2656
    %3011 = vmatprep.subr.bf16.mxu0 %v2665
    %3012 = vmatpush1.bf16.msra.mxu0 %v2664
    %3013 = vmatprep.subr.bf16.mxu0 %v2673
    %3014 = vmatpush1.bf16.msra.mxu0 %v2672
    %3015 = vmatprep.subr.bf16.mxu0 %v2681
    %3016 = vmatpush1.bf16.msra.mxu0 %v2680
    %3017 = vmatprep.mubr.bf16.mxu0 %v1365
    %3018 = vmatmul.mubr.bf16.gmra.mrb[0].mxu0 %v1364
    %v3019 = vpop.f32.mrb[0].mxu0
    %v3020 = vadd.f32 %v2979, %v3019
    %v3021 = vpop.f32.mrb[0].mxu0
    %v3022 = vadd.f32 %v2981, %v3021
    %v3023 = vpop.f32.mrb[0].mxu0
    %v3024 = vpop.f32.mrb[0].mxu0
    %3025 = vdwg.mxu0
    %3026 = vmatprep.subr.bf16.mxu0 %v2435
    %3027 = vmatpush1.bf16.msra.mxu0 %v2434
    %3028 = vmatprep.subr.bf16.mxu0 %v2443
    %3029 = vmatpush1.bf16.msra.mxu0 %v2442
    %3030 = vmatprep.subr.bf16.mxu0 %v2451
    %3031 = vmatpush1.bf16.msra.mxu0 %v2450
    %3032 = vmatprep.subr.bf16.mxu0 %v2459
    %3033 = vmatpush1.bf16.msra.mxu0 %v2458
    %3034 = vmatprep.subr.bf16.mxu0 %v2467
    %3035 = vmatpush1.bf16.msra.mxu0 %v2466
    %3036 = vmatprep.subr.bf16.mxu0 %v2475
    %3037 = vmatpush1.bf16.msra.mxu0 %v2474
    %3038 = vmatprep.subr.bf16.mxu0 %v2483
    %3039 = vmatpush1.bf16.msra.mxu0 %v2482
    %3040 = vmatprep.subr.bf16.mxu0 %v2491
    %3041 = vmatpush1.bf16.msra.mxu0 %v2490
    %3042 = vmatprep.subr.bf16.mxu0 %v2499
    %3043 = vmatpush1.bf16.msra.mxu0 %v2498
    %3044 = vmatprep.subr.bf16.mxu0 %v2507
    %3045 = vmatpush1.bf16.msra.mxu0 %v2506
    %3046 = vmatprep.subr.bf16.mxu0 %v2515
    %3047 = vmatpush1.bf16.msra.mxu0 %v2514
    %3048 = vmatprep.subr.bf16.mxu0 %v2523
    %3049 = vmatpush1.bf16.msra.mxu0 %v2522
    %3050 = vmatprep.subr.bf16.mxu0 %v2531
    %3051 = vmatpush1.bf16.msra.mxu0 %v2530
    %3052 = vmatprep.subr.bf16.mxu0 %v2539
    %3053 = vmatpush1.bf16.msra.mxu0 %v2538
    %3054 = vmatprep.subr.bf16.mxu0 %v2547
    %3055 = vmatpush1.bf16.msra.mxu0 %v2546
    %3056 = vmatprep.subr.bf16.mxu0 %v2555
    %3057 = vmatpush1.bf16.msra.mxu0 %v2554
    %3058 = vmatprep.mubr.bf16.mxu0 %v1363
    %3059 = vmatmul.mubr.bf16.gmra.mrb[0].mxu0 %v1362
    %v3060 = vpop.f32.mrb[0].mxu0
    %v3061 = vadd.f32 %v1635, %v3060
    %v3062 = vpop.f32.mrb[0].mxu0
    %v3063 = vadd.f32 %v1639, %v3062
    %v3064 = vpop.f32.mrb[0].mxu0
    %v3065 = vpop.f32.mrb[0].mxu0
    %3066 = vdwg.mxu0
    %3067 = vmatprep.subr.bf16.mxu0 %v2563
    %3068 = vmatpush1.bf16.msra.mxu0 %v2562
    %3069 = vmatprep.subr.bf16.mxu0 %v2571
    %3070 = vmatpush1.bf16.msra.mxu0 %v2570
    %3071 = vmatprep.subr.bf16.mxu0 %v2579
    %3072 = vmatpush1.bf16.msra.mxu0 %v2578
    %3073 = vmatprep.subr.bf16.mxu0 %v2587
    %3074 = vmatpush1.bf16.msra.mxu0 %v2586
    %3075 = vmatprep.subr.bf16.mxu0 %v2595
    %3076 = vmatpush1.bf16.msra.mxu0 %v2594
    %3077 = vmatprep.subr.bf16.mxu0 %v2603
    %3078 = vmatpush1.bf16.msra.mxu0 %v2602
    %3079 = vmatprep.subr.bf16.mxu0 %v2611
    %3080 = vmatpush1.bf16.msra.mxu0 %v2610
    %3081 = vmatprep.subr.bf16.mxu0 %v2619
    %3082 = vmatpush1.bf16.msra.mxu0 %v2618
    %3083 = vmatprep.subr.bf16.mxu0 %v2627
    %3084 = vmatpush1.bf16.msra.mxu0 %v2626
    %3085 = vmatprep.subr.bf16.mxu0 %v2635
    %3086 = vmatpush1.bf16.msra.mxu0 %v2634
    %3087 = vmatprep.subr.bf16.mxu0 %v2643
    %3088 = vmatpush1.bf16.msra.mxu0 %v2642
    %3089 = vmatprep.subr.bf16.mxu0 %v2651
    %3090 = vmatpush1.bf16.msra.mxu0 %v2650
    %3091 = vmatprep.subr.bf16.mxu0 %v2659
    %3092 = vmatpush1.bf16.msra.mxu0 %v2658
    %3093 = vmatprep.subr.bf16.mxu0 %v2667
    %3094 = vmatpush1.bf16.msra.mxu0 %v2666
    %3095 = vmatprep.subr.bf16.mxu0 %v2675
    %3096 = vmatpush1.bf16.msra.mxu0 %v2674
    %3097 = vmatprep.subr.bf16.mxu0 %v2683
    %3098 = vmatpush1.bf16.msra.mxu0 %v2682
    %3099 = vmatprep.mubr.bf16.mxu0 %v1365
    %3100 = vmatmul.mubr.bf16.gmra.mrb[0].mxu0 %v1364
    %v3101 = vpop.f32.mrb[0].mxu0
    %v3102 = vadd.f32 %v3061, %v3101
    %v3103 = vpop.f32.mrb[0].mxu0
    %v3104 = vadd.f32 %v3063, %v3103
    %v3105 = vpop.f32.mrb[0].mxu0
    %v3106 = vpop.f32.mrb[0].mxu0
    %3107 = vdwg.mxu0
    %3108 = vmatprep.subr.bf16.mxu0 %v2437
    %3109 = vmatpush1.bf16.msra.mxu0 %v2436
    %3110 = vmatprep.subr.bf16.mxu0 %v2445
    %3111 = vmatpush1.bf16.msra.mxu0 %v2444
    %3112 = vmatprep.subr.bf16.mxu0 %v2453
    %3113 = vmatpush1.bf16.msra.mxu0 %v2452
    %3114 = vmatprep.subr.bf16.mxu0 %v2461
    %3115 = vmatpush1.bf16.msra.mxu0 %v2460
    %3116 = vmatprep.subr.bf16.mxu0 %v2469
    %3117 = vmatpush1.bf16.msra.mxu0 %v2468
    %3118 = vmatprep.subr.bf16.mxu0 %v2477
    %3119 = vmatpush1.bf16.msra.mxu0 %v2476
    %3120 = vmatprep.subr.bf16.mxu0 %v2485
    %3121 = vmatpush1.bf16.msra.mxu0 %v2484
    %3122 = vmatprep.subr.bf16.mxu0 %v2493
    %3123 = vmatpush1.bf16.msra.mxu0 %v2492
    %3124 = vmatprep.subr.bf16.mxu0 %v2501
    %3125 = vmatpush1.bf16.msra.mxu0 %v2500
    %3126 = vmatprep.subr.bf16.mxu0 %v2509
    %3127 = vmatpush1.bf16.msra.mxu0 %v2508
    %3128 = vmatprep.subr.bf16.mxu0 %v2517
    %3129 = vmatpush1.bf16.msra.mxu0 %v2516
    %3130 = vmatprep.subr.bf16.mxu0 %v2525
    %3131 = vmatpush1.bf16.msra.mxu0 %v2524
    %3132 = vmatprep.subr.bf16.mxu0 %v2533
    %3133 = vmatpush1.bf16.msra.mxu0 %v2532
    %3134 = vmatprep.subr.bf16.mxu0 %v2541
    %3135 = vmatpush1.bf16.msra.mxu0 %v2540
    %3136 = vmatprep.subr.bf16.mxu0 %v2549
    %3137 = vmatpush1.bf16.msra.mxu0 %v2548
    %3138 = vmatprep.subr.bf16.mxu0 %v2557
    %3139 = vmatpush1.bf16.msra.mxu0 %v2556
    %3140 = vmatprep.mubr.bf16.mxu0 %v1363
    %3141 = vmatmul.mubr.bf16.gmra.mrb[0].mxu0 %v1362
    %v3142 = vpop.f32.mrb[0].mxu0
    %v3143 = vadd.f32 %v1643, %v3142
    %v3144 = vpop.f32.mrb[0].mxu0
    %v3145 = vadd.f32 %v1647, %v3144
    %v3146 = vpop.f32.mrb[0].mxu0
    %v3147 = vpop.f32.mrb[0].mxu0
    %3148 = vdwg.mxu0
    %3149 = vmatprep.subr.bf16.mxu0 %v2565
    %3150 = vmatpush1.bf16.msra.mxu0 %v2564
    %3151 = vmatprep.subr.bf16.mxu0 %v2573
    %3152 = vmatpush1.bf16.msra.mxu0 %v2572
    %3153 = vmatprep.subr.bf16.mxu0 %v2581
    %3154 = vmatpush1.bf16.msra.mxu0 %v2580
    %3155 = vmatprep.subr.bf16.mxu0 %v2589
    %3156 = vmatpush1.bf16.msra.mxu0 %v2588
    %3157 = vmatprep.subr.bf16.mxu0 %v2597
    %3158 = vmatpush1.bf16.msra.mxu0 %v2596
    %3159 = vmatprep.subr.bf16.mxu0 %v2605
    %3160 = vmatpush1.bf16.msra.mxu0 %v2604
    %3161 = vmatprep.subr.bf16.mxu0 %v2613
    %3162 = vmatpush1.bf16.msra.mxu0 %v2612
    %3163 = vmatprep.subr.bf16.mxu0 %v2621
    %3164 = vmatpush1.bf16.msra.mxu0 %v2620
    %3165 = vmatprep.subr.bf16.mxu0 %v2629
    %3166 = vmatpush1.bf16.msra.mxu0 %v2628
    %3167 = vmatprep.subr.bf16.mxu0 %v2637
    %3168 = vmatpush1.bf16.msra.mxu0 %v2636
    %3169 = vmatprep.subr.bf16.mxu0 %v2645
    %3170 = vmatpush1.bf16.msra.mxu0 %v2644
    %3171 = vmatprep.subr.bf16.mxu0 %v2653
    %3172 = vmatpush1.bf16.msra.mxu0 %v2652
    %3173 = vmatprep.subr.bf16.mxu0 %v2661
    %3174 = vmatpush1.bf16.msra.mxu0 %v2660
    %3175 = vmatprep.subr.bf16.mxu0 %v2669
    %3176 = vmatpush1.bf16.msra.mxu0 %v2668
    %3177 = vmatprep.subr.bf16.mxu0 %v2677
    %3178 = vmatpush1.bf16.msra.mxu0 %v2676
    %3179 = vmatprep.subr.bf16.mxu0 %v2685
    %3180 = vmatpush1.bf16.msra.mxu0 %v2684
    %3181 = vmatprep.mubr.bf16.mxu0 %v1365
    %3182 = vmatmul.mubr.bf16.gmra.mrb[0].mxu0 %v1364
    %v3183 = vpop.f32.mrb[0].mxu0
    %v3184 = vadd.f32 %v3143, %v3183
    %v3185 = vpop.f32.mrb[0].mxu0
    %v3186 = vadd.f32 %v3145, %v3185
    %v3187 = vpop.f32.mrb[0].mxu0
    %v3188 = vpop.f32.mrb[0].mxu0
    %3189 = vdwg.mxu0
    %3190 = vmatprep.subr.bf16.mxu0 %v2439
    %3191 = vmatpush1.bf16.msra.mxu0 %v2438
    %3192 = vmatprep.subr.bf16.mxu0 %v2447
    %3193 = vmatpush1.bf16.msra.mxu0 %v2446
    %3194 = vmatprep.subr.bf16.mxu0 %v2455
    %3195 = vmatpush1.bf16.msra.mxu0 %v2454
    %3196 = vmatprep.subr.bf16.mxu0 %v2463
    %3197 = vmatpush1.bf16.msra.mxu0 %v2462
    %3198 = vmatprep.subr.bf16.mxu0 %v2471
    %3199 = vmatpush1.bf16.msra.mxu0 %v2470
    %3200 = vmatprep.subr.bf16.mxu0 %v2479
    %3201 = vmatpush1.bf16.msra.mxu0 %v2478
    %3202 = vmatprep.subr.bf16.mxu0 %v2487
    %3203 = vmatpush1.bf16.msra.mxu0 %v2486
    %3204 = vmatprep.subr.bf16.mxu0 %v2495
    %3205 = vmatpush1.bf16.msra.mxu0 %v2494
    %3206 = vmatprep.subr.bf16.mxu0 %v2503
    %3207 = vmatpush1.bf16.msra.mxu0 %v2502
    %3208 = vmatprep.subr.bf16.mxu0 %v2511
    %3209 = vmatpush1.bf16.msra.mxu0 %v2510
    %3210 = vmatprep.subr.bf16.mxu0 %v2519
    %3211 = vmatpush1.bf16.msra.mxu0 %v2518
    %3212 = vmatprep.subr.bf16.mxu0 %v2527
    %3213 = vmatpush1.bf16.msra.mxu0 %v2526
    %3214 = vmatprep.subr.bf16.mxu0 %v2535
    %3215 = vmatpush1.bf16.msra.mxu0 %v2534
    %3216 = vmatprep.subr.bf16.mxu0 %v2543
    %3217 = vmatpush1.bf16.msra.mxu0 %v2542
    %3218 = vmatprep.subr.bf16.mxu0 %v2551
    %3219 = vmatpush1.bf16.msra.mxu0 %v2550
    %3220 = vmatprep.subr.bf16.mxu0 %v2559
    %3221 = vmatpush1.bf16.msra.mxu0 %v2558
    %3222 = vmatprep.mubr.bf16.mxu0 %v1363
    %3223 = vmatmul.mubr.bf16.gmra.mrb[0].mxu0 %v1362
    %v3224 = vpop.f32.mrb[0].mxu0
    %v3225 = vadd.f32 %v1651, %v3224
    %v3226 = vpop.f32.mrb[0].mxu0
    %v3227 = vadd.f32 %v1655, %v3226
    %v3228 = vpop.f32.mrb[0].mxu0
    %v3229 = vpop.f32.mrb[0].mxu0
    %3230 = vdwg.mxu0
    %3231 = vmatprep.subr.bf16.mxu0 %v2567
    %3232 = vmatpush1.bf16.msra.mxu0 %v2566
    %3233 = vmatprep.subr.bf16.mxu0 %v2575
    %3234 = vmatpush1.bf16.msra.mxu0 %v2574
    %3235 = vmatprep.subr.bf16.mxu0 %v2583
    %3236 = vmatpush1.bf16.msra.mxu0 %v2582
    %3237 = vmatprep.subr.bf16.mxu0 %v2591
    %3238 = vmatpush1.bf16.msra.mxu0 %v2590
    %3239 = vmatprep.subr.bf16.mxu0 %v2599
    %3240 = vmatpush1.bf16.msra.mxu0 %v2598
    %3241 = vmatprep.subr.bf16.mxu0 %v2607
    %3242 = vmatpush1.bf16.msra.mxu0 %v2606
    %3243 = vmatprep.subr.bf16.mxu0 %v2615
    %3244 = vmatpush1.bf16.msra.mxu0 %v2614
    %3245 = vmatprep.subr.bf16.mxu0 %v2623
    %3246 = vmatpush1.bf16.msra.mxu0 %v2622
    %3247 = vmatprep.subr.bf16.mxu0 %v2631
    %3248 = vmatpush1.bf16.msra.mxu0 %v2630
    %3249 = vmatprep.subr.bf16.mxu0 %v2639
    %3250 = vmatpush1.bf16.msra.mxu0 %v2638
    %3251 = vmatprep.subr.bf16.mxu0 %v2647
    %3252 = vmatpush1.bf16.msra.mxu0 %v2646
    %3253 = vmatprep.subr.bf16.mxu0 %v2655
    %3254 = vmatpush1.bf16.msra.mxu0 %v2654
    %3255 = vmatprep.subr.bf16.mxu0 %v2663
    %3256 = vmatpush1.bf16.msra.mxu0 %v2662
    %3257 = vmatprep.subr.bf16.mxu0 %v2671
    %3258 = vmatpush1.bf16.msra.mxu0 %v2670
    %3259 = vmatprep.subr.bf16.mxu0 %v2679
    %3260 = vmatpush1.bf16.msra.mxu0 %v2678
    %3261 = vmatprep.subr.bf16.mxu0 %v2687
    %3262 = vmatpush1.bf16.msra.mxu0 %v2686
    %3263 = vmatprep.mubr.bf16.mxu0 %v1365
    %3264 = vmatmul.mubr.bf16.gmra.mrb[0].mxu0 %v1364
    %v3265 = vpop.f32.mrb[0].mxu0
    %v3266 = vadd.f32 %v3225, %v3265
    %v3267 = vpop.f32.mrb[0].mxu0
    %v3268 = vadd.f32 %v3227, %v3267
    %v3269 = vpop.f32.mrb[0].mxu0
    %v3270 = vpop.f32.mrb[0].mxu0
    %3271 = vdwg.mxu0
    %v3272 = vmax.f32 %v3020, 0.0
    %v3273 = vmax.f32 %v3022, 0.0
    %v3274 = vmax.f32 %v3102, 0.0
    %v3275 = vmax.f32 %v3104, 0.0
    %v3276 = vmax.f32 %v3184, 0.0
    %v3277 = vmax.f32 %v3186, 0.0
    %v3278 = vmax.f32 %v3266, 0.0
    %v3279 = vmax.f32 %v3268, 0.0
    %v3280 = vpack.c.bf16 %v3272, %v3272
    %v3281 = vpack.c.bf16 %v3273, %v3273
    %v3282 = vpack.c.bf16 %v3274, %v3274
    %v3283 = vpack.c.bf16 %v3275, %v3275
    %v3284 = vpack.c.bf16 %v3276, %v3276
    %v3285 = vpack.c.bf16 %v3277, %v3277
    %v3286 = vpack.c.bf16 %v3278, %v3278
    %v3287 = vpack.c.bf16 %v3279, %v3279
    %v3288 = vld [vmem:[#allocation13] sm:$0xff]
    %v3289 = vld [vmem:[#allocation13 + $0x8] sm:$0xff]
    %v3290 = vld [vmem:[#allocation13 + $0x10] sm:$0xff]
    %v3291 = vld [vmem:[#allocation13 + $0x18] sm:$0xff]
    %v3292 = vld [vmem:[#allocation13 + $0x20] sm:$0xff]
    %v3293 = vld [vmem:[#allocation13 + $0x28] sm:$0xff]
    %v3294 = vld [vmem:[#allocation13 + $0x30] sm:$0xff]
    %v3295 = vld [vmem:[#allocation13 + $0x38] sm:$0xff]
    %v3296 = vld [vmem:[#allocation13 + $0x40] sm:$0xff]
    %v3297 = vld [vmem:[#allocation13 + $0x48] sm:$0xff]
    %v3298 = vld [vmem:[#allocation13 + $0x50] sm:$0xff]
    %v3299 = vld [vmem:[#allocation13 + $0x58] sm:$0xff]
    %v3300 = vld [vmem:[#allocation13 + $0x60] sm:$0xff]
    %v3301 = vld [vmem:[#allocation13 + $0x68] sm:$0xff]
    %v3302 = vld [vmem:[#allocation13 + $0x70] sm:$0xff]
    %v3303 = vld [vmem:[#allocation13 + $0x78] sm:$0xff]
    %v3304 = vld [vmem:[#allocation13 + $0x80] sm:$0xff]
    %v3305 = vld [vmem:[#allocation13 + $0x88] sm:$0xff]
    %v3306 = vld [vmem:[#allocation13 + $0x90] sm:$0xff]
    %v3307 = vld [vmem:[#allocation13 + $0x98] sm:$0xff]
    %v3308 = vld [vmem:[#allocation13 + $0xa0] sm:$0xff]
    %v3309 = vld [vmem:[#allocation13 + $0xa8] sm:$0xff]
    %v3310 = vld [vmem:[#allocation13 + $0xb0] sm:$0xff]
    %v3311 = vld [vmem:[#allocation13 + $0xb8] sm:$0xff]
    %v3312 = vld [vmem:[#allocation13 + $0xc0] sm:$0xff]
    %v3313 = vld [vmem:[#allocation13 + $0xc8] sm:$0xff]
    %v3314 = vld [vmem:[#allocation13 + $0xd0] sm:$0xff]
    %v3315 = vld [vmem:[#allocation13 + $0xd8] sm:$0xff]
    %v3316 = vld [vmem:[#allocation13 + $0xe0] sm:$0xff]
    %v3317 = vld [vmem:[#allocation13 + $0xe8] sm:$0xff]
    %v3318 = vld [vmem:[#allocation13 + $0xf0] sm:$0xff]
    %v3319 = vld [vmem:[#allocation13 + $0xf8] sm:$0xff]
    %v3320 = vld [vmem:[#allocation13 + $0x100] sm:$0xff]
    %v3321 = vld [vmem:[#allocation13 + $0x108] sm:$0xff]
    %v3322 = vld [vmem:[#allocation13 + $0x110] sm:$0xff]
    %v3323 = vld [vmem:[#allocation13 + $0x118] sm:$0xff]
    %v3324 = vld [vmem:[#allocation13 + $0x120] sm:$0xff]
    %v3325 = vld [vmem:[#allocation13 + $0x128] sm:$0xff]
    %v3326 = vld [vmem:[#allocation13 + $0x130] sm:$0xff]
    %v3327 = vld [vmem:[#allocation13 + $0x138] sm:$0xff]
    %v3328 = vld [vmem:[#allocation13 + $0x140] sm:$0xff]
    %v3329 = vld [vmem:[#allocation13 + $0x148] sm:$0xff]
    %v3330 = vld [vmem:[#allocation13 + $0x150] sm:$0xff]
    %v3331 = vld [vmem:[#allocation13 + $0x158] sm:$0xff]
    %v3332 = vld [vmem:[#allocation13 + $0x160] sm:$0xff]
    %v3333 = vld [vmem:[#allocation13 + $0x168] sm:$0xff]
    %v3334 = vld [vmem:[#allocation13 + $0x170] sm:$0xff]
    %v3335 = vld [vmem:[#allocation13 + $0x178] sm:$0xff]
    %v3336 = vld [vmem:[#allocation13 + $0x180] sm:$0xff]
    %v3337 = vld [vmem:[#allocation13 + $0x188] sm:$0xff]
    %v3338 = vld [vmem:[#allocation13 + $0x190] sm:$0xff]
    %v3339 = vld [vmem:[#allocation13 + $0x198] sm:$0xff]
    %v3340 = vld [vmem:[#allocation13 + $0x1a0] sm:$0xff]
    %v3341 = vld [vmem:[#allocation13 + $0x1a8] sm:$0xff]
    %v3342 = vld [vmem:[#allocation13 + $0x1b0] sm:$0xff]
    %v3343 = vld [vmem:[#allocation13 + $0x1b8] sm:$0xff]
    %v3344 = vld [vmem:[#allocation13 + $0x1c0] sm:$0xff]
    %v3345 = vld [vmem:[#allocation13 + $0x1c8] sm:$0xff]
    %v3346 = vld [vmem:[#allocation13 + $0x1d0] sm:$0xff]
    %v3347 = vld [vmem:[#allocation13 + $0x1d8] sm:$0xff]
    %v3348 = vld [vmem:[#allocation13 + $0x1e0] sm:$0xff]
    %v3349 = vld [vmem:[#allocation13 + $0x1e8] sm:$0xff]
    %v3350 = vld [vmem:[#allocation13 + $0x1f0] sm:$0xff]
    %v3351 = vld [vmem:[#allocation13 + $0x1f8] sm:$0xff]
    %v3352 = vld [vmem:[#allocation13 + $0x200] sm:$0xff]
    %v3353 = vld [vmem:[#allocation13 + $0x208] sm:$0xff]
    %v3354 = vld [vmem:[#allocation13 + $0x210] sm:$0xff]
    %v3355 = vld [vmem:[#allocation13 + $0x218] sm:$0xff]
    %v3356 = vld [vmem:[#allocation13 + $0x220] sm:$0xff]
    %v3357 = vld [vmem:[#allocation13 + $0x228] sm:$0xff]
    %v3358 = vld [vmem:[#allocation13 + $0x230] sm:$0xff]
    %v3359 = vld [vmem:[#allocation13 + $0x238] sm:$0xff]
    %v3360 = vld [vmem:[#allocation13 + $0x240] sm:$0xff]
    %v3361 = vld [vmem:[#allocation13 + $0x248] sm:$0xff]
    %v3362 = vld [vmem:[#allocation13 + $0x250] sm:$0xff]
    %v3363 = vld [vmem:[#allocation13 + $0x258] sm:$0xff]
    %v3364 = vld [vmem:[#allocation13 + $0x260] sm:$0xff]
    %v3365 = vld [vmem:[#allocation13 + $0x268] sm:$0xff]
    %v3366 = vld [vmem:[#allocation13 + $0x270] sm:$0xff]
    %v3367 = vld [vmem:[#allocation13 + $0x278] sm:$0xff]
    %v3368 = vld [vmem:[#allocation13 + $0x280] sm:$0xff]
    %v3369 = vld [vmem:[#allocation13 + $0x288] sm:$0xff]
    %v3370 = vld [vmem:[#allocation13 + $0x290] sm:$0xff]
    %v3371 = vld [vmem:[#allocation13 + $0x298] sm:$0xff]
    %v3372 = vld [vmem:[#allocation13 + $0x2a0] sm:$0xff]
    %v3373 = vld [vmem:[#allocation13 + $0x2a8] sm:$0xff]
    %v3374 = vld [vmem:[#allocation13 + $0x2b0] sm:$0xff]
    %v3375 = vld [vmem:[#allocation13 + $0x2b8] sm:$0xff]
    %v3376 = vld [vmem:[#allocation13 + $0x2c0] sm:$0xff]
    %v3377 = vld [vmem:[#allocation13 + $0x2c8] sm:$0xff]
    %v3378 = vld [vmem:[#allocation13 + $0x2d0] sm:$0xff]
    %v3379 = vld [vmem:[#allocation13 + $0x2d8] sm:$0xff]
    %v3380 = vld [vmem:[#allocation13 + $0x2e0] sm:$0xff]
    %v3381 = vld [vmem:[#allocation13 + $0x2e8] sm:$0xff]
    %v3382 = vld [vmem:[#allocation13 + $0x2f0] sm:$0xff]
    %v3383 = vld [vmem:[#allocation13 + $0x2f8] sm:$0xff]
    %v3384 = vld [vmem:[#allocation13 + $0x300] sm:$0xff]
    %v3385 = vld [vmem:[#allocation13 + $0x308] sm:$0xff]
    %v3386 = vld [vmem:[#allocation13 + $0x310] sm:$0xff]
    %v3387 = vld [vmem:[#allocation13 + $0x318] sm:$0xff]
    %v3388 = vld [vmem:[#allocation13 + $0x320] sm:$0xff]
    %v3389 = vld [vmem:[#allocation13 + $0x328] sm:$0xff]
    %v3390 = vld [vmem:[#allocation13 + $0x330] sm:$0xff]
    %v3391 = vld [vmem:[#allocation13 + $0x338] sm:$0xff]
    %v3392 = vld [vmem:[#allocation13 + $0x340] sm:$0xff]
    %v3393 = vld [vmem:[#allocation13 + $0x348] sm:$0xff]
    %v3394 = vld [vmem:[#allocation13 + $0x350] sm:$0xff]
    %v3395 = vld [vmem:[#allocation13 + $0x358] sm:$0xff]
    %v3396 = vld [vmem:[#allocation13 + $0x360] sm:$0xff]
    %v3397 = vld [vmem:[#allocation13 + $0x368] sm:$0xff]
    %v3398 = vld [vmem:[#allocation13 + $0x370] sm:$0xff]
    %v3399 = vld [vmem:[#allocation13 + $0x378] sm:$0xff]
    %v3400 = vld [vmem:[#allocation13 + $0x380] sm:$0xff]
    %v3401 = vld [vmem:[#allocation13 + $0x388] sm:$0xff]
    %v3402 = vld [vmem:[#allocation13 + $0x390] sm:$0xff]
    %v3403 = vld [vmem:[#allocation13 + $0x398] sm:$0xff]
    %v3404 = vld [vmem:[#allocation13 + $0x3a0] sm:$0xff]
    %v3405 = vld [vmem:[#allocation13 + $0x3a8] sm:$0xff]
    %v3406 = vld [vmem:[#allocation13 + $0x3b0] sm:$0xff]
    %v3407 = vld [vmem:[#allocation13 + $0x3b8] sm:$0xff]
    %v3408 = vld [vmem:[#allocation13 + $0x3c0] sm:$0xff]
    %v3409 = vld [vmem:[#allocation13 + $0x3c8] sm:$0xff]
    %v3410 = vld [vmem:[#allocation13 + $0x3d0] sm:$0xff]
    %v3411 = vld [vmem:[#allocation13 + $0x3d8] sm:$0xff]
    %v3412 = vld [vmem:[#allocation13 + $0x3e0] sm:$0xff]
    %v3413 = vld [vmem:[#allocation13 + $0x3e8] sm:$0xff]
    %v3414 = vld [vmem:[#allocation13 + $0x3f0] sm:$0xff]
    %v3415 = vld [vmem:[#allocation13 + $0x3f8] sm:$0xff]
    %v3416 = vld [vmem:[#allocation13 + $0x400] sm:$0xff]
    %v3417 = vld [vmem:[#allocation13 + $0x408] sm:$0xff]
    %v3418 = vld [vmem:[#allocation13 + $0x410] sm:$0xff]
    %v3419 = vld [vmem:[#allocation13 + $0x418] sm:$0xff]
    %v3420 = vld [vmem:[#allocation13 + $0x420] sm:$0xff]
    %v3421 = vld [vmem:[#allocation13 + $0x428] sm:$0xff]
    %v3422 = vld [vmem:[#allocation13 + $0x430] sm:$0xff]
    %v3423 = vld [vmem:[#allocation13 + $0x438] sm:$0xff]
    %v3424 = vld [vmem:[#allocation13 + $0x440] sm:$0xff]
    %v3425 = vld [vmem:[#allocation13 + $0x448] sm:$0xff]
    %v3426 = vld [vmem:[#allocation13 + $0x450] sm:$0xff]
    %v3427 = vld [vmem:[#allocation13 + $0x458] sm:$0xff]
    %v3428 = vld [vmem:[#allocation13 + $0x460] sm:$0xff]
    %v3429 = vld [vmem:[#allocation13 + $0x468] sm:$0xff]
    %v3430 = vld [vmem:[#allocation13 + $0x470] sm:$0xff]
    %v3431 = vld [vmem:[#allocation13 + $0x478] sm:$0xff]
    %v3432 = vld [vmem:[#allocation13 + $0x480] sm:$0xff]
    %v3433 = vld [vmem:[#allocation13 + $0x488] sm:$0xff]
    %v3434 = vld [vmem:[#allocation13 + $0x490] sm:$0xff]
    %v3435 = vld [vmem:[#allocation13 + $0x498] sm:$0xff]
    %v3436 = vld [vmem:[#allocation13 + $0x4a0] sm:$0xff]
    %v3437 = vld [vmem:[#allocation13 + $0x4a8] sm:$0xff]
    %v3438 = vld [vmem:[#allocation13 + $0x4b0] sm:$0xff]
    %v3439 = vld [vmem:[#allocation13 + $0x4b8] sm:$0xff]
    %v3440 = vld [vmem:[#allocation13 + $0x4c0] sm:$0xff]
    %v3441 = vld [vmem:[#allocation13 + $0x4c8] sm:$0xff]
    %v3442 = vld [vmem:[#allocation13 + $0x4d0] sm:$0xff]
    %v3443 = vld [vmem:[#allocation13 + $0x4d8] sm:$0xff]
    %v3444 = vld [vmem:[#allocation13 + $0x4e0] sm:$0xff]
    %v3445 = vld [vmem:[#allocation13 + $0x4e8] sm:$0xff]
    %v3446 = vld [vmem:[#allocation13 + $0x4f0] sm:$0xff]
    %v3447 = vld [vmem:[#allocation13 + $0x4f8] sm:$0xff]
    %v3448 = vld [vmem:[#allocation13 + $0x500] sm:$0xff]
    %v3449 = vld [vmem:[#allocation13 + $0x508] sm:$0xff]
    %v3450 = vld [vmem:[#allocation13 + $0x510] sm:$0xff]
    %v3451 = vld [vmem:[#allocation13 + $0x518] sm:$0xff]
    %v3452 = vld [vmem:[#allocation13 + $0x520] sm:$0xff]
    %v3453 = vld [vmem:[#allocation13 + $0x528] sm:$0xff]
    %v3454 = vld [vmem:[#allocation13 + $0x530] sm:$0xff]
    %v3455 = vld [vmem:[#allocation13 + $0x538] sm:$0xff]
    %v3456 = vld [vmem:[#allocation13 + $0x540] sm:$0xff]
    %v3457 = vld [vmem:[#allocation13 + $0x548] sm:$0xff]
    %v3458 = vld [vmem:[#allocation13 + $0x550] sm:$0xff]
    %v3459 = vld [vmem:[#allocation13 + $0x558] sm:$0xff]
    %v3460 = vld [vmem:[#allocation13 + $0x560] sm:$0xff]
    %v3461 = vld [vmem:[#allocation13 + $0x568] sm:$0xff]
    %v3462 = vld [vmem:[#allocation13 + $0x570] sm:$0xff]
    %v3463 = vld [vmem:[#allocation13 + $0x578] sm:$0xff]
    %v3464 = vld [vmem:[#allocation13 + $0x580] sm:$0xff]
    %v3465 = vld [vmem:[#allocation13 + $0x588] sm:$0xff]
    %v3466 = vld [vmem:[#allocation13 + $0x590] sm:$0xff]
    %v3467 = vld [vmem:[#allocation13 + $0x598] sm:$0xff]
    %v3468 = vld [vmem:[#allocation13 + $0x5a0] sm:$0xff]
    %v3469 = vld [vmem:[#allocation13 + $0x5a8] sm:$0xff]
    %v3470 = vld [vmem:[#allocation13 + $0x5b0] sm:$0xff]
    %v3471 = vld [vmem:[#allocation13 + $0x5b8] sm:$0xff]
    %v3472 = vld [vmem:[#allocation13 + $0x5c0] sm:$0xff]
    %v3473 = vld [vmem:[#allocation13 + $0x5c8] sm:$0xff]
    %v3474 = vld [vmem:[#allocation13 + $0x5d0] sm:$0xff]
    %v3475 = vld [vmem:[#allocation13 + $0x5d8] sm:$0xff]
    %v3476 = vld [vmem:[#allocation13 + $0x5e0] sm:$0xff]
    %v3477 = vld [vmem:[#allocation13 + $0x5e8] sm:$0xff]
    %v3478 = vld [vmem:[#allocation13 + $0x5f0] sm:$0xff]
    %v3479 = vld [vmem:[#allocation13 + $0x5f8] sm:$0xff]
    %v3480 = vld [vmem:[#allocation13 + $0x600] sm:$0xff]
    %v3481 = vld [vmem:[#allocation13 + $0x608] sm:$0xff]
    %v3482 = vld [vmem:[#allocation13 + $0x610] sm:$0xff]
    %v3483 = vld [vmem:[#allocation13 + $0x618] sm:$0xff]
    %v3484 = vld [vmem:[#allocation13 + $0x620] sm:$0xff]
    %v3485 = vld [vmem:[#allocation13 + $0x628] sm:$0xff]
    %v3486 = vld [vmem:[#allocation13 + $0x630] sm:$0xff]
    %v3487 = vld [vmem:[#allocation13 + $0x638] sm:$0xff]
    %v3488 = vld [vmem:[#allocation13 + $0x640] sm:$0xff]
    %v3489 = vld [vmem:[#allocation13 + $0x648] sm:$0xff]
    %v3490 = vld [vmem:[#allocation13 + $0x650] sm:$0xff]
    %v3491 = vld [vmem:[#allocation13 + $0x658] sm:$0xff]
    %v3492 = vld [vmem:[#allocation13 + $0x660] sm:$0xff]
    %v3493 = vld [vmem:[#allocation13 + $0x668] sm:$0xff]
    %v3494 = vld [vmem:[#allocation13 + $0x670] sm:$0xff]
    %v3495 = vld [vmem:[#allocation13 + $0x678] sm:$0xff]
    %v3496 = vld [vmem:[#allocation13 + $0x680] sm:$0xff]
    %v3497 = vld [vmem:[#allocation13 + $0x688] sm:$0xff]
    %v3498 = vld [vmem:[#allocation13 + $0x690] sm:$0xff]
    %v3499 = vld [vmem:[#allocation13 + $0x698] sm:$0xff]
    %v3500 = vld [vmem:[#allocation13 + $0x6a0] sm:$0xff]
    %v3501 = vld [vmem:[#allocation13 + $0x6a8] sm:$0xff]
    %v3502 = vld [vmem:[#allocation13 + $0x6b0] sm:$0xff]
    %v3503 = vld [vmem:[#allocation13 + $0x6b8] sm:$0xff]
    %v3504 = vld [vmem:[#allocation13 + $0x6c0] sm:$0xff]
    %v3505 = vld [vmem:[#allocation13 + $0x6c8] sm:$0xff]
    %v3506 = vld [vmem:[#allocation13 + $0x6d0] sm:$0xff]
    %v3507 = vld [vmem:[#allocation13 + $0x6d8] sm:$0xff]
    %v3508 = vld [vmem:[#allocation13 + $0x6e0] sm:$0xff]
    %v3509 = vld [vmem:[#allocation13 + $0x6e8] sm:$0xff]
    %v3510 = vld [vmem:[#allocation13 + $0x6f0] sm:$0xff]
    %v3511 = vld [vmem:[#allocation13 + $0x6f8] sm:$0xff]
    %v3512 = vld [vmem:[#allocation13 + $0x700] sm:$0xff]
    %v3513 = vld [vmem:[#allocation13 + $0x708] sm:$0xff]
    %v3514 = vld [vmem:[#allocation13 + $0x710] sm:$0xff]
    %v3515 = vld [vmem:[#allocation13 + $0x718] sm:$0xff]
    %v3516 = vld [vmem:[#allocation13 + $0x720] sm:$0xff]
    %v3517 = vld [vmem:[#allocation13 + $0x728] sm:$0xff]
    %v3518 = vld [vmem:[#allocation13 + $0x730] sm:$0xff]
    %v3519 = vld [vmem:[#allocation13 + $0x738] sm:$0xff]
    %v3520 = vld [vmem:[#allocation13 + $0x740] sm:$0xff]
    %v3521 = vld [vmem:[#allocation13 + $0x748] sm:$0xff]
    %v3522 = vld [vmem:[#allocation13 + $0x750] sm:$0xff]
    %v3523 = vld [vmem:[#allocation13 + $0x758] sm:$0xff]
    %v3524 = vld [vmem:[#allocation13 + $0x760] sm:$0xff]
    %v3525 = vld [vmem:[#allocation13 + $0x768] sm:$0xff]
    %v3526 = vld [vmem:[#allocation13 + $0x770] sm:$0xff]
    %v3527 = vld [vmem:[#allocation13 + $0x778] sm:$0xff]
    %v3528 = vld [vmem:[#allocation13 + $0x780] sm:$0xff]
    %v3529 = vld [vmem:[#allocation13 + $0x788] sm:$0xff]
    %v3530 = vld [vmem:[#allocation13 + $0x790] sm:$0xff]
    %v3531 = vld [vmem:[#allocation13 + $0x798] sm:$0xff]
    %v3532 = vld [vmem:[#allocation13 + $0x7a0] sm:$0xff]
    %v3533 = vld [vmem:[#allocation13 + $0x7a8] sm:$0xff]
    %v3534 = vld [vmem:[#allocation13 + $0x7b0] sm:$0xff]
    %v3535 = vld [vmem:[#allocation13 + $0x7b8] sm:$0xff]
    %v3536 = vld [vmem:[#allocation13 + $0x7c0] sm:$0xff]
    %v3537 = vld [vmem:[#allocation13 + $0x7c8] sm:$0xff]
    %v3538 = vld [vmem:[#allocation13 + $0x7d0] sm:$0xff]
    %v3539 = vld [vmem:[#allocation13 + $0x7d8] sm:$0xff]
    %v3540 = vld [vmem:[#allocation13 + $0x7e0] sm:$0xff]
    %v3541 = vld [vmem:[#allocation13 + $0x7e8] sm:$0xff]
    %v3542 = vld [vmem:[#allocation13 + $0x7f0] sm:$0xff]
    %v3543 = vld [vmem:[#allocation13 + $0x7f8] sm:$0xff]
    %v3544 = vld [vmem:[#allocation13 + $0x800] sm:$0xff]
    %v3545 = vld [vmem:[#allocation13 + $0x808] sm:$0xff]
    %v3546 = vld [vmem:[#allocation13 + $0x810] sm:$0xff]
    %v3547 = vld [vmem:[#allocation13 + $0x818] sm:$0xff]
    %v3548 = vld [vmem:[#allocation13 + $0x820] sm:$0xff]
    %v3549 = vld [vmem:[#allocation13 + $0x828] sm:$0xff]
    %v3550 = vld [vmem:[#allocation13 + $0x830] sm:$0xff]
    %v3551 = vld [vmem:[#allocation13 + $0x838] sm:$0xff]
    %v3552 = vld [vmem:[#allocation13 + $0x840] sm:$0xff]
    %v3553 = vld [vmem:[#allocation13 + $0x848] sm:$0xff]
    %v3554 = vld [vmem:[#allocation13 + $0x850] sm:$0xff]
    %v3555 = vld [vmem:[#allocation13 + $0x858] sm:$0xff]
    %v3556 = vld [vmem:[#allocation13 + $0x860] sm:$0xff]
    %v3557 = vld [vmem:[#allocation13 + $0x868] sm:$0xff]
    %v3558 = vld [vmem:[#allocation13 + $0x870] sm:$0xff]
    %v3559 = vld [vmem:[#allocation13 + $0x878] sm:$0xff]
    %v3560 = vld [vmem:[#allocation13 + $0x880] sm:$0xff]
    %v3561 = vld [vmem:[#allocation13 + $0x888] sm:$0xff]
    %v3562 = vld [vmem:[#allocation13 + $0x890] sm:$0xff]
    %v3563 = vld [vmem:[#allocation13 + $0x898] sm:$0xff]
    %v3564 = vld [vmem:[#allocation13 + $0x8a0] sm:$0xff]
    %v3565 = vld [vmem:[#allocation13 + $0x8a8] sm:$0xff]
    %v3566 = vld [vmem:[#allocation13 + $0x8b0] sm:$0xff]
    %v3567 = vld [vmem:[#allocation13 + $0x8b8] sm:$0xff]
    %v3568 = vld [vmem:[#allocation13 + $0x8c0] sm:$0xff]
    %v3569 = vld [vmem:[#allocation13 + $0x8c8] sm:$0xff]
    %v3570 = vld [vmem:[#allocation13 + $0x8d0] sm:$0xff]
    %v3571 = vld [vmem:[#allocation13 + $0x8d8] sm:$0xff]
    %v3572 = vld [vmem:[#allocation13 + $0x8e0] sm:$0xff]
    %v3573 = vld [vmem:[#allocation13 + $0x8e8] sm:$0xff]
    %v3574 = vld [vmem:[#allocation13 + $0x8f0] sm:$0xff]
    %v3575 = vld [vmem:[#allocation13 + $0x8f8] sm:$0xff]
    %v3576 = vld [vmem:[#allocation13 + $0x900] sm:$0xff]
    %v3577 = vld [vmem:[#allocation13 + $0x908] sm:$0xff]
    %v3578 = vld [vmem:[#allocation13 + $0x910] sm:$0xff]
    %v3579 = vld [vmem:[#allocation13 + $0x918] sm:$0xff]
    %v3580 = vld [vmem:[#allocation13 + $0x920] sm:$0xff]
    %v3581 = vld [vmem:[#allocation13 + $0x928] sm:$0xff]
    %v3582 = vld [vmem:[#allocation13 + $0x930] sm:$0xff]
    %v3583 = vld [vmem:[#allocation13 + $0x938] sm:$0xff]
    %v3584 = vld [vmem:[#allocation13 + $0x940] sm:$0xff]
    %v3585 = vld [vmem:[#allocation13 + $0x948] sm:$0xff]
    %v3586 = vld [vmem:[#allocation13 + $0x950] sm:$0xff]
    %v3587 = vld [vmem:[#allocation13 + $0x958] sm:$0xff]
    %v3588 = vld [vmem:[#allocation13 + $0x960] sm:$0xff]
    %v3589 = vld [vmem:[#allocation13 + $0x968] sm:$0xff]
    %v3590 = vld [vmem:[#allocation13 + $0x970] sm:$0xff]
    %v3591 = vld [vmem:[#allocation13 + $0x978] sm:$0xff]
    %v3592 = vld [vmem:[#allocation13 + $0x980] sm:$0xff]
    %v3593 = vld [vmem:[#allocation13 + $0x988] sm:$0xff]
    %v3594 = vld [vmem:[#allocation13 + $0x990] sm:$0xff]
    %v3595 = vld [vmem:[#allocation13 + $0x998] sm:$0xff]
    %v3596 = vld [vmem:[#allocation13 + $0x9a0] sm:$0xff]
    %v3597 = vld [vmem:[#allocation13 + $0x9a8] sm:$0xff]
    %v3598 = vld [vmem:[#allocation13 + $0x9b0] sm:$0xff]
    %v3599 = vld [vmem:[#allocation13 + $0x9b8] sm:$0xff]
    %v3600 = vld [vmem:[#allocation13 + $0x9c0] sm:$0xff]
    %v3601 = vld [vmem:[#allocation13 + $0x9c8] sm:$0xff]
    %v3602 = vld [vmem:[#allocation13 + $0x9d0] sm:$0xff]
    %v3603 = vld [vmem:[#allocation13 + $0x9d8] sm:$0xff]
    %v3604 = vld [vmem:[#allocation13 + $0x9e0] sm:$0xff]
    %v3605 = vld [vmem:[#allocation13 + $0x9e8] sm:$0xff]
    %v3606 = vld [vmem:[#allocation13 + $0x9f0] sm:$0xff]
    %v3607 = vld [vmem:[#allocation13 + $0x9f8] sm:$0xff]
    %v3608 = vld [vmem:[#allocation13 + $0xa00] sm:$0xff]
    %v3609 = vld [vmem:[#allocation13 + $0xa08] sm:$0xff]
    %v3610 = vld [vmem:[#allocation13 + $0xa10] sm:$0xff]
    %v3611 = vld [vmem:[#allocation13 + $0xa18] sm:$0xff]
    %v3612 = vld [vmem:[#allocation13 + $0xa20] sm:$0xff]
    %v3613 = vld [vmem:[#allocation13 + $0xa28] sm:$0xff]
    %v3614 = vld [vmem:[#allocation13 + $0xa30] sm:$0xff]
    %v3615 = vld [vmem:[#allocation13 + $0xa38] sm:$0xff]
    %v3616 = vld [vmem:[#allocation13 + $0xa40] sm:$0xff]
    %v3617 = vld [vmem:[#allocation13 + $0xa48] sm:$0xff]
    %v3618 = vld [vmem:[#allocation13 + $0xa50] sm:$0xff]
    %v3619 = vld [vmem:[#allocation13 + $0xa58] sm:$0xff]
    %v3620 = vld [vmem:[#allocation13 + $0xa60] sm:$0xff]
    %v3621 = vld [vmem:[#allocation13 + $0xa68] sm:$0xff]
    %v3622 = vld [vmem:[#allocation13 + $0xa70] sm:$0xff]
    %v3623 = vld [vmem:[#allocation13 + $0xa78] sm:$0xff]
    %v3624 = vld [vmem:[#allocation13 + $0xa80] sm:$0xff]
    %v3625 = vld [vmem:[#allocation13 + $0xa88] sm:$0xff]
    %v3626 = vld [vmem:[#allocation13 + $0xa90] sm:$0xff]
    %v3627 = vld [vmem:[#allocation13 + $0xa98] sm:$0xff]
    %v3628 = vld [vmem:[#allocation13 + $0xaa0] sm:$0xff]
    %v3629 = vld [vmem:[#allocation13 + $0xaa8] sm:$0xff]
    %v3630 = vld [vmem:[#allocation13 + $0xab0] sm:$0xff]
    %v3631 = vld [vmem:[#allocation13 + $0xab8] sm:$0xff]
    %v3632 = vld [vmem:[#allocation13 + $0xac0] sm:$0xff]
    %v3633 = vld [vmem:[#allocation13 + $0xac8] sm:$0xff]
    %v3634 = vld [vmem:[#allocation13 + $0xad0] sm:$0xff]
    %v3635 = vld [vmem:[#allocation13 + $0xad8] sm:$0xff]
    %v3636 = vld [vmem:[#allocation13 + $0xae0] sm:$0xff]
    %v3637 = vld [vmem:[#allocation13 + $0xae8] sm:$0xff]
    %v3638 = vld [vmem:[#allocation13 + $0xaf0] sm:$0xff]
    %v3639 = vld [vmem:[#allocation13 + $0xaf8] sm:$0xff]
    %v3640 = vld [vmem:[#allocation13 + $0xb00] sm:$0xff]
    %v3641 = vld [vmem:[#allocation13 + $0xb08] sm:$0xff]
    %v3642 = vld [vmem:[#allocation13 + $0xb10] sm:$0xff]
    %v3643 = vld [vmem:[#allocation13 + $0xb18] sm:$0xff]
    %v3644 = vld [vmem:[#allocation13 + $0xb20] sm:$0xff]
    %v3645 = vld [vmem:[#allocation13 + $0xb28] sm:$0xff]
    %v3646 = vld [vmem:[#allocation13 + $0xb30] sm:$0xff]
    %v3647 = vld [vmem:[#allocation13 + $0xb38] sm:$0xff]
    %v3648 = vld [vmem:[#allocation13 + $0xb40] sm:$0xff]
    %v3649 = vld [vmem:[#allocation13 + $0xb48] sm:$0xff]
    %v3650 = vld [vmem:[#allocation13 + $0xb50] sm:$0xff]
    %v3651 = vld [vmem:[#allocation13 + $0xb58] sm:$0xff]
    %v3652 = vld [vmem:[#allocation13 + $0xb60] sm:$0xff]
    %v3653 = vld [vmem:[#allocation13 + $0xb68] sm:$0xff]
    %v3654 = vld [vmem:[#allocation13 + $0xb70] sm:$0xff]
    %v3655 = vld [vmem:[#allocation13 + $0xb78] sm:$0xff]
    %v3656 = vld [vmem:[#allocation13 + $0xb80] sm:$0xff]
    %v3657 = vld [vmem:[#allocation13 + $0xb88] sm:$0xff]
    %v3658 = vld [vmem:[#allocation13 + $0xb90] sm:$0xff]
    %v3659 = vld [vmem:[#allocation13 + $0xb98] sm:$0xff]
    %v3660 = vld [vmem:[#allocation13 + $0xba0] sm:$0xff]
    %v3661 = vld [vmem:[#allocation13 + $0xba8] sm:$0xff]
    %v3662 = vld [vmem:[#allocation13 + $0xbb0] sm:$0xff]
    %v3663 = vld [vmem:[#allocation13 + $0xbb8] sm:$0xff]
    %v3664 = vld [vmem:[#allocation13 + $0xbc0] sm:$0xff]
    %v3665 = vld [vmem:[#allocation13 + $0xbc8] sm:$0xff]
    %v3666 = vld [vmem:[#allocation13 + $0xbd0] sm:$0xff]
    %v3667 = vld [vmem:[#allocation13 + $0xbd8] sm:$0xff]
    %v3668 = vld [vmem:[#allocation13 + $0xbe0] sm:$0xff]
    %v3669 = vld [vmem:[#allocation13 + $0xbe8] sm:$0xff]
    %v3670 = vld [vmem:[#allocation13 + $0xbf0] sm:$0xff]
    %v3671 = vld [vmem:[#allocation13 + $0xbf8] sm:$0xff]
    %v3672 = vld [vmem:[#allocation15] sm:$0x3f]
    %v3674 = vlaneseq
    %v3675 = vshrl.u32 %v3674, 7
    %v3676 = vsub.s32 0, %v3675
    %v3677 = vrot.slane %v3672, %v3676
    %v3678 = vlaneseq
    %v3679 = vshrl.u32 %v3678, 7
    %v3680 = vsub.s32 1, %v3679
    %v3681 = vrot.slane %v3672, %v3680
    %v3682 = vlaneseq
    %v3683 = vshrl.u32 %v3682, 7
    %v3684 = vsub.s32 2, %v3683
    %v3685 = vrot.slane %v3672, %v3684
    %v3686 = vlaneseq
    %v3687 = vshrl.u32 %v3686, 7
    %v3688 = vsub.s32 3, %v3687
    %v3689 = vrot.slane %v3672, %v3688
    %v3690 = vlaneseq
    %v3691 = vshrl.u32 %v3690, 7
    %v3692 = vsub.s32 4, %v3691
    %v3693 = vrot.slane %v3672, %v3692
    %v3694 = vlaneseq
    %v3695 = vshrl.u32 %v3694, 7
    %v3696 = vsub.s32 5, %v3695
    %v3697 = vrot.slane %v3672, %v3696
    %v4088 = vunpack.c.l.b16 %v3288
    %v4089 = vunpack.c.h.b16 %v3288
    %v4090 = vunpack.c.l.b16 %v3289
    %v4091 = vunpack.c.h.b16 %v3289
    %v4092 = vunpack.c.l.b16 %v3290
    %v4093 = vunpack.c.h.b16 %v3290
    %v4094 = vunpack.c.l.b16 %v3291
    %v4095 = vunpack.c.h.b16 %v3291
    %v4096 = vunpack.c.l.b16 %v3292
    %v4097 = vunpack.c.h.b16 %v3292
    %v4098 = vunpack.c.l.b16 %v3293
    %v4099 = vunpack.c.h.b16 %v3293
    %v4100 = vunpack.c.l.b16 %v3294
    %v4101 = vunpack.c.h.b16 %v3294
    %v4102 = vunpack.c.l.b16 %v3295
    %v4103 = vunpack.c.h.b16 %v3295
    %v4104 = vunpack.c.l.b16 %v3296
    %v4105 = vunpack.c.h.b16 %v3296
    %v4106 = vunpack.c.l.b16 %v3297
    %v4107 = vunpack.c.h.b16 %v3297
    %v4108 = vunpack.c.l.b16 %v3298
    %v4109 = vunpack.c.h.b16 %v3298
    %v4110 = vunpack.c.l.b16 %v3299
    %v4111 = vunpack.c.h.b16 %v3299
    %v4112 = vunpack.c.l.b16 %v3300
    %v4113 = vunpack.c.h.b16 %v3300
    %v4114 = vunpack.c.l.b16 %v3301
    %v4115 = vunpack.c.h.b16 %v3301
    %v4116 = vunpack.c.l.b16 %v3302
    %v4117 = vunpack.c.h.b16 %v3302
    %v4118 = vunpack.c.l.b16 %v3303
    %v4119 = vunpack.c.h.b16 %v3303
    %v4120 = vunpack.c.l.b16 %v3304
    %v4121 = vunpack.c.h.b16 %v3304
    %v4122 = vunpack.c.l.b16 %v3305
    %v4123 = vunpack.c.h.b16 %v3305
    %v4124 = vunpack.c.l.b16 %v3306
    %v4125 = vunpack.c.h.b16 %v3306
    %v4126 = vunpack.c.l.b16 %v3307
    %v4127 = vunpack.c.h.b16 %v3307
    %v4128 = vunpack.c.l.b16 %v3308
    %v4129 = vunpack.c.h.b16 %v3308
    %v4130 = vunpack.c.l.b16 %v3309
    %v4131 = vunpack.c.h.b16 %v3309
    %v4132 = vunpack.c.l.b16 %v3310
    %v4133 = vunpack.c.h.b16 %v3310
    %v4134 = vunpack.c.l.b16 %v3311
    %v4135 = vunpack.c.h.b16 %v3311
    %v4136 = vunpack.c.l.b16 %v3312
    %v4137 = vunpack.c.h.b16 %v3312
    %v4138 = vunpack.c.l.b16 %v3313
    %v4139 = vunpack.c.h.b16 %v3313
    %v4140 = vunpack.c.l.b16 %v3314
    %v4141 = vunpack.c.h.b16 %v3314
    %v4142 = vunpack.c.l.b16 %v3315
    %v4143 = vunpack.c.h.b16 %v3315
    %v4144 = vunpack.c.l.b16 %v3316
    %v4145 = vunpack.c.h.b16 %v3316
    %v4146 = vunpack.c.l.b16 %v3317
    %v4147 = vunpack.c.h.b16 %v3317
    %v4148 = vunpack.c.l.b16 %v3318
    %v4149 = vunpack.c.h.b16 %v3318
    %v4150 = vunpack.c.l.b16 %v3319
    %v4151 = vunpack.c.h.b16 %v3319
    %v4152 = vunpack.c.l.b16 %v3320
    %v4153 = vunpack.c.h.b16 %v3320
    %v4154 = vunpack.c.l.b16 %v3321
    %v4155 = vunpack.c.h.b16 %v3321
    %v4156 = vunpack.c.l.b16 %v3322
    %v4157 = vunpack.c.h.b16 %v3322
    %v4158 = vunpack.c.l.b16 %v3323
    %v4159 = vunpack.c.h.b16 %v3323
    %v4160 = vunpack.c.l.b16 %v3324
    %v4161 = vunpack.c.h.b16 %v3324
    %v4162 = vunpack.c.l.b16 %v3325
    %v4163 = vunpack.c.h.b16 %v3325
    %v4164 = vunpack.c.l.b16 %v3326
    %v4165 = vunpack.c.h.b16 %v3326
    %v4166 = vunpack.c.l.b16 %v3327
    %v4167 = vunpack.c.h.b16 %v3327
    %v4168 = vunpack.c.l.b16 %v3328
    %v4169 = vunpack.c.h.b16 %v3328
    %v4170 = vunpack.c.l.b16 %v3329
    %v4171 = vunpack.c.h.b16 %v3329
    %v4172 = vunpack.c.l.b16 %v3330
    %v4173 = vunpack.c.h.b16 %v3330
    %v4174 = vunpack.c.l.b16 %v3331
    %v4175 = vunpack.c.h.b16 %v3331
    %v4176 = vunpack.c.l.b16 %v3332
    %v4177 = vunpack.c.h.b16 %v3332
    %v4178 = vunpack.c.l.b16 %v3333
    %v4179 = vunpack.c.h.b16 %v3333
    %v4180 = vunpack.c.l.b16 %v3334
    %v4181 = vunpack.c.h.b16 %v3334
    %v4182 = vunpack.c.l.b16 %v3335
    %v4183 = vunpack.c.h.b16 %v3335
    %v4184 = vunpack.c.l.b16 %v3336
    %v4185 = vunpack.c.h.b16 %v3336
    %v4186 = vunpack.c.l.b16 %v3337
    %v4187 = vunpack.c.h.b16 %v3337
    %v4188 = vunpack.c.l.b16 %v3338
    %v4189 = vunpack.c.h.b16 %v3338
    %v4190 = vunpack.c.l.b16 %v3339
    %v4191 = vunpack.c.h.b16 %v3339
    %v4192 = vunpack.c.l.b16 %v3340
    %v4193 = vunpack.c.h.b16 %v3340
    %v4194 = vunpack.c.l.b16 %v3341
    %v4195 = vunpack.c.h.b16 %v3341
    %v4196 = vunpack.c.l.b16 %v3342
    %v4197 = vunpack.c.h.b16 %v3342
    %v4198 = vunpack.c.l.b16 %v3343
    %v4199 = vunpack.c.h.b16 %v3343
    %v4200 = vunpack.c.l.b16 %v3344
    %v4201 = vunpack.c.h.b16 %v3344
    %v4202 = vunpack.c.l.b16 %v3345
    %v4203 = vunpack.c.h.b16 %v3345
    %v4204 = vunpack.c.l.b16 %v3346
    %v4205 = vunpack.c.h.b16 %v3346
    %v4206 = vunpack.c.l.b16 %v3347
    %v4207 = vunpack.c.h.b16 %v3347
    %v4208 = vunpack.c.l.b16 %v3348
    %v4209 = vunpack.c.h.b16 %v3348
    %v4210 = vunpack.c.l.b16 %v3349
    %v4211 = vunpack.c.h.b16 %v3349
    %v4212 = vunpack.c.l.b16 %v3350
    %v4213 = vunpack.c.h.b16 %v3350
    %v4214 = vunpack.c.l.b16 %v3351
    %v4215 = vunpack.c.h.b16 %v3351
    %v4216 = vunpack.c.l.b16 %v3352
    %v4217 = vunpack.c.h.b16 %v3352
    %v4218 = vunpack.c.l.b16 %v3353
    %v4219 = vunpack.c.h.b16 %v3353
    %v4220 = vunpack.c.l.b16 %v3354
    %v4221 = vunpack.c.h.b16 %v3354
    %v4222 = vunpack.c.l.b16 %v3355
    %v4223 = vunpack.c.h.b16 %v3355
    %v4224 = vunpack.c.l.b16 %v3356
    %v4225 = vunpack.c.h.b16 %v3356
    %v4226 = vunpack.c.l.b16 %v3357
    %v4227 = vunpack.c.h.b16 %v3357
    %v4228 = vunpack.c.l.b16 %v3358
    %v4229 = vunpack.c.h.b16 %v3358
    %v4230 = vunpack.c.l.b16 %v3359
    %v4231 = vunpack.c.h.b16 %v3359
    %v4232 = vunpack.c.l.b16 %v3360
    %v4233 = vunpack.c.h.b16 %v3360
    %v4234 = vunpack.c.l.b16 %v3361
    %v4235 = vunpack.c.h.b16 %v3361
    %v4236 = vunpack.c.l.b16 %v3362
    %v4237 = vunpack.c.h.b16 %v3362
    %v4238 = vunpack.c.l.b16 %v3363
    %v4239 = vunpack.c.h.b16 %v3363
    %v4240 = vunpack.c.l.b16 %v3364
    %v4241 = vunpack.c.h.b16 %v3364
    %v4242 = vunpack.c.l.b16 %v3365
    %v4243 = vunpack.c.h.b16 %v3365
    %v4244 = vunpack.c.l.b16 %v3366
    %v4245 = vunpack.c.h.b16 %v3366
    %v4246 = vunpack.c.l.b16 %v3367
    %v4247 = vunpack.c.h.b16 %v3367
    %v4248 = vunpack.c.l.b16 %v3368
    %v4249 = vunpack.c.h.b16 %v3368
    %v4250 = vunpack.c.l.b16 %v3369
    %v4251 = vunpack.c.h.b16 %v3369
    %v4252 = vunpack.c.l.b16 %v3370
    %v4253 = vunpack.c.h.b16 %v3370
    %v4254 = vunpack.c.l.b16 %v3371
    %v4255 = vunpack.c.h.b16 %v3371
    %v4256 = vunpack.c.l.b16 %v3372
    %v4257 = vunpack.c.h.b16 %v3372
    %v4258 = vunpack.c.l.b16 %v3373
    %v4259 = vunpack.c.h.b16 %v3373
    %v4260 = vunpack.c.l.b16 %v3374
    %v4261 = vunpack.c.h.b16 %v3374
    %v4262 = vunpack.c.l.b16 %v3375
    %v4263 = vunpack.c.h.b16 %v3375
    %v4264 = vunpack.c.l.b16 %v3376
    %v4265 = vunpack.c.h.b16 %v3376
    %v4266 = vunpack.c.l.b16 %v3377
    %v4267 = vunpack.c.h.b16 %v3377
    %v4268 = vunpack.c.l.b16 %v3378
    %v4269 = vunpack.c.h.b16 %v3378
    %v4270 = vunpack.c.l.b16 %v3379
    %v4271 = vunpack.c.h.b16 %v3379
    %v4272 = vunpack.c.l.b16 %v3380
    %v4273 = vunpack.c.h.b16 %v3380
    %v4274 = vunpack.c.l.b16 %v3381
    %v4275 = vunpack.c.h.b16 %v3381
    %v4276 = vunpack.c.l.b16 %v3382
    %v4277 = vunpack.c.h.b16 %v3382
    %v4278 = vunpack.c.l.b16 %v3383
    %v4279 = vunpack.c.h.b16 %v3383
    %v4280 = vunpack.c.l.b16 %v3384
    %v4281 = vunpack.c.h.b16 %v3384
    %v4282 = vunpack.c.l.b16 %v3385
    %v4283 = vunpack.c.h.b16 %v3385
    %v4284 = vunpack.c.l.b16 %v3386
    %v4285 = vunpack.c.h.b16 %v3386
    %v4286 = vunpack.c.l.b16 %v3387
    %v4287 = vunpack.c.h.b16 %v3387
    %v4288 = vunpack.c.l.b16 %v3388
    %v4289 = vunpack.c.h.b16 %v3388
    %v4290 = vunpack.c.l.b16 %v3389
    %v4291 = vunpack.c.h.b16 %v3389
    %v4292 = vunpack.c.l.b16 %v3390
    %v4293 = vunpack.c.h.b16 %v3390
    %v4294 = vunpack.c.l.b16 %v3391
    %v4295 = vunpack.c.h.b16 %v3391
    %v4296 = vunpack.c.l.b16 %v3392
    %v4297 = vunpack.c.h.b16 %v3392
    %v4298 = vunpack.c.l.b16 %v3393
    %v4299 = vunpack.c.h.b16 %v3393
    %v4300 = vunpack.c.l.b16 %v3394
    %v4301 = vunpack.c.h.b16 %v3394
    %v4302 = vunpack.c.l.b16 %v3395
    %v4303 = vunpack.c.h.b16 %v3395
    %v4304 = vunpack.c.l.b16 %v3396
    %v4305 = vunpack.c.h.b16 %v3396
    %v4306 = vunpack.c.l.b16 %v3397
    %v4307 = vunpack.c.h.b16 %v3397
    %v4308 = vunpack.c.l.b16 %v3398
    %v4309 = vunpack.c.h.b16 %v3398
    %v4310 = vunpack.c.l.b16 %v3399
    %v4311 = vunpack.c.h.b16 %v3399
    %v4312 = vunpack.c.l.b16 %v3400
    %v4313 = vunpack.c.h.b16 %v3400
    %v4314 = vunpack.c.l.b16 %v3401
    %v4315 = vunpack.c.h.b16 %v3401
    %v4316 = vunpack.c.l.b16 %v3402
    %v4317 = vunpack.c.h.b16 %v3402
    %v4318 = vunpack.c.l.b16 %v3403
    %v4319 = vunpack.c.h.b16 %v3403
    %v4320 = vunpack.c.l.b16 %v3404
    %v4321 = vunpack.c.h.b16 %v3404
    %v4322 = vunpack.c.l.b16 %v3405
    %v4323 = vunpack.c.h.b16 %v3405
    %v4324 = vunpack.c.l.b16 %v3406
    %v4325 = vunpack.c.h.b16 %v3406
    %v4326 = vunpack.c.l.b16 %v3407
    %v4327 = vunpack.c.h.b16 %v3407
    %v4328 = vunpack.c.l.b16 %v3408
    %v4329 = vunpack.c.h.b16 %v3408
    %v4330 = vunpack.c.l.b16 %v3409
    %v4331 = vunpack.c.h.b16 %v3409
    %v4332 = vunpack.c.l.b16 %v3410
    %v4333 = vunpack.c.h.b16 %v3410
    %v4334 = vunpack.c.l.b16 %v3411
    %v4335 = vunpack.c.h.b16 %v3411
    %v4336 = vunpack.c.l.b16 %v3412
    %v4337 = vunpack.c.h.b16 %v3412
    %v4338 = vunpack.c.l.b16 %v3413
    %v4339 = vunpack.c.h.b16 %v3413
    %v4340 = vunpack.c.l.b16 %v3414
    %v4341 = vunpack.c.h.b16 %v3414
    %v4342 = vunpack.c.l.b16 %v3415
    %v4343 = vunpack.c.h.b16 %v3415
    %v4344 = vunpack.c.l.b16 %v3416
    %v4345 = vunpack.c.h.b16 %v3416
    %v4346 = vunpack.c.l.b16 %v3417
    %v4347 = vunpack.c.h.b16 %v3417
    %v4348 = vunpack.c.l.b16 %v3418
    %v4349 = vunpack.c.h.b16 %v3418
    %v4350 = vunpack.c.l.b16 %v3419
    %v4351 = vunpack.c.h.b16 %v3419
    %v4352 = vunpack.c.l.b16 %v3420
    %v4353 = vunpack.c.h.b16 %v3420
    %v4354 = vunpack.c.l.b16 %v3421
    %v4355 = vunpack.c.h.b16 %v3421
    %v4356 = vunpack.c.l.b16 %v3422
    %v4357 = vunpack.c.h.b16 %v3422
    %v4358 = vunpack.c.l.b16 %v3423
    %v4359 = vunpack.c.h.b16 %v3423
    %v4360 = vunpack.c.l.b16 %v3424
    %v4361 = vunpack.c.h.b16 %v3424
    %v4362 = vunpack.c.l.b16 %v3425
    %v4363 = vunpack.c.h.b16 %v3425
    %v4364 = vunpack.c.l.b16 %v3426
    %v4365 = vunpack.c.h.b16 %v3426
    %v4366 = vunpack.c.l.b16 %v3427
    %v4367 = vunpack.c.h.b16 %v3427
    %v4368 = vunpack.c.l.b16 %v3428
    %v4369 = vunpack.c.h.b16 %v3428
    %v4370 = vunpack.c.l.b16 %v3429
    %v4371 = vunpack.c.h.b16 %v3429
    %v4372 = vunpack.c.l.b16 %v3430
    %v4373 = vunpack.c.h.b16 %v3430
    %v4374 = vunpack.c.l.b16 %v3431
    %v4375 = vunpack.c.h.b16 %v3431
    %v4376 = vunpack.c.l.b16 %v3432
    %v4377 = vunpack.c.h.b16 %v3432
    %v4378 = vunpack.c.l.b16 %v3433
    %v4379 = vunpack.c.h.b16 %v3433
    %v4380 = vunpack.c.l.b16 %v3434
    %v4381 = vunpack.c.h.b16 %v3434
    %v4382 = vunpack.c.l.b16 %v3435
    %v4383 = vunpack.c.h.b16 %v3435
    %v4384 = vunpack.c.l.b16 %v3436
    %v4385 = vunpack.c.h.b16 %v3436
    %v4386 = vunpack.c.l.b16 %v3437
    %v4387 = vunpack.c.h.b16 %v3437
    %v4388 = vunpack.c.l.b16 %v3438
    %v4389 = vunpack.c.h.b16 %v3438
    %v4390 = vunpack.c.l.b16 %v3439
    %v4391 = vunpack.c.h.b16 %v3439
    %v4392 = vunpack.c.l.b16 %v3440
    %v4393 = vunpack.c.h.b16 %v3440
    %v4394 = vunpack.c.l.b16 %v3441
    %v4395 = vunpack.c.h.b16 %v3441
    %v4396 = vunpack.c.l.b16 %v3442
    %v4397 = vunpack.c.h.b16 %v3442
    %v4398 = vunpack.c.l.b16 %v3443
    %v4399 = vunpack.c.h.b16 %v3443
    %v4400 = vunpack.c.l.b16 %v3444
    %v4401 = vunpack.c.h.b16 %v3444
    %v4402 = vunpack.c.l.b16 %v3445
    %v4403 = vunpack.c.h.b16 %v3445
    %v4404 = vunpack.c.l.b16 %v3446
    %v4405 = vunpack.c.h.b16 %v3446
    %v4406 = vunpack.c.l.b16 %v3447
    %v4407 = vunpack.c.h.b16 %v3447
    %v4408 = vunpack.c.l.b16 %v3448
    %v4409 = vunpack.c.h.b16 %v3448
    %v4410 = vunpack.c.l.b16 %v3449
    %v4411 = vunpack.c.h.b16 %v3449
    %v4412 = vunpack.c.l.b16 %v3450
    %v4413 = vunpack.c.h.b16 %v3450
    %v4414 = vunpack.c.l.b16 %v3451
    %v4415 = vunpack.c.h.b16 %v3451
    %v4416 = vunpack.c.l.b16 %v3452
    %v4417 = vunpack.c.h.b16 %v3452
    %v4418 = vunpack.c.l.b16 %v3453
    %v4419 = vunpack.c.h.b16 %v3453
    %v4420 = vunpack.c.l.b16 %v3454
    %v4421 = vunpack.c.h.b16 %v3454
    %v4422 = vunpack.c.l.b16 %v3455
    %v4423 = vunpack.c.h.b16 %v3455
    %v4424 = vunpack.c.l.b16 %v3456
    %v4425 = vunpack.c.h.b16 %v3456
    %v4426 = vunpack.c.l.b16 %v3457
    %v4427 = vunpack.c.h.b16 %v3457
    %v4428 = vunpack.c.l.b16 %v3458
    %v4429 = vunpack.c.h.b16 %v3458
    %v4430 = vunpack.c.l.b16 %v3459
    %v4431 = vunpack.c.h.b16 %v3459
    %v4432 = vunpack.c.l.b16 %v3460
    %v4433 = vunpack.c.h.b16 %v3460
    %v4434 = vunpack.c.l.b16 %v3461
    %v4435 = vunpack.c.h.b16 %v3461
    %v4436 = vunpack.c.l.b16 %v3462
    %v4437 = vunpack.c.h.b16 %v3462
    %v4438 = vunpack.c.l.b16 %v3463
    %v4439 = vunpack.c.h.b16 %v3463
    %v4440 = vunpack.c.l.b16 %v3464
    %v4441 = vunpack.c.h.b16 %v3464
    %v4442 = vunpack.c.l.b16 %v3465
    %v4443 = vunpack.c.h.b16 %v3465
    %v4444 = vunpack.c.l.b16 %v3466
    %v4445 = vunpack.c.h.b16 %v3466
    %v4446 = vunpack.c.l.b16 %v3467
    %v4447 = vunpack.c.h.b16 %v3467
    %v4448 = vunpack.c.l.b16 %v3468
    %v4449 = vunpack.c.h.b16 %v3468
    %v4450 = vunpack.c.l.b16 %v3469
    %v4451 = vunpack.c.h.b16 %v3469
    %v4452 = vunpack.c.l.b16 %v3470
    %v4453 = vunpack.c.h.b16 %v3470
    %v4454 = vunpack.c.l.b16 %v3471
    %v4455 = vunpack.c.h.b16 %v3471
    %v4456 = vunpack.c.l.b16 %v3472
    %v4457 = vunpack.c.h.b16 %v3472
    %v4458 = vunpack.c.l.b16 %v3473
    %v4459 = vunpack.c.h.b16 %v3473
    %v4460 = vunpack.c.l.b16 %v3474
    %v4461 = vunpack.c.h.b16 %v3474
    %v4462 = vunpack.c.l.b16 %v3475
    %v4463 = vunpack.c.h.b16 %v3475
    %v4464 = vunpack.c.l.b16 %v3476
    %v4465 = vunpack.c.h.b16 %v3476
    %v4466 = vunpack.c.l.b16 %v3477
    %v4467 = vunpack.c.h.b16 %v3477
    %v4468 = vunpack.c.l.b16 %v3478
    %v4469 = vunpack.c.h.b16 %v3478
    %v4470 = vunpack.c.l.b16 %v3479
    %v4471 = vunpack.c.h.b16 %v3479
    %v4472 = vunpack.c.l.b16 %v3480
    %v4473 = vunpack.c.h.b16 %v3480
    %v4474 = vunpack.c.l.b16 %v3481
    %v4475 = vunpack.c.h.b16 %v3481
    %v4476 = vunpack.c.l.b16 %v3482
    %v4477 = vunpack.c.h.b16 %v3482
    %v4478 = vunpack.c.l.b16 %v3483
    %v4479 = vunpack.c.h.b16 %v3483
    %v4480 = vunpack.c.l.b16 %v3484
    %v4481 = vunpack.c.h.b16 %v3484
    %v4482 = vunpack.c.l.b16 %v3485
    %v4483 = vunpack.c.h.b16 %v3485
    %v4484 = vunpack.c.l.b16 %v3486
    %v4485 = vunpack.c.h.b16 %v3486
    %v4486 = vunpack.c.l.b16 %v3487
    %v4487 = vunpack.c.h.b16 %v3487
    %v4488 = vunpack.c.l.b16 %v3488
    %v4489 = vunpack.c.h.b16 %v3488
    %v4490 = vunpack.c.l.b16 %v3489
    %v4491 = vunpack.c.h.b16 %v3489
    %v4492 = vunpack.c.l.b16 %v3490
    %v4493 = vunpack.c.h.b16 %v3490
    %v4494 = vunpack.c.l.b16 %v3491
    %v4495 = vunpack.c.h.b16 %v3491
    %v4496 = vunpack.c.l.b16 %v3492
    %v4497 = vunpack.c.h.b16 %v3492
    %v4498 = vunpack.c.l.b16 %v3493
    %v4499 = vunpack.c.h.b16 %v3493
    %v4500 = vunpack.c.l.b16 %v3494
    %v4501 = vunpack.c.h.b16 %v3494
    %v4502 = vunpack.c.l.b16 %v3495
    %v4503 = vunpack.c.h.b16 %v3495
    %v4504 = vunpack.c.l.b16 %v3496
    %v4505 = vunpack.c.h.b16 %v3496
    %v4506 = vunpack.c.l.b16 %v3497
    %v4507 = vunpack.c.h.b16 %v3497
    %v4508 = vunpack.c.l.b16 %v3498
    %v4509 = vunpack.c.h.b16 %v3498
    %v4510 = vunpack.c.l.b16 %v3499
    %v4511 = vunpack.c.h.b16 %v3499
    %v4512 = vunpack.c.l.b16 %v3500
    %v4513 = vunpack.c.h.b16 %v3500
    %v4514 = vunpack.c.l.b16 %v3501
    %v4515 = vunpack.c.h.b16 %v3501
    %v4516 = vunpack.c.l.b16 %v3502
    %v4517 = vunpack.c.h.b16 %v3502
    %v4518 = vunpack.c.l.b16 %v3503
    %v4519 = vunpack.c.h.b16 %v3503
    %v4520 = vunpack.c.l.b16 %v3504
    %v4521 = vunpack.c.h.b16 %v3504
    %v4522 = vunpack.c.l.b16 %v3505
    %v4523 = vunpack.c.h.b16 %v3505
    %v4524 = vunpack.c.l.b16 %v3506
    %v4525 = vunpack.c.h.b16 %v3506
    %v4526 = vunpack.c.l.b16 %v3507
    %v4527 = vunpack.c.h.b16 %v3507
    %v4528 = vunpack.c.l.b16 %v3508
    %v4529 = vunpack.c.h.b16 %v3508
    %v4530 = vunpack.c.l.b16 %v3509
    %v4531 = vunpack.c.h.b16 %v3509
    %v4532 = vunpack.c.l.b16 %v3510
    %v4533 = vunpack.c.h.b16 %v3510
    %v4534 = vunpack.c.l.b16 %v3511
    %v4535 = vunpack.c.h.b16 %v3511
    %v4536 = vunpack.c.l.b16 %v3512
    %v4537 = vunpack.c.h.b16 %v3512
    %v4538 = vunpack.c.l.b16 %v3513
    %v4539 = vunpack.c.h.b16 %v3513
    %v4540 = vunpack.c.l.b16 %v3514
    %v4541 = vunpack.c.h.b16 %v3514
    %v4542 = vunpack.c.l.b16 %v3515
    %v4543 = vunpack.c.h.b16 %v3515
    %v4544 = vunpack.c.l.b16 %v3516
    %v4545 = vunpack.c.h.b16 %v3516
    %v4546 = vunpack.c.l.b16 %v3517
    %v4547 = vunpack.c.h.b16 %v3517
    %v4548 = vunpack.c.l.b16 %v3518
    %v4549 = vunpack.c.h.b16 %v3518
    %v4550 = vunpack.c.l.b16 %v3519
    %v4551 = vunpack.c.h.b16 %v3519
    %v4552 = vunpack.c.l.b16 %v3520
    %v4553 = vunpack.c.h.b16 %v3520
    %v4554 = vunpack.c.l.b16 %v3521
    %v4555 = vunpack.c.h.b16 %v3521
    %v4556 = vunpack.c.l.b16 %v3522
    %v4557 = vunpack.c.h.b16 %v3522
    %v4558 = vunpack.c.l.b16 %v3523
    %v4559 = vunpack.c.h.b16 %v3523
    %v4560 = vunpack.c.l.b16 %v3524
    %v4561 = vunpack.c.h.b16 %v3524
    %v4562 = vunpack.c.l.b16 %v3525
    %v4563 = vunpack.c.h.b16 %v3525
    %v4564 = vunpack.c.l.b16 %v3526
    %v4565 = vunpack.c.h.b16 %v3526
    %v4566 = vunpack.c.l.b16 %v3527
    %v4567 = vunpack.c.h.b16 %v3527
    %v4568 = vunpack.c.l.b16 %v3528
    %v4569 = vunpack.c.h.b16 %v3528
    %v4570 = vunpack.c.l.b16 %v3529
    %v4571 = vunpack.c.h.b16 %v3529
    %v4572 = vunpack.c.l.b16 %v3530
    %v4573 = vunpack.c.h.b16 %v3530
    %v4574 = vunpack.c.l.b16 %v3531
    %v4575 = vunpack.c.h.b16 %v3531
    %v4576 = vunpack.c.l.b16 %v3532
    %v4577 = vunpack.c.h.b16 %v3532
    %v4578 = vunpack.c.l.b16 %v3533
    %v4579 = vunpack.c.h.b16 %v3533
    %v4580 = vunpack.c.l.b16 %v3534
    %v4581 = vunpack.c.h.b16 %v3534
    %v4582 = vunpack.c.l.b16 %v3535
    %v4583 = vunpack.c.h.b16 %v3535
    %v4584 = vunpack.c.l.b16 %v3536
    %v4585 = vunpack.c.h.b16 %v3536
    %v4586 = vunpack.c.l.b16 %v3537
    %v4587 = vunpack.c.h.b16 %v3537
    %v4588 = vunpack.c.l.b16 %v3538
    %v4589 = vunpack.c.h.b16 %v3538
    %v4590 = vunpack.c.l.b16 %v3539
    %v4591 = vunpack.c.h.b16 %v3539
    %v4592 = vunpack.c.l.b16 %v3540
    %v4593 = vunpack.c.h.b16 %v3540
    %v4594 = vunpack.c.l.b16 %v3541
    %v4595 = vunpack.c.h.b16 %v3541
    %v4596 = vunpack.c.l.b16 %v3542
    %v4597 = vunpack.c.h.b16 %v3542
    %v4598 = vunpack.c.l.b16 %v3543
    %v4599 = vunpack.c.h.b16 %v3543
    %v4600 = vunpack.c.l.b16 %v3544
    %v4601 = vunpack.c.h.b16 %v3544
    %v4602 = vunpack.c.l.b16 %v3545
    %v4603 = vunpack.c.h.b16 %v3545
    %v4604 = vunpack.c.l.b16 %v3546
    %v4605 = vunpack.c.h.b16 %v3546
    %v4606 = vunpack.c.l.b16 %v3547
    %v4607 = vunpack.c.h.b16 %v3547
    %v4608 = vunpack.c.l.b16 %v3548
    %v4609 = vunpack.c.h.b16 %v3548
    %v4610 = vunpack.c.l.b16 %v3549
    %v4611 = vunpack.c.h.b16 %v3549
    %v4612 = vunpack.c.l.b16 %v3550
    %v4613 = vunpack.c.h.b16 %v3550
    %v4614 = vunpack.c.l.b16 %v3551
    %v4615 = vunpack.c.h.b16 %v3551
    %v4616 = vunpack.c.l.b16 %v3552
    %v4617 = vunpack.c.h.b16 %v3552
    %v4618 = vunpack.c.l.b16 %v3553
    %v4619 = vunpack.c.h.b16 %v3553
    %v4620 = vunpack.c.l.b16 %v3554
    %v4621 = vunpack.c.h.b16 %v3554
    %v4622 = vunpack.c.l.b16 %v3555
    %v4623 = vunpack.c.h.b16 %v3555
    %v4624 = vunpack.c.l.b16 %v3556
    %v4625 = vunpack.c.h.b16 %v3556
    %v4626 = vunpack.c.l.b16 %v3557
    %v4627 = vunpack.c.h.b16 %v3557
    %v4628 = vunpack.c.l.b16 %v3558
    %v4629 = vunpack.c.h.b16 %v3558
    %v4630 = vunpack.c.l.b16 %v3559
    %v4631 = vunpack.c.h.b16 %v3559
    %v4632 = vunpack.c.l.b16 %v3560
    %v4633 = vunpack.c.h.b16 %v3560
    %v4634 = vunpack.c.l.b16 %v3561
    %v4635 = vunpack.c.h.b16 %v3561
    %v4636 = vunpack.c.l.b16 %v3562
    %v4637 = vunpack.c.h.b16 %v3562
    %v4638 = vunpack.c.l.b16 %v3563
    %v4639 = vunpack.c.h.b16 %v3563
    %v4640 = vunpack.c.l.b16 %v3564
    %v4641 = vunpack.c.h.b16 %v3564
    %v4642 = vunpack.c.l.b16 %v3565
    %v4643 = vunpack.c.h.b16 %v3565
    %v4644 = vunpack.c.l.b16 %v3566
    %v4645 = vunpack.c.h.b16 %v3566
    %v4646 = vunpack.c.l.b16 %v3567
    %v4647 = vunpack.c.h.b16 %v3567
    %v4648 = vunpack.c.l.b16 %v3568
    %v4649 = vunpack.c.h.b16 %v3568
    %v4650 = vunpack.c.l.b16 %v3569
    %v4651 = vunpack.c.h.b16 %v3569
    %v4652 = vunpack.c.l.b16 %v3570
    %v4653 = vunpack.c.h.b16 %v3570
    %v4654 = vunpack.c.l.b16 %v3571
    %v4655 = vunpack.c.h.b16 %v3571
    %v4656 = vunpack.c.l.b16 %v3572
    %v4657 = vunpack.c.h.b16 %v3572
    %v4658 = vunpack.c.l.b16 %v3573
    %v4659 = vunpack.c.h.b16 %v3573
    %v4660 = vunpack.c.l.b16 %v3574
    %v4661 = vunpack.c.h.b16 %v3574
    %v4662 = vunpack.c.l.b16 %v3575
    %v4663 = vunpack.c.h.b16 %v3575
    %v4664 = vunpack.c.l.b16 %v3576
    %v4665 = vunpack.c.h.b16 %v3576
    %v4666 = vunpack.c.l.b16 %v3577
    %v4667 = vunpack.c.h.b16 %v3577
    %v4668 = vunpack.c.l.b16 %v3578
    %v4669 = vunpack.c.h.b16 %v3578
    %v4670 = vunpack.c.l.b16 %v3579
    %v4671 = vunpack.c.h.b16 %v3579
    %v4672 = vunpack.c.l.b16 %v3580
    %v4673 = vunpack.c.h.b16 %v3580
    %v4674 = vunpack.c.l.b16 %v3581
    %v4675 = vunpack.c.h.b16 %v3581
    %v4676 = vunpack.c.l.b16 %v3582
    %v4677 = vunpack.c.h.b16 %v3582
    %v4678 = vunpack.c.l.b16 %v3583
    %v4679 = vunpack.c.h.b16 %v3583
    %v4680 = vunpack.c.l.b16 %v3584
    %v4681 = vunpack.c.h.b16 %v3584
    %v4682 = vunpack.c.l.b16 %v3585
    %v4683 = vunpack.c.h.b16 %v3585
    %v4684 = vunpack.c.l.b16 %v3586
    %v4685 = vunpack.c.h.b16 %v3586
    %v4686 = vunpack.c.l.b16 %v3587
    %v4687 = vunpack.c.h.b16 %v3587
    %v4688 = vunpack.c.l.b16 %v3588
    %v4689 = vunpack.c.h.b16 %v3588
    %v4690 = vunpack.c.l.b16 %v3589
    %v4691 = vunpack.c.h.b16 %v3589
    %v4692 = vunpack.c.l.b16 %v3590
    %v4693 = vunpack.c.h.b16 %v3590
    %v4694 = vunpack.c.l.b16 %v3591
    %v4695 = vunpack.c.h.b16 %v3591
    %v4696 = vunpack.c.l.b16 %v3592
    %v4697 = vunpack.c.h.b16 %v3592
    %v4698 = vunpack.c.l.b16 %v3593
    %v4699 = vunpack.c.h.b16 %v3593
    %v4700 = vunpack.c.l.b16 %v3594
    %v4701 = vunpack.c.h.b16 %v3594
    %v4702 = vunpack.c.l.b16 %v3595
    %v4703 = vunpack.c.h.b16 %v3595
    %v4704 = vunpack.c.l.b16 %v3596
    %v4705 = vunpack.c.h.b16 %v3596
    %v4706 = vunpack.c.l.b16 %v3597
    %v4707 = vunpack.c.h.b16 %v3597
    %v4708 = vunpack.c.l.b16 %v3598
    %v4709 = vunpack.c.h.b16 %v3598
    %v4710 = vunpack.c.l.b16 %v3599
    %v4711 = vunpack.c.h.b16 %v3599
    %v4712 = vunpack.c.l.b16 %v3600
    %v4713 = vunpack.c.h.b16 %v3600
    %v4714 = vunpack.c.l.b16 %v3601
    %v4715 = vunpack.c.h.b16 %v3601
    %v4716 = vunpack.c.l.b16 %v3602
    %v4717 = vunpack.c.h.b16 %v3602
    %v4718 = vunpack.c.l.b16 %v3603
    %v4719 = vunpack.c.h.b16 %v3603
    %v4720 = vunpack.c.l.b16 %v3604
    %v4721 = vunpack.c.h.b16 %v3604
    %v4722 = vunpack.c.l.b16 %v3605
    %v4723 = vunpack.c.h.b16 %v3605
    %v4724 = vunpack.c.l.b16 %v3606
    %v4725 = vunpack.c.h.b16 %v3606
    %v4726 = vunpack.c.l.b16 %v3607
    %v4727 = vunpack.c.h.b16 %v3607
    %v4728 = vunpack.c.l.b16 %v3608
    %v4729 = vunpack.c.h.b16 %v3608
    %v4730 = vunpack.c.l.b16 %v3609
    %v4731 = vunpack.c.h.b16 %v3609
    %v4732 = vunpack.c.l.b16 %v3610
    %v4733 = vunpack.c.h.b16 %v3610
    %v4734 = vunpack.c.l.b16 %v3611
    %v4735 = vunpack.c.h.b16 %v3611
    %v4736 = vunpack.c.l.b16 %v3612
    %v4737 = vunpack.c.h.b16 %v3612
    %v4738 = vunpack.c.l.b16 %v3613
    %v4739 = vunpack.c.h.b16 %v3613
    %v4740 = vunpack.c.l.b16 %v3614
    %v4741 = vunpack.c.h.b16 %v3614
    %v4742 = vunpack.c.l.b16 %v3615
    %v4743 = vunpack.c.h.b16 %v3615
    %v4744 = vunpack.c.l.b16 %v3616
    %v4745 = vunpack.c.h.b16 %v3616
    %v4746 = vunpack.c.l.b16 %v3617
    %v4747 = vunpack.c.h.b16 %v3617
    %v4748 = vunpack.c.l.b16 %v3618
    %v4749 = vunpack.c.h.b16 %v3618
    %v4750 = vunpack.c.l.b16 %v3619
    %v4751 = vunpack.c.h.b16 %v3619
    %v4752 = vunpack.c.l.b16 %v3620
    %v4753 = vunpack.c.h.b16 %v3620
    %v4754 = vunpack.c.l.b16 %v3621
    %v4755 = vunpack.c.h.b16 %v3621
    %v4756 = vunpack.c.l.b16 %v3622
    %v4757 = vunpack.c.h.b16 %v3622
    %v4758 = vunpack.c.l.b16 %v3623
    %v4759 = vunpack.c.h.b16 %v3623
    %v4760 = vunpack.c.l.b16 %v3624
    %v4761 = vunpack.c.h.b16 %v3624
    %v4762 = vunpack.c.l.b16 %v3625
    %v4763 = vunpack.c.h.b16 %v3625
    %v4764 = vunpack.c.l.b16 %v3626
    %v4765 = vunpack.c.h.b16 %v3626
    %v4766 = vunpack.c.l.b16 %v3627
    %v4767 = vunpack.c.h.b16 %v3627
    %v4768 = vunpack.c.l.b16 %v3628
    %v4769 = vunpack.c.h.b16 %v3628
    %v4770 = vunpack.c.l.b16 %v3629
    %v4771 = vunpack.c.h.b16 %v3629
    %v4772 = vunpack.c.l.b16 %v3630
    %v4773 = vunpack.c.h.b16 %v3630
    %v4774 = vunpack.c.l.b16 %v3631
    %v4775 = vunpack.c.h.b16 %v3631
    %v4776 = vunpack.c.l.b16 %v3632
    %v4777 = vunpack.c.h.b16 %v3632
    %v4778 = vunpack.c.l.b16 %v3633
    %v4779 = vunpack.c.h.b16 %v3633
    %v4780 = vunpack.c.l.b16 %v3634
    %v4781 = vunpack.c.h.b16 %v3634
    %v4782 = vunpack.c.l.b16 %v3635
    %v4783 = vunpack.c.h.b16 %v3635
    %v4784 = vunpack.c.l.b16 %v3636
    %v4785 = vunpack.c.h.b16 %v3636
    %v4786 = vunpack.c.l.b16 %v3637
    %v4787 = vunpack.c.h.b16 %v3637
    %v4788 = vunpack.c.l.b16 %v3638
    %v4789 = vunpack.c.h.b16 %v3638
    %v4790 = vunpack.c.l.b16 %v3639
    %v4791 = vunpack.c.h.b16 %v3639
    %v4792 = vunpack.c.l.b16 %v3640
    %v4793 = vunpack.c.h.b16 %v3640
    %v4794 = vunpack.c.l.b16 %v3641
    %v4795 = vunpack.c.h.b16 %v3641
    %v4796 = vunpack.c.l.b16 %v3642
    %v4797 = vunpack.c.h.b16 %v3642
    %v4798 = vunpack.c.l.b16 %v3643
    %v4799 = vunpack.c.h.b16 %v3643
    %v4800 = vunpack.c.l.b16 %v3644
    %v4801 = vunpack.c.h.b16 %v3644
    %v4802 = vunpack.c.l.b16 %v3645
    %v4803 = vunpack.c.h.b16 %v3645
    %v4804 = vunpack.c.l.b16 %v3646
    %v4805 = vunpack.c.h.b16 %v3646
    %v4806 = vunpack.c.l.b16 %v3647
    %v4807 = vunpack.c.h.b16 %v3647
    %v4808 = vunpack.c.l.b16 %v3648
    %v4809 = vunpack.c.h.b16 %v3648
    %v4810 = vunpack.c.l.b16 %v3649
    %v4811 = vunpack.c.h.b16 %v3649
    %v4812 = vunpack.c.l.b16 %v3650
    %v4813 = vunpack.c.h.b16 %v3650
    %v4814 = vunpack.c.l.b16 %v3651
    %v4815 = vunpack.c.h.b16 %v3651
    %v4816 = vunpack.c.l.b16 %v3652
    %v4817 = vunpack.c.h.b16 %v3652
    %v4818 = vunpack.c.l.b16 %v3653
    %v4819 = vunpack.c.h.b16 %v3653
    %v4820 = vunpack.c.l.b16 %v3654
    %v4821 = vunpack.c.h.b16 %v3654
    %v4822 = vunpack.c.l.b16 %v3655
    %v4823 = vunpack.c.h.b16 %v3655
    %v4824 = vunpack.c.l.b16 %v3656
    %v4825 = vunpack.c.h.b16 %v3656
    %v4826 = vunpack.c.l.b16 %v3657
    %v4827 = vunpack.c.h.b16 %v3657
    %v4828 = vunpack.c.l.b16 %v3658
    %v4829 = vunpack.c.h.b16 %v3658
    %v4830 = vunpack.c.l.b16 %v3659
    %v4831 = vunpack.c.h.b16 %v3659
    %v4832 = vunpack.c.l.b16 %v3660
    %v4833 = vunpack.c.h.b16 %v3660
    %v4834 = vunpack.c.l.b16 %v3661
    %v4835 = vunpack.c.h.b16 %v3661
    %v4836 = vunpack.c.l.b16 %v3662
    %v4837 = vunpack.c.h.b16 %v3662
    %v4838 = vunpack.c.l.b16 %v3663
    %v4839 = vunpack.c.h.b16 %v3663
    %v4840 = vunpack.c.l.b16 %v3664
    %v4841 = vunpack.c.h.b16 %v3664
    %v4842 = vunpack.c.l.b16 %v3665
    %v4843 = vunpack.c.h.b16 %v3665
    %v4844 = vunpack.c.l.b16 %v3666
    %v4845 = vunpack.c.h.b16 %v3666
    %v4846 = vunpack.c.l.b16 %v3667
    %v4847 = vunpack.c.h.b16 %v3667
    %v4848 = vunpack.c.l.b16 %v3668
    %v4849 = vunpack.c.h.b16 %v3668
    %v4850 = vunpack.c.l.b16 %v3669
    %v4851 = vunpack.c.h.b16 %v3669
    %v4852 = vunpack.c.l.b16 %v3670
    %v4853 = vunpack.c.h.b16 %v3670
    %v4854 = vunpack.c.l.b16 %v3671
    %v4855 = vunpack.c.h.b16 %v3671
    %v4856 = vpack.c.b16 %v4094, %v4088
    %v4857 = vpack.c.b16 %v4095, %v4089
    %v4858 = vpack.c.b16 %v4096, %v4090
    %v4859 = vpack.c.b16 %v4097, %v4091
    %v4860 = vpack.c.b16 %v4098, %v4092
    %v4861 = vpack.c.b16 %v4099, %v4093
    %v4862 = vpack.c.b16 %v4106, %v4100
    %v4863 = vpack.c.b16 %v4107, %v4101
    %v4864 = vpack.c.b16 %v4108, %v4102
    %v4865 = vpack.c.b16 %v4109, %v4103
    %v4866 = vpack.c.b16 %v4110, %v4104
    %v4867 = vpack.c.b16 %v4111, %v4105
    %v4868 = vpack.c.b16 %v4118, %v4112
    %v4869 = vpack.c.b16 %v4119, %v4113
    %v4870 = vpack.c.b16 %v4120, %v4114
    %v4871 = vpack.c.b16 %v4121, %v4115
    %v4872 = vpack.c.b16 %v4122, %v4116
    %v4873 = vpack.c.b16 %v4123, %v4117
    %v4874 = vpack.c.b16 %v4130, %v4124
    %v4875 = vpack.c.b16 %v4131, %v4125
    %v4876 = vpack.c.b16 %v4132, %v4126
    %v4877 = vpack.c.b16 %v4133, %v4127
    %v4878 = vpack.c.b16 %v4134, %v4128
    %v4879 = vpack.c.b16 %v4135, %v4129
    %v4880 = vpack.c.b16 %v4142, %v4136
    %v4881 = vpack.c.b16 %v4143, %v4137
    %v4882 = vpack.c.b16 %v4144, %v4138
    %v4883 = vpack.c.b16 %v4145, %v4139
    %v4884 = vpack.c.b16 %v4146, %v4140
    %v4885 = vpack.c.b16 %v4147, %v4141
    %v4886 = vpack.c.b16 %v4154, %v4148
    %v4887 = vpack.c.b16 %v4155, %v4149
    %v4888 = vpack.c.b16 %v4156, %v4150
    %v4889 = vpack.c.b16 %v4157, %v4151
    %v4890 = vpack.c.b16 %v4158, %v4152
    %v4891 = vpack.c.b16 %v4159, %v4153
    %v4892 = vpack.c.b16 %v4166, %v4160
    %v4893 = vpack.c.b16 %v4167, %v4161
    %v4894 = vpack.c.b16 %v4168, %v4162
    %v4895 = vpack.c.b16 %v4169, %v4163
    %v4896 = vpack.c.b16 %v4170, %v4164
    %v4897 = vpack.c.b16 %v4171, %v4165
    %v4898 = vpack.c.b16 %v4178, %v4172
    %v4899 = vpack.c.b16 %v4179, %v4173
    %v4900 = vpack.c.b16 %v4180, %v4174
    %v4901 = vpack.c.b16 %v4181, %v4175
    %v4902 = vpack.c.b16 %v4182, %v4176
    %v4903 = vpack.c.b16 %v4183, %v4177
    %v4904 = vpack.c.b16 %v4190, %v4184
    %v4905 = vpack.c.b16 %v4191, %v4185
    %v4906 = vpack.c.b16 %v4192, %v4186
    %v4907 = vpack.c.b16 %v4193, %v4187
    %v4908 = vpack.c.b16 %v4194, %v4188
    %v4909 = vpack.c.b16 %v4195, %v4189
    %v4910 = vpack.c.b16 %v4202, %v4196
    %v4911 = vpack.c.b16 %v4203, %v4197
    %v4912 = vpack.c.b16 %v4204, %v4198
    %v4913 = vpack.c.b16 %v4205, %v4199
    %v4914 = vpack.c.b16 %v4206, %v4200
    %v4915 = vpack.c.b16 %v4207, %v4201
    %v4916 = vpack.c.b16 %v4214, %v4208
    %v4917 = vpack.c.b16 %v4215, %v4209
    %v4918 = vpack.c.b16 %v4216, %v4210
    %v4919 = vpack.c.b16 %v4217, %v4211
    %v4920 = vpack.c.b16 %v4218, %v4212
    %v4921 = vpack.c.b16 %v4219, %v4213
    %v4922 = vpack.c.b16 %v4226, %v4220
    %v4923 = vpack.c.b16 %v4227, %v4221
    %v4924 = vpack.c.b16 %v4228, %v4222
    %v4925 = vpack.c.b16 %v4229, %v4223
    %v4926 = vpack.c.b16 %v4230, %v4224
    %v4927 = vpack.c.b16 %v4231, %v4225
    %v4928 = vpack.c.b16 %v4238, %v4232
    %v4929 = vpack.c.b16 %v4239, %v4233
    %v4930 = vpack.c.b16 %v4240, %v4234
    %v4931 = vpack.c.b16 %v4241, %v4235
    %v4932 = vpack.c.b16 %v4242, %v4236
    %v4933 = vpack.c.b16 %v4243, %v4237
    %v4934 = vpack.c.b16 %v4250, %v4244
    %v4935 = vpack.c.b16 %v4251, %v4245
    %v4936 = vpack.c.b16 %v4252, %v4246
    %v4937 = vpack.c.b16 %v4253, %v4247
    %v4938 = vpack.c.b16 %v4254, %v4248
    %v4939 = vpack.c.b16 %v4255, %v4249
    %v4940 = vpack.c.b16 %v4262, %v4256
    %v4941 = vpack.c.b16 %v4263, %v4257
    %v4942 = vpack.c.b16 %v4264, %v4258
    %v4943 = vpack.c.b16 %v4265, %v4259
    %v4944 = vpack.c.b16 %v4266, %v4260
    %v4945 = vpack.c.b16 %v4267, %v4261
    %v4946 = vpack.c.b16 %v4274, %v4268
    %v4947 = vpack.c.b16 %v4275, %v4269
    %v4948 = vpack.c.b16 %v4276, %v4270
    %v4949 = vpack.c.b16 %v4277, %v4271
    %v4950 = vpack.c.b16 %v4278, %v4272
    %v4951 = vpack.c.b16 %v4279, %v4273
    %v4952 = vpack.c.b16 %v4286, %v4280
    %v4953 = vpack.c.b16 %v4287, %v4281
    %v4954 = vpack.c.b16 %v4288, %v4282
    %v4955 = vpack.c.b16 %v4289, %v4283
    %v4956 = vpack.c.b16 %v4290, %v4284
    %v4957 = vpack.c.b16 %v4291, %v4285
    %v4958 = vpack.c.b16 %v4298, %v4292
    %v4959 = vpack.c.b16 %v4299, %v4293
    %v4960 = vpack.c.b16 %v4300, %v4294
    %v4961 = vpack.c.b16 %v4301, %v4295
    %v4962 = vpack.c.b16 %v4302, %v4296
    %v4963 = vpack.c.b16 %v4303, %v4297
    %v4964 = vpack.c.b16 %v4310, %v4304
    %v4965 = vpack.c.b16 %v4311, %v4305
    %v4966 = vpack.c.b16 %v4312, %v4306
    %v4967 = vpack.c.b16 %v4313, %v4307
    %v4968 = vpack.c.b16 %v4314, %v4308
    %v4969 = vpack.c.b16 %v4315, %v4309
    %v4970 = vpack.c.b16 %v4322, %v4316
    %v4971 = vpack.c.b16 %v4323, %v4317
    %v4972 = vpack.c.b16 %v4324, %v4318
    %v4973 = vpack.c.b16 %v4325, %v4319
    %v4974 = vpack.c.b16 %v4326, %v4320
    %v4975 = vpack.c.b16 %v4327, %v4321
    %v4976 = vpack.c.b16 %v4334, %v4328
    %v4977 = vpack.c.b16 %v4335, %v4329
    %v4978 = vpack.c.b16 %v4336, %v4330
    %v4979 = vpack.c.b16 %v4337, %v4331
    %v4980 = vpack.c.b16 %v4338, %v4332
    %v4981 = vpack.c.b16 %v4339, %v4333
    %v4982 = vpack.c.b16 %v4346, %v4340
    %v4983 = vpack.c.b16 %v4347, %v4341
    %v4984 = vpack.c.b16 %v4348, %v4342
    %v4985 = vpack.c.b16 %v4349, %v4343
    %v4986 = vpack.c.b16 %v4350, %v4344
    %v4987 = vpack.c.b16 %v4351, %v4345
    %v4988 = vpack.c.b16 %v4358, %v4352
    %v4989 = vpack.c.b16 %v4359, %v4353
    %v4990 = vpack.c.b16 %v4360, %v4354
    %v4991 = vpack.c.b16 %v4361, %v4355
    %v4992 = vpack.c.b16 %v4362, %v4356
    %v4993 = vpack.c.b16 %v4363, %v4357
    %v4994 = vpack.c.b16 %v4370, %v4364
    %v4995 = vpack.c.b16 %v4371, %v4365
    %v4996 = vpack.c.b16 %v4372, %v4366
    %v4997 = vpack.c.b16 %v4373, %v4367
    %v4998 = vpack.c.b16 %v4374, %v4368
    %v4999 = vpack.c.b16 %v4375, %v4369
    %v5000 = vpack.c.b16 %v4382, %v4376
    %v5001 = vpack.c.b16 %v4383, %v4377
    %v5002 = vpack.c.b16 %v4384, %v4378
    %v5003 = vpack.c.b16 %v4385, %v4379
    %v5004 = vpack.c.b16 %v4386, %v4380
    %v5005 = vpack.c.b16 %v4387, %v4381
    %v5006 = vpack.c.b16 %v4394, %v4388
    %v5007 = vpack.c.b16 %v4395, %v4389
    %v5008 = vpack.c.b16 %v4396, %v4390
    %v5009 = vpack.c.b16 %v4397, %v4391
    %v5010 = vpack.c.b16 %v4398, %v4392
    %v5011 = vpack.c.b16 %v4399, %v4393
    %v5012 = vpack.c.b16 %v4406, %v4400
    %v5013 = vpack.c.b16 %v4407, %v4401
    %v5014 = vpack.c.b16 %v4408, %v4402
    %v5015 = vpack.c.b16 %v4409, %v4403
    %v5016 = vpack.c.b16 %v4410, %v4404
    %v5017 = vpack.c.b16 %v4411, %v4405
    %v5018 = vpack.c.b16 %v4418, %v4412
    %v5019 = vpack.c.b16 %v4419, %v4413
    %v5020 = vpack.c.b16 %v4420, %v4414
    %v5021 = vpack.c.b16 %v4421, %v4415
    %v5022 = vpack.c.b16 %v4422, %v4416
    %v5023 = vpack.c.b16 %v4423, %v4417
    %v5024 = vpack.c.b16 %v4430, %v4424
    %v5025 = vpack.c.b16 %v4431, %v4425
    %v5026 = vpack.c.b16 %v4432, %v4426
    %v5027 = vpack.c.b16 %v4433, %v4427
    %v5028 = vpack.c.b16 %v4434, %v4428
    %v5029 = vpack.c.b16 %v4435, %v4429
    %v5030 = vpack.c.b16 %v4442, %v4436
    %v5031 = vpack.c.b16 %v4443, %v4437
    %v5032 = vpack.c.b16 %v4444, %v4438
    %v5033 = vpack.c.b16 %v4445, %v4439
    %v5034 = vpack.c.b16 %v4446, %v4440
    %v5035 = vpack.c.b16 %v4447, %v4441
    %v5036 = vpack.c.b16 %v4454, %v4448
    %v5037 = vpack.c.b16 %v4455, %v4449
    %v5038 = vpack.c.b16 %v4456, %v4450
    %v5039 = vpack.c.b16 %v4457, %v4451
    %v5040 = vpack.c.b16 %v4458, %v4452
    %v5041 = vpack.c.b16 %v4459, %v4453
    %v5042 = vpack.c.b16 %v4466, %v4460
    %v5043 = vpack.c.b16 %v4467, %v4461
    %v5044 = vpack.c.b16 %v4468, %v4462
    %v5045 = vpack.c.b16 %v4469, %v4463
    %v5046 = vpack.c.b16 %v4470, %v4464
    %v5047 = vpack.c.b16 %v4471, %v4465
    %v5048 = vpack.c.b16 %v4478, %v4472
    %v5049 = vpack.c.b16 %v4479, %v4473
    %v5050 = vpack.c.b16 %v4480, %v4474
    %v5051 = vpack.c.b16 %v4481, %v4475
    %v5052 = vpack.c.b16 %v4482, %v4476
    %v5053 = vpack.c.b16 %v4483, %v4477
    %v5054 = vpack.c.b16 %v4490, %v4484
    %v5055 = vpack.c.b16 %v4491, %v4485
    %v5056 = vpack.c.b16 %v4492, %v4486
    %v5057 = vpack.c.b16 %v4493, %v4487
    %v5058 = vpack.c.b16 %v4494, %v4488
    %v5059 = vpack.c.b16 %v4495, %v4489
    %v5060 = vpack.c.b16 %v4502, %v4496
    %v5061 = vpack.c.b16 %v4503, %v4497
    %v5062 = vpack.c.b16 %v4504, %v4498
    %v5063 = vpack.c.b16 %v4505, %v4499
    %v5064 = vpack.c.b16 %v4506, %v4500
    %v5065 = vpack.c.b16 %v4507, %v4501
    %v5066 = vpack.c.b16 %v4514, %v4508
    %v5067 = vpack.c.b16 %v4515, %v4509
    %v5068 = vpack.c.b16 %v4516, %v4510
    %v5069 = vpack.c.b16 %v4517, %v4511
    %v5070 = vpack.c.b16 %v4518, %v4512
    %v5071 = vpack.c.b16 %v4519, %v4513
    %v5072 = vpack.c.b16 %v4526, %v4520
    %v5073 = vpack.c.b16 %v4527, %v4521
    %v5074 = vpack.c.b16 %v4528, %v4522
    %v5075 = vpack.c.b16 %v4529, %v4523
    %v5076 = vpack.c.b16 %v4530, %v4524
    %v5077 = vpack.c.b16 %v4531, %v4525
    %v5078 = vpack.c.b16 %v4538, %v4532
    %v5079 = vpack.c.b16 %v4539, %v4533
    %v5080 = vpack.c.b16 %v4540, %v4534
    %v5081 = vpack.c.b16 %v4541, %v4535
    %v5082 = vpack.c.b16 %v4542, %v4536
    %v5083 = vpack.c.b16 %v4543, %v4537
    %v5084 = vpack.c.b16 %v4550, %v4544
    %v5085 = vpack.c.b16 %v4551, %v4545
    %v5086 = vpack.c.b16 %v4552, %v4546
    %v5087 = vpack.c.b16 %v4553, %v4547
    %v5088 = vpack.c.b16 %v4554, %v4548
    %v5089 = vpack.c.b16 %v4555, %v4549
    %v5090 = vpack.c.b16 %v4562, %v4556
    %v5091 = vpack.c.b16 %v4563, %v4557
    %v5092 = vpack.c.b16 %v4564, %v4558
    %v5093 = vpack.c.b16 %v4565, %v4559
    %v5094 = vpack.c.b16 %v4566, %v4560
    %v5095 = vpack.c.b16 %v4567, %v4561
    %v5096 = vpack.c.b16 %v4574, %v4568
    %v5097 = vpack.c.b16 %v4575, %v4569
    %v5098 = vpack.c.b16 %v4576, %v4570
    %v5099 = vpack.c.b16 %v4577, %v4571
    %v5100 = vpack.c.b16 %v4578, %v4572
    %v5101 = vpack.c.b16 %v4579, %v4573
    %v5102 = vpack.c.b16 %v4586, %v4580
    %v5103 = vpack.c.b16 %v4587, %v4581
    %v5104 = vpack.c.b16 %v4588, %v4582
    %v5105 = vpack.c.b16 %v4589, %v4583
    %v5106 = vpack.c.b16 %v4590, %v4584
    %v5107 = vpack.c.b16 %v4591, %v4585
    %v5108 = vpack.c.b16 %v4598, %v4592
    %v5109 = vpack.c.b16 %v4599, %v4593
    %v5110 = vpack.c.b16 %v4600, %v4594
    %v5111 = vpack.c.b16 %v4601, %v4595
    %v5112 = vpack.c.b16 %v4602, %v4596
    %v5113 = vpack.c.b16 %v4603, %v4597
    %v5114 = vpack.c.b16 %v4610, %v4604
    %v5115 = vpack.c.b16 %v4611, %v4605
    %v5116 = vpack.c.b16 %v4612, %v4606
    %v5117 = vpack.c.b16 %v4613, %v4607
    %v5118 = vpack.c.b16 %v4614, %v4608
    %v5119 = vpack.c.b16 %v4615, %v4609
    %v5120 = vpack.c.b16 %v4622, %v4616
    %v5121 = vpack.c.b16 %v4623, %v4617
    %v5122 = vpack.c.b16 %v4624, %v4618
    %v5123 = vpack.c.b16 %v4625, %v4619
    %v5124 = vpack.c.b16 %v4626, %v4620
    %v5125 = vpack.c.b16 %v4627, %v4621
    %v5126 = vpack.c.b16 %v4634, %v4628
    %v5127 = vpack.c.b16 %v4635, %v4629
    %v5128 = vpack.c.b16 %v4636, %v4630
    %v5129 = vpack.c.b16 %v4637, %v4631
    %v5130 = vpack.c.b16 %v4638, %v4632
    %v5131 = vpack.c.b16 %v4639, %v4633
    %v5132 = vpack.c.b16 %v4646, %v4640
    %v5133 = vpack.c.b16 %v4647, %v4641
    %v5134 = vpack.c.b16 %v4648, %v4642
    %v5135 = vpack.c.b16 %v4649, %v4643
    %v5136 = vpack.c.b16 %v4650, %v4644
    %v5137 = vpack.c.b16 %v4651, %v4645
    %v5138 = vpack.c.b16 %v4658, %v4652
    %v5139 = vpack.c.b16 %v4659, %v4653
    %v5140 = vpack.c.b16 %v4660, %v4654
    %v5141 = vpack.c.b16 %v4661, %v4655
    %v5142 = vpack.c.b16 %v4662, %v4656
    %v5143 = vpack.c.b16 %v4663, %v4657
    %v5144 = vpack.c.b16 %v4670, %v4664
    %v5145 = vpack.c.b16 %v4671, %v4665
    %v5146 = vpack.c.b16 %v4672, %v4666
    %v5147 = vpack.c.b16 %v4673, %v4667
    %v5148 = vpack.c.b16 %v4674, %v4668
    %v5149 = vpack.c.b16 %v4675, %v4669
    %v5150 = vpack.c.b16 %v4682, %v4676
    %v5151 = vpack.c.b16 %v4683, %v4677
    %v5152 = vpack.c.b16 %v4684, %v4678
    %v5153 = vpack.c.b16 %v4685, %v4679
    %v5154 = vpack.c.b16 %v4686, %v4680
    %v5155 = vpack.c.b16 %v4687, %v4681
    %v5156 = vpack.c.b16 %v4694, %v4688
    %v5157 = vpack.c.b16 %v4695, %v4689
    %v5158 = vpack.c.b16 %v4696, %v4690
    %v5159 = vpack.c.b16 %v4697, %v4691
    %v5160 = vpack.c.b16 %v4698, %v4692
    %v5161 = vpack.c.b16 %v4699, %v4693
    %v5162 = vpack.c.b16 %v4706, %v4700
    %v5163 = vpack.c.b16 %v4707, %v4701
    %v5164 = vpack.c.b16 %v4708, %v4702
    %v5165 = vpack.c.b16 %v4709, %v4703
    %v5166 = vpack.c.b16 %v4710, %v4704
    %v5167 = vpack.c.b16 %v4711, %v4705
    %v5168 = vpack.c.b16 %v4718, %v4712
    %v5169 = vpack.c.b16 %v4719, %v4713
    %v5170 = vpack.c.b16 %v4720, %v4714
    %v5171 = vpack.c.b16 %v4721, %v4715
    %v5172 = vpack.c.b16 %v4722, %v4716
    %v5173 = vpack.c.b16 %v4723, %v4717
    %v5174 = vpack.c.b16 %v4730, %v4724
    %v5175 = vpack.c.b16 %v4731, %v4725
    %v5176 = vpack.c.b16 %v4732, %v4726
    %v5177 = vpack.c.b16 %v4733, %v4727
    %v5178 = vpack.c.b16 %v4734, %v4728
    %v5179 = vpack.c.b16 %v4735, %v4729
    %v5180 = vpack.c.b16 %v4742, %v4736
    %v5181 = vpack.c.b16 %v4743, %v4737
    %v5182 = vpack.c.b16 %v4744, %v4738
    %v5183 = vpack.c.b16 %v4745, %v4739
    %v5184 = vpack.c.b16 %v4746, %v4740
    %v5185 = vpack.c.b16 %v4747, %v4741
    %v5186 = vpack.c.b16 %v4754, %v4748
    %v5187 = vpack.c.b16 %v4755, %v4749
    %v5188 = vpack.c.b16 %v4756, %v4750
    %v5189 = vpack.c.b16 %v4757, %v4751
    %v5190 = vpack.c.b16 %v4758, %v4752
    %v5191 = vpack.c.b16 %v4759, %v4753
    %v5192 = vpack.c.b16 %v4766, %v4760
    %v5193 = vpack.c.b16 %v4767, %v4761
    %v5194 = vpack.c.b16 %v4768, %v4762
    %v5195 = vpack.c.b16 %v4769, %v4763
    %v5196 = vpack.c.b16 %v4770, %v4764
    %v5197 = vpack.c.b16 %v4771, %v4765
    %v5198 = vpack.c.b16 %v4778, %v4772
    %v5199 = vpack.c.b16 %v4779, %v4773
    %v5200 = vpack.c.b16 %v4780, %v4774
    %v5201 = vpack.c.b16 %v4781, %v4775
    %v5202 = vpack.c.b16 %v4782, %v4776
    %v5203 = vpack.c.b16 %v4783, %v4777
    %v5204 = vpack.c.b16 %v4790, %v4784
    %v5205 = vpack.c.b16 %v4791, %v4785
    %v5206 = vpack.c.b16 %v4792, %v4786
    %v5207 = vpack.c.b16 %v4793, %v4787
    %v5208 = vpack.c.b16 %v4794, %v4788
    %v5209 = vpack.c.b16 %v4795, %v4789
    %v5210 = vpack.c.b16 %v4802, %v4796
    %v5211 = vpack.c.b16 %v4803, %v4797
    %v5212 = vpack.c.b16 %v4804, %v4798
    %v5213 = vpack.c.b16 %v4805, %v4799
    %v5214 = vpack.c.b16 %v4806, %v4800
    %v5215 = vpack.c.b16 %v4807, %v4801
    %v5216 = vpack.c.b16 %v4814, %v4808
    %v5217 = vpack.c.b16 %v4815, %v4809
    %v5218 = vpack.c.b16 %v4816, %v4810
    %v5219 = vpack.c.b16 %v4817, %v4811
    %v5220 = vpack.c.b16 %v4818, %v4812
    %v5221 = vpack.c.b16 %v4819, %v4813
    %v5222 = vpack.c.b16 %v4826, %v4820
    %v5223 = vpack.c.b16 %v4827, %v4821
    %v5224 = vpack.c.b16 %v4828, %v4822
    %v5225 = vpack.c.b16 %v4829, %v4823
    %v5226 = vpack.c.b16 %v4830, %v4824
    %v5227 = vpack.c.b16 %v4831, %v4825
    %v5228 = vpack.c.b16 %v4838, %v4832
    %v5229 = vpack.c.b16 %v4839, %v4833
    %v5230 = vpack.c.b16 %v4840, %v4834
    %v5231 = vpack.c.b16 %v4841, %v4835
    %v5232 = vpack.c.b16 %v4842, %v4836
    %v5233 = vpack.c.b16 %v4843, %v4837
    %v5234 = vpack.c.b16 %v4850, %v4844
    %v5235 = vpack.c.b16 %v4851, %v4845
    %v5236 = vpack.c.b16 %v4852, %v4846
    %v5237 = vpack.c.b16 %v4853, %v4847
    %v5238 = vpack.c.b16 %v4854, %v4848
    %v5239 = vpack.c.b16 %v4855, %v4849
    %5624 = vmatprep.subr.bf16.mxu0 %v4857
    %5625 = vmatpush1.bf16.msra.mxu0 %v4856
    %5626 = vmatprep.subr.bf16.mxu0 %v4863
    %5627 = vmatpush1.bf16.msra.mxu0 %v4862
    %5628 = vmatprep.subr.bf16.mxu0 %v4869
    %5629 = vmatpush1.bf16.msra.mxu0 %v4868
    %5630 = vmatprep.subr.bf16.mxu0 %v4875
    %5631 = vmatpush1.bf16.msra.mxu0 %v4874
    %5632 = vmatprep.subr.bf16.mxu0 %v4881
    %5633 = vmatpush1.bf16.msra.mxu0 %v4880
    %5634 = vmatprep.subr.bf16.mxu0 %v4887
    %5635 = vmatpush1.bf16.msra.mxu0 %v4886
    %5636 = vmatprep.subr.bf16.mxu0 %v4893
    %5637 = vmatpush1.bf16.msra.mxu0 %v4892
    %5638 = vmatprep.subr.bf16.mxu0 %v4899
    %5639 = vmatpush1.bf16.msra.mxu0 %v4898
    %5640 = vmatprep.subr.bf16.mxu0 %v4905
    %5641 = vmatpush1.bf16.msra.mxu0 %v4904
    %5642 = vmatprep.subr.bf16.mxu0 %v4911
    %5643 = vmatpush1.bf16.msra.mxu0 %v4910
    %5644 = vmatprep.subr.bf16.mxu0 %v4917
    %5645 = vmatpush1.bf16.msra.mxu0 %v4916
    %5646 = vmatprep.subr.bf16.mxu0 %v4923
    %5647 = vmatpush1.bf16.msra.mxu0 %v4922
    %5648 = vmatprep.subr.bf16.mxu0 %v4929
    %5649 = vmatpush1.bf16.msra.mxu0 %v4928
    %5650 = vmatprep.subr.bf16.mxu0 %v4935
    %5651 = vmatpush1.bf16.msra.mxu0 %v4934
    %5652 = vmatprep.subr.bf16.mxu0 %v4941
    %5653 = vmatpush1.bf16.msra.mxu0 %v4940
    %5654 = vmatprep.subr.bf16.mxu0 %v4947
    %5655 = vmatpush1.bf16.msra.mxu0 %v4946
    %5656 = vmatprep.mubr.bf16.mxu0 %v3281
    %5657 = vmatmul.mubr.bf16.gmra.mrb[0].mxu0 %v3280
    %v5658 = vpop.f32.mrb[0].mxu0
    %v5659 = vadd.f32 %v3677, %v5658
    %v5660 = vpop.f32.mrb[0].mxu0
    %v5661 = vadd.f32 %v3681, %v5660
    %v5662 = vpop.f32.mrb[0].mxu0
    %v5663 = vpop.f32.mrb[0].mxu0
    %5664 = vdwg.mxu0
    %5665 = vmatprep.subr.bf16.mxu0 %v4953
    %5666 = vmatpush1.bf16.msra.mxu0 %v4952
    %5667 = vmatprep.subr.bf16.mxu0 %v4959
    %5668 = vmatpush1.bf16.msra.mxu0 %v4958
    %5669 = vmatprep.subr.bf16.mxu0 %v4965
    %5670 = vmatpush1.bf16.msra.mxu0 %v4964
    %5671 = vmatprep.subr.bf16.mxu0 %v4971
    %5672 = vmatpush1.bf16.msra.mxu0 %v4970
    %5673 = vmatprep.subr.bf16.mxu0 %v4977
    %5674 = vmatpush1.bf16.msra.mxu0 %v4976
    %5675 = vmatprep.subr.bf16.mxu0 %v4983
    %5676 = vmatpush1.bf16.msra.mxu0 %v4982
    %5677 = vmatprep.subr.bf16.mxu0 %v4989
    %5678 = vmatpush1.bf16.msra.mxu0 %v4988
    %5679 = vmatprep.subr.bf16.mxu0 %v4995
    %5680 = vmatpush1.bf16.msra.mxu0 %v4994
    %5681 = vmatprep.subr.bf16.mxu0 %v5001
    %5682 = vmatpush1.bf16.msra.mxu0 %v5000
    %5683 = vmatprep.subr.bf16.mxu0 %v5007
    %5684 = vmatpush1.bf16.msra.mxu0 %v5006
    %5685 = vmatprep.subr.bf16.mxu0 %v5013
    %5686 = vmatpush1.bf16.msra.mxu0 %v5012
    %5687 = vmatprep.subr.bf16.mxu0 %v5019
    %5688 = vmatpush1.bf16.msra.mxu0 %v5018
    %5689 = vmatprep.subr.bf16.mxu0 %v5025
    %5690 = vmatpush1.bf16.msra.mxu0 %v5024
    %5691 = vmatprep.subr.bf16.mxu0 %v5031
    %5692 = vmatpush1.bf16.msra.mxu0 %v5030
    %5693 = vmatprep.subr.bf16.mxu0 %v5037
    %5694 = vmatpush1.bf16.msra.mxu0 %v5036
    %5695 = vmatprep.subr.bf16.mxu0 %v5043
    %5696 = vmatpush1.bf16.msra.mxu0 %v5042
    %5697 = vmatprep.mubr.bf16.mxu0 %v3283
    %5698 = vmatmul.mubr.bf16.gmra.mrb[0].mxu0 %v3282
    %v5699 = vpop.f32.mrb[0].mxu0
    %v5700 = vadd.f32 %v5659, %v5699
    %v5701 = vpop.f32.mrb[0].mxu0
    %v5702 = vadd.f32 %v5661, %v5701
    %v5703 = vpop.f32.mrb[0].mxu0
    %v5704 = vpop.f32.mrb[0].mxu0
    %5705 = vdwg.mxu0
    %5706 = vmatprep.subr.bf16.mxu0 %v5049
    %5707 = vmatpush1.bf16.msra.mxu0 %v5048
    %5708 = vmatprep.subr.bf16.mxu0 %v5055
    %5709 = vmatpush1.bf16.msra.mxu0 %v5054
    %5710 = vmatprep.subr.bf16.mxu0 %v5061
    %5711 = vmatpush1.bf16.msra.mxu0 %v5060
    %5712 = vmatprep.subr.bf16.mxu0 %v5067
    %5713 = vmatpush1.bf16.msra.mxu0 %v5066
    %5714 = vmatprep.subr.bf16.mxu0 %v5073
    %5715 = vmatpush1.bf16.msra.mxu0 %v5072
    %5716 = vmatprep.subr.bf16.mxu0 %v5079
    %5717 = vmatpush1.bf16.msra.mxu0 %v5078
    %5718 = vmatprep.subr.bf16.mxu0 %v5085
    %5719 = vmatpush1.bf16.msra.mxu0 %v5084
    %5720 = vmatprep.subr.bf16.mxu0 %v5091
    %5721 = vmatpush1.bf16.msra.mxu0 %v5090
    %5722 = vmatprep.subr.bf16.mxu0 %v5097
    %5723 = vmatpush1.bf16.msra.mxu0 %v5096
    %5724 = vmatprep.subr.bf16.mxu0 %v5103
    %5725 = vmatpush1.bf16.msra.mxu0 %v5102
    %5726 = vmatprep.subr.bf16.mxu0 %v5109
    %5727 = vmatpush1.bf16.msra.mxu0 %v5108
    %5728 = vmatprep.subr.bf16.mxu0 %v5115
    %5729 = vmatpush1.bf16.msra.mxu0 %v5114
    %5730 = vmatprep.subr.bf16.mxu0 %v5121
    %5731 = vmatpush1.bf16.msra.mxu0 %v5120
    %5732 = vmatprep.subr.bf16.mxu0 %v5127
    %5733 = vmatpush1.bf16.msra.mxu0 %v5126
    %5734 = vmatprep.subr.bf16.mxu0 %v5133
    %5735 = vmatpush1.bf16.msra.mxu0 %v5132
    %5736 = vmatprep.subr.bf16.mxu0 %v5139
    %5737 = vmatpush1.bf16.msra.mxu0 %v5138
    %5738 = vmatprep.mubr.bf16.mxu0 %v3285
    %5739 = vmatmul.mubr.bf16.gmra.mrb[0].mxu0 %v3284
    %v5740 = vpop.f32.mrb[0].mxu0
    %v5741 = vadd.f32 %v5700, %v5740
    %v5742 = vpop.f32.mrb[0].mxu0
    %v5743 = vadd.f32 %v5702, %v5742
    %v5744 = vpop.f32.mrb[0].mxu0
    %v5745 = vpop.f32.mrb[0].mxu0
    %5746 = vdwg.mxu0
    %5747 = vmatprep.subr.bf16.mxu0 %v5145
    %5748 = vmatpush1.bf16.msra.mxu0 %v5144
    %5749 = vmatprep.subr.bf16.mxu0 %v5151
    %5750 = vmatpush1.bf16.msra.mxu0 %v5150
    %5751 = vmatprep.subr.bf16.mxu0 %v5157
    %5752 = vmatpush1.bf16.msra.mxu0 %v5156
    %5753 = vmatprep.subr.bf16.mxu0 %v5163
    %5754 = vmatpush1.bf16.msra.mxu0 %v5162
    %5755 = vmatprep.subr.bf16.mxu0 %v5169
    %5756 = vmatpush1.bf16.msra.mxu0 %v5168
    %5757 = vmatprep.subr.bf16.mxu0 %v5175
    %5758 = vmatpush1.bf16.msra.mxu0 %v5174
    %5759 = vmatprep.subr.bf16.mxu0 %v5181
    %5760 = vmatpush1.bf16.msra.mxu0 %v5180
    %5761 = vmatprep.subr.bf16.mxu0 %v5187
    %5762 = vmatpush1.bf16.msra.mxu0 %v5186
    %5763 = vmatprep.subr.bf16.mxu0 %v5193
    %5764 = vmatpush1.bf16.msra.mxu0 %v5192
    %5765 = vmatprep.subr.bf16.mxu0 %v5199
    %5766 = vmatpush1.bf16.msra.mxu0 %v5198
    %5767 = vmatprep.subr.bf16.mxu0 %v5205
    %5768 = vmatpush1.bf16.msra.mxu0 %v5204
    %5769 = vmatprep.subr.bf16.mxu0 %v5211
    %5770 = vmatpush1.bf16.msra.mxu0 %v5210
    %5771 = vmatprep.subr.bf16.mxu0 %v5217
    %5772 = vmatpush1.bf16.msra.mxu0 %v5216
    %5773 = vmatprep.subr.bf16.mxu0 %v5223
    %5774 = vmatpush1.bf16.msra.mxu0 %v5222
    %5775 = vmatprep.subr.bf16.mxu0 %v5229
    %5776 = vmatpush1.bf16.msra.mxu0 %v5228
    %5777 = vmatprep.subr.bf16.mxu0 %v5235
    %5778 = vmatpush1.bf16.msra.mxu0 %v5234
    %5779 = vmatprep.mubr.bf16.mxu0 %v3287
    %5780 = vmatmul.mubr.bf16.gmra.mrb[0].mxu0 %v3286
    %v5781 = vpop.f32.mrb[0].mxu0
    %v5782 = vadd.f32 %v5741, %v5781
    %v5783 = vpop.f32.mrb[0].mxu0
    %v5784 = vadd.f32 %v5743, %v5783
    %v5785 = vpop.f32.mrb[0].mxu0
    %v5786 = vpop.f32.mrb[0].mxu0
    %5787 = vdwg.mxu0
    %5788 = vmatprep.subr.bf16.mxu0 %v4859
    %5789 = vmatpush1.bf16.msra.mxu0 %v4858
    %5790 = vmatprep.subr.bf16.mxu0 %v4865
    %5791 = vmatpush1.bf16.msra.mxu0 %v4864
    %5792 = vmatprep.subr.bf16.mxu0 %v4871
    %5793 = vmatpush1.bf16.msra.mxu0 %v4870
    %5794 = vmatprep.subr.bf16.mxu0 %v4877
    %5795 = vmatpush1.bf16.msra.mxu0 %v4876
    %5796 = vmatprep.subr.bf16.mxu0 %v4883
    %5797 = vmatpush1.bf16.msra.mxu0 %v4882
    %5798 = vmatprep.subr.bf16.mxu0 %v4889
    %5799 = vmatpush1.bf16.msra.mxu0 %v4888
    %5800 = vmatprep.subr.bf16.mxu0 %v4895
    %5801 = vmatpush1.bf16.msra.mxu0 %v4894
    %5802 = vmatprep.subr.bf16.mxu0 %v4901
    %5803 = vmatpush1.bf16.msra.mxu0 %v4900
    %5804 = vmatprep.subr.bf16.mxu0 %v4907
    %5805 = vmatpush1.bf16.msra.mxu0 %v4906
    %5806 = vmatprep.subr.bf16.mxu0 %v4913
    %5807 = vmatpush1.bf16.msra.mxu0 %v4912
    %5808 = vmatprep.subr.bf16.mxu0 %v4919
    %5809 = vmatpush1.bf16.msra.mxu0 %v4918
    %5810 = vmatprep.subr.bf16.mxu0 %v4925
    %5811 = vmatpush1.bf16.msra.mxu0 %v4924
    %5812 = vmatprep.subr.bf16.mxu0 %v4931
    %5813 = vmatpush1.bf16.msra.mxu0 %v4930
    %5814 = vmatprep.subr.bf16.mxu0 %v4937
    %5815 = vmatpush1.bf16.msra.mxu0 %v4936
    %5816 = vmatprep.subr.bf16.mxu0 %v4943
    %5817 = vmatpush1.bf16.msra.mxu0 %v4942
    %5818 = vmatprep.subr.bf16.mxu0 %v4949
    %5819 = vmatpush1.bf16.msra.mxu0 %v4948
    %5820 = vmatprep.mubr.bf16.mxu0 %v3281
    %5821 = vmatmul.mubr.bf16.gmra.mrb[0].mxu0 %v3280
    %v5822 = vpop.f32.mrb[0].mxu0
    %v5823 = vadd.f32 %v3685, %v5822
    %v5824 = vpop.f32.mrb[0].mxu0
    %v5825 = vadd.f32 %v3689, %v5824
    %v5826 = vpop.f32.mrb[0].mxu0
    %v5827 = vpop.f32.mrb[0].mxu0
    %5828 = vdwg.mxu0
    %5829 = vmatprep.subr.bf16.mxu0 %v4955
    %5830 = vmatpush1.bf16.msra.mxu0 %v4954
    %5831 = vmatprep.subr.bf16.mxu0 %v4961
    %5832 = vmatpush1.bf16.msra.mxu0 %v4960
    %5833 = vmatprep.subr.bf16.mxu0 %v4967
    %5834 = vmatpush1.bf16.msra.mxu0 %v4966
    %5835 = vmatprep.subr.bf16.mxu0 %v4973
    %5836 = vmatpush1.bf16.msra.mxu0 %v4972
    %5837 = vmatprep.subr.bf16.mxu0 %v4979
    %5838 = vmatpush1.bf16.msra.mxu0 %v4978
    %5839 = vmatprep.subr.bf16.mxu0 %v4985
    %5840 = vmatpush1.bf16.msra.mxu0 %v4984
    %5841 = vmatprep.subr.bf16.mxu0 %v4991
    %5842 = vmatpush1.bf16.msra.mxu0 %v4990
    %5843 = vmatprep.subr.bf16.mxu0 %v4997
    %5844 = vmatpush1.bf16.msra.mxu0 %v4996
    %5845 = vmatprep.subr.bf16.mxu0 %v5003
    %5846 = vmatpush1.bf16.msra.mxu0 %v5002
    %5847 = vmatprep.subr.bf16.mxu0 %v5009
    %5848 = vmatpush1.bf16.msra.mxu0 %v5008
    %5849 = vmatprep.subr.bf16.mxu0 %v5015
    %5850 = vmatpush1.bf16.msra.mxu0 %v5014
    %5851 = vmatprep.subr.bf16.mxu0 %v5021
    %5852 = vmatpush1.bf16.msra.mxu0 %v5020
    %5853 = vmatprep.subr.bf16.mxu0 %v5027
    %5854 = vmatpush1.bf16.msra.mxu0 %v5026
    %5855 = vmatprep.subr.bf16.mxu0 %v5033
    %5856 = vmatpush1.bf16.msra.mxu0 %v5032
    %5857 = vmatprep.subr.bf16.mxu0 %v5039
    %5858 = vmatpush1.bf16.msra.mxu0 %v5038
    %5859 = vmatprep.subr.bf16.mxu0 %v5045
    %5860 = vmatpush1.bf16.msra.mxu0 %v5044
    %5861 = vmatprep.mubr.bf16.mxu0 %v3283
    %5862 = vmatmul.mubr.bf16.gmra.mrb[0].mxu0 %v3282
    %v5863 = vpop.f32.mrb[0].mxu0
    %v5864 = vadd.f32 %v5823, %v5863
    %v5865 = vpop.f32.mrb[0].mxu0
    %v5866 = vadd.f32 %v5825, %v5865
    %v5867 = vpop.f32.mrb[0].mxu0
    %v5868 = vpop.f32.mrb[0].mxu0
    %5869 = vdwg.mxu0
    %5870 = vmatprep.subr.bf16.mxu0 %v5051
    %5871 = vmatpush1.bf16.msra.mxu0 %v5050
    %5872 = vmatprep.subr.bf16.mxu0 %v5057
    %5873 = vmatpush1.bf16.msra.mxu0 %v5056
    %5874 = vmatprep.subr.bf16.mxu0 %v5063
    %5875 = vmatpush1.bf16.msra.mxu0 %v5062
    %5876 = vmatprep.subr.bf16.mxu0 %v5069
    %5877 = vmatpush1.bf16.msra.mxu0 %v5068
    %5878 = vmatprep.subr.bf16.mxu0 %v5075
    %5879 = vmatpush1.bf16.msra.mxu0 %v5074
    %5880 = vmatprep.subr.bf16.mxu0 %v5081
    %5881 = vmatpush1.bf16.msra.mxu0 %v5080
    %5882 = vmatprep.subr.bf16.mxu0 %v5087
    %5883 = vmatpush1.bf16.msra.mxu0 %v5086
    %5884 = vmatprep.subr.bf16.mxu0 %v5093
    %5885 = vmatpush1.bf16.msra.mxu0 %v5092
    %5886 = vmatprep.subr.bf16.mxu0 %v5099
    %5887 = vmatpush1.bf16.msra.mxu0 %v5098
    %5888 = vmatprep.subr.bf16.mxu0 %v5105
    %5889 = vmatpush1.bf16.msra.mxu0 %v5104
    %5890 = vmatprep.subr.bf16.mxu0 %v5111
    %5891 = vmatpush1.bf16.msra.mxu0 %v5110
    %5892 = vmatprep.subr.bf16.mxu0 %v5117
    %5893 = vmatpush1.bf16.msra.mxu0 %v5116
    %5894 = vmatprep.subr.bf16.mxu0 %v5123
    %5895 = vmatpush1.bf16.msra.mxu0 %v5122
    %5896 = vmatprep.subr.bf16.mxu0 %v5129
    %5897 = vmatpush1.bf16.msra.mxu0 %v5128
    %5898 = vmatprep.subr.bf16.mxu0 %v5135
    %5899 = vmatpush1.bf16.msra.mxu0 %v5134
    %5900 = vmatprep.subr.bf16.mxu0 %v5141
    %5901 = vmatpush1.bf16.msra.mxu0 %v5140
    %5902 = vmatprep.mubr.bf16.mxu0 %v3285
    %5903 = vmatmul.mubr.bf16.gmra.mrb[0].mxu0 %v3284
    %v5904 = vpop.f32.mrb[0].mxu0
    %v5905 = vadd.f32 %v5864, %v5904
    %v5906 = vpop.f32.mrb[0].mxu0
    %v5907 = vadd.f32 %v5866, %v5906
    %v5908 = vpop.f32.mrb[0].mxu0
    %v5909 = vpop.f32.mrb[0].mxu0
    %5910 = vdwg.mxu0
    %5911 = vmatprep.subr.bf16.mxu0 %v5147
    %5912 = vmatpush1.bf16.msra.mxu0 %v5146
    %5913 = vmatprep.subr.bf16.mxu0 %v5153
    %5914 = vmatpush1.bf16.msra.mxu0 %v5152
    %5915 = vmatprep.subr.bf16.mxu0 %v5159
    %5916 = vmatpush1.bf16.msra.mxu0 %v5158
    %5917 = vmatprep.subr.bf16.mxu0 %v5165
    %5918 = vmatpush1.bf16.msra.mxu0 %v5164
    %5919 = vmatprep.subr.bf16.mxu0 %v5171
    %5920 = vmatpush1.bf16.msra.mxu0 %v5170
    %5921 = vmatprep.subr.bf16.mxu0 %v5177
    %5922 = vmatpush1.bf16.msra.mxu0 %v5176
    %5923 = vmatprep.subr.bf16.mxu0 %v5183
    %5924 = vmatpush1.bf16.msra.mxu0 %v5182
    %5925 = vmatprep.subr.bf16.mxu0 %v5189
    %5926 = vmatpush1.bf16.msra.mxu0 %v5188
    %5927 = vmatprep.subr.bf16.mxu0 %v5195
    %5928 = vmatpush1.bf16.msra.mxu0 %v5194
    %5929 = vmatprep.subr.bf16.mxu0 %v5201
    %5930 = vmatpush1.bf16.msra.mxu0 %v5200
    %5931 = vmatprep.subr.bf16.mxu0 %v5207
    %5932 = vmatpush1.bf16.msra.mxu0 %v5206
    %5933 = vmatprep.subr.bf16.mxu0 %v5213
    %5934 = vmatpush1.bf16.msra.mxu0 %v5212
    %5935 = vmatprep.subr.bf16.mxu0 %v5219
    %5936 = vmatpush1.bf16.msra.mxu0 %v5218
    %5937 = vmatprep.subr.bf16.mxu0 %v5225
    %5938 = vmatpush1.bf16.msra.mxu0 %v5224
    %5939 = vmatprep.subr.bf16.mxu0 %v5231
    %5940 = vmatpush1.bf16.msra.mxu0 %v5230
    %5941 = vmatprep.subr.bf16.mxu0 %v5237
    %5942 = vmatpush1.bf16.msra.mxu0 %v5236
    %5943 = vmatprep.mubr.bf16.mxu0 %v3287
    %5944 = vmatmul.mubr.bf16.gmra.mrb[0].mxu0 %v3286
    %v5945 = vpop.f32.mrb[0].mxu0
    %v5946 = vadd.f32 %v5905, %v5945
    %v5947 = vpop.f32.mrb[0].mxu0
    %v5948 = vadd.f32 %v5907, %v5947
    %v5949 = vpop.f32.mrb[0].mxu0
    %v5950 = vpop.f32.mrb[0].mxu0
    %5951 = vdwg.mxu0
    %5952 = vmatprep.subr.bf16.mxu0 %v4861
    %5953 = vmatpush1.bf16.msra.mxu0 %v4860
    %5954 = vmatprep.subr.bf16.mxu0 %v4867
    %5955 = vmatpush1.bf16.msra.mxu0 %v4866
    %5956 = vmatprep.subr.bf16.mxu0 %v4873
    %5957 = vmatpush1.bf16.msra.mxu0 %v4872
    %5958 = vmatprep.subr.bf16.mxu0 %v4879
    %5959 = vmatpush1.bf16.msra.mxu0 %v4878
    %5960 = vmatprep.subr.bf16.mxu0 %v4885
    %5961 = vmatpush1.bf16.msra.mxu0 %v4884
    %5962 = vmatprep.subr.bf16.mxu0 %v4891
    %5963 = vmatpush1.bf16.msra.mxu0 %v4890
    %5964 = vmatprep.subr.bf16.mxu0 %v4897
    %5965 = vmatpush1.bf16.msra.mxu0 %v4896
    %5966 = vmatprep.subr.bf16.mxu0 %v4903
    %5967 = vmatpush1.bf16.msra.mxu0 %v4902
    %5968 = vmatprep.subr.bf16.mxu0 %v4909
    %5969 = vmatpush1.bf16.msra.mxu0 %v4908
    %5970 = vmatprep.subr.bf16.mxu0 %v4915
    %5971 = vmatpush1.bf16.msra.mxu0 %v4914
    %5972 = vmatprep.subr.bf16.mxu0 %v4921
    %5973 = vmatpush1.bf16.msra.mxu0 %v4920
    %5974 = vmatprep.subr.bf16.mxu0 %v4927
    %5975 = vmatpush1.bf16.msra.mxu0 %v4926
    %5976 = vmatprep.subr.bf16.mxu0 %v4933
    %5977 = vmatpush1.bf16.msra.mxu0 %v4932
    %5978 = vmatprep.subr.bf16.mxu0 %v4939
    %5979 = vmatpush1.bf16.msra.mxu0 %v4938
    %5980 = vmatprep.subr.bf16.mxu0 %v4945
    %5981 = vmatpush1.bf16.msra.mxu0 %v4944
    %5982 = vmatprep.subr.bf16.mxu0 %v4951
    %5983 = vmatpush1.bf16.msra.mxu0 %v4950
    %5984 = vmatprep.mubr.bf16.mxu0 %v3281
    %5985 = vmatmul.mubr.bf16.gmra.mrb[0].mxu0 %v3280
    %v5986 = vpop.f32.mrb[0].mxu0
    %v5987 = vadd.f32 %v3693, %v5986
    %v5988 = vpop.f32.mrb[0].mxu0
    %v5989 = vadd.f32 %v3697, %v5988
    %v5990 = vpop.f32.mrb[0].mxu0
    %v5991 = vpop.f32.mrb[0].mxu0
    %5992 = vdwg.mxu0
    %5993 = vmatprep.subr.bf16.mxu0 %v4957
    %5994 = vmatpush1.bf16.msra.mxu0 %v4956
    %5995 = vmatprep.subr.bf16.mxu0 %v4963
    %5996 = vmatpush1.bf16.msra.mxu0 %v4962
    %5997 = vmatprep.subr.bf16.mxu0 %v4969
    %5998 = vmatpush1.bf16.msra.mxu0 %v4968
    %5999 = vmatprep.subr.bf16.mxu0 %v4975
    %6000 = vmatpush1.bf16.msra.mxu0 %v4974
    %6001 = vmatprep.subr.bf16.mxu0 %v4981
    %6002 = vmatpush1.bf16.msra.mxu0 %v4980
    %6003 = vmatprep.subr.bf16.mxu0 %v4987
    %6004 = vmatpush1.bf16.msra.mxu0 %v4986
    %6005 = vmatprep.subr.bf16.mxu0 %v4993
    %6006 = vmatpush1.bf16.msra.mxu0 %v4992
    %6007 = vmatprep.subr.bf16.mxu0 %v4999
    %6008 = vmatpush1.bf16.msra.mxu0 %v4998
    %6009 = vmatprep.subr.bf16.mxu0 %v5005
    %6010 = vmatpush1.bf16.msra.mxu0 %v5004
    %6011 = vmatprep.subr.bf16.mxu0 %v5011
    %6012 = vmatpush1.bf16.msra.mxu0 %v5010
    %6013 = vmatprep.subr.bf16.mxu0 %v5017
    %6014 = vmatpush1.bf16.msra.mxu0 %v5016
    %6015 = vmatprep.subr.bf16.mxu0 %v5023
    %6016 = vmatpush1.bf16.msra.mxu0 %v5022
    %6017 = vmatprep.subr.bf16.mxu0 %v5029
    %6018 = vmatpush1.bf16.msra.mxu0 %v5028
    %6019 = vmatprep.subr.bf16.mxu0 %v5035
    %6020 = vmatpush1.bf16.msra.mxu0 %v5034
    %6021 = vmatprep.subr.bf16.mxu0 %v5041
    %6022 = vmatpush1.bf16.msra.mxu0 %v5040
    %6023 = vmatprep.subr.bf16.mxu0 %v5047
    %6024 = vmatpush1.bf16.msra.mxu0 %v5046
    %6025 = vmatprep.mubr.bf16.mxu0 %v3283
    %6026 = vmatmul.mubr.bf16.gmra.mrb[0].mxu0 %v3282
    %v6027 = vpop.f32.mrb[0].mxu0
    %v6028 = vadd.f32 %v5987, %v6027
    %v6029 = vpop.f32.mrb[0].mxu0
    %v6030 = vadd.f32 %v5989, %v6029
    %v6031 = vpop.f32.mrb[0].mxu0
    %v6032 = vpop.f32.mrb[0].mxu0
    %6033 = vdwg.mxu0
    %6034 = vmatprep.subr.bf16.mxu0 %v5053
    %6035 = vmatpush1.bf16.msra.mxu0 %v5052
    %6036 = vmatprep.subr.bf16.mxu0 %v5059
    %6037 = vmatpush1.bf16.msra.mxu0 %v5058
    %6038 = vmatprep.subr.bf16.mxu0 %v5065
    %6039 = vmatpush1.bf16.msra.mxu0 %v5064
    %6040 = vmatprep.subr.bf16.mxu0 %v5071
    %6041 = vmatpush1.bf16.msra.mxu0 %v5070
    %6042 = vmatprep.subr.bf16.mxu0 %v5077
    %6043 = vmatpush1.bf16.msra.mxu0 %v5076
    %6044 = vmatprep.subr.bf16.mxu0 %v5083
    %6045 = vmatpush1.bf16.msra.mxu0 %v5082
    %6046 = vmatprep.subr.bf16.mxu0 %v5089
    %6047 = vmatpush1.bf16.msra.mxu0 %v5088
    %6048 = vmatprep.subr.bf16.mxu0 %v5095
    %6049 = vmatpush1.bf16.msra.mxu0 %v5094
    %6050 = vmatprep.subr.bf16.mxu0 %v5101
    %6051 = vmatpush1.bf16.msra.mxu0 %v5100
    %6052 = vmatprep.subr.bf16.mxu0 %v5107
    %6053 = vmatpush1.bf16.msra.mxu0 %v5106
    %6054 = vmatprep.subr.bf16.mxu0 %v5113
    %6055 = vmatpush1.bf16.msra.mxu0 %v5112
    %6056 = vmatprep.subr.bf16.mxu0 %v5119
    %6057 = vmatpush1.bf16.msra.mxu0 %v5118
    %6058 = vmatprep.subr.bf16.mxu0 %v5125
    %6059 = vmatpush1.bf16.msra.mxu0 %v5124
    %6060 = vmatprep.subr.bf16.mxu0 %v5131
    %6061 = vmatpush1.bf16.msra.mxu0 %v5130
    %6062 = vmatprep.subr.bf16.mxu0 %v5137
    %6063 = vmatpush1.bf16.msra.mxu0 %v5136
    %6064 = vmatprep.subr.bf16.mxu0 %v5143
    %6065 = vmatpush1.bf16.msra.mxu0 %v5142
    %6066 = vmatprep.mubr.bf16.mxu0 %v3285
    %6067 = vmatmul.mubr.bf16.gmra.mrb[0].mxu0 %v3284
    %v6068 = vpop.f32.mrb[0].mxu0
    %v6069 = vadd.f32 %v6028, %v6068
    %v6070 = vpop.f32.mrb[0].mxu0
    %v6071 = vadd.f32 %v6030, %v6070
    %v6072 = vpop.f32.mrb[0].mxu0
    %v6073 = vpop.f32.mrb[0].mxu0
    %6074 = vdwg.mxu0
    %6075 = vmatprep.subr.bf16.mxu0 %v5149
    %6076 = vmatpush1.bf16.msra.mxu0 %v5148
    %6077 = vmatprep.subr.bf16.mxu0 %v5155
    %6078 = vmatpush1.bf16.msra.mxu0 %v5154
    %6079 = vmatprep.subr.bf16.mxu0 %v5161
    %6080 = vmatpush1.bf16.msra.mxu0 %v5160
    %6081 = vmatprep.subr.bf16.mxu0 %v5167
    %6082 = vmatpush1.bf16.msra.mxu0 %v5166
    %6083 = vmatprep.subr.bf16.mxu0 %v5173
    %6084 = vmatpush1.bf16.msra.mxu0 %v5172
    %6085 = vmatprep.subr.bf16.mxu0 %v5179
    %6086 = vmatpush1.bf16.msra.mxu0 %v5178
    %6087 = vmatprep.subr.bf16.mxu0 %v5185
    %6088 = vmatpush1.bf16.msra.mxu0 %v5184
    %6089 = vmatprep.subr.bf16.mxu0 %v5191
    %6090 = vmatpush1.bf16.msra.mxu0 %v5190
    %6091 = vmatprep.subr.bf16.mxu0 %v5197
    %6092 = vmatpush1.bf16.msra.mxu0 %v5196
    %6093 = vmatprep.subr.bf16.mxu0 %v5203
    %6094 = vmatpush1.bf16.msra.mxu0 %v5202
    %6095 = vmatprep.subr.bf16.mxu0 %v5209
    %6096 = vmatpush1.bf16.msra.mxu0 %v5208
    %6097 = vmatprep.subr.bf16.mxu0 %v5215
    %6098 = vmatpush1.bf16.msra.mxu0 %v5214
    %6099 = vmatprep.subr.bf16.mxu0 %v5221
    %6100 = vmatpush1.bf16.msra.mxu0 %v5220
    %6101 = vmatprep.subr.bf16.mxu0 %v5227
    %6102 = vmatpush1.bf16.msra.mxu0 %v5226
    %6103 = vmatprep.subr.bf16.mxu0 %v5233
    %6104 = vmatpush1.bf16.msra.mxu0 %v5232
    %6105 = vmatprep.subr.bf16.mxu0 %v5239
    %6106 = vmatpush1.bf16.msra.mxu0 %v5238
    %6107 = vmatprep.mubr.bf16.mxu0 %v3287
    %6108 = vmatmul.mubr.bf16.gmra.mrb[0].mxu0 %v3286
    %v6109 = vpop.f32.mrb[0].mxu0
    %v6110 = vadd.f32 %v6069, %v6109
    %v6111 = vpop.f32.mrb[0].mxu0
    %v6112 = vadd.f32 %v6071, %v6111
    %v6113 = vpop.f32.mrb[0].mxu0
    %v6114 = vpop.f32.mrb[0].mxu0
    %6115 = vdwg.mxu0
    %v6116 = vmax.f32 %v5782, 0.0
    %v6117 = vmax.f32 %v5784, 0.0
    %v6118 = vmax.f32 %v5946, 0.0
    %v6119 = vmax.f32 %v5948, 0.0
    %v6120 = vmax.f32 %v6110, 0.0
    %v6121 = vmax.f32 %v6112, 0.0
    %v6122 = vpack.c.bf16 %v6116, %v6116
    %v6123 = vpack.c.bf16 %v6117, %v6117
    %v6124 = vpack.c.bf16 %v6118, %v6118
    %v6125 = vpack.c.bf16 %v6119, %v6119
    %v6126 = vpack.c.bf16 %v6120, %v6120
    %v6127 = vpack.c.bf16 %v6121, %v6121
    %v6128 = vld [vmem:[#allocation16] sm:$0xff]
    %v6129 = vld [vmem:[#allocation16 + $0x8] sm:$0xff]
    %v6130 = vld [vmem:[#allocation16 + $0x10] sm:$0xff]
    %v6131 = vld [vmem:[#allocation16 + $0x18] sm:$0xff]
    %v6132 = vld [vmem:[#allocation16 + $0x20] sm:$0xff]
    %v6133 = vld [vmem:[#allocation16 + $0x28] sm:$0xff]
    %v6134 = vld [vmem:[#allocation16 + $0x30] sm:$0xff]
    %v6135 = vld [vmem:[#allocation16 + $0x38] sm:$0xff]
    %v6136 = vld [vmem:[#allocation16 + $0x40] sm:$0xff]
    %v6137 = vld [vmem:[#allocation16 + $0x48] sm:$0xff]
    %v6138 = vld [vmem:[#allocation16 + $0x50] sm:$0xff]
    %v6139 = vld [vmem:[#allocation16 + $0x58] sm:$0xff]
    %v6140 = vld [vmem:[#allocation16 + $0x60] sm:$0xff]
    %v6141 = vld [vmem:[#allocation16 + $0x68] sm:$0xff]
    %v6142 = vld [vmem:[#allocation16 + $0x70] sm:$0xff]
    %v6143 = vld [vmem:[#allocation16 + $0x78] sm:$0xff]
    %v6144 = vld [vmem:[#allocation16 + $0x80] sm:$0xff]
    %v6145 = vld [vmem:[#allocation16 + $0x88] sm:$0xff]
    %v6146 = vld [vmem:[#allocation16 + $0x90] sm:$0xff]
    %v6147 = vld [vmem:[#allocation16 + $0x98] sm:$0xff]
    %v6148 = vld [vmem:[#allocation16 + $0xa0] sm:$0xff]
    %v6149 = vld [vmem:[#allocation16 + $0xa8] sm:$0xff]
    %v6150 = vld [vmem:[#allocation16 + $0xb0] sm:$0xff]
    %v6151 = vld [vmem:[#allocation16 + $0xb8] sm:$0xff]
    %v6152 = vld [vmem:[#allocation16 + $0xc0] sm:$0xff]
    %v6153 = vld [vmem:[#allocation16 + $0xc8] sm:$0xff]
    %v6154 = vld [vmem:[#allocation16 + $0xd0] sm:$0xff]
    %v6155 = vld [vmem:[#allocation16 + $0xd8] sm:$0xff]
    %v6156 = vld [vmem:[#allocation16 + $0xe0] sm:$0xff]
    %v6157 = vld [vmem:[#allocation16 + $0xe8] sm:$0xff]
    %v6158 = vld [vmem:[#allocation16 + $0xf0] sm:$0xff]
    %v6159 = vld [vmem:[#allocation16 + $0xf8] sm:$0xff]
    %v6160 = vld [vmem:[#allocation16 + $0x100] sm:$0xff]
    %v6161 = vld [vmem:[#allocation16 + $0x108] sm:$0xff]
    %v6162 = vld [vmem:[#allocation16 + $0x110] sm:$0xff]
    %v6163 = vld [vmem:[#allocation16 + $0x118] sm:$0xff]
    %v6164 = vld [vmem:[#allocation16 + $0x120] sm:$0xff]
    %v6165 = vld [vmem:[#allocation16 + $0x128] sm:$0xff]
    %v6166 = vld [vmem:[#allocation16 + $0x130] sm:$0xff]
    %v6167 = vld [vmem:[#allocation16 + $0x138] sm:$0xff]
    %v6168 = vld [vmem:[#allocation16 + $0x140] sm:$0xff]
    %v6169 = vld [vmem:[#allocation16 + $0x148] sm:$0xff]
    %v6170 = vld [vmem:[#allocation16 + $0x150] sm:$0xff]
    %v6171 = vld [vmem:[#allocation16 + $0x158] sm:$0xff]
    %v6172 = vld [vmem:[#allocation16 + $0x160] sm:$0xff]
    %v6173 = vld [vmem:[#allocation16 + $0x168] sm:$0xff]
    %v6174 = vld [vmem:[#allocation16 + $0x170] sm:$0xff]
    %v6175 = vld [vmem:[#allocation16 + $0x178] sm:$0xff]
    %v6176 = vld [vmem:[#allocation16 + $0x180] sm:$0xff]
    %v6177 = vld [vmem:[#allocation16 + $0x188] sm:$0xff]
    %v6178 = vld [vmem:[#allocation16 + $0x190] sm:$0xff]
    %v6179 = vld [vmem:[#allocation16 + $0x198] sm:$0xff]
    %v6180 = vld [vmem:[#allocation16 + $0x1a0] sm:$0xff]
    %v6181 = vld [vmem:[#allocation16 + $0x1a8] sm:$0xff]
    %v6182 = vld [vmem:[#allocation16 + $0x1b0] sm:$0xff]
    %v6183 = vld [vmem:[#allocation16 + $0x1b8] sm:$0xff]
    %v6184 = vld [vmem:[#allocation16 + $0x1c0] sm:$0xff]
    %v6185 = vld [vmem:[#allocation16 + $0x1c8] sm:$0xff]
    %v6186 = vld [vmem:[#allocation16 + $0x1d0] sm:$0xff]
    %v6187 = vld [vmem:[#allocation16 + $0x1d8] sm:$0xff]
    %v6188 = vld [vmem:[#allocation16 + $0x1e0] sm:$0xff]
    %v6189 = vld [vmem:[#allocation16 + $0x1e8] sm:$0xff]
    %v6190 = vld [vmem:[#allocation16 + $0x1f0] sm:$0xff]
    %v6191 = vld [vmem:[#allocation16 + $0x1f8] sm:$0xff]
    %v6192 = vld [vmem:[#allocation16 + $0x200] sm:$0xff]
    %v6193 = vld [vmem:[#allocation16 + $0x208] sm:$0xff]
    %v6194 = vld [vmem:[#allocation16 + $0x210] sm:$0xff]
    %v6195 = vld [vmem:[#allocation16 + $0x218] sm:$0xff]
    %v6196 = vld [vmem:[#allocation16 + $0x220] sm:$0xff]
    %v6197 = vld [vmem:[#allocation16 + $0x228] sm:$0xff]
    %v6198 = vld [vmem:[#allocation16 + $0x230] sm:$0xff]
    %v6199 = vld [vmem:[#allocation16 + $0x238] sm:$0xff]
    %v6200 = vld [vmem:[#allocation16 + $0x240] sm:$0xff]
    %v6201 = vld [vmem:[#allocation16 + $0x248] sm:$0xff]
    %v6202 = vld [vmem:[#allocation16 + $0x250] sm:$0xff]
    %v6203 = vld [vmem:[#allocation16 + $0x258] sm:$0xff]
    %v6204 = vld [vmem:[#allocation16 + $0x260] sm:$0xff]
    %v6205 = vld [vmem:[#allocation16 + $0x268] sm:$0xff]
    %v6206 = vld [vmem:[#allocation16 + $0x270] sm:$0xff]
    %v6207 = vld [vmem:[#allocation16 + $0x278] sm:$0xff]
    %v6208 = vld [vmem:[#allocation16 + $0x280] sm:$0xff]
    %v6209 = vld [vmem:[#allocation16 + $0x288] sm:$0xff]
    %v6210 = vld [vmem:[#allocation16 + $0x290] sm:$0xff]
    %v6211 = vld [vmem:[#allocation16 + $0x298] sm:$0xff]
    %v6212 = vld [vmem:[#allocation16 + $0x2a0] sm:$0xff]
    %v6213 = vld [vmem:[#allocation16 + $0x2a8] sm:$0xff]
    %v6214 = vld [vmem:[#allocation16 + $0x2b0] sm:$0xff]
    %v6215 = vld [vmem:[#allocation16 + $0x2b8] sm:$0xff]
    %v6216 = vld [vmem:[#allocation16 + $0x2c0] sm:$0xff]
    %v6217 = vld [vmem:[#allocation16 + $0x2c8] sm:$0xff]
    %v6218 = vld [vmem:[#allocation16 + $0x2d0] sm:$0xff]
    %v6219 = vld [vmem:[#allocation16 + $0x2d8] sm:$0xff]
    %v6220 = vld [vmem:[#allocation16 + $0x2e0] sm:$0xff]
    %v6221 = vld [vmem:[#allocation16 + $0x2e8] sm:$0xff]
    %v6222 = vld [vmem:[#allocation16 + $0x2f0] sm:$0xff]
    %v6223 = vld [vmem:[#allocation16 + $0x2f8] sm:$0xff]
    %v6224 = vld [vmem:[#allocation16 + $0x300] sm:$0xff]
    %v6225 = vld [vmem:[#allocation16 + $0x308] sm:$0xff]
    %v6226 = vld [vmem:[#allocation16 + $0x310] sm:$0xff]
    %v6227 = vld [vmem:[#allocation16 + $0x318] sm:$0xff]
    %v6228 = vld [vmem:[#allocation16 + $0x320] sm:$0xff]
    %v6229 = vld [vmem:[#allocation16 + $0x328] sm:$0xff]
    %v6230 = vld [vmem:[#allocation16 + $0x330] sm:$0xff]
    %v6231 = vld [vmem:[#allocation16 + $0x338] sm:$0xff]
    %v6232 = vld [vmem:[#allocation16 + $0x340] sm:$0xff]
    %v6233 = vld [vmem:[#allocation16 + $0x348] sm:$0xff]
    %v6234 = vld [vmem:[#allocation16 + $0x350] sm:$0xff]
    %v6235 = vld [vmem:[#allocation16 + $0x358] sm:$0xff]
    %v6236 = vld [vmem:[#allocation16 + $0x360] sm:$0xff]
    %v6237 = vld [vmem:[#allocation16 + $0x368] sm:$0xff]
    %v6238 = vld [vmem:[#allocation16 + $0x370] sm:$0xff]
    %v6239 = vld [vmem:[#allocation16 + $0x378] sm:$0xff]
    %v6240 = vld [vmem:[#allocation16 + $0x380] sm:$0xff]
    %v6241 = vld [vmem:[#allocation16 + $0x388] sm:$0xff]
    %v6242 = vld [vmem:[#allocation16 + $0x390] sm:$0xff]
    %v6243 = vld [vmem:[#allocation16 + $0x398] sm:$0xff]
    %v6244 = vld [vmem:[#allocation16 + $0x3a0] sm:$0xff]
    %v6245 = vld [vmem:[#allocation16 + $0x3a8] sm:$0xff]
    %v6246 = vld [vmem:[#allocation16 + $0x3b0] sm:$0xff]
    %v6247 = vld [vmem:[#allocation16 + $0x3b8] sm:$0xff]
    %v6248 = vld [vmem:[#allocation16 + $0x3c0] sm:$0xff]
    %v6249 = vld [vmem:[#allocation16 + $0x3c8] sm:$0xff]
    %v6250 = vld [vmem:[#allocation16 + $0x3d0] sm:$0xff]
    %v6251 = vld [vmem:[#allocation16 + $0x3d8] sm:$0xff]
    %v6252 = vld [vmem:[#allocation16 + $0x3e0] sm:$0xff]
    %v6253 = vld [vmem:[#allocation16 + $0x3e8] sm:$0xff]
    %v6254 = vld [vmem:[#allocation16 + $0x3f0] sm:$0xff]
    %v6255 = vld [vmem:[#allocation16 + $0x3f8] sm:$0xff]
    %v6256 = vld [vmem:[#allocation16 + $0x400] sm:$0xff]
    %v6257 = vld [vmem:[#allocation16 + $0x408] sm:$0xff]
    %v6258 = vld [vmem:[#allocation16 + $0x410] sm:$0xff]
    %v6259 = vld [vmem:[#allocation16 + $0x418] sm:$0xff]
    %v6260 = vld [vmem:[#allocation16 + $0x420] sm:$0xff]
    %v6261 = vld [vmem:[#allocation16 + $0x428] sm:$0xff]
    %v6262 = vld [vmem:[#allocation16 + $0x430] sm:$0xff]
    %v6263 = vld [vmem:[#allocation16 + $0x438] sm:$0xff]
    %v6264 = vld [vmem:[#allocation16 + $0x440] sm:$0xff]
    %v6265 = vld [vmem:[#allocation16 + $0x448] sm:$0xff]
    %v6266 = vld [vmem:[#allocation16 + $0x450] sm:$0xff]
    %v6267 = vld [vmem:[#allocation16 + $0x458] sm:$0xff]
    %v6268 = vld [vmem:[#allocation16 + $0x460] sm:$0xff]
    %v6269 = vld [vmem:[#allocation16 + $0x468] sm:$0xff]
    %v6270 = vld [vmem:[#allocation16 + $0x470] sm:$0xff]
    %v6271 = vld [vmem:[#allocation16 + $0x478] sm:$0xff]
    %v6272 = vld [vmem:[#allocation16 + $0x480] sm:$0xff]
    %v6273 = vld [vmem:[#allocation16 + $0x488] sm:$0xff]
    %v6274 = vld [vmem:[#allocation16 + $0x490] sm:$0xff]
    %v6275 = vld [vmem:[#allocation16 + $0x498] sm:$0xff]
    %v6276 = vld [vmem:[#allocation16 + $0x4a0] sm:$0xff]
    %v6277 = vld [vmem:[#allocation16 + $0x4a8] sm:$0xff]
    %v6278 = vld [vmem:[#allocation16 + $0x4b0] sm:$0xff]
    %v6279 = vld [vmem:[#allocation16 + $0x4b8] sm:$0xff]
    %v6280 = vld [vmem:[#allocation16 + $0x4c0] sm:$0xff]
    %v6281 = vld [vmem:[#allocation16 + $0x4c8] sm:$0xff]
    %v6282 = vld [vmem:[#allocation16 + $0x4d0] sm:$0xff]
    %v6283 = vld [vmem:[#allocation16 + $0x4d8] sm:$0xff]
    %v6284 = vld [vmem:[#allocation16 + $0x4e0] sm:$0xff]
    %v6285 = vld [vmem:[#allocation16 + $0x4e8] sm:$0xff]
    %v6286 = vld [vmem:[#allocation16 + $0x4f0] sm:$0xff]
    %v6287 = vld [vmem:[#allocation16 + $0x4f8] sm:$0xff]
    %v6288 = vld [vmem:[#allocation16 + $0x500] sm:$0xff]
    %v6289 = vld [vmem:[#allocation16 + $0x508] sm:$0xff]
    %v6290 = vld [vmem:[#allocation16 + $0x510] sm:$0xff]
    %v6291 = vld [vmem:[#allocation16 + $0x518] sm:$0xff]
    %v6292 = vld [vmem:[#allocation16 + $0x520] sm:$0xff]
    %v6293 = vld [vmem:[#allocation16 + $0x528] sm:$0xff]
    %v6294 = vld [vmem:[#allocation16 + $0x530] sm:$0xff]
    %v6295 = vld [vmem:[#allocation16 + $0x538] sm:$0xff]
    %v6296 = vld [vmem:[#allocation16 + $0x540] sm:$0xff]
    %v6297 = vld [vmem:[#allocation16 + $0x548] sm:$0xff]
    %v6298 = vld [vmem:[#allocation16 + $0x550] sm:$0xff]
    %v6299 = vld [vmem:[#allocation16 + $0x558] sm:$0xff]
    %v6300 = vld [vmem:[#allocation16 + $0x560] sm:$0xff]
    %v6301 = vld [vmem:[#allocation16 + $0x568] sm:$0xff]
    %v6302 = vld [vmem:[#allocation16 + $0x570] sm:$0xff]
    %v6303 = vld [vmem:[#allocation16 + $0x578] sm:$0xff]
    %v6304 = vld [vmem:[#allocation16 + $0x580] sm:$0xff]
    %v6305 = vld [vmem:[#allocation16 + $0x588] sm:$0xff]
    %v6306 = vld [vmem:[#allocation16 + $0x590] sm:$0xff]
    %v6307 = vld [vmem:[#allocation16 + $0x598] sm:$0xff]
    %v6308 = vld [vmem:[#allocation16 + $0x5a0] sm:$0xff]
    %v6309 = vld [vmem:[#allocation16 + $0x5a8] sm:$0xff]
    %v6310 = vld [vmem:[#allocation16 + $0x5b0] sm:$0xff]
    %v6311 = vld [vmem:[#allocation16 + $0x5b8] sm:$0xff]
    %v6312 = vld [vmem:[#allocation16 + $0x5c0] sm:$0xff]
    %v6313 = vld [vmem:[#allocation16 + $0x5c8] sm:$0xff]
    %v6314 = vld [vmem:[#allocation16 + $0x5d0] sm:$0xff]
    %v6315 = vld [vmem:[#allocation16 + $0x5d8] sm:$0xff]
    %v6316 = vld [vmem:[#allocation16 + $0x5e0] sm:$0xff]
    %v6317 = vld [vmem:[#allocation16 + $0x5e8] sm:$0xff]
    %v6318 = vld [vmem:[#allocation16 + $0x5f0] sm:$0xff]
    %v6319 = vld [vmem:[#allocation16 + $0x5f8] sm:$0xff]
    %v6320 = vld [vmem:[#allocation16 + $0x600] sm:$0xff]
    %v6321 = vld [vmem:[#allocation16 + $0x608] sm:$0xff]
    %v6322 = vld [vmem:[#allocation16 + $0x610] sm:$0xff]
    %v6323 = vld [vmem:[#allocation16 + $0x618] sm:$0xff]
    %v6324 = vld [vmem:[#allocation16 + $0x620] sm:$0xff]
    %v6325 = vld [vmem:[#allocation16 + $0x628] sm:$0xff]
    %v6326 = vld [vmem:[#allocation16 + $0x630] sm:$0xff]
    %v6327 = vld [vmem:[#allocation16 + $0x638] sm:$0xff]
    %v6328 = vld [vmem:[#allocation16 + $0x640] sm:$0xff]
    %v6329 = vld [vmem:[#allocation16 + $0x648] sm:$0xff]
    %v6330 = vld [vmem:[#allocation16 + $0x650] sm:$0xff]
    %v6331 = vld [vmem:[#allocation16 + $0x658] sm:$0xff]
    %v6332 = vld [vmem:[#allocation16 + $0x660] sm:$0xff]
    %v6333 = vld [vmem:[#allocation16 + $0x668] sm:$0xff]
    %v6334 = vld [vmem:[#allocation16 + $0x670] sm:$0xff]
    %v6335 = vld [vmem:[#allocation16 + $0x678] sm:$0xff]
    %v6336 = vld [vmem:[#allocation16 + $0x680] sm:$0xff]
    %v6337 = vld [vmem:[#allocation16 + $0x688] sm:$0xff]
    %v6338 = vld [vmem:[#allocation16 + $0x690] sm:$0xff]
    %v6339 = vld [vmem:[#allocation16 + $0x698] sm:$0xff]
    %v6340 = vld [vmem:[#allocation16 + $0x6a0] sm:$0xff]
    %v6341 = vld [vmem:[#allocation16 + $0x6a8] sm:$0xff]
    %v6342 = vld [vmem:[#allocation16 + $0x6b0] sm:$0xff]
    %v6343 = vld [vmem:[#allocation16 + $0x6b8] sm:$0xff]
    %v6344 = vld [vmem:[#allocation16 + $0x6c0] sm:$0xff]
    %v6345 = vld [vmem:[#allocation16 + $0x6c8] sm:$0xff]
    %v6346 = vld [vmem:[#allocation16 + $0x6d0] sm:$0xff]
    %v6347 = vld [vmem:[#allocation16 + $0x6d8] sm:$0xff]
    %v6348 = vld [vmem:[#allocation16 + $0x6e0] sm:$0xff]
    %v6349 = vld [vmem:[#allocation16 + $0x6e8] sm:$0xff]
    %v6350 = vld [vmem:[#allocation16 + $0x6f0] sm:$0xff]
    %v6351 = vld [vmem:[#allocation16 + $0x6f8] sm:$0xff]
    %v6352 = vld [vmem:[#allocation16 + $0x700] sm:$0xff]
    %v6353 = vld [vmem:[#allocation16 + $0x708] sm:$0xff]
    %v6354 = vld [vmem:[#allocation16 + $0x710] sm:$0xff]
    %v6355 = vld [vmem:[#allocation16 + $0x718] sm:$0xff]
    %v6356 = vld [vmem:[#allocation16 + $0x720] sm:$0xff]
    %v6357 = vld [vmem:[#allocation16 + $0x728] sm:$0xff]
    %v6358 = vld [vmem:[#allocation16 + $0x730] sm:$0xff]
    %v6359 = vld [vmem:[#allocation16 + $0x738] sm:$0xff]
    %v6360 = vld [vmem:[#allocation16 + $0x740] sm:$0xff]
    %v6361 = vld [vmem:[#allocation16 + $0x748] sm:$0xff]
    %v6362 = vld [vmem:[#allocation16 + $0x750] sm:$0xff]
    %v6363 = vld [vmem:[#allocation16 + $0x758] sm:$0xff]
    %v6364 = vld [vmem:[#allocation16 + $0x760] sm:$0xff]
    %v6365 = vld [vmem:[#allocation16 + $0x768] sm:$0xff]
    %v6366 = vld [vmem:[#allocation16 + $0x770] sm:$0xff]
    %v6367 = vld [vmem:[#allocation16 + $0x778] sm:$0xff]
    %v6368 = vld [vmem:[#allocation16 + $0x780] sm:$0xff]
    %v6369 = vld [vmem:[#allocation16 + $0x788] sm:$0xff]
    %v6370 = vld [vmem:[#allocation16 + $0x790] sm:$0xff]
    %v6371 = vld [vmem:[#allocation16 + $0x798] sm:$0xff]
    %v6372 = vld [vmem:[#allocation16 + $0x7a0] sm:$0xff]
    %v6373 = vld [vmem:[#allocation16 + $0x7a8] sm:$0xff]
    %v6374 = vld [vmem:[#allocation16 + $0x7b0] sm:$0xff]
    %v6375 = vld [vmem:[#allocation16 + $0x7b8] sm:$0xff]
    %v6376 = vld [vmem:[#allocation16 + $0x7c0] sm:$0xff]
    %v6377 = vld [vmem:[#allocation16 + $0x7c8] sm:$0xff]
    %v6378 = vld [vmem:[#allocation16 + $0x7d0] sm:$0xff]
    %v6379 = vld [vmem:[#allocation16 + $0x7d8] sm:$0xff]
    %v6380 = vld [vmem:[#allocation16 + $0x7e0] sm:$0xff]
    %v6381 = vld [vmem:[#allocation16 + $0x7e8] sm:$0xff]
    %v6382 = vld [vmem:[#allocation16 + $0x7f0] sm:$0xff]
    %v6383 = vld [vmem:[#allocation16 + $0x7f8] sm:$0xff]
    %v6384 = vld [vmem:[#allocation16 + $0x800] sm:$0xff]
    %v6385 = vld [vmem:[#allocation16 + $0x808] sm:$0xff]
    %v6386 = vld [vmem:[#allocation16 + $0x810] sm:$0xff]
    %v6387 = vld [vmem:[#allocation16 + $0x818] sm:$0xff]
    %v6388 = vld [vmem:[#allocation16 + $0x820] sm:$0xff]
    %v6389 = vld [vmem:[#allocation16 + $0x828] sm:$0xff]
    %v6390 = vld [vmem:[#allocation16 + $0x830] sm:$0xff]
    %v6391 = vld [vmem:[#allocation16 + $0x838] sm:$0xff]
    %v6392 = vld [vmem:[#allocation16 + $0x840] sm:$0xff]
    %v6393 = vld [vmem:[#allocation16 + $0x848] sm:$0xff]
    %v6394 = vld [vmem:[#allocation16 + $0x850] sm:$0xff]
    %v6395 = vld [vmem:[#allocation16 + $0x858] sm:$0xff]
    %v6396 = vld [vmem:[#allocation16 + $0x860] sm:$0xff]
    %v6397 = vld [vmem:[#allocation16 + $0x868] sm:$0xff]
    %v6398 = vld [vmem:[#allocation16 + $0x870] sm:$0xff]
    %v6399 = vld [vmem:[#allocation16 + $0x878] sm:$0xff]
    %v6400 = vld [vmem:[#allocation16 + $0x880] sm:$0xff]
    %v6401 = vld [vmem:[#allocation16 + $0x888] sm:$0xff]
    %v6402 = vld [vmem:[#allocation16 + $0x890] sm:$0xff]
    %v6403 = vld [vmem:[#allocation16 + $0x898] sm:$0xff]
    %v6404 = vld [vmem:[#allocation16 + $0x8a0] sm:$0xff]
    %v6405 = vld [vmem:[#allocation16 + $0x8a8] sm:$0xff]
    %v6406 = vld [vmem:[#allocation16 + $0x8b0] sm:$0xff]
    %v6407 = vld [vmem:[#allocation16 + $0x8b8] sm:$0xff]
    %v6408 = vld [vmem:[#allocation16 + $0x8c0] sm:$0xff]
    %v6409 = vld [vmem:[#allocation16 + $0x8c8] sm:$0xff]
    %v6410 = vld [vmem:[#allocation16 + $0x8d0] sm:$0xff]
    %v6411 = vld [vmem:[#allocation16 + $0x8d8] sm:$0xff]
    %v6412 = vld [vmem:[#allocation16 + $0x8e0] sm:$0xff]
    %v6413 = vld [vmem:[#allocation16 + $0x8e8] sm:$0xff]
    %v6414 = vld [vmem:[#allocation16 + $0x8f0] sm:$0xff]
    %v6415 = vld [vmem:[#allocation16 + $0x8f8] sm:$0xff]
    %v6416 = vld [vmem:[#allocation18] sm:$0x3f]
    %v6418 = vlaneseq
    %v6419 = vshrl.u32 %v6418, 7
    %v6420 = vsub.s32 0, %v6419
    %v6421 = vrot.slane %v6416, %v6420
    %v6422 = vlaneseq
    %v6423 = vshrl.u32 %v6422, 7
    %v6424 = vsub.s32 1, %v6423
    %v6425 = vrot.slane %v6416, %v6424
    %v6426 = vlaneseq
    %v6427 = vshrl.u32 %v6426, 7
    %v6428 = vsub.s32 2, %v6427
    %v6429 = vrot.slane %v6416, %v6428
    %v6430 = vlaneseq
    %v6431 = vshrl.u32 %v6430, 7
    %v6432 = vsub.s32 3, %v6431
    %v6433 = vrot.slane %v6416, %v6432
    %v6434 = vlaneseq
    %v6435 = vshrl.u32 %v6434, 7
    %v6436 = vsub.s32 4, %v6435
    %v6437 = vrot.slane %v6416, %v6436
    %v6438 = vlaneseq
    %v6439 = vshrl.u32 %v6438, 7
    %v6440 = vsub.s32 5, %v6439
    %v6441 = vrot.slane %v6416, %v6440
    %v6736 = vunpack.c.l.b16 %v6128
    %v6737 = vunpack.c.h.b16 %v6128
    %v6738 = vunpack.c.l.b16 %v6129
    %v6739 = vunpack.c.h.b16 %v6129
    %v6740 = vunpack.c.l.b16 %v6130
    %v6741 = vunpack.c.h.b16 %v6130
    %v6742 = vunpack.c.l.b16 %v6131
    %v6743 = vunpack.c.h.b16 %v6131
    %v6744 = vunpack.c.l.b16 %v6132
    %v6745 = vunpack.c.h.b16 %v6132
    %v6746 = vunpack.c.l.b16 %v6133
    %v6747 = vunpack.c.h.b16 %v6133
    %v6748 = vunpack.c.l.b16 %v6134
    %v6749 = vunpack.c.h.b16 %v6134
    %v6750 = vunpack.c.l.b16 %v6135
    %v6751 = vunpack.c.h.b16 %v6135
    %v6752 = vunpack.c.l.b16 %v6136
    %v6753 = vunpack.c.h.b16 %v6136
    %v6754 = vunpack.c.l.b16 %v6137
    %v6755 = vunpack.c.h.b16 %v6137
    %v6756 = vunpack.c.l.b16 %v6138
    %v6757 = vunpack.c.h.b16 %v6138
    %v6758 = vunpack.c.l.b16 %v6139
    %v6759 = vunpack.c.h.b16 %v6139
    %v6760 = vunpack.c.l.b16 %v6140
    %v6761 = vunpack.c.h.b16 %v6140
    %v6762 = vunpack.c.l.b16 %v6141
    %v6763 = vunpack.c.h.b16 %v6141
    %v6764 = vunpack.c.l.b16 %v6142
    %v6765 = vunpack.c.h.b16 %v6142
    %v6766 = vunpack.c.l.b16 %v6143
    %v6767 = vunpack.c.h.b16 %v6143
    %v6768 = vunpack.c.l.b16 %v6144
    %v6769 = vunpack.c.h.b16 %v6144
    %v6770 = vunpack.c.l.b16 %v6145
    %v6771 = vunpack.c.h.b16 %v6145
    %v6772 = vunpack.c.l.b16 %v6146
    %v6773 = vunpack.c.h.b16 %v6146
    %v6774 = vunpack.c.l.b16 %v6147
    %v6775 = vunpack.c.h.b16 %v6147
    %v6776 = vunpack.c.l.b16 %v6148
    %v6777 = vunpack.c.h.b16 %v6148
    %v6778 = vunpack.c.l.b16 %v6149
    %v6779 = vunpack.c.h.b16 %v6149
    %v6780 = vunpack.c.l.b16 %v6150
    %v6781 = vunpack.c.h.b16 %v6150
    %v6782 = vunpack.c.l.b16 %v6151
    %v6783 = vunpack.c.h.b16 %v6151
    %v6784 = vunpack.c.l.b16 %v6152
    %v6785 = vunpack.c.h.b16 %v6152
    %v6786 = vunpack.c.l.b16 %v6153
    %v6787 = vunpack.c.h.b16 %v6153
    %v6788 = vunpack.c.l.b16 %v6154
    %v6789 = vunpack.c.h.b16 %v6154
    %v6790 = vunpack.c.l.b16 %v6155
    %v6791 = vunpack.c.h.b16 %v6155
    %v6792 = vunpack.c.l.b16 %v6156
    %v6793 = vunpack.c.h.b16 %v6156
    %v6794 = vunpack.c.l.b16 %v6157
    %v6795 = vunpack.c.h.b16 %v6157
    %v6796 = vunpack.c.l.b16 %v6158
    %v6797 = vunpack.c.h.b16 %v6158
    %v6798 = vunpack.c.l.b16 %v6159
    %v6799 = vunpack.c.h.b16 %v6159
    %v6800 = vunpack.c.l.b16 %v6160
    %v6801 = vunpack.c.h.b16 %v6160
    %v6802 = vunpack.c.l.b16 %v6161
    %v6803 = vunpack.c.h.b16 %v6161
    %v6804 = vunpack.c.l.b16 %v6162
    %v6805 = vunpack.c.h.b16 %v6162
    %v6806 = vunpack.c.l.b16 %v6163
    %v6807 = vunpack.c.h.b16 %v6163
    %v6808 = vunpack.c.l.b16 %v6164
    %v6809 = vunpack.c.h.b16 %v6164
    %v6810 = vunpack.c.l.b16 %v6165
    %v6811 = vunpack.c.h.b16 %v6165
    %v6812 = vunpack.c.l.b16 %v6166
    %v6813 = vunpack.c.h.b16 %v6166
    %v6814 = vunpack.c.l.b16 %v6167
    %v6815 = vunpack.c.h.b16 %v6167
    %v6816 = vunpack.c.l.b16 %v6168
    %v6817 = vunpack.c.h.b16 %v6168
    %v6818 = vunpack.c.l.b16 %v6169
    %v6819 = vunpack.c.h.b16 %v6169
    %v6820 = vunpack.c.l.b16 %v6170
    %v6821 = vunpack.c.h.b16 %v6170
    %v6822 = vunpack.c.l.b16 %v6171
    %v6823 = vunpack.c.h.b16 %v6171
    %v6824 = vunpack.c.l.b16 %v6172
    %v6825 = vunpack.c.h.b16 %v6172
    %v6826 = vunpack.c.l.b16 %v6173
    %v6827 = vunpack.c.h.b16 %v6173
    %v6828 = vunpack.c.l.b16 %v6174
    %v6829 = vunpack.c.h.b16 %v6174
    %v6830 = vunpack.c.l.b16 %v6175
    %v6831 = vunpack.c.h.b16 %v6175
    %v6832 = vunpack.c.l.b16 %v6176
    %v6833 = vunpack.c.h.b16 %v6176
    %v6834 = vunpack.c.l.b16 %v6177
    %v6835 = vunpack.c.h.b16 %v6177
    %v6836 = vunpack.c.l.b16 %v6178
    %v6837 = vunpack.c.h.b16 %v6178
    %v6838 = vunpack.c.l.b16 %v6179
    %v6839 = vunpack.c.h.b16 %v6179
    %v6840 = vunpack.c.l.b16 %v6180
    %v6841 = vunpack.c.h.b16 %v6180
    %v6842 = vunpack.c.l.b16 %v6181
    %v6843 = vunpack.c.h.b16 %v6181
    %v6844 = vunpack.c.l.b16 %v6182
    %v6845 = vunpack.c.h.b16 %v6182
    %v6846 = vunpack.c.l.b16 %v6183
    %v6847 = vunpack.c.h.b16 %v6183
    %v6848 = vunpack.c.l.b16 %v6184
    %v6849 = vunpack.c.h.b16 %v6184
    %v6850 = vunpack.c.l.b16 %v6185
    %v6851 = vunpack.c.h.b16 %v6185
    %v6852 = vunpack.c.l.b16 %v6186
    %v6853 = vunpack.c.h.b16 %v6186
    %v6854 = vunpack.c.l.b16 %v6187
    %v6855 = vunpack.c.h.b16 %v6187
    %v6856 = vunpack.c.l.b16 %v6188
    %v6857 = vunpack.c.h.b16 %v6188
    %v6858 = vunpack.c.l.b16 %v6189
    %v6859 = vunpack.c.h.b16 %v6189
    %v6860 = vunpack.c.l.b16 %v6190
    %v6861 = vunpack.c.h.b16 %v6190
    %v6862 = vunpack.c.l.b16 %v6191
    %v6863 = vunpack.c.h.b16 %v6191
    %v6864 = vunpack.c.l.b16 %v6192
    %v6865 = vunpack.c.h.b16 %v6192
    %v6866 = vunpack.c.l.b16 %v6193
    %v6867 = vunpack.c.h.b16 %v6193
    %v6868 = vunpack.c.l.b16 %v6194
    %v6869 = vunpack.c.h.b16 %v6194
    %v6870 = vunpack.c.l.b16 %v6195
    %v6871 = vunpack.c.h.b16 %v6195
    %v6872 = vunpack.c.l.b16 %v6196
    %v6873 = vunpack.c.h.b16 %v6196
    %v6874 = vunpack.c.l.b16 %v6197
    %v6875 = vunpack.c.h.b16 %v6197
    %v6876 = vunpack.c.l.b16 %v6198
    %v6877 = vunpack.c.h.b16 %v6198
    %v6878 = vunpack.c.l.b16 %v6199
    %v6879 = vunpack.c.h.b16 %v6199
    %v6880 = vunpack.c.l.b16 %v6200
    %v6881 = vunpack.c.h.b16 %v6200
    %v6882 = vunpack.c.l.b16 %v6201
    %v6883 = vunpack.c.h.b16 %v6201
    %v6884 = vunpack.c.l.b16 %v6202
    %v6885 = vunpack.c.h.b16 %v6202
    %v6886 = vunpack.c.l.b16 %v6203
    %v6887 = vunpack.c.h.b16 %v6203
    %v6888 = vunpack.c.l.b16 %v6204
    %v6889 = vunpack.c.h.b16 %v6204
    %v6890 = vunpack.c.l.b16 %v6205
    %v6891 = vunpack.c.h.b16 %v6205
    %v6892 = vunpack.c.l.b16 %v6206
    %v6893 = vunpack.c.h.b16 %v6206
    %v6894 = vunpack.c.l.b16 %v6207
    %v6895 = vunpack.c.h.b16 %v6207
    %v6896 = vunpack.c.l.b16 %v6208
    %v6897 = vunpack.c.h.b16 %v6208
    %v6898 = vunpack.c.l.b16 %v6209
    %v6899 = vunpack.c.h.b16 %v6209
    %v6900 = vunpack.c.l.b16 %v6210
    %v6901 = vunpack.c.h.b16 %v6210
    %v6902 = vunpack.c.l.b16 %v6211
    %v6903 = vunpack.c.h.b16 %v6211
    %v6904 = vunpack.c.l.b16 %v6212
    %v6905 = vunpack.c.h.b16 %v6212
    %v6906 = vunpack.c.l.b16 %v6213
    %v6907 = vunpack.c.h.b16 %v6213
    %v6908 = vunpack.c.l.b16 %v6214
    %v6909 = vunpack.c.h.b16 %v6214
    %v6910 = vunpack.c.l.b16 %v6215
    %v6911 = vunpack.c.h.b16 %v6215
    %v6912 = vunpack.c.l.b16 %v6216
    %v6913 = vunpack.c.h.b16 %v6216
    %v6914 = vunpack.c.l.b16 %v6217
    %v6915 = vunpack.c.h.b16 %v6217
    %v6916 = vunpack.c.l.b16 %v6218
    %v6917 = vunpack.c.h.b16 %v6218
    %v6918 = vunpack.c.l.b16 %v6219
    %v6919 = vunpack.c.h.b16 %v6219
    %v6920 = vunpack.c.l.b16 %v6220
    %v6921 = vunpack.c.h.b16 %v6220
    %v6922 = vunpack.c.l.b16 %v6221
    %v6923 = vunpack.c.h.b16 %v6221
    %v6924 = vunpack.c.l.b16 %v6222
    %v6925 = vunpack.c.h.b16 %v6222
    %v6926 = vunpack.c.l.b16 %v6223
    %v6927 = vunpack.c.h.b16 %v6223
    %v6928 = vunpack.c.l.b16 %v6224
    %v6929 = vunpack.c.h.b16 %v6224
    %v6930 = vunpack.c.l.b16 %v6225
    %v6931 = vunpack.c.h.b16 %v6225
    %v6932 = vunpack.c.l.b16 %v6226
    %v6933 = vunpack.c.h.b16 %v6226
    %v6934 = vunpack.c.l.b16 %v6227
    %v6935 = vunpack.c.h.b16 %v6227
    %v6936 = vunpack.c.l.b16 %v6228
    %v6937 = vunpack.c.h.b16 %v6228
    %v6938 = vunpack.c.l.b16 %v6229
    %v6939 = vunpack.c.h.b16 %v6229
    %v6940 = vunpack.c.l.b16 %v6230
    %v6941 = vunpack.c.h.b16 %v6230
    %v6942 = vunpack.c.l.b16 %v6231
    %v6943 = vunpack.c.h.b16 %v6231
    %v6944 = vunpack.c.l.b16 %v6232
    %v6945 = vunpack.c.h.b16 %v6232
    %v6946 = vunpack.c.l.b16 %v6233
    %v6947 = vunpack.c.h.b16 %v6233
    %v6948 = vunpack.c.l.b16 %v6234
    %v6949 = vunpack.c.h.b16 %v6234
    %v6950 = vunpack.c.l.b16 %v6235
    %v6951 = vunpack.c.h.b16 %v6235
    %v6952 = vunpack.c.l.b16 %v6236
    %v6953 = vunpack.c.h.b16 %v6236
    %v6954 = vunpack.c.l.b16 %v6237
    %v6955 = vunpack.c.h.b16 %v6237
    %v6956 = vunpack.c.l.b16 %v6238
    %v6957 = vunpack.c.h.b16 %v6238
    %v6958 = vunpack.c.l.b16 %v6239
    %v6959 = vunpack.c.h.b16 %v6239
    %v6960 = vunpack.c.l.b16 %v6240
    %v6961 = vunpack.c.h.b16 %v6240
    %v6962 = vunpack.c.l.b16 %v6241
    %v6963 = vunpack.c.h.b16 %v6241
    %v6964 = vunpack.c.l.b16 %v6242
    %v6965 = vunpack.c.h.b16 %v6242
    %v6966 = vunpack.c.l.b16 %v6243
    %v6967 = vunpack.c.h.b16 %v6243
    %v6968 = vunpack.c.l.b16 %v6244
    %v6969 = vunpack.c.h.b16 %v6244
    %v6970 = vunpack.c.l.b16 %v6245
    %v6971 = vunpack.c.h.b16 %v6245
    %v6972 = vunpack.c.l.b16 %v6246
    %v6973 = vunpack.c.h.b16 %v6246
    %v6974 = vunpack.c.l.b16 %v6247
    %v6975 = vunpack.c.h.b16 %v6247
    %v6976 = vunpack.c.l.b16 %v6248
    %v6977 = vunpack.c.h.b16 %v6248
    %v6978 = vunpack.c.l.b16 %v6249
    %v6979 = vunpack.c.h.b16 %v6249
    %v6980 = vunpack.c.l.b16 %v6250
    %v6981 = vunpack.c.h.b16 %v6250
    %v6982 = vunpack.c.l.b16 %v6251
    %v6983 = vunpack.c.h.b16 %v6251
    %v6984 = vunpack.c.l.b16 %v6252
    %v6985 = vunpack.c.h.b16 %v6252
    %v6986 = vunpack.c.l.b16 %v6253
    %v6987 = vunpack.c.h.b16 %v6253
    %v6988 = vunpack.c.l.b16 %v6254
    %v6989 = vunpack.c.h.b16 %v6254
    %v6990 = vunpack.c.l.b16 %v6255
    %v6991 = vunpack.c.h.b16 %v6255
    %v6992 = vunpack.c.l.b16 %v6256
    %v6993 = vunpack.c.h.b16 %v6256
    %v6994 = vunpack.c.l.b16 %v6257
    %v6995 = vunpack.c.h.b16 %v6257
    %v6996 = vunpack.c.l.b16 %v6258
    %v6997 = vunpack.c.h.b16 %v6258
    %v6998 = vunpack.c.l.b16 %v6259
    %v6999 = vunpack.c.h.b16 %v6259
    %v7000 = vunpack.c.l.b16 %v6260
    %v7001 = vunpack.c.h.b16 %v6260
    %v7002 = vunpack.c.l.b16 %v6261
    %v7003 = vunpack.c.h.b16 %v6261
    %v7004 = vunpack.c.l.b16 %v6262
    %v7005 = vunpack.c.h.b16 %v6262
    %v7006 = vunpack.c.l.b16 %v6263
    %v7007 = vunpack.c.h.b16 %v6263
    %v7008 = vunpack.c.l.b16 %v6264
    %v7009 = vunpack.c.h.b16 %v6264
    %v7010 = vunpack.c.l.b16 %v6265
    %v7011 = vunpack.c.h.b16 %v6265
    %v7012 = vunpack.c.l.b16 %v6266
    %v7013 = vunpack.c.h.b16 %v6266
    %v7014 = vunpack.c.l.b16 %v6267
    %v7015 = vunpack.c.h.b16 %v6267
    %v7016 = vunpack.c.l.b16 %v6268
    %v7017 = vunpack.c.h.b16 %v6268
    %v7018 = vunpack.c.l.b16 %v6269
    %v7019 = vunpack.c.h.b16 %v6269
    %v7020 = vunpack.c.l.b16 %v6270
    %v7021 = vunpack.c.h.b16 %v6270
    %v7022 = vunpack.c.l.b16 %v6271
    %v7023 = vunpack.c.h.b16 %v6271
    %v7024 = vunpack.c.l.b16 %v6272
    %v7025 = vunpack.c.h.b16 %v6272
    %v7026 = vunpack.c.l.b16 %v6273
    %v7027 = vunpack.c.h.b16 %v6273
    %v7028 = vunpack.c.l.b16 %v6274
    %v7029 = vunpack.c.h.b16 %v6274
    %v7030 = vunpack.c.l.b16 %v6275
    %v7031 = vunpack.c.h.b16 %v6275
    %v7032 = vunpack.c.l.b16 %v6276
    %v7033 = vunpack.c.h.b16 %v6276
    %v7034 = vunpack.c.l.b16 %v6277
    %v7035 = vunpack.c.h.b16 %v6277
    %v7036 = vunpack.c.l.b16 %v6278
    %v7037 = vunpack.c.h.b16 %v6278
    %v7038 = vunpack.c.l.b16 %v6279
    %v7039 = vunpack.c.h.b16 %v6279
    %v7040 = vunpack.c.l.b16 %v6280
    %v7041 = vunpack.c.h.b16 %v6280
    %v7042 = vunpack.c.l.b16 %v6281
    %v7043 = vunpack.c.h.b16 %v6281
    %v7044 = vunpack.c.l.b16 %v6282
    %v7045 = vunpack.c.h.b16 %v6282
    %v7046 = vunpack.c.l.b16 %v6283
    %v7047 = vunpack.c.h.b16 %v6283
    %v7048 = vunpack.c.l.b16 %v6284
    %v7049 = vunpack.c.h.b16 %v6284
    %v7050 = vunpack.c.l.b16 %v6285
    %v7051 = vunpack.c.h.b16 %v6285
    %v7052 = vunpack.c.l.b16 %v6286
    %v7053 = vunpack.c.h.b16 %v6286
    %v7054 = vunpack.c.l.b16 %v6287
    %v7055 = vunpack.c.h.b16 %v6287
    %v7056 = vunpack.c.l.b16 %v6288
    %v7057 = vunpack.c.h.b16 %v6288
    %v7058 = vunpack.c.l.b16 %v6289
    %v7059 = vunpack.c.h.b16 %v6289
    %v7060 = vunpack.c.l.b16 %v6290
    %v7061 = vunpack.c.h.b16 %v6290
    %v7062 = vunpack.c.l.b16 %v6291
    %v7063 = vunpack.c.h.b16 %v6291
    %v7064 = vunpack.c.l.b16 %v6292
    %v7065 = vunpack.c.h.b16 %v6292
    %v7066 = vunpack.c.l.b16 %v6293
    %v7067 = vunpack.c.h.b16 %v6293
    %v7068 = vunpack.c.l.b16 %v6294
    %v7069 = vunpack.c.h.b16 %v6294
    %v7070 = vunpack.c.l.b16 %v6295
    %v7071 = vunpack.c.h.b16 %v6295
    %v7072 = vunpack.c.l.b16 %v6296
    %v7073 = vunpack.c.h.b16 %v6296
    %v7074 = vunpack.c.l.b16 %v6297
    %v7075 = vunpack.c.h.b16 %v6297
    %v7076 = vunpack.c.l.b16 %v6298
    %v7077 = vunpack.c.h.b16 %v6298
    %v7078 = vunpack.c.l.b16 %v6299
    %v7079 = vunpack.c.h.b16 %v6299
    %v7080 = vunpack.c.l.b16 %v6300
    %v7081 = vunpack.c.h.b16 %v6300
    %v7082 = vunpack.c.l.b16 %v6301
    %v7083 = vunpack.c.h.b16 %v6301
    %v7084 = vunpack.c.l.b16 %v6302
    %v7085 = vunpack.c.h.b16 %v6302
    %v7086 = vunpack.c.l.b16 %v6303
    %v7087 = vunpack.c.h.b16 %v6303
    %v7088 = vunpack.c.l.b16 %v6304
    %v7089 = vunpack.c.h.b16 %v6304
    %v7090 = vunpack.c.l.b16 %v6305
    %v7091 = vunpack.c.h.b16 %v6305
    %v7092 = vunpack.c.l.b16 %v6306
    %v7093 = vunpack.c.h.b16 %v6306
    %v7094 = vunpack.c.l.b16 %v6307
    %v7095 = vunpack.c.h.b16 %v6307
    %v7096 = vunpack.c.l.b16 %v6308
    %v7097 = vunpack.c.h.b16 %v6308
    %v7098 = vunpack.c.l.b16 %v6309
    %v7099 = vunpack.c.h.b16 %v6309
    %v7100 = vunpack.c.l.b16 %v6310
    %v7101 = vunpack.c.h.b16 %v6310
    %v7102 = vunpack.c.l.b16 %v6311
    %v7103 = vunpack.c.h.b16 %v6311
    %v7104 = vunpack.c.l.b16 %v6312
    %v7105 = vunpack.c.h.b16 %v6312
    %v7106 = vunpack.c.l.b16 %v6313
    %v7107 = vunpack.c.h.b16 %v6313
    %v7108 = vunpack.c.l.b16 %v6314
    %v7109 = vunpack.c.h.b16 %v6314
    %v7110 = vunpack.c.l.b16 %v6315
    %v7111 = vunpack.c.h.b16 %v6315
    %v7112 = vunpack.c.l.b16 %v6316
    %v7113 = vunpack.c.h.b16 %v6316
    %v7114 = vunpack.c.l.b16 %v6317
    %v7115 = vunpack.c.h.b16 %v6317
    %v7116 = vunpack.c.l.b16 %v6318
    %v7117 = vunpack.c.h.b16 %v6318
    %v7118 = vunpack.c.l.b16 %v6319
    %v7119 = vunpack.c.h.b16 %v6319
    %v7120 = vunpack.c.l.b16 %v6320
    %v7121 = vunpack.c.h.b16 %v6320
    %v7122 = vunpack.c.l.b16 %v6321
    %v7123 = vunpack.c.h.b16 %v6321
    %v7124 = vunpack.c.l.b16 %v6322
    %v7125 = vunpack.c.h.b16 %v6322
    %v7126 = vunpack.c.l.b16 %v6323
    %v7127 = vunpack.c.h.b16 %v6323
    %v7128 = vunpack.c.l.b16 %v6324
    %v7129 = vunpack.c.h.b16 %v6324
    %v7130 = vunpack.c.l.b16 %v6325
    %v7131 = vunpack.c.h.b16 %v6325
    %v7132 = vunpack.c.l.b16 %v6326
    %v7133 = vunpack.c.h.b16 %v6326
    %v7134 = vunpack.c.l.b16 %v6327
    %v7135 = vunpack.c.h.b16 %v6327
    %v7136 = vunpack.c.l.b16 %v6328
    %v7137 = vunpack.c.h.b16 %v6328
    %v7138 = vunpack.c.l.b16 %v6329
    %v7139 = vunpack.c.h.b16 %v6329
    %v7140 = vunpack.c.l.b16 %v6330
    %v7141 = vunpack.c.h.b16 %v6330
    %v7142 = vunpack.c.l.b16 %v6331
    %v7143 = vunpack.c.h.b16 %v6331
    %v7144 = vunpack.c.l.b16 %v6332
    %v7145 = vunpack.c.h.b16 %v6332
    %v7146 = vunpack.c.l.b16 %v6333
    %v7147 = vunpack.c.h.b16 %v6333
    %v7148 = vunpack.c.l.b16 %v6334
    %v7149 = vunpack.c.h.b16 %v6334
    %v7150 = vunpack.c.l.b16 %v6335
    %v7151 = vunpack.c.h.b16 %v6335
    %v7152 = vunpack.c.l.b16 %v6336
    %v7153 = vunpack.c.h.b16 %v6336
    %v7154 = vunpack.c.l.b16 %v6337
    %v7155 = vunpack.c.h.b16 %v6337
    %v7156 = vunpack.c.l.b16 %v6338
    %v7157 = vunpack.c.h.b16 %v6338
    %v7158 = vunpack.c.l.b16 %v6339
    %v7159 = vunpack.c.h.b16 %v6339
    %v7160 = vunpack.c.l.b16 %v6340
    %v7161 = vunpack.c.h.b16 %v6340
    %v7162 = vunpack.c.l.b16 %v6341
    %v7163 = vunpack.c.h.b16 %v6341
    %v7164 = vunpack.c.l.b16 %v6342
    %v7165 = vunpack.c.h.b16 %v6342
    %v7166 = vunpack.c.l.b16 %v6343
    %v7167 = vunpack.c.h.b16 %v6343
    %v7168 = vunpack.c.l.b16 %v6344
    %v7169 = vunpack.c.h.b16 %v6344
    %v7170 = vunpack.c.l.b16 %v6345
    %v7171 = vunpack.c.h.b16 %v6345
    %v7172 = vunpack.c.l.b16 %v6346
    %v7173 = vunpack.c.h.b16 %v6346
    %v7174 = vunpack.c.l.b16 %v6347
    %v7175 = vunpack.c.h.b16 %v6347
    %v7176 = vunpack.c.l.b16 %v6348
    %v7177 = vunpack.c.h.b16 %v6348
    %v7178 = vunpack.c.l.b16 %v6349
    %v7179 = vunpack.c.h.b16 %v6349
    %v7180 = vunpack.c.l.b16 %v6350
    %v7181 = vunpack.c.h.b16 %v6350
    %v7182 = vunpack.c.l.b16 %v6351
    %v7183 = vunpack.c.h.b16 %v6351
    %v7184 = vunpack.c.l.b16 %v6352
    %v7185 = vunpack.c.h.b16 %v6352
    %v7186 = vunpack.c.l.b16 %v6353
    %v7187 = vunpack.c.h.b16 %v6353
    %v7188 = vunpack.c.l.b16 %v6354
    %v7189 = vunpack.c.h.b16 %v6354
    %v7190 = vunpack.c.l.b16 %v6355
    %v7191 = vunpack.c.h.b16 %v6355
    %v7192 = vunpack.c.l.b16 %v6356
    %v7193 = vunpack.c.h.b16 %v6356
    %v7194 = vunpack.c.l.b16 %v6357
    %v7195 = vunpack.c.h.b16 %v6357
    %v7196 = vunpack.c.l.b16 %v6358
    %v7197 = vunpack.c.h.b16 %v6358
    %v7198 = vunpack.c.l.b16 %v6359
    %v7199 = vunpack.c.h.b16 %v6359
    %v7200 = vunpack.c.l.b16 %v6360
    %v7201 = vunpack.c.h.b16 %v6360
    %v7202 = vunpack.c.l.b16 %v6361
    %v7203 = vunpack.c.h.b16 %v6361
    %v7204 = vunpack.c.l.b16 %v6362
    %v7205 = vunpack.c.h.b16 %v6362
    %v7206 = vunpack.c.l.b16 %v6363
    %v7207 = vunpack.c.h.b16 %v6363
    %v7208 = vunpack.c.l.b16 %v6364
    %v7209 = vunpack.c.h.b16 %v6364
    %v7210 = vunpack.c.l.b16 %v6365
    %v7211 = vunpack.c.h.b16 %v6365
    %v7212 = vunpack.c.l.b16 %v6366
    %v7213 = vunpack.c.h.b16 %v6366
    %v7214 = vunpack.c.l.b16 %v6367
    %v7215 = vunpack.c.h.b16 %v6367
    %v7216 = vunpack.c.l.b16 %v6368
    %v7217 = vunpack.c.h.b16 %v6368
    %v7218 = vunpack.c.l.b16 %v6369
    %v7219 = vunpack.c.h.b16 %v6369
    %v7220 = vunpack.c.l.b16 %v6370
    %v7221 = vunpack.c.h.b16 %v6370
    %v7222 = vunpack.c.l.b16 %v6371
    %v7223 = vunpack.c.h.b16 %v6371
    %v7224 = vunpack.c.l.b16 %v6372
    %v7225 = vunpack.c.h.b16 %v6372
    %v7226 = vunpack.c.l.b16 %v6373
    %v7227 = vunpack.c.h.b16 %v6373
    %v7228 = vunpack.c.l.b16 %v6374
    %v7229 = vunpack.c.h.b16 %v6374
    %v7230 = vunpack.c.l.b16 %v6375
    %v7231 = vunpack.c.h.b16 %v6375
    %v7232 = vunpack.c.l.b16 %v6376
    %v7233 = vunpack.c.h.b16 %v6376
    %v7234 = vunpack.c.l.b16 %v6377
    %v7235 = vunpack.c.h.b16 %v6377
    %v7236 = vunpack.c.l.b16 %v6378
    %v7237 = vunpack.c.h.b16 %v6378
    %v7238 = vunpack.c.l.b16 %v6379
    %v7239 = vunpack.c.h.b16 %v6379
    %v7240 = vunpack.c.l.b16 %v6380
    %v7241 = vunpack.c.h.b16 %v6380
    %v7242 = vunpack.c.l.b16 %v6381
    %v7243 = vunpack.c.h.b16 %v6381
    %v7244 = vunpack.c.l.b16 %v6382
    %v7245 = vunpack.c.h.b16 %v6382
    %v7246 = vunpack.c.l.b16 %v6383
    %v7247 = vunpack.c.h.b16 %v6383
    %v7248 = vunpack.c.l.b16 %v6384
    %v7249 = vunpack.c.h.b16 %v6384
    %v7250 = vunpack.c.l.b16 %v6385
    %v7251 = vunpack.c.h.b16 %v6385
    %v7252 = vunpack.c.l.b16 %v6386
    %v7253 = vunpack.c.h.b16 %v6386
    %v7254 = vunpack.c.l.b16 %v6387
    %v7255 = vunpack.c.h.b16 %v6387
    %v7256 = vunpack.c.l.b16 %v6388
    %v7257 = vunpack.c.h.b16 %v6388
    %v7258 = vunpack.c.l.b16 %v6389
    %v7259 = vunpack.c.h.b16 %v6389
    %v7260 = vunpack.c.l.b16 %v6390
    %v7261 = vunpack.c.h.b16 %v6390
    %v7262 = vunpack.c.l.b16 %v6391
    %v7263 = vunpack.c.h.b16 %v6391
    %v7264 = vunpack.c.l.b16 %v6392
    %v7265 = vunpack.c.h.b16 %v6392
    %v7266 = vunpack.c.l.b16 %v6393
    %v7267 = vunpack.c.h.b16 %v6393
    %v7268 = vunpack.c.l.b16 %v6394
    %v7269 = vunpack.c.h.b16 %v6394
    %v7270 = vunpack.c.l.b16 %v6395
    %v7271 = vunpack.c.h.b16 %v6395
    %v7272 = vunpack.c.l.b16 %v6396
    %v7273 = vunpack.c.h.b16 %v6396
    %v7274 = vunpack.c.l.b16 %v6397
    %v7275 = vunpack.c.h.b16 %v6397
    %v7276 = vunpack.c.l.b16 %v6398
    %v7277 = vunpack.c.h.b16 %v6398
    %v7278 = vunpack.c.l.b16 %v6399
    %v7279 = vunpack.c.h.b16 %v6399
    %v7280 = vunpack.c.l.b16 %v6400
    %v7281 = vunpack.c.h.b16 %v6400
    %v7282 = vunpack.c.l.b16 %v6401
    %v7283 = vunpack.c.h.b16 %v6401
    %v7284 = vunpack.c.l.b16 %v6402
    %v7285 = vunpack.c.h.b16 %v6402
    %v7286 = vunpack.c.l.b16 %v6403
    %v7287 = vunpack.c.h.b16 %v6403
    %v7288 = vunpack.c.l.b16 %v6404
    %v7289 = vunpack.c.h.b16 %v6404
    %v7290 = vunpack.c.l.b16 %v6405
    %v7291 = vunpack.c.h.b16 %v6405
    %v7292 = vunpack.c.l.b16 %v6406
    %v7293 = vunpack.c.h.b16 %v6406
    %v7294 = vunpack.c.l.b16 %v6407
    %v7295 = vunpack.c.h.b16 %v6407
    %v7296 = vunpack.c.l.b16 %v6408
    %v7297 = vunpack.c.h.b16 %v6408
    %v7298 = vunpack.c.l.b16 %v6409
    %v7299 = vunpack.c.h.b16 %v6409
    %v7300 = vunpack.c.l.b16 %v6410
    %v7301 = vunpack.c.h.b16 %v6410
    %v7302 = vunpack.c.l.b16 %v6411
    %v7303 = vunpack.c.h.b16 %v6411
    %v7304 = vunpack.c.l.b16 %v6412
    %v7305 = vunpack.c.h.b16 %v6412
    %v7306 = vunpack.c.l.b16 %v6413
    %v7307 = vunpack.c.h.b16 %v6413
    %v7308 = vunpack.c.l.b16 %v6414
    %v7309 = vunpack.c.h.b16 %v6414
    %v7310 = vunpack.c.l.b16 %v6415
    %v7311 = vunpack.c.h.b16 %v6415
    %v7312 = vpack.c.b16 %v6742, %v6736
    %v7313 = vpack.c.b16 %v6743, %v6737
    %v7314 = vpack.c.b16 %v6744, %v6738
    %v7315 = vpack.c.b16 %v6745, %v6739
    %v7316 = vpack.c.b16 %v6746, %v6740
    %v7317 = vpack.c.b16 %v6747, %v6741
    %v7318 = vpack.c.b16 %v6754, %v6748
    %v7319 = vpack.c.b16 %v6755, %v6749
    %v7320 = vpack.c.b16 %v6756, %v6750
    %v7321 = vpack.c.b16 %v6757, %v6751
    %v7322 = vpack.c.b16 %v6758, %v6752
    %v7323 = vpack.c.b16 %v6759, %v6753
    %v7324 = vpack.c.b16 %v6766, %v6760
    %v7325 = vpack.c.b16 %v6767, %v6761
    %v7326 = vpack.c.b16 %v6768, %v6762
    %v7327 = vpack.c.b16 %v6769, %v6763
    %v7328 = vpack.c.b16 %v6770, %v6764
    %v7329 = vpack.c.b16 %v6771, %v6765
    %v7330 = vpack.c.b16 %v6778, %v6772
    %v7331 = vpack.c.b16 %v6779, %v6773
    %v7332 = vpack.c.b16 %v6780, %v6774
    %v7333 = vpack.c.b16 %v6781, %v6775
    %v7334 = vpack.c.b16 %v6782, %v6776
    %v7335 = vpack.c.b16 %v6783, %v6777
    %v7336 = vpack.c.b16 %v6790, %v6784
    %v7337 = vpack.c.b16 %v6791, %v6785
    %v7338 = vpack.c.b16 %v6792, %v6786
    %v7339 = vpack.c.b16 %v6793, %v6787
    %v7340 = vpack.c.b16 %v6794, %v6788
    %v7341 = vpack.c.b16 %v6795, %v6789
    %v7342 = vpack.c.b16 %v6802, %v6796
    %v7343 = vpack.c.b16 %v6803, %v6797
    %v7344 = vpack.c.b16 %v6804, %v6798
    %v7345 = vpack.c.b16 %v6805, %v6799
    %v7346 = vpack.c.b16 %v6806, %v6800
    %v7347 = vpack.c.b16 %v6807, %v6801
    %v7348 = vpack.c.b16 %v6814, %v6808
    %v7349 = vpack.c.b16 %v6815, %v6809
    %v7350 = vpack.c.b16 %v6816, %v6810
    %v7351 = vpack.c.b16 %v6817, %v6811
    %v7352 = vpack.c.b16 %v6818, %v6812
    %v7353 = vpack.c.b16 %v6819, %v6813
    %v7354 = vpack.c.b16 %v6826, %v6820
    %v7355 = vpack.c.b16 %v6827, %v6821
    %v7356 = vpack.c.b16 %v6828, %v6822
    %v7357 = vpack.c.b16 %v6829, %v6823
    %v7358 = vpack.c.b16 %v6830, %v6824
    %v7359 = vpack.c.b16 %v6831, %v6825
    %v7360 = vpack.c.b16 %v6838, %v6832
    %v7361 = vpack.c.b16 %v6839, %v6833
    %v7362 = vpack.c.b16 %v6840, %v6834
    %v7363 = vpack.c.b16 %v6841, %v6835
    %v7364 = vpack.c.b16 %v6842, %v6836
    %v7365 = vpack.c.b16 %v6843, %v6837
    %v7366 = vpack.c.b16 %v6850, %v6844
    %v7367 = vpack.c.b16 %v6851, %v6845
    %v7368 = vpack.c.b16 %v6852, %v6846
    %v7369 = vpack.c.b16 %v6853, %v6847
    %v7370 = vpack.c.b16 %v6854, %v6848
    %v7371 = vpack.c.b16 %v6855, %v6849
    %v7372 = vpack.c.b16 %v6862, %v6856
    %v7373 = vpack.c.b16 %v6863, %v6857
    %v7374 = vpack.c.b16 %v6864, %v6858
    %v7375 = vpack.c.b16 %v6865, %v6859
    %v7376 = vpack.c.b16 %v6866, %v6860
    %v7377 = vpack.c.b16 %v6867, %v6861
    %v7378 = vpack.c.b16 %v6874, %v6868
    %v7379 = vpack.c.b16 %v6875, %v6869
    %v7380 = vpack.c.b16 %v6876, %v6870
    %v7381 = vpack.c.b16 %v6877, %v6871
    %v7382 = vpack.c.b16 %v6878, %v6872
    %v7383 = vpack.c.b16 %v6879, %v6873
    %v7384 = vpack.c.b16 %v6886, %v6880
    %v7385 = vpack.c.b16 %v6887, %v6881
    %v7386 = vpack.c.b16 %v6888, %v6882
    %v7387 = vpack.c.b16 %v6889, %v6883
    %v7388 = vpack.c.b16 %v6890, %v6884
    %v7389 = vpack.c.b16 %v6891, %v6885
    %v7390 = vpack.c.b16 %v6898, %v6892
    %v7391 = vpack.c.b16 %v6899, %v6893
    %v7392 = vpack.c.b16 %v6900, %v6894
    %v7393 = vpack.c.b16 %v6901, %v6895
    %v7394 = vpack.c.b16 %v6902, %v6896
    %v7395 = vpack.c.b16 %v6903, %v6897
    %v7396 = vpack.c.b16 %v6910, %v6904
    %v7397 = vpack.c.b16 %v6911, %v6905
    %v7398 = vpack.c.b16 %v6912, %v6906
    %v7399 = vpack.c.b16 %v6913, %v6907
    %v7400 = vpack.c.b16 %v6914, %v6908
    %v7401 = vpack.c.b16 %v6915, %v6909
    %v7402 = vpack.c.b16 %v6922, %v6916
    %v7403 = vpack.c.b16 %v6923, %v6917
    %v7404 = vpack.c.b16 %v6924, %v6918
    %v7405 = vpack.c.b16 %v6925, %v6919
    %v7406 = vpack.c.b16 %v6926, %v6920
    %v7407 = vpack.c.b16 %v6927, %v6921
    %v7408 = vpack.c.b16 %v6934, %v6928
    %v7409 = vpack.c.b16 %v6935, %v6929
    %v7410 = vpack.c.b16 %v6936, %v6930
    %v7411 = vpack.c.b16 %v6937, %v6931
    %v7412 = vpack.c.b16 %v6938, %v6932
    %v7413 = vpack.c.b16 %v6939, %v6933
    %v7414 = vpack.c.b16 %v6946, %v6940
    %v7415 = vpack.c.b16 %v6947, %v6941
    %v7416 = vpack.c.b16 %v6948, %v6942
    %v7417 = vpack.c.b16 %v6949, %v6943
    %v7418 = vpack.c.b16 %v6950, %v6944
    %v7419 = vpack.c.b16 %v6951, %v6945
    %v7420 = vpack.c.b16 %v6958, %v6952
    %v7421 = vpack.c.b16 %v6959, %v6953
    %v7422 = vpack.c.b16 %v6960, %v6954
    %v7423 = vpack.c.b16 %v6961, %v6955
    %v7424 = vpack.c.b16 %v6962, %v6956
    %v7425 = vpack.c.b16 %v6963, %v6957
    %v7426 = vpack.c.b16 %v6970, %v6964
    %v7427 = vpack.c.b16 %v6971, %v6965
    %v7428 = vpack.c.b16 %v6972, %v6966
    %v7429 = vpack.c.b16 %v6973, %v6967
    %v7430 = vpack.c.b16 %v6974, %v6968
    %v7431 = vpack.c.b16 %v6975, %v6969
    %v7432 = vpack.c.b16 %v6982, %v6976
    %v7433 = vpack.c.b16 %v6983, %v6977
    %v7434 = vpack.c.b16 %v6984, %v6978
    %v7435 = vpack.c.b16 %v6985, %v6979
    %v7436 = vpack.c.b16 %v6986, %v6980
    %v7437 = vpack.c.b16 %v6987, %v6981
    %v7438 = vpack.c.b16 %v6994, %v6988
    %v7439 = vpack.c.b16 %v6995, %v6989
    %v7440 = vpack.c.b16 %v6996, %v6990
    %v7441 = vpack.c.b16 %v6997, %v6991
    %v7442 = vpack.c.b16 %v6998, %v6992
    %v7443 = vpack.c.b16 %v6999, %v6993
    %v7444 = vpack.c.b16 %v7006, %v7000
    %v7445 = vpack.c.b16 %v7007, %v7001
    %v7446 = vpack.c.b16 %v7008, %v7002
    %v7447 = vpack.c.b16 %v7009, %v7003
    %v7448 = vpack.c.b16 %v7010, %v7004
    %v7449 = vpack.c.b16 %v7011, %v7005
    %v7450 = vpack.c.b16 %v7018, %v7012
    %v7451 = vpack.c.b16 %v7019, %v7013
    %v7452 = vpack.c.b16 %v7020, %v7014
    %v7453 = vpack.c.b16 %v7021, %v7015
    %v7454 = vpack.c.b16 %v7022, %v7016
    %v7455 = vpack.c.b16 %v7023, %v7017
    %v7456 = vpack.c.b16 %v7030, %v7024
    %v7457 = vpack.c.b16 %v7031, %v7025
    %v7458 = vpack.c.b16 %v7032, %v7026
    %v7459 = vpack.c.b16 %v7033, %v7027
    %v7460 = vpack.c.b16 %v7034, %v7028
    %v7461 = vpack.c.b16 %v7035, %v7029
    %v7462 = vpack.c.b16 %v7042, %v7036
    %v7463 = vpack.c.b16 %v7043, %v7037
    %v7464 = vpack.c.b16 %v7044, %v7038
    %v7465 = vpack.c.b16 %v7045, %v7039
    %v7466 = vpack.c.b16 %v7046, %v7040
    %v7467 = vpack.c.b16 %v7047, %v7041
    %v7468 = vpack.c.b16 %v7054, %v7048
    %v7469 = vpack.c.b16 %v7055, %v7049
    %v7470 = vpack.c.b16 %v7056, %v7050
    %v7471 = vpack.c.b16 %v7057, %v7051
    %v7472 = vpack.c.b16 %v7058, %v7052
    %v7473 = vpack.c.b16 %v7059, %v7053
    %v7474 = vpack.c.b16 %v7066, %v7060
    %v7475 = vpack.c.b16 %v7067, %v7061
    %v7476 = vpack.c.b16 %v7068, %v7062
    %v7477 = vpack.c.b16 %v7069, %v7063
    %v7478 = vpack.c.b16 %v7070, %v7064
    %v7479 = vpack.c.b16 %v7071, %v7065
    %v7480 = vpack.c.b16 %v7078, %v7072
    %v7481 = vpack.c.b16 %v7079, %v7073
    %v7482 = vpack.c.b16 %v7080, %v7074
    %v7483 = vpack.c.b16 %v7081, %v7075
    %v7484 = vpack.c.b16 %v7082, %v7076
    %v7485 = vpack.c.b16 %v7083, %v7077
    %v7486 = vpack.c.b16 %v7090, %v7084
    %v7487 = vpack.c.b16 %v7091, %v7085
    %v7488 = vpack.c.b16 %v7092, %v7086
    %v7489 = vpack.c.b16 %v7093, %v7087
    %v7490 = vpack.c.b16 %v7094, %v7088
    %v7491 = vpack.c.b16 %v7095, %v7089
    %v7492 = vpack.c.b16 %v7102, %v7096
    %v7493 = vpack.c.b16 %v7103, %v7097
    %v7494 = vpack.c.b16 %v7104, %v7098
    %v7495 = vpack.c.b16 %v7105, %v7099
    %v7496 = vpack.c.b16 %v7106, %v7100
    %v7497 = vpack.c.b16 %v7107, %v7101
    %v7498 = vpack.c.b16 %v7114, %v7108
    %v7499 = vpack.c.b16 %v7115, %v7109
    %v7500 = vpack.c.b16 %v7116, %v7110
    %v7501 = vpack.c.b16 %v7117, %v7111
    %v7502 = vpack.c.b16 %v7118, %v7112
    %v7503 = vpack.c.b16 %v7119, %v7113
    %v7504 = vpack.c.b16 %v7126, %v7120
    %v7505 = vpack.c.b16 %v7127, %v7121
    %v7506 = vpack.c.b16 %v7128, %v7122
    %v7507 = vpack.c.b16 %v7129, %v7123
    %v7508 = vpack.c.b16 %v7130, %v7124
    %v7509 = vpack.c.b16 %v7131, %v7125
    %v7510 = vpack.c.b16 %v7138, %v7132
    %v7511 = vpack.c.b16 %v7139, %v7133
    %v7512 = vpack.c.b16 %v7140, %v7134
    %v7513 = vpack.c.b16 %v7141, %v7135
    %v7514 = vpack.c.b16 %v7142, %v7136
    %v7515 = vpack.c.b16 %v7143, %v7137
    %v7516 = vpack.c.b16 %v7150, %v7144
    %v7517 = vpack.c.b16 %v7151, %v7145
    %v7518 = vpack.c.b16 %v7152, %v7146
    %v7519 = vpack.c.b16 %v7153, %v7147
    %v7520 = vpack.c.b16 %v7154, %v7148
    %v7521 = vpack.c.b16 %v7155, %v7149
    %v7522 = vpack.c.b16 %v7162, %v7156
    %v7523 = vpack.c.b16 %v7163, %v7157
    %v7524 = vpack.c.b16 %v7164, %v7158
    %v7525 = vpack.c.b16 %v7165, %v7159
    %v7526 = vpack.c.b16 %v7166, %v7160
    %v7527 = vpack.c.b16 %v7167, %v7161
    %v7528 = vpack.c.b16 %v7174, %v7168
    %v7529 = vpack.c.b16 %v7175, %v7169
    %v7530 = vpack.c.b16 %v7176, %v7170
    %v7531 = vpack.c.b16 %v7177, %v7171
    %v7532 = vpack.c.b16 %v7178, %v7172
    %v7533 = vpack.c.b16 %v7179, %v7173
    %v7534 = vpack.c.b16 %v7186, %v7180
    %v7535 = vpack.c.b16 %v7187, %v7181
    %v7536 = vpack.c.b16 %v7188, %v7182
    %v7537 = vpack.c.b16 %v7189, %v7183
    %v7538 = vpack.c.b16 %v7190, %v7184
    %v7539 = vpack.c.b16 %v7191, %v7185
    %v7540 = vpack.c.b16 %v7198, %v7192
    %v7541 = vpack.c.b16 %v7199, %v7193
    %v7542 = vpack.c.b16 %v7200, %v7194
    %v7543 = vpack.c.b16 %v7201, %v7195
    %v7544 = vpack.c.b16 %v7202, %v7196
    %v7545 = vpack.c.b16 %v7203, %v7197
    %v7546 = vpack.c.b16 %v7210, %v7204
    %v7547 = vpack.c.b16 %v7211, %v7205
    %v7548 = vpack.c.b16 %v7212, %v7206
    %v7549 = vpack.c.b16 %v7213, %v7207
    %v7550 = vpack.c.b16 %v7214, %v7208
    %v7551 = vpack.c.b16 %v7215, %v7209
    %v7552 = vpack.c.b16 %v7222, %v7216
    %v7553 = vpack.c.b16 %v7223, %v7217
    %v7554 = vpack.c.b16 %v7224, %v7218
    %v7555 = vpack.c.b16 %v7225, %v7219
    %v7556 = vpack.c.b16 %v7226, %v7220
    %v7557 = vpack.c.b16 %v7227, %v7221
    %v7558 = vpack.c.b16 %v7234, %v7228
    %v7559 = vpack.c.b16 %v7235, %v7229
    %v7560 = vpack.c.b16 %v7236, %v7230
    %v7561 = vpack.c.b16 %v7237, %v7231
    %v7562 = vpack.c.b16 %v7238, %v7232
    %v7563 = vpack.c.b16 %v7239, %v7233
    %v7564 = vpack.c.b16 %v7246, %v7240
    %v7565 = vpack.c.b16 %v7247, %v7241
    %v7566 = vpack.c.b16 %v7248, %v7242
    %v7567 = vpack.c.b16 %v7249, %v7243
    %v7568 = vpack.c.b16 %v7250, %v7244
    %v7569 = vpack.c.b16 %v7251, %v7245
    %v7570 = vpack.c.b16 %v7258, %v7252
    %v7571 = vpack.c.b16 %v7259, %v7253
    %v7572 = vpack.c.b16 %v7260, %v7254
    %v7573 = vpack.c.b16 %v7261, %v7255
    %v7574 = vpack.c.b16 %v7262, %v7256
    %v7575 = vpack.c.b16 %v7263, %v7257
    %v7576 = vpack.c.b16 %v7270, %v7264
    %v7577 = vpack.c.b16 %v7271, %v7265
    %v7578 = vpack.c.b16 %v7272, %v7266
    %v7579 = vpack.c.b16 %v7273, %v7267
    %v7580 = vpack.c.b16 %v7274, %v7268
    %v7581 = vpack.c.b16 %v7275, %v7269
    %v7582 = vpack.c.b16 %v7282, %v7276
    %v7583 = vpack.c.b16 %v7283, %v7277
    %v7584 = vpack.c.b16 %v7284, %v7278
    %v7585 = vpack.c.b16 %v7285, %v7279
    %v7586 = vpack.c.b16 %v7286, %v7280
    %v7587 = vpack.c.b16 %v7287, %v7281
    %v7588 = vpack.c.b16 %v7294, %v7288
    %v7589 = vpack.c.b16 %v7295, %v7289
    %v7590 = vpack.c.b16 %v7296, %v7290
    %v7591 = vpack.c.b16 %v7297, %v7291
    %v7592 = vpack.c.b16 %v7298, %v7292
    %v7593 = vpack.c.b16 %v7299, %v7293
    %v7594 = vpack.c.b16 %v7306, %v7300
    %v7595 = vpack.c.b16 %v7307, %v7301
    %v7596 = vpack.c.b16 %v7308, %v7302
    %v7597 = vpack.c.b16 %v7309, %v7303
    %v7598 = vpack.c.b16 %v7310, %v7304
    %v7599 = vpack.c.b16 %v7311, %v7305
    %7888 = vmatprep.subr.bf16.mxu0 %v7313
    %7889 = vmatpush1.bf16.msra.mxu0 %v7312
    %7890 = vmatprep.subr.bf16.mxu0 %v7319
    %7891 = vmatpush1.bf16.msra.mxu0 %v7318
    %7892 = vmatprep.subr.bf16.mxu0 %v7325
    %7893 = vmatpush1.bf16.msra.mxu0 %v7324
    %7894 = vmatprep.subr.bf16.mxu0 %v7331
    %7895 = vmatpush1.bf16.msra.mxu0 %v7330
    %7896 = vmatprep.subr.bf16.mxu0 %v7337
    %7897 = vmatpush1.bf16.msra.mxu0 %v7336
    %7898 = vmatprep.subr.bf16.mxu0 %v7343
    %7899 = vmatpush1.bf16.msra.mxu0 %v7342
    %7900 = vmatprep.subr.bf16.mxu0 %v7349
    %7901 = vmatpush1.bf16.msra.mxu0 %v7348
    %7902 = vmatprep.subr.bf16.mxu0 %v7355
    %7903 = vmatpush1.bf16.msra.mxu0 %v7354
    %7904 = vmatprep.subr.bf16.mxu0 %v7361
    %7905 = vmatpush1.bf16.msra.mxu0 %v7360
    %7906 = vmatprep.subr.bf16.mxu0 %v7367
    %7907 = vmatpush1.bf16.msra.mxu0 %v7366
    %7908 = vmatprep.subr.bf16.mxu0 %v7373
    %7909 = vmatpush1.bf16.msra.mxu0 %v7372
    %7910 = vmatprep.subr.bf16.mxu0 %v7379
    %7911 = vmatpush1.bf16.msra.mxu0 %v7378
    %7912 = vmatprep.subr.bf16.mxu0 %v7385
    %7913 = vmatpush1.bf16.msra.mxu0 %v7384
    %7914 = vmatprep.subr.bf16.mxu0 %v7391
    %7915 = vmatpush1.bf16.msra.mxu0 %v7390
    %7916 = vmatprep.subr.bf16.mxu0 %v7397
    %7917 = vmatpush1.bf16.msra.mxu0 %v7396
    %7918 = vmatprep.subr.bf16.mxu0 %v7403
    %7919 = vmatpush1.bf16.msra.mxu0 %v7402
    %7920 = vmatprep.mubr.bf16.mxu0 %v6123
    %7921 = vmatmul.mubr.bf16.gmra.mrb[0].mxu0 %v6122
    %v7922 = vpop.f32.mrb[0].mxu0
    %v7923 = vadd.f32 %v6421, %v7922
    %v7924 = vpop.f32.mrb[0].mxu0
    %v7925 = vadd.f32 %v6425, %v7924
    %v7926 = vpop.f32.mrb[0].mxu0
    %v7927 = vpop.f32.mrb[0].mxu0
    %7928 = vdwg.mxu0
    %7929 = vmatprep.subr.bf16.mxu0 %v7409
    %7930 = vmatpush1.bf16.msra.mxu0 %v7408
    %7931 = vmatprep.subr.bf16.mxu0 %v7415
    %7932 = vmatpush1.bf16.msra.mxu0 %v7414
    %7933 = vmatprep.subr.bf16.mxu0 %v7421
    %7934 = vmatpush1.bf16.msra.mxu0 %v7420
    %7935 = vmatprep.subr.bf16.mxu0 %v7427
    %7936 = vmatpush1.bf16.msra.mxu0 %v7426
    %7937 = vmatprep.subr.bf16.mxu0 %v7433
    %7938 = vmatpush1.bf16.msra.mxu0 %v7432
    %7939 = vmatprep.subr.bf16.mxu0 %v7439
    %7940 = vmatpush1.bf16.msra.mxu0 %v7438
    %7941 = vmatprep.subr.bf16.mxu0 %v7445
    %7942 = vmatpush1.bf16.msra.mxu0 %v7444
    %7943 = vmatprep.subr.bf16.mxu0 %v7451
    %7944 = vmatpush1.bf16.msra.mxu0 %v7450
    %7945 = vmatprep.subr.bf16.mxu0 %v7457
    %7946 = vmatpush1.bf16.msra.mxu0 %v7456
    %7947 = vmatprep.subr.bf16.mxu0 %v7463
    %7948 = vmatpush1.bf16.msra.mxu0 %v7462
    %7949 = vmatprep.subr.bf16.mxu0 %v7469
    %7950 = vmatpush1.bf16.msra.mxu0 %v7468
    %7951 = vmatprep.subr.bf16.mxu0 %v7475
    %7952 = vmatpush1.bf16.msra.mxu0 %v7474
    %7953 = vmatprep.subr.bf16.mxu0 %v7481
    %7954 = vmatpush1.bf16.msra.mxu0 %v7480
    %7955 = vmatprep.subr.bf16.mxu0 %v7487
    %7956 = vmatpush1.bf16.msra.mxu0 %v7486
    %7957 = vmatprep.subr.bf16.mxu0 %v7493
    %7958 = vmatpush1.bf16.msra.mxu0 %v7492
    %7959 = vmatprep.subr.bf16.mxu0 %v7499
    %7960 = vmatpush1.bf16.msra.mxu0 %v7498
    %7961 = vmatprep.mubr.bf16.mxu0 %v6125
    %7962 = vmatmul.mubr.bf16.gmra.mrb[0].mxu0 %v6124
    %v7963 = vpop.f32.mrb[0].mxu0
    %v7964 = vadd.f32 %v7923, %v7963
    %v7965 = vpop.f32.mrb[0].mxu0
    %v7966 = vadd.f32 %v7925, %v7965
    %v7967 = vpop.f32.mrb[0].mxu0
    %v7968 = vpop.f32.mrb[0].mxu0
    %7969 = vdwg.mxu0
    %7970 = vmatprep.subr.bf16.mxu0 %v7505
    %7971 = vmatpush1.bf16.msra.mxu0 %v7504
    %7972 = vmatprep.subr.bf16.mxu0 %v7511
    %7973 = vmatpush1.bf16.msra.mxu0 %v7510
    %7974 = vmatprep.subr.bf16.mxu0 %v7517
    %7975 = vmatpush1.bf16.msra.mxu0 %v7516
    %7976 = vmatprep.subr.bf16.mxu0 %v7523
    %7977 = vmatpush1.bf16.msra.mxu0 %v7522
    %7978 = vmatprep.subr.bf16.mxu0 %v7529
    %7979 = vmatpush1.bf16.msra.mxu0 %v7528
    %7980 = vmatprep.subr.bf16.mxu0 %v7535
    %7981 = vmatpush1.bf16.msra.mxu0 %v7534
    %7982 = vmatprep.subr.bf16.mxu0 %v7541
    %7983 = vmatpush1.bf16.msra.mxu0 %v7540
    %7984 = vmatprep.subr.bf16.mxu0 %v7547
    %7985 = vmatpush1.bf16.msra.mxu0 %v7546
    %7986 = vmatprep.subr.bf16.mxu0 %v7553
    %7987 = vmatpush1.bf16.msra.mxu0 %v7552
    %7988 = vmatprep.subr.bf16.mxu0 %v7559
    %7989 = vmatpush1.bf16.msra.mxu0 %v7558
    %7990 = vmatprep.subr.bf16.mxu0 %v7565
    %7991 = vmatpush1.bf16.msra.mxu0 %v7564
    %7992 = vmatprep.subr.bf16.mxu0 %v7571
    %7993 = vmatpush1.bf16.msra.mxu0 %v7570
    %7994 = vmatprep.subr.bf16.mxu0 %v7577
    %7995 = vmatpush1.bf16.msra.mxu0 %v7576
    %7996 = vmatprep.subr.bf16.mxu0 %v7583
    %7997 = vmatpush1.bf16.msra.mxu0 %v7582
    %7998 = vmatprep.subr.bf16.mxu0 %v7589
    %7999 = vmatpush1.bf16.msra.mxu0 %v7588
    %8000 = vmatprep.subr.bf16.mxu0 %v7595
    %8001 = vmatpush1.bf16.msra.mxu0 %v7594
    %8002 = vmatprep.mubr.bf16.mxu0 %v6127
    %8003 = vmatmul.mubr.bf16.gmra.mrb[0].mxu0 %v6126
    %v8004 = vpop.f32.mrb[0].mxu0
    %v8005 = vadd.f32 %v7964, %v8004
    %v8006 = vpop.f32.mrb[0].mxu0
    %v8007 = vadd.f32 %v7966, %v8006
    %v8008 = vpop.f32.mrb[0].mxu0
    %v8009 = vpop.f32.mrb[0].mxu0
    %8010 = vdwg.mxu0
    %8011 = vmatprep.subr.bf16.mxu0 %v7315
    %8012 = vmatpush1.bf16.msra.mxu0 %v7314
    %8013 = vmatprep.subr.bf16.mxu0 %v7321
    %8014 = vmatpush1.bf16.msra.mxu0 %v7320
    %8015 = vmatprep.subr.bf16.mxu0 %v7327
    %8016 = vmatpush1.bf16.msra.mxu0 %v7326
    %8017 = vmatprep.subr.bf16.mxu0 %v7333
    %8018 = vmatpush1.bf16.msra.mxu0 %v7332
    %8019 = vmatprep.subr.bf16.mxu0 %v7339
    %8020 = vmatpush1.bf16.msra.mxu0 %v7338
    %8021 = vmatprep.subr.bf16.mxu0 %v7345
    %8022 = vmatpush1.bf16.msra.mxu0 %v7344
    %8023 = vmatprep.subr.bf16.mxu0 %v7351
    %8024 = vmatpush1.bf16.msra.mxu0 %v7350
    %8025 = vmatprep.subr.bf16.mxu0 %v7357
    %8026 = vmatpush1.bf16.msra.mxu0 %v7356
    %8027 = vmatprep.subr.bf16.mxu0 %v7363
    %8028 = vmatpush1.bf16.msra.mxu0 %v7362
    %8029 = vmatprep.subr.bf16.mxu0 %v7369
    %8030 = vmatpush1.bf16.msra.mxu0 %v7368
    %8031 = vmatprep.subr.bf16.mxu0 %v7375
    %8032 = vmatpush1.bf16.msra.mxu0 %v7374
    %8033 = vmatprep.subr.bf16.mxu0 %v7381
    %8034 = vmatpush1.bf16.msra.mxu0 %v7380
    %8035 = vmatprep.subr.bf16.mxu0 %v7387
    %8036 = vmatpush1.bf16.msra.mxu0 %v7386
    %8037 = vmatprep.subr.bf16.mxu0 %v7393
    %8038 = vmatpush1.bf16.msra.mxu0 %v7392
    %8039 = vmatprep.subr.bf16.mxu0 %v7399
    %8040 = vmatpush1.bf16.msra.mxu0 %v7398
    %8041 = vmatprep.subr.bf16.mxu0 %v7405
    %8042 = vmatpush1.bf16.msra.mxu0 %v7404
    %8043 = vmatprep.mubr.bf16.mxu0 %v6123
    %8044 = vmatmul.mubr.bf16.gmra.mrb[0].mxu0 %v6122
    %v8045 = vpop.f32.mrb[0].mxu0
    %v8046 = vadd.f32 %v6429, %v8045
    %v8047 = vpop.f32.mrb[0].mxu0
    %v8048 = vadd.f32 %v6433, %v8047
    %v8049 = vpop.f32.mrb[0].mxu0
    %v8050 = vpop.f32.mrb[0].mxu0
    %8051 = vdwg.mxu0
    %8052 = vmatprep.subr.bf16.mxu0 %v7411
    %8053 = vmatpush1.bf16.msra.mxu0 %v7410
    %8054 = vmatprep.subr.bf16.mxu0 %v7417
    %8055 = vmatpush1.bf16.msra.mxu0 %v7416
    %8056 = vmatprep.subr.bf16.mxu0 %v7423
    %8057 = vmatpush1.bf16.msra.mxu0 %v7422
    %8058 = vmatprep.subr.bf16.mxu0 %v7429
    %8059 = vmatpush1.bf16.msra.mxu0 %v7428
    %8060 = vmatprep.subr.bf16.mxu0 %v7435
    %8061 = vmatpush1.bf16.msra.mxu0 %v7434
    %8062 = vmatprep.subr.bf16.mxu0 %v7441
    %8063 = vmatpush1.bf16.msra.mxu0 %v7440
    %8064 = vmatprep.subr.bf16.mxu0 %v7447
    %8065 = vmatpush1.bf16.msra.mxu0 %v7446
    %8066 = vmatprep.subr.bf16.mxu0 %v7453
    %8067 = vmatpush1.bf16.msra.mxu0 %v7452
    %8068 = vmatprep.subr.bf16.mxu0 %v7459
    %8069 = vmatpush1.bf16.msra.mxu0 %v7458
    %8070 = vmatprep.subr.bf16.mxu0 %v7465
    %8071 = vmatpush1.bf16.msra.mxu0 %v7464
    %8072 = vmatprep.subr.bf16.mxu0 %v7471
    %8073 = vmatpush1.bf16.msra.mxu0 %v7470
    %8074 = vmatprep.subr.bf16.mxu0 %v7477
    %8075 = vmatpush1.bf16.msra.mxu0 %v7476
    %8076 = vmatprep.subr.bf16.mxu0 %v7483
    %8077 = vmatpush1.bf16.msra.mxu0 %v7482
    %8078 = vmatprep.subr.bf16.mxu0 %v7489
    %8079 = vmatpush1.bf16.msra.mxu0 %v7488
    %8080 = vmatprep.subr.bf16.mxu0 %v7495
    %8081 = vmatpush1.bf16.msra.mxu0 %v7494
    %8082 = vmatprep.subr.bf16.mxu0 %v7501
    %8083 = vmatpush1.bf16.msra.mxu0 %v7500
    %8084 = vmatprep.mubr.bf16.mxu0 %v6125
    %8085 = vmatmul.mubr.bf16.gmra.mrb[0].mxu0 %v6124
    %v8086 = vpop.f32.mrb[0].mxu0
    %v8087 = vadd.f32 %v8046, %v8086
    %v8088 = vpop.f32.mrb[0].mxu0
    %v8089 = vadd.f32 %v8048, %v8088
    %v8090 = vpop.f32.mrb[0].mxu0
    %v8091 = vpop.f32.mrb[0].mxu0
    %8092 = vdwg.mxu0
    %8093 = vmatprep.subr.bf16.mxu0 %v7507
    %8094 = vmatpush1.bf16.msra.mxu0 %v7506
    %8095 = vmatprep.subr.bf16.mxu0 %v7513
    %8096 = vmatpush1.bf16.msra.mxu0 %v7512
    %8097 = vmatprep.subr.bf16.mxu0 %v7519
    %8098 = vmatpush1.bf16.msra.mxu0 %v7518
    %8099 = vmatprep.subr.bf16.mxu0 %v7525
    %8100 = vmatpush1.bf16.msra.mxu0 %v7524
    %8101 = vmatprep.subr.bf16.mxu0 %v7531
    %8102 = vmatpush1.bf16.msra.mxu0 %v7530
    %8103 = vmatprep.subr.bf16.mxu0 %v7537
    %8104 = vmatpush1.bf16.msra.mxu0 %v7536
    %8105 = vmatprep.subr.bf16.mxu0 %v7543
    %8106 = vmatpush1.bf16.msra.mxu0 %v7542
    %8107 = vmatprep.subr.bf16.mxu0 %v7549
    %8108 = vmatpush1.bf16.msra.mxu0 %v7548
    %8109 = vmatprep.subr.bf16.mxu0 %v7555
    %8110 = vmatpush1.bf16.msra.mxu0 %v7554
    %8111 = vmatprep.subr.bf16.mxu0 %v7561
    %8112 = vmatpush1.bf16.msra.mxu0 %v7560
    %8113 = vmatprep.subr.bf16.mxu0 %v7567
    %8114 = vmatpush1.bf16.msra.mxu0 %v7566
    %8115 = vmatprep.subr.bf16.mxu0 %v7573
    %8116 = vmatpush1.bf16.msra.mxu0 %v7572
    %8117 = vmatprep.subr.bf16.mxu0 %v7579
    %8118 = vmatpush1.bf16.msra.mxu0 %v7578
    %8119 = vmatprep.subr.bf16.mxu0 %v7585
    %8120 = vmatpush1.bf16.msra.mxu0 %v7584
    %8121 = vmatprep.subr.bf16.mxu0 %v7591
    %8122 = vmatpush1.bf16.msra.mxu0 %v7590
    %8123 = vmatprep.subr.bf16.mxu0 %v7597
    %8124 = vmatpush1.bf16.msra.mxu0 %v7596
    %8125 = vmatprep.mubr.bf16.mxu0 %v6127
    %8126 = vmatmul.mubr.bf16.gmra.mrb[0].mxu0 %v6126
    %v8127 = vpop.f32.mrb[0].mxu0
    %v8128 = vadd.f32 %v8087, %v8127
    %v8129 = vpop.f32.mrb[0].mxu0
    %v8130 = vadd.f32 %v8089, %v8129
    %v8131 = vpop.f32.mrb[0].mxu0
    %v8132 = vpop.f32.mrb[0].mxu0
    %8133 = vdwg.mxu0
    %8134 = vmatprep.subr.bf16.mxu0 %v7317
    %8135 = vmatpush1.bf16.msra.mxu0 %v7316
    %8136 = vmatprep.subr.bf16.mxu0 %v7323
    %8137 = vmatpush1.bf16.msra.mxu0 %v7322
    %8138 = vmatprep.subr.bf16.mxu0 %v7329
    %8139 = vmatpush1.bf16.msra.mxu0 %v7328
    %8140 = vmatprep.subr.bf16.mxu0 %v7335
    %8141 = vmatpush1.bf16.msra.mxu0 %v7334
    %8142 = vmatprep.subr.bf16.mxu0 %v7341
    %8143 = vmatpush1.bf16.msra.mxu0 %v7340
    %8144 = vmatprep.subr.bf16.mxu0 %v7347
    %8145 = vmatpush1.bf16.msra.mxu0 %v7346
    %8146 = vmatprep.subr.bf16.mxu0 %v7353
    %8147 = vmatpush1.bf16.msra.mxu0 %v7352
    %8148 = vmatprep.subr.bf16.mxu0 %v7359
    %8149 = vmatpush1.bf16.msra.mxu0 %v7358
    %8150 = vmatprep.subr.bf16.mxu0 %v7365
    %8151 = vmatpush1.bf16.msra.mxu0 %v7364
    %8152 = vmatprep.subr.bf16.mxu0 %v7371
    %8153 = vmatpush1.bf16.msra.mxu0 %v7370
    %8154 = vmatprep.subr.bf16.mxu0 %v7377
    %8155 = vmatpush1.bf16.msra.mxu0 %v7376
    %8156 = vmatprep.subr.bf16.mxu0 %v7383
    %8157 = vmatpush1.bf16.msra.mxu0 %v7382
    %8158 = vmatprep.subr.bf16.mxu0 %v7389
    %8159 = vmatpush1.bf16.msra.mxu0 %v7388
    %8160 = vmatprep.subr.bf16.mxu0 %v7395
    %8161 = vmatpush1.bf16.msra.mxu0 %v7394
    %8162 = vmatprep.subr.bf16.mxu0 %v7401
    %8163 = vmatpush1.bf16.msra.mxu0 %v7400
    %8164 = vmatprep.subr.bf16.mxu0 %v7407
    %8165 = vmatpush1.bf16.msra.mxu0 %v7406
    %8166 = vmatprep.mubr.bf16.mxu0 %v6123
    %8167 = vmatmul.mubr.bf16.gmra.mrb[0].mxu0 %v6122
    %v8168 = vpop.f32.mrb[0].mxu0
    %v8169 = vadd.f32 %v6437, %v8168
    %v8170 = vpop.f32.mrb[0].mxu0
    %v8171 = vadd.f32 %v6441, %v8170
    %v8172 = vpop.f32.mrb[0].mxu0
    %v8173 = vpop.f32.mrb[0].mxu0
    %8174 = vdwg.mxu0
    %8175 = vmatprep.subr.bf16.mxu0 %v7413
    %8176 = vmatpush1.bf16.msra.mxu0 %v7412
    %8177 = vmatprep.subr.bf16.mxu0 %v7419
    %8178 = vmatpush1.bf16.msra.mxu0 %v7418
    %8179 = vmatprep.subr.bf16.mxu0 %v7425
    %8180 = vmatpush1.bf16.msra.mxu0 %v7424
    %8181 = vmatprep.subr.bf16.mxu0 %v7431
    %8182 = vmatpush1.bf16.msra.mxu0 %v7430
    %8183 = vmatprep.subr.bf16.mxu0 %v7437
    %8184 = vmatpush1.bf16.msra.mxu0 %v7436
    %8185 = vmatprep.subr.bf16.mxu0 %v7443
    %8186 = vmatpush1.bf16.msra.mxu0 %v7442
    %8187 = vmatprep.subr.bf16.mxu0 %v7449
    %8188 = vmatpush1.bf16.msra.mxu0 %v7448
    %8189 = vmatprep.subr.bf16.mxu0 %v7455
    %8190 = vmatpush1.bf16.msra.mxu0 %v7454
    %8191 = vmatprep.subr.bf16.mxu0 %v7461
    %8192 = vmatpush1.bf16.msra.mxu0 %v7460
    %8193 = vmatprep.subr.bf16.mxu0 %v7467
    %8194 = vmatpush1.bf16.msra.mxu0 %v7466
    %8195 = vmatprep.subr.bf16.mxu0 %v7473
    %8196 = vmatpush1.bf16.msra.mxu0 %v7472
    %8197 = vmatprep.subr.bf16.mxu0 %v7479
    %8198 = vmatpush1.bf16.msra.mxu0 %v7478
    %8199 = vmatprep.subr.bf16.mxu0 %v7485
    %8200 = vmatpush1.bf16.msra.mxu0 %v7484
    %8201 = vmatprep.subr.bf16.mxu0 %v7491
    %8202 = vmatpush1.bf16.msra.mxu0 %v7490
    %8203 = vmatprep.subr.bf16.mxu0 %v7497
    %8204 = vmatpush1.bf16.msra.mxu0 %v7496
    %8205 = vmatprep.subr.bf16.mxu0 %v7503
    %8206 = vmatpush1.bf16.msra.mxu0 %v7502
    %8207 = vmatprep.mubr.bf16.mxu0 %v6125
    %8208 = vmatmul.mubr.bf16.gmra.mrb[0].mxu0 %v6124
    %v8209 = vpop.f32.mrb[0].mxu0
    %v8210 = vadd.f32 %v8169, %v8209
    %v8211 = vpop.f32.mrb[0].mxu0
    %v8212 = vadd.f32 %v8171, %v8211
    %v8213 = vpop.f32.mrb[0].mxu0
    %v8214 = vpop.f32.mrb[0].mxu0
    %8215 = vdwg.mxu0
    %8216 = vmatprep.subr.bf16.mxu0 %v7509
    %8217 = vmatpush1.bf16.msra.mxu0 %v7508
    %8218 = vmatprep.subr.bf16.mxu0 %v7515
    %8219 = vmatpush1.bf16.msra.mxu0 %v7514
    %8220 = vmatprep.subr.bf16.mxu0 %v7521
    %8221 = vmatpush1.bf16.msra.mxu0 %v7520
    %8222 = vmatprep.subr.bf16.mxu0 %v7527
    %8223 = vmatpush1.bf16.msra.mxu0 %v7526
    %8224 = vmatprep.subr.bf16.mxu0 %v7533
    %8225 = vmatpush1.bf16.msra.mxu0 %v7532
    %8226 = vmatprep.subr.bf16.mxu0 %v7539
    %8227 = vmatpush1.bf16.msra.mxu0 %v7538
    %8228 = vmatprep.subr.bf16.mxu0 %v7545
    %8229 = vmatpush1.bf16.msra.mxu0 %v7544
    %8230 = vmatprep.subr.bf16.mxu0 %v7551
    %8231 = vmatpush1.bf16.msra.mxu0 %v7550
    %8232 = vmatprep.subr.bf16.mxu0 %v7557
    %8233 = vmatpush1.bf16.msra.mxu0 %v7556
    %8234 = vmatprep.subr.bf16.mxu0 %v7563
    %8235 = vmatpush1.bf16.msra.mxu0 %v7562
    %8236 = vmatprep.subr.bf16.mxu0 %v7569
    %8237 = vmatpush1.bf16.msra.mxu0 %v7568
    %8238 = vmatprep.subr.bf16.mxu0 %v7575
    %8239 = vmatpush1.bf16.msra.mxu0 %v7574
    %8240 = vmatprep.subr.bf16.mxu0 %v7581
    %8241 = vmatpush1.bf16.msra.mxu0 %v7580
    %8242 = vmatprep.subr.bf16.mxu0 %v7587
    %8243 = vmatpush1.bf16.msra.mxu0 %v7586
    %8244 = vmatprep.subr.bf16.mxu0 %v7593
    %8245 = vmatpush1.bf16.msra.mxu0 %v7592
    %8246 = vmatprep.subr.bf16.mxu0 %v7599
    %8247 = vmatpush1.bf16.msra.mxu0 %v7598
    %8248 = vmatprep.mubr.bf16.mxu0 %v6127
    %8249 = vmatmul.mubr.bf16.gmra.mrb[0].mxu0 %v6126
    %v8250 = vpop.f32.mrb[0].mxu0
    %v8251 = vadd.f32 %v8210, %v8250
    %v8252 = vpop.f32.mrb[0].mxu0
    %v8253 = vadd.f32 %v8212, %v8252
    %v8254 = vpop.f32.mrb[0].mxu0
    %v8255 = vpop.f32.mrb[0].mxu0
    %8256 = vdwg.mxu0
    %v8257 = vmax.f32 %v8005, 0.0
    %v8258 = vmax.f32 %v8007, 0.0
    %v8259 = vmax.f32 %v8128, 0.0
    %v8260 = vmax.f32 %v8130, 0.0
    %v8261 = vmax.f32 %v8251, 0.0
    %v8262 = vmax.f32 %v8253, 0.0
    %v8263 = vpack.c.bf16 %v8257, %v8257
    %v8264 = vpack.c.bf16 %v8258, %v8258
    %v8265 = vpack.c.bf16 %v8259, %v8259
    %v8266 = vpack.c.bf16 %v8260, %v8260
    %v8267 = vpack.c.bf16 %v8261, %v8261
    %v8268 = vpack.c.bf16 %v8262, %v8262
    %v8269 = vld [vmem:[#allocation19] sm:$0xff]
    %v8270 = vld [vmem:[#allocation19 + $0x8] sm:$0xff]
    %v8271 = vld [vmem:[#allocation19 + $0x10] sm:$0xff]
    %v8272 = vld [vmem:[#allocation19 + $0x18] sm:$0xff]
    %v8273 = vld [vmem:[#allocation19 + $0x20] sm:$0xff]
    %v8274 = vld [vmem:[#allocation19 + $0x28] sm:$0xff]
    %v8275 = vld [vmem:[#allocation19 + $0x30] sm:$0xff]
    %v8276 = vld [vmem:[#allocation19 + $0x38] sm:$0xff]
    %v8277 = vld [vmem:[#allocation19 + $0x40] sm:$0xff]
    %v8278 = vld [vmem:[#allocation19 + $0x48] sm:$0xff]
    %v8279 = vld [vmem:[#allocation19 + $0x50] sm:$0xff]
    %v8280 = vld [vmem:[#allocation19 + $0x58] sm:$0xff]
    %v8281 = vld [vmem:[#allocation19 + $0x60] sm:$0xff]
    %v8282 = vld [vmem:[#allocation19 + $0x68] sm:$0xff]
    %v8283 = vld [vmem:[#allocation19 + $0x70] sm:$0xff]
    %v8284 = vld [vmem:[#allocation19 + $0x78] sm:$0xff]
    %v8285 = vld [vmem:[#allocation19 + $0x80] sm:$0xff]
    %v8286 = vld [vmem:[#allocation19 + $0x88] sm:$0xff]
    %v8287 = vld [vmem:[#allocation19 + $0x90] sm:$0xff]
    %v8288 = vld [vmem:[#allocation19 + $0x98] sm:$0xff]
    %v8289 = vld [vmem:[#allocation19 + $0xa0] sm:$0xff]
    %v8290 = vld [vmem:[#allocation19 + $0xa8] sm:$0xff]
    %v8291 = vld [vmem:[#allocation19 + $0xb0] sm:$0xff]
    %v8292 = vld [vmem:[#allocation19 + $0xb8] sm:$0xff]
    %v8293 = vld [vmem:[#allocation19 + $0xc0] sm:$0xff]
    %v8294 = vld [vmem:[#allocation19 + $0xc8] sm:$0xff]
    %v8295 = vld [vmem:[#allocation19 + $0xd0] sm:$0xff]
    %v8296 = vld [vmem:[#allocation19 + $0xd8] sm:$0xff]
    %v8297 = vld [vmem:[#allocation19 + $0xe0] sm:$0xff]
    %v8298 = vld [vmem:[#allocation19 + $0xe8] sm:$0xff]
    %v8299 = vld [vmem:[#allocation19 + $0xf0] sm:$0xff]
    %v8300 = vld [vmem:[#allocation19 + $0xf8] sm:$0xff]
    %v8301 = vld [vmem:[#allocation19 + $0x100] sm:$0xff]
    %v8302 = vld [vmem:[#allocation19 + $0x108] sm:$0xff]
    %v8303 = vld [vmem:[#allocation19 + $0x110] sm:$0xff]
    %v8304 = vld [vmem:[#allocation19 + $0x118] sm:$0xff]
    %v8305 = vld [vmem:[#allocation19 + $0x120] sm:$0xff]
    %v8306 = vld [vmem:[#allocation19 + $0x128] sm:$0xff]
    %v8307 = vld [vmem:[#allocation19 + $0x130] sm:$0xff]
    %v8308 = vld [vmem:[#allocation19 + $0x138] sm:$0xff]
    %v8309 = vld [vmem:[#allocation19 + $0x140] sm:$0xff]
    %v8310 = vld [vmem:[#allocation19 + $0x148] sm:$0xff]
    %v8311 = vld [vmem:[#allocation19 + $0x150] sm:$0xff]
    %v8312 = vld [vmem:[#allocation19 + $0x158] sm:$0xff]
    %v8313 = vld [vmem:[#allocation19 + $0x160] sm:$0xff]
    %v8314 = vld [vmem:[#allocation19 + $0x168] sm:$0xff]
    %v8315 = vld [vmem:[#allocation19 + $0x170] sm:$0xff]
    %v8316 = vld [vmem:[#allocation19 + $0x178] sm:$0xff]
    %v8317 = vld [vmem:[#allocation19 + $0x180] sm:$0xff]
    %v8318 = vld [vmem:[#allocation19 + $0x188] sm:$0xff]
    %v8319 = vld [vmem:[#allocation19 + $0x190] sm:$0xff]
    %v8320 = vld [vmem:[#allocation19 + $0x198] sm:$0xff]
    %v8321 = vld [vmem:[#allocation19 + $0x1a0] sm:$0xff]
    %v8322 = vld [vmem:[#allocation19 + $0x1a8] sm:$0xff]
    %v8323 = vld [vmem:[#allocation19 + $0x1b0] sm:$0xff]
    %v8324 = vld [vmem:[#allocation19 + $0x1b8] sm:$0xff]
    %v8325 = vld [vmem:[#allocation19 + $0x1c0] sm:$0xff]
    %v8326 = vld [vmem:[#allocation19 + $0x1c8] sm:$0xff]
    %v8327 = vld [vmem:[#allocation19 + $0x1d0] sm:$0xff]
    %v8328 = vld [vmem:[#allocation19 + $0x1d8] sm:$0xff]
    %v8329 = vld [vmem:[#allocation19 + $0x1e0] sm:$0xff]
    %v8330 = vld [vmem:[#allocation19 + $0x1e8] sm:$0xff]
    %v8331 = vld [vmem:[#allocation19 + $0x1f0] sm:$0xff]
    %v8332 = vld [vmem:[#allocation19 + $0x1f8] sm:$0xff]
    %v8333 = vld [vmem:[#allocation19 + $0x200] sm:$0xff]
    %v8334 = vld [vmem:[#allocation19 + $0x208] sm:$0xff]
    %v8335 = vld [vmem:[#allocation19 + $0x210] sm:$0xff]
    %v8336 = vld [vmem:[#allocation19 + $0x218] sm:$0xff]
    %v8337 = vld [vmem:[#allocation19 + $0x220] sm:$0xff]
    %v8338 = vld [vmem:[#allocation19 + $0x228] sm:$0xff]
    %v8339 = vld [vmem:[#allocation19 + $0x230] sm:$0xff]
    %v8340 = vld [vmem:[#allocation19 + $0x238] sm:$0xff]
    %v8341 = vld [vmem:[#allocation19 + $0x240] sm:$0xff]
    %v8342 = vld [vmem:[#allocation19 + $0x248] sm:$0xff]
    %v8343 = vld [vmem:[#allocation19 + $0x250] sm:$0xff]
    %v8344 = vld [vmem:[#allocation19 + $0x258] sm:$0xff]
    %v8345 = vld [vmem:[#allocation19 + $0x260] sm:$0xff]
    %v8346 = vld [vmem:[#allocation19 + $0x268] sm:$0xff]
    %v8347 = vld [vmem:[#allocation19 + $0x270] sm:$0xff]
    %v8348 = vld [vmem:[#allocation19 + $0x278] sm:$0xff]
    %v8349 = vld [vmem:[#allocation19 + $0x280] sm:$0xff]
    %v8350 = vld [vmem:[#allocation19 + $0x288] sm:$0xff]
    %v8351 = vld [vmem:[#allocation19 + $0x290] sm:$0xff]
    %v8352 = vld [vmem:[#allocation19 + $0x298] sm:$0xff]
    %v8353 = vld [vmem:[#allocation19 + $0x2a0] sm:$0xff]
    %v8354 = vld [vmem:[#allocation19 + $0x2a8] sm:$0xff]
    %v8355 = vld [vmem:[#allocation19 + $0x2b0] sm:$0xff]
    %v8356 = vld [vmem:[#allocation19 + $0x2b8] sm:$0xff]
    %v8357 = vld [vmem:[#allocation19 + $0x2c0] sm:$0xff]
    %v8358 = vld [vmem:[#allocation19 + $0x2c8] sm:$0xff]
    %v8359 = vld [vmem:[#allocation19 + $0x2d0] sm:$0xff]
    %v8360 = vld [vmem:[#allocation19 + $0x2d8] sm:$0xff]
    %v8361 = vld [vmem:[#allocation19 + $0x2e0] sm:$0xff]
    %v8362 = vld [vmem:[#allocation19 + $0x2e8] sm:$0xff]
    %v8363 = vld [vmem:[#allocation19 + $0x2f0] sm:$0xff]
    %v8364 = vld [vmem:[#allocation19 + $0x2f8] sm:$0xff]
    %v8365 = vld [vmem:[#allocation19 + $0x300] sm:$0xff]
    %v8366 = vld [vmem:[#allocation19 + $0x308] sm:$0xff]
    %v8367 = vld [vmem:[#allocation19 + $0x310] sm:$0xff]
    %v8368 = vld [vmem:[#allocation19 + $0x318] sm:$0xff]
    %v8369 = vld [vmem:[#allocation19 + $0x320] sm:$0xff]
    %v8370 = vld [vmem:[#allocation19 + $0x328] sm:$0xff]
    %v8371 = vld [vmem:[#allocation19 + $0x330] sm:$0xff]
    %v8372 = vld [vmem:[#allocation19 + $0x338] sm:$0xff]
    %v8373 = vld [vmem:[#allocation19 + $0x340] sm:$0xff]
    %v8374 = vld [vmem:[#allocation19 + $0x348] sm:$0xff]
    %v8375 = vld [vmem:[#allocation19 + $0x350] sm:$0xff]
    %v8376 = vld [vmem:[#allocation19 + $0x358] sm:$0xff]
    %v8377 = vld [vmem:[#allocation19 + $0x360] sm:$0xff]
    %v8378 = vld [vmem:[#allocation19 + $0x368] sm:$0xff]
    %v8379 = vld [vmem:[#allocation19 + $0x370] sm:$0xff]
    %v8380 = vld [vmem:[#allocation19 + $0x378] sm:$0xff]
    %v8381 = vld [vmem:[#allocation19 + $0x380] sm:$0xff]
    %v8382 = vld [vmem:[#allocation19 + $0x388] sm:$0xff]
    %v8383 = vld [vmem:[#allocation19 + $0x390] sm:$0xff]
    %v8384 = vld [vmem:[#allocation19 + $0x398] sm:$0xff]
    %v8385 = vld [vmem:[#allocation19 + $0x3a0] sm:$0xff]
    %v8386 = vld [vmem:[#allocation19 + $0x3a8] sm:$0xff]
    %v8387 = vld [vmem:[#allocation19 + $0x3b0] sm:$0xff]
    %v8388 = vld [vmem:[#allocation19 + $0x3b8] sm:$0xff]
    %v8389 = vld [vmem:[#allocation19 + $0x3c0] sm:$0xff]
    %v8390 = vld [vmem:[#allocation19 + $0x3c8] sm:$0xff]
    %v8391 = vld [vmem:[#allocation19 + $0x3d0] sm:$0xff]
    %v8392 = vld [vmem:[#allocation19 + $0x3d8] sm:$0xff]
    %v8393 = vld [vmem:[#allocation19 + $0x3e0] sm:$0xff]
    %v8394 = vld [vmem:[#allocation19 + $0x3e8] sm:$0xff]
    %v8395 = vld [vmem:[#allocation19 + $0x3f0] sm:$0xff]
    %v8396 = vld [vmem:[#allocation19 + $0x3f8] sm:$0xff]
    %v8397 = vld [vmem:[#allocation19 + $0x400] sm:$0xff]
    %v8398 = vld [vmem:[#allocation19 + $0x408] sm:$0xff]
    %v8399 = vld [vmem:[#allocation19 + $0x410] sm:$0xff]
    %v8400 = vld [vmem:[#allocation19 + $0x418] sm:$0xff]
    %v8401 = vld [vmem:[#allocation19 + $0x420] sm:$0xff]
    %v8402 = vld [vmem:[#allocation19 + $0x428] sm:$0xff]
    %v8403 = vld [vmem:[#allocation19 + $0x430] sm:$0xff]
    %v8404 = vld [vmem:[#allocation19 + $0x438] sm:$0xff]
    %v8405 = vld [vmem:[#allocation19 + $0x440] sm:$0xff]
    %v8406 = vld [vmem:[#allocation19 + $0x448] sm:$0xff]
    %v8407 = vld [vmem:[#allocation19 + $0x450] sm:$0xff]
    %v8408 = vld [vmem:[#allocation19 + $0x458] sm:$0xff]
    %v8409 = vld [vmem:[#allocation19 + $0x460] sm:$0xff]
    %v8410 = vld [vmem:[#allocation19 + $0x468] sm:$0xff]
    %v8411 = vld [vmem:[#allocation19 + $0x470] sm:$0xff]
    %v8412 = vld [vmem:[#allocation19 + $0x478] sm:$0xff]
    %v8413 = vld [vmem:[#allocation19 + $0x480] sm:$0xff]
    %v8414 = vld [vmem:[#allocation19 + $0x488] sm:$0xff]
    %v8415 = vld [vmem:[#allocation19 + $0x490] sm:$0xff]
    %v8416 = vld [vmem:[#allocation19 + $0x498] sm:$0xff]
    %v8417 = vld [vmem:[#allocation19 + $0x4a0] sm:$0xff]
    %v8418 = vld [vmem:[#allocation19 + $0x4a8] sm:$0xff]
    %v8419 = vld [vmem:[#allocation19 + $0x4b0] sm:$0xff]
    %v8420 = vld [vmem:[#allocation19 + $0x4b8] sm:$0xff]
    %v8421 = vld [vmem:[#allocation19 + $0x4c0] sm:$0xff]
    %v8422 = vld [vmem:[#allocation19 + $0x4c8] sm:$0xff]
    %v8423 = vld [vmem:[#allocation19 + $0x4d0] sm:$0xff]
    %v8424 = vld [vmem:[#allocation19 + $0x4d8] sm:$0xff]
    %v8425 = vld [vmem:[#allocation19 + $0x4e0] sm:$0xff]
    %v8426 = vld [vmem:[#allocation19 + $0x4e8] sm:$0xff]
    %v8427 = vld [vmem:[#allocation19 + $0x4f0] sm:$0xff]
    %v8428 = vld [vmem:[#allocation19 + $0x4f8] sm:$0xff]
    %v8429 = vld [vmem:[#allocation19 + $0x500] sm:$0xff]
    %v8430 = vld [vmem:[#allocation19 + $0x508] sm:$0xff]
    %v8431 = vld [vmem:[#allocation19 + $0x510] sm:$0xff]
    %v8432 = vld [vmem:[#allocation19 + $0x518] sm:$0xff]
    %v8433 = vld [vmem:[#allocation19 + $0x520] sm:$0xff]
    %v8434 = vld [vmem:[#allocation19 + $0x528] sm:$0xff]
    %v8435 = vld [vmem:[#allocation19 + $0x530] sm:$0xff]
    %v8436 = vld [vmem:[#allocation19 + $0x538] sm:$0xff]
    %v8437 = vld [vmem:[#allocation19 + $0x540] sm:$0xff]
    %v8438 = vld [vmem:[#allocation19 + $0x548] sm:$0xff]
    %v8439 = vld [vmem:[#allocation19 + $0x550] sm:$0xff]
    %v8440 = vld [vmem:[#allocation19 + $0x558] sm:$0xff]
    %v8441 = vld [vmem:[#allocation19 + $0x560] sm:$0xff]
    %v8442 = vld [vmem:[#allocation19 + $0x568] sm:$0xff]
    %v8443 = vld [vmem:[#allocation19 + $0x570] sm:$0xff]
    %v8444 = vld [vmem:[#allocation19 + $0x578] sm:$0xff]
    %v8445 = vld [vmem:[#allocation19 + $0x580] sm:$0xff]
    %v8446 = vld [vmem:[#allocation19 + $0x588] sm:$0xff]
    %v8447 = vld [vmem:[#allocation19 + $0x590] sm:$0xff]
    %v8448 = vld [vmem:[#allocation19 + $0x598] sm:$0xff]
    %v8449 = vld [vmem:[#allocation19 + $0x5a0] sm:$0xff]
    %v8450 = vld [vmem:[#allocation19 + $0x5a8] sm:$0xff]
    %v8451 = vld [vmem:[#allocation19 + $0x5b0] sm:$0xff]
    %v8452 = vld [vmem:[#allocation19 + $0x5b8] sm:$0xff]
    %v8453 = vld [vmem:[#allocation19 + $0x5c0] sm:$0xff]
    %v8454 = vld [vmem:[#allocation19 + $0x5c8] sm:$0xff]
    %v8455 = vld [vmem:[#allocation19 + $0x5d0] sm:$0xff]
    %v8456 = vld [vmem:[#allocation19 + $0x5d8] sm:$0xff]
    %v8457 = vld [vmem:[#allocation19 + $0x5e0] sm:$0xff]
    %v8458 = vld [vmem:[#allocation19 + $0x5e8] sm:$0xff]
    %v8459 = vld [vmem:[#allocation19 + $0x5f0] sm:$0xff]
    %v8460 = vld [vmem:[#allocation19 + $0x5f8] sm:$0xff]
    %v8461 = vld [vmem:[#allocation19 + $0x600] sm:$0xff]
    %v8462 = vld [vmem:[#allocation19 + $0x608] sm:$0xff]
    %v8463 = vld [vmem:[#allocation19 + $0x610] sm:$0xff]
    %v8464 = vld [vmem:[#allocation19 + $0x618] sm:$0xff]
    %v8465 = vld [vmem:[#allocation19 + $0x620] sm:$0xff]
    %v8466 = vld [vmem:[#allocation19 + $0x628] sm:$0xff]
    %v8467 = vld [vmem:[#allocation19 + $0x630] sm:$0xff]
    %v8468 = vld [vmem:[#allocation19 + $0x638] sm:$0xff]
    %v8469 = vld [vmem:[#allocation19 + $0x640] sm:$0xff]
    %v8470 = vld [vmem:[#allocation19 + $0x648] sm:$0xff]
    %v8471 = vld [vmem:[#allocation19 + $0x650] sm:$0xff]
    %v8472 = vld [vmem:[#allocation19 + $0x658] sm:$0xff]
    %v8473 = vld [vmem:[#allocation19 + $0x660] sm:$0xff]
    %v8474 = vld [vmem:[#allocation19 + $0x668] sm:$0xff]
    %v8475 = vld [vmem:[#allocation19 + $0x670] sm:$0xff]
    %v8476 = vld [vmem:[#allocation19 + $0x678] sm:$0xff]
    %v8477 = vld [vmem:[#allocation19 + $0x680] sm:$0xff]
    %v8478 = vld [vmem:[#allocation19 + $0x688] sm:$0xff]
    %v8479 = vld [vmem:[#allocation19 + $0x690] sm:$0xff]
    %v8480 = vld [vmem:[#allocation19 + $0x698] sm:$0xff]
    %v8481 = vld [vmem:[#allocation19 + $0x6a0] sm:$0xff]
    %v8482 = vld [vmem:[#allocation19 + $0x6a8] sm:$0xff]
    %v8483 = vld [vmem:[#allocation19 + $0x6b0] sm:$0xff]
    %v8484 = vld [vmem:[#allocation19 + $0x6b8] sm:$0xff]
    %v8485 = vld [vmem:[#allocation19 + $0x6c0] sm:$0xff]
    %v8486 = vld [vmem:[#allocation19 + $0x6c8] sm:$0xff]
    %v8487 = vld [vmem:[#allocation19 + $0x6d0] sm:$0xff]
    %v8488 = vld [vmem:[#allocation19 + $0x6d8] sm:$0xff]
    %v8489 = vld [vmem:[#allocation19 + $0x6e0] sm:$0xff]
    %v8490 = vld [vmem:[#allocation19 + $0x6e8] sm:$0xff]
    %v8491 = vld [vmem:[#allocation19 + $0x6f0] sm:$0xff]
    %v8492 = vld [vmem:[#allocation19 + $0x6f8] sm:$0xff]
    %v8493 = vld [vmem:[#allocation19 + $0x700] sm:$0xff]
    %v8494 = vld [vmem:[#allocation19 + $0x708] sm:$0xff]
    %v8495 = vld [vmem:[#allocation19 + $0x710] sm:$0xff]
    %v8496 = vld [vmem:[#allocation19 + $0x718] sm:$0xff]
    %v8497 = vld [vmem:[#allocation19 + $0x720] sm:$0xff]
    %v8498 = vld [vmem:[#allocation19 + $0x728] sm:$0xff]
    %v8499 = vld [vmem:[#allocation19 + $0x730] sm:$0xff]
    %v8500 = vld [vmem:[#allocation19 + $0x738] sm:$0xff]
    %v8501 = vld [vmem:[#allocation19 + $0x740] sm:$0xff]
    %v8502 = vld [vmem:[#allocation19 + $0x748] sm:$0xff]
    %v8503 = vld [vmem:[#allocation19 + $0x750] sm:$0xff]
    %v8504 = vld [vmem:[#allocation19 + $0x758] sm:$0xff]
    %v8505 = vld [vmem:[#allocation19 + $0x760] sm:$0xff]
    %v8506 = vld [vmem:[#allocation19 + $0x768] sm:$0xff]
    %v8507 = vld [vmem:[#allocation19 + $0x770] sm:$0xff]
    %v8508 = vld [vmem:[#allocation19 + $0x778] sm:$0xff]
    %v8509 = vld [vmem:[#allocation19 + $0x780] sm:$0xff]
    %v8510 = vld [vmem:[#allocation19 + $0x788] sm:$0xff]
    %v8511 = vld [vmem:[#allocation19 + $0x790] sm:$0xff]
    %v8512 = vld [vmem:[#allocation19 + $0x798] sm:$0xff]
    %v8513 = vld [vmem:[#allocation19 + $0x7a0] sm:$0xff]
    %v8514 = vld [vmem:[#allocation19 + $0x7a8] sm:$0xff]
    %v8515 = vld [vmem:[#allocation19 + $0x7b0] sm:$0xff]
    %v8516 = vld [vmem:[#allocation19 + $0x7b8] sm:$0xff]
    %v8517 = vld [vmem:[#allocation19 + $0x7c0] sm:$0xff]
    %v8518 = vld [vmem:[#allocation19 + $0x7c8] sm:$0xff]
    %v8519 = vld [vmem:[#allocation19 + $0x7d0] sm:$0xff]
    %v8520 = vld [vmem:[#allocation19 + $0x7d8] sm:$0xff]
    %v8521 = vld [vmem:[#allocation19 + $0x7e0] sm:$0xff]
    %v8522 = vld [vmem:[#allocation19 + $0x7e8] sm:$0xff]
    %v8523 = vld [vmem:[#allocation19 + $0x7f0] sm:$0xff]
    %v8524 = vld [vmem:[#allocation19 + $0x7f8] sm:$0xff]
    %v8525 = vld [vmem:[#allocation19 + $0x800] sm:$0xff]
    %v8526 = vld [vmem:[#allocation19 + $0x808] sm:$0xff]
    %v8527 = vld [vmem:[#allocation19 + $0x810] sm:$0xff]
    %v8528 = vld [vmem:[#allocation19 + $0x818] sm:$0xff]
    %v8529 = vld [vmem:[#allocation19 + $0x820] sm:$0xff]
    %v8530 = vld [vmem:[#allocation19 + $0x828] sm:$0xff]
    %v8531 = vld [vmem:[#allocation19 + $0x830] sm:$0xff]
    %v8532 = vld [vmem:[#allocation19 + $0x838] sm:$0xff]
    %v8533 = vld [vmem:[#allocation19 + $0x840] sm:$0xff]
    %v8534 = vld [vmem:[#allocation19 + $0x848] sm:$0xff]
    %v8535 = vld [vmem:[#allocation19 + $0x850] sm:$0xff]
    %v8536 = vld [vmem:[#allocation19 + $0x858] sm:$0xff]
    %v8537 = vld [vmem:[#allocation19 + $0x860] sm:$0xff]
    %v8538 = vld [vmem:[#allocation19 + $0x868] sm:$0xff]
    %v8539 = vld [vmem:[#allocation19 + $0x870] sm:$0xff]
    %v8540 = vld [vmem:[#allocation19 + $0x878] sm:$0xff]
    %v8541 = vld [vmem:[#allocation19 + $0x880] sm:$0xff]
    %v8542 = vld [vmem:[#allocation19 + $0x888] sm:$0xff]
    %v8543 = vld [vmem:[#allocation19 + $0x890] sm:$0xff]
    %v8544 = vld [vmem:[#allocation19 + $0x898] sm:$0xff]
    %v8545 = vld [vmem:[#allocation19 + $0x8a0] sm:$0xff]
    %v8546 = vld [vmem:[#allocation19 + $0x8a8] sm:$0xff]
    %v8547 = vld [vmem:[#allocation19 + $0x8b0] sm:$0xff]
    %v8548 = vld [vmem:[#allocation19 + $0x8b8] sm:$0xff]
    %v8549 = vld [vmem:[#allocation19 + $0x8c0] sm:$0xff]
    %v8550 = vld [vmem:[#allocation19 + $0x8c8] sm:$0xff]
    %v8551 = vld [vmem:[#allocation19 + $0x8d0] sm:$0xff]
    %v8552 = vld [vmem:[#allocation19 + $0x8d8] sm:$0xff]
    %v8553 = vld [vmem:[#allocation19 + $0x8e0] sm:$0xff]
    %v8554 = vld [vmem:[#allocation19 + $0x8e8] sm:$0xff]
    %v8555 = vld [vmem:[#allocation19 + $0x8f0] sm:$0xff]
    %v8556 = vld [vmem:[#allocation19 + $0x8f8] sm:$0xff]
    %v8557 = vld [vmem:[#allocation21] sm:$0x3f]
    %v8559 = vlaneseq
    %v8560 = vshrl.u32 %v8559, 7
    %v8561 = vsub.s32 0, %v8560
    %v8562 = vrot.slane %v8557, %v8561
    %v8563 = vlaneseq
    %v8564 = vshrl.u32 %v8563, 7
    %v8565 = vsub.s32 1, %v8564
    %v8566 = vrot.slane %v8557, %v8565
    %v8567 = vlaneseq
    %v8568 = vshrl.u32 %v8567, 7
    %v8569 = vsub.s32 2, %v8568
    %v8570 = vrot.slane %v8557, %v8569
    %v8571 = vlaneseq
    %v8572 = vshrl.u32 %v8571, 7
    %v8573 = vsub.s32 3, %v8572
    %v8574 = vrot.slane %v8557, %v8573
    %v8575 = vlaneseq
    %v8576 = vshrl.u32 %v8575, 7
    %v8577 = vsub.s32 4, %v8576
    %v8578 = vrot.slane %v8557, %v8577
    %v8579 = vlaneseq
    %v8580 = vshrl.u32 %v8579, 7
    %v8581 = vsub.s32 5, %v8580
    %v8582 = vrot.slane %v8557, %v8581
    %v8877 = vunpack.c.l.b16 %v8269
    %v8878 = vunpack.c.h.b16 %v8269
    %v8879 = vunpack.c.l.b16 %v8270
    %v8880 = vunpack.c.h.b16 %v8270
    %v8881 = vunpack.c.l.b16 %v8271
    %v8882 = vunpack.c.h.b16 %v8271
    %v8883 = vunpack.c.l.b16 %v8272
    %v8884 = vunpack.c.h.b16 %v8272
    %v8885 = vunpack.c.l.b16 %v8273
    %v8886 = vunpack.c.h.b16 %v8273
    %v8887 = vunpack.c.l.b16 %v8274
    %v8888 = vunpack.c.h.b16 %v8274
    %v8889 = vunpack.c.l.b16 %v8275
    %v8890 = vunpack.c.h.b16 %v8275
    %v8891 = vunpack.c.l.b16 %v8276
    %v8892 = vunpack.c.h.b16 %v8276
    %v8893 = vunpack.c.l.b16 %v8277
    %v8894 = vunpack.c.h.b16 %v8277
    %v8895 = vunpack.c.l.b16 %v8278
    %v8896 = vunpack.c.h.b16 %v8278
    %v8897 = vunpack.c.l.b16 %v8279
    %v8898 = vunpack.c.h.b16 %v8279
    %v8899 = vunpack.c.l.b16 %v8280
    %v8900 = vunpack.c.h.b16 %v8280
    %v8901 = vunpack.c.l.b16 %v8281
    %v8902 = vunpack.c.h.b16 %v8281
    %v8903 = vunpack.c.l.b16 %v8282
    %v8904 = vunpack.c.h.b16 %v8282
    %v8905 = vunpack.c.l.b16 %v8283
    %v8906 = vunpack.c.h.b16 %v8283
    %v8907 = vunpack.c.l.b16 %v8284
    %v8908 = vunpack.c.h.b16 %v8284
    %v8909 = vunpack.c.l.b16 %v8285
    %v8910 = vunpack.c.h.b16 %v8285
    %v8911 = vunpack.c.l.b16 %v8286
    %v8912 = vunpack.c.h.b16 %v8286
    %v8913 = vunpack.c.l.b16 %v8287
    %v8914 = vunpack.c.h.b16 %v8287
    %v8915 = vunpack.c.l.b16 %v8288
    %v8916 = vunpack.c.h.b16 %v8288
    %v8917 = vunpack.c.l.b16 %v8289
    %v8918 = vunpack.c.h.b16 %v8289
    %v8919 = vunpack.c.l.b16 %v8290
    %v8920 = vunpack.c.h.b16 %v8290
    %v8921 = vunpack.c.l.b16 %v8291
    %v8922 = vunpack.c.h.b16 %v8291
    %v8923 = vunpack.c.l.b16 %v8292
    %v8924 = vunpack.c.h.b16 %v8292
    %v8925 = vunpack.c.l.b16 %v8293
    %v8926 = vunpack.c.h.b16 %v8293
    %v8927 = vunpack.c.l.b16 %v8294
    %v8928 = vunpack.c.h.b16 %v8294
    %v8929 = vunpack.c.l.b16 %v8295
    %v8930 = vunpack.c.h.b16 %v8295
    %v8931 = vunpack.c.l.b16 %v8296
    %v8932 = vunpack.c.h.b16 %v8296
    %v8933 = vunpack.c.l.b16 %v8297
    %v8934 = vunpack.c.h.b16 %v8297
    %v8935 = vunpack.c.l.b16 %v8298
    %v8936 = vunpack.c.h.b16 %v8298
    %v8937 = vunpack.c.l.b16 %v8299
    %v8938 = vunpack.c.h.b16 %v8299
    %v8939 = vunpack.c.l.b16 %v8300
    %v8940 = vunpack.c.h.b16 %v8300
    %v8941 = vunpack.c.l.b16 %v8301
    %v8942 = vunpack.c.h.b16 %v8301
    %v8943 = vunpack.c.l.b16 %v8302
    %v8944 = vunpack.c.h.b16 %v8302
    %v8945 = vunpack.c.l.b16 %v8303
    %v8946 = vunpack.c.h.b16 %v8303
    %v8947 = vunpack.c.l.b16 %v8304
    %v8948 = vunpack.c.h.b16 %v8304
    %v8949 = vunpack.c.l.b16 %v8305
    %v8950 = vunpack.c.h.b16 %v8305
    %v8951 = vunpack.c.l.b16 %v8306
    %v8952 = vunpack.c.h.b16 %v8306
    %v8953 = vunpack.c.l.b16 %v8307
    %v8954 = vunpack.c.h.b16 %v8307
    %v8955 = vunpack.c.l.b16 %v8308
    %v8956 = vunpack.c.h.b16 %v8308
    %v8957 = vunpack.c.l.b16 %v8309
    %v8958 = vunpack.c.h.b16 %v8309
    %v8959 = vunpack.c.l.b16 %v8310
    %v8960 = vunpack.c.h.b16 %v8310
    %v8961 = vunpack.c.l.b16 %v8311
    %v8962 = vunpack.c.h.b16 %v8311
    %v8963 = vunpack.c.l.b16 %v8312
    %v8964 = vunpack.c.h.b16 %v8312
    %v8965 = vunpack.c.l.b16 %v8313
    %v8966 = vunpack.c.h.b16 %v8313
    %v8967 = vunpack.c.l.b16 %v8314
    %v8968 = vunpack.c.h.b16 %v8314
    %v8969 = vunpack.c.l.b16 %v8315
    %v8970 = vunpack.c.h.b16 %v8315
    %v8971 = vunpack.c.l.b16 %v8316
    %v8972 = vunpack.c.h.b16 %v8316
    %v8973 = vunpack.c.l.b16 %v8317
    %v8974 = vunpack.c.h.b16 %v8317
    %v8975 = vunpack.c.l.b16 %v8318
    %v8976 = vunpack.c.h.b16 %v8318
    %v8977 = vunpack.c.l.b16 %v8319
    %v8978 = vunpack.c.h.b16 %v8319
    %v8979 = vunpack.c.l.b16 %v8320
    %v8980 = vunpack.c.h.b16 %v8320
    %v8981 = vunpack.c.l.b16 %v8321
    %v8982 = vunpack.c.h.b16 %v8321
    %v8983 = vunpack.c.l.b16 %v8322
    %v8984 = vunpack.c.h.b16 %v8322
    %v8985 = vunpack.c.l.b16 %v8323
    %v8986 = vunpack.c.h.b16 %v8323
    %v8987 = vunpack.c.l.b16 %v8324
    %v8988 = vunpack.c.h.b16 %v8324
    %v8989 = vunpack.c.l.b16 %v8325
    %v8990 = vunpack.c.h.b16 %v8325
    %v8991 = vunpack.c.l.b16 %v8326
    %v8992 = vunpack.c.h.b16 %v8326
    %v8993 = vunpack.c.l.b16 %v8327
    %v8994 = vunpack.c.h.b16 %v8327
    %v8995 = vunpack.c.l.b16 %v8328
    %v8996 = vunpack.c.h.b16 %v8328
    %v8997 = vunpack.c.l.b16 %v8329
    %v8998 = vunpack.c.h.b16 %v8329
    %v8999 = vunpack.c.l.b16 %v8330
    %v9000 = vunpack.c.h.b16 %v8330
    %v9001 = vunpack.c.l.b16 %v8331
    %v9002 = vunpack.c.h.b16 %v8331
    %v9003 = vunpack.c.l.b16 %v8332
    %v9004 = vunpack.c.h.b16 %v8332
    %v9005 = vunpack.c.l.b16 %v8333
    %v9006 = vunpack.c.h.b16 %v8333
    %v9007 = vunpack.c.l.b16 %v8334
    %v9008 = vunpack.c.h.b16 %v8334
    %v9009 = vunpack.c.l.b16 %v8335
    %v9010 = vunpack.c.h.b16 %v8335
    %v9011 = vunpack.c.l.b16 %v8336
    %v9012 = vunpack.c.h.b16 %v8336
    %v9013 = vunpack.c.l.b16 %v8337
    %v9014 = vunpack.c.h.b16 %v8337
    %v9015 = vunpack.c.l.b16 %v8338
    %v9016 = vunpack.c.h.b16 %v8338
    %v9017 = vunpack.c.l.b16 %v8339
    %v9018 = vunpack.c.h.b16 %v8339
    %v9019 = vunpack.c.l.b16 %v8340
    %v9020 = vunpack.c.h.b16 %v8340
    %v9021 = vunpack.c.l.b16 %v8341
    %v9022 = vunpack.c.h.b16 %v8341
    %v9023 = vunpack.c.l.b16 %v8342
    %v9024 = vunpack.c.h.b16 %v8342
    %v9025 = vunpack.c.l.b16 %v8343
    %v9026 = vunpack.c.h.b16 %v8343
    %v9027 = vunpack.c.l.b16 %v8344
    %v9028 = vunpack.c.h.b16 %v8344
    %v9029 = vunpack.c.l.b16 %v8345
    %v9030 = vunpack.c.h.b16 %v8345
    %v9031 = vunpack.c.l.b16 %v8346
    %v9032 = vunpack.c.h.b16 %v8346
    %v9033 = vunpack.c.l.b16 %v8347
    %v9034 = vunpack.c.h.b16 %v8347
    %v9035 = vunpack.c.l.b16 %v8348
    %v9036 = vunpack.c.h.b16 %v8348
    %v9037 = vunpack.c.l.b16 %v8349
    %v9038 = vunpack.c.h.b16 %v8349
    %v9039 = vunpack.c.l.b16 %v8350
    %v9040 = vunpack.c.h.b16 %v8350
    %v9041 = vunpack.c.l.b16 %v8351
    %v9042 = vunpack.c.h.b16 %v8351
    %v9043 = vunpack.c.l.b16 %v8352
    %v9044 = vunpack.c.h.b16 %v8352
    %v9045 = vunpack.c.l.b16 %v8353
    %v9046 = vunpack.c.h.b16 %v8353
    %v9047 = vunpack.c.l.b16 %v8354
    %v9048 = vunpack.c.h.b16 %v8354
    %v9049 = vunpack.c.l.b16 %v8355
    %v9050 = vunpack.c.h.b16 %v8355
    %v9051 = vunpack.c.l.b16 %v8356
    %v9052 = vunpack.c.h.b16 %v8356
    %v9053 = vunpack.c.l.b16 %v8357
    %v9054 = vunpack.c.h.b16 %v8357
    %v9055 = vunpack.c.l.b16 %v8358
    %v9056 = vunpack.c.h.b16 %v8358
    %v9057 = vunpack.c.l.b16 %v8359
    %v9058 = vunpack.c.h.b16 %v8359
    %v9059 = vunpack.c.l.b16 %v8360
    %v9060 = vunpack.c.h.b16 %v8360
    %v9061 = vunpack.c.l.b16 %v8361
    %v9062 = vunpack.c.h.b16 %v8361
    %v9063 = vunpack.c.l.b16 %v8362
    %v9064 = vunpack.c.h.b16 %v8362
    %v9065 = vunpack.c.l.b16 %v8363
    %v9066 = vunpack.c.h.b16 %v8363
    %v9067 = vunpack.c.l.b16 %v8364
    %v9068 = vunpack.c.h.b16 %v8364
    %v9069 = vunpack.c.l.b16 %v8365
    %v9070 = vunpack.c.h.b16 %v8365
    %v9071 = vunpack.c.l.b16 %v8366
    %v9072 = vunpack.c.h.b16 %v8366
    %v9073 = vunpack.c.l.b16 %v8367
    %v9074 = vunpack.c.h.b16 %v8367
    %v9075 = vunpack.c.l.b16 %v8368
    %v9076 = vunpack.c.h.b16 %v8368
    %v9077 = vunpack.c.l.b16 %v8369
    %v9078 = vunpack.c.h.b16 %v8369
    %v9079 = vunpack.c.l.b16 %v8370
    %v9080 = vunpack.c.h.b16 %v8370
    %v9081 = vunpack.c.l.b16 %v8371
    %v9082 = vunpack.c.h.b16 %v8371
    %v9083 = vunpack.c.l.b16 %v8372
    %v9084 = vunpack.c.h.b16 %v8372
    %v9085 = vunpack.c.l.b16 %v8373
    %v9086 = vunpack.c.h.b16 %v8373
    %v9087 = vunpack.c.l.b16 %v8374
    %v9088 = vunpack.c.h.b16 %v8374
    %v9089 = vunpack.c.l.b16 %v8375
    %v9090 = vunpack.c.h.b16 %v8375
    %v9091 = vunpack.c.l.b16 %v8376
    %v9092 = vunpack.c.h.b16 %v8376
    %v9093 = vunpack.c.l.b16 %v8377
    %v9094 = vunpack.c.h.b16 %v8377
    %v9095 = vunpack.c.l.b16 %v8378
    %v9096 = vunpack.c.h.b16 %v8378
    %v9097 = vunpack.c.l.b16 %v8379
    %v9098 = vunpack.c.h.b16 %v8379
    %v9099 = vunpack.c.l.b16 %v8380
    %v9100 = vunpack.c.h.b16 %v8380
    %v9101 = vunpack.c.l.b16 %v8381
    %v9102 = vunpack.c.h.b16 %v8381
    %v9103 = vunpack.c.l.b16 %v8382
    %v9104 = vunpack.c.h.b16 %v8382
    %v9105 = vunpack.c.l.b16 %v8383
    %v9106 = vunpack.c.h.b16 %v8383
    %v9107 = vunpack.c.l.b16 %v8384
    %v9108 = vunpack.c.h.b16 %v8384
    %v9109 = vunpack.c.l.b16 %v8385
    %v9110 = vunpack.c.h.b16 %v8385
    %v9111 = vunpack.c.l.b16 %v8386
    %v9112 = vunpack.c.h.b16 %v8386
    %v9113 = vunpack.c.l.b16 %v8387
    %v9114 = vunpack.c.h.b16 %v8387
    %v9115 = vunpack.c.l.b16 %v8388
    %v9116 = vunpack.c.h.b16 %v8388
    %v9117 = vunpack.c.l.b16 %v8389
    %v9118 = vunpack.c.h.b16 %v8389
    %v9119 = vunpack.c.l.b16 %v8390
    %v9120 = vunpack.c.h.b16 %v8390
    %v9121 = vunpack.c.l.b16 %v8391
    %v9122 = vunpack.c.h.b16 %v8391
    %v9123 = vunpack.c.l.b16 %v8392
    %v9124 = vunpack.c.h.b16 %v8392
    %v9125 = vunpack.c.l.b16 %v8393
    %v9126 = vunpack.c.h.b16 %v8393
    %v9127 = vunpack.c.l.b16 %v8394
    %v9128 = vunpack.c.h.b16 %v8394
    %v9129 = vunpack.c.l.b16 %v8395
    %v9130 = vunpack.c.h.b16 %v8395
    %v9131 = vunpack.c.l.b16 %v8396
    %v9132 = vunpack.c.h.b16 %v8396
    %v9133 = vunpack.c.l.b16 %v8397
    %v9134 = vunpack.c.h.b16 %v8397
    %v9135 = vunpack.c.l.b16 %v8398
    %v9136 = vunpack.c.h.b16 %v8398
    %v9137 = vunpack.c.l.b16 %v8399
    %v9138 = vunpack.c.h.b16 %v8399
    %v9139 = vunpack.c.l.b16 %v8400
    %v9140 = vunpack.c.h.b16 %v8400
    %v9141 = vunpack.c.l.b16 %v8401
    %v9142 = vunpack.c.h.b16 %v8401
    %v9143 = vunpack.c.l.b16 %v8402
    %v9144 = vunpack.c.h.b16 %v8402
    %v9145 = vunpack.c.l.b16 %v8403
    %v9146 = vunpack.c.h.b16 %v8403
    %v9147 = vunpack.c.l.b16 %v8404
    %v9148 = vunpack.c.h.b16 %v8404
    %v9149 = vunpack.c.l.b16 %v8405
    %v9150 = vunpack.c.h.b16 %v8405
    %v9151 = vunpack.c.l.b16 %v8406
    %v9152 = vunpack.c.h.b16 %v8406
    %v9153 = vunpack.c.l.b16 %v8407
    %v9154 = vunpack.c.h.b16 %v8407
    %v9155 = vunpack.c.l.b16 %v8408
    %v9156 = vunpack.c.h.b16 %v8408
    %v9157 = vunpack.c.l.b16 %v8409
    %v9158 = vunpack.c.h.b16 %v8409
    %v9159 = vunpack.c.l.b16 %v8410
    %v9160 = vunpack.c.h.b16 %v8410
    %v9161 = vunpack.c.l.b16 %v8411
    %v9162 = vunpack.c.h.b16 %v8411
    %v9163 = vunpack.c.l.b16 %v8412
    %v9164 = vunpack.c.h.b16 %v8412
    %v9165 = vunpack.c.l.b16 %v8413
    %v9166 = vunpack.c.h.b16 %v8413
    %v9167 = vunpack.c.l.b16 %v8414
    %v9168 = vunpack.c.h.b16 %v8414
    %v9169 = vunpack.c.l.b16 %v8415
    %v9170 = vunpack.c.h.b16 %v8415
    %v9171 = vunpack.c.l.b16 %v8416
    %v9172 = vunpack.c.h.b16 %v8416
    %v9173 = vunpack.c.l.b16 %v8417
    %v9174 = vunpack.c.h.b16 %v8417
    %v9175 = vunpack.c.l.b16 %v8418
    %v9176 = vunpack.c.h.b16 %v8418
    %v9177 = vunpack.c.l.b16 %v8419
    %v9178 = vunpack.c.h.b16 %v8419
    %v9179 = vunpack.c.l.b16 %v8420
    %v9180 = vunpack.c.h.b16 %v8420
    %v9181 = vunpack.c.l.b16 %v8421
    %v9182 = vunpack.c.h.b16 %v8421
    %v9183 = vunpack.c.l.b16 %v8422
    %v9184 = vunpack.c.h.b16 %v8422
    %v9185 = vunpack.c.l.b16 %v8423
    %v9186 = vunpack.c.h.b16 %v8423
    %v9187 = vunpack.c.l.b16 %v8424
    %v9188 = vunpack.c.h.b16 %v8424
    %v9189 = vunpack.c.l.b16 %v8425
    %v9190 = vunpack.c.h.b16 %v8425
    %v9191 = vunpack.c.l.b16 %v8426
    %v9192 = vunpack.c.h.b16 %v8426
    %v9193 = vunpack.c.l.b16 %v8427
    %v9194 = vunpack.c.h.b16 %v8427
    %v9195 = vunpack.c.l.b16 %v8428
    %v9196 = vunpack.c.h.b16 %v8428
    %v9197 = vunpack.c.l.b16 %v8429
    %v9198 = vunpack.c.h.b16 %v8429
    %v9199 = vunpack.c.l.b16 %v8430
    %v9200 = vunpack.c.h.b16 %v8430
    %v9201 = vunpack.c.l.b16 %v8431
    %v9202 = vunpack.c.h.b16 %v8431
    %v9203 = vunpack.c.l.b16 %v8432
    %v9204 = vunpack.c.h.b16 %v8432
    %v9205 = vunpack.c.l.b16 %v8433
    %v9206 = vunpack.c.h.b16 %v8433
    %v9207 = vunpack.c.l.b16 %v8434
    %v9208 = vunpack.c.h.b16 %v8434
    %v9209 = vunpack.c.l.b16 %v8435
    %v9210 = vunpack.c.h.b16 %v8435
    %v9211 = vunpack.c.l.b16 %v8436
    %v9212 = vunpack.c.h.b16 %v8436
    %v9213 = vunpack.c.l.b16 %v8437
    %v9214 = vunpack.c.h.b16 %v8437
    %v9215 = vunpack.c.l.b16 %v8438
    %v9216 = vunpack.c.h.b16 %v8438
    %v9217 = vunpack.c.l.b16 %v8439
    %v9218 = vunpack.c.h.b16 %v8439
    %v9219 = vunpack.c.l.b16 %v8440
    %v9220 = vunpack.c.h.b16 %v8440
    %v9221 = vunpack.c.l.b16 %v8441
    %v9222 = vunpack.c.h.b16 %v8441
    %v9223 = vunpack.c.l.b16 %v8442
    %v9224 = vunpack.c.h.b16 %v8442
    %v9225 = vunpack.c.l.b16 %v8443
    %v9226 = vunpack.c.h.b16 %v8443
    %v9227 = vunpack.c.l.b16 %v8444
    %v9228 = vunpack.c.h.b16 %v8444
    %v9229 = vunpack.c.l.b16 %v8445
    %v9230 = vunpack.c.h.b16 %v8445
    %v9231 = vunpack.c.l.b16 %v8446
    %v9232 = vunpack.c.h.b16 %v8446
    %v9233 = vunpack.c.l.b16 %v8447
    %v9234 = vunpack.c.h.b16 %v8447
    %v9235 = vunpack.c.l.b16 %v8448
    %v9236 = vunpack.c.h.b16 %v8448
    %v9237 = vunpack.c.l.b16 %v8449
    %v9238 = vunpack.c.h.b16 %v8449
    %v9239 = vunpack.c.l.b16 %v8450
    %v9240 = vunpack.c.h.b16 %v8450
    %v9241 = vunpack.c.l.b16 %v8451
    %v9242 = vunpack.c.h.b16 %v8451
    %v9243 = vunpack.c.l.b16 %v8452
    %v9244 = vunpack.c.h.b16 %v8452
    %v9245 = vunpack.c.l.b16 %v8453
    %v9246 = vunpack.c.h.b16 %v8453
    %v9247 = vunpack.c.l.b16 %v8454
    %v9248 = vunpack.c.h.b16 %v8454
    %v9249 = vunpack.c.l.b16 %v8455
    %v9250 = vunpack.c.h.b16 %v8455
    %v9251 = vunpack.c.l.b16 %v8456
    %v9252 = vunpack.c.h.b16 %v8456
    %v9253 = vunpack.c.l.b16 %v8457
    %v9254 = vunpack.c.h.b16 %v8457
    %v9255 = vunpack.c.l.b16 %v8458
    %v9256 = vunpack.c.h.b16 %v8458
    %v9257 = vunpack.c.l.b16 %v8459
    %v9258 = vunpack.c.h.b16 %v8459
    %v9259 = vunpack.c.l.b16 %v8460
    %v9260 = vunpack.c.h.b16 %v8460
    %v9261 = vunpack.c.l.b16 %v8461
    %v9262 = vunpack.c.h.b16 %v8461
    %v9263 = vunpack.c.l.b16 %v8462
    %v9264 = vunpack.c.h.b16 %v8462
    %v9265 = vunpack.c.l.b16 %v8463
    %v9266 = vunpack.c.h.b16 %v8463
    %v9267 = vunpack.c.l.b16 %v8464
    %v9268 = vunpack.c.h.b16 %v8464
    %v9269 = vunpack.c.l.b16 %v8465
    %v9270 = vunpack.c.h.b16 %v8465
    %v9271 = vunpack.c.l.b16 %v8466
    %v9272 = vunpack.c.h.b16 %v8466
    %v9273 = vunpack.c.l.b16 %v8467
    %v9274 = vunpack.c.h.b16 %v8467
    %v9275 = vunpack.c.l.b16 %v8468
    %v9276 = vunpack.c.h.b16 %v8468
    %v9277 = vunpack.c.l.b16 %v8469
    %v9278 = vunpack.c.h.b16 %v8469
    %v9279 = vunpack.c.l.b16 %v8470
    %v9280 = vunpack.c.h.b16 %v8470
    %v9281 = vunpack.c.l.b16 %v8471
    %v9282 = vunpack.c.h.b16 %v8471
    %v9283 = vunpack.c.l.b16 %v8472
    %v9284 = vunpack.c.h.b16 %v8472
    %v9285 = vunpack.c.l.b16 %v8473
    %v9286 = vunpack.c.h.b16 %v8473
    %v9287 = vunpack.c.l.b16 %v8474
    %v9288 = vunpack.c.h.b16 %v8474
    %v9289 = vunpack.c.l.b16 %v8475
    %v9290 = vunpack.c.h.b16 %v8475
    %v9291 = vunpack.c.l.b16 %v8476
    %v9292 = vunpack.c.h.b16 %v8476
    %v9293 = vunpack.c.l.b16 %v8477
    %v9294 = vunpack.c.h.b16 %v8477
    %v9295 = vunpack.c.l.b16 %v8478
    %v9296 = vunpack.c.h.b16 %v8478
    %v9297 = vunpack.c.l.b16 %v8479
    %v9298 = vunpack.c.h.b16 %v8479
    %v9299 = vunpack.c.l.b16 %v8480
    %v9300 = vunpack.c.h.b16 %v8480
    %v9301 = vunpack.c.l.b16 %v8481
    %v9302 = vunpack.c.h.b16 %v8481
    %v9303 = vunpack.c.l.b16 %v8482
    %v9304 = vunpack.c.h.b16 %v8482
    %v9305 = vunpack.c.l.b16 %v8483
    %v9306 = vunpack.c.h.b16 %v8483
    %v9307 = vunpack.c.l.b16 %v8484
    %v9308 = vunpack.c.h.b16 %v8484
    %v9309 = vunpack.c.l.b16 %v8485
    %v9310 = vunpack.c.h.b16 %v8485
    %v9311 = vunpack.c.l.b16 %v8486
    %v9312 = vunpack.c.h.b16 %v8486
    %v9313 = vunpack.c.l.b16 %v8487
    %v9314 = vunpack.c.h.b16 %v8487
    %v9315 = vunpack.c.l.b16 %v8488
    %v9316 = vunpack.c.h.b16 %v8488
    %v9317 = vunpack.c.l.b16 %v8489
    %v9318 = vunpack.c.h.b16 %v8489
    %v9319 = vunpack.c.l.b16 %v8490
    %v9320 = vunpack.c.h.b16 %v8490
    %v9321 = vunpack.c.l.b16 %v8491
    %v9322 = vunpack.c.h.b16 %v8491
    %v9323 = vunpack.c.l.b16 %v8492
    %v9324 = vunpack.c.h.b16 %v8492
    %v9325 = vunpack.c.l.b16 %v8493
    %v9326 = vunpack.c.h.b16 %v8493
    %v9327 = vunpack.c.l.b16 %v8494
    %v9328 = vunpack.c.h.b16 %v8494
    %v9329 = vunpack.c.l.b16 %v8495
    %v9330 = vunpack.c.h.b16 %v8495
    %v9331 = vunpack.c.l.b16 %v8496
    %v9332 = vunpack.c.h.b16 %v8496
    %v9333 = vunpack.c.l.b16 %v8497
    %v9334 = vunpack.c.h.b16 %v8497
    %v9335 = vunpack.c.l.b16 %v8498
    %v9336 = vunpack.c.h.b16 %v8498
    %v9337 = vunpack.c.l.b16 %v8499
    %v9338 = vunpack.c.h.b16 %v8499
    %v9339 = vunpack.c.l.b16 %v8500
    %v9340 = vunpack.c.h.b16 %v8500
    %v9341 = vunpack.c.l.b16 %v8501
    %v9342 = vunpack.c.h.b16 %v8501
    %v9343 = vunpack.c.l.b16 %v8502
    %v9344 = vunpack.c.h.b16 %v8502
    %v9345 = vunpack.c.l.b16 %v8503
    %v9346 = vunpack.c.h.b16 %v8503
    %v9347 = vunpack.c.l.b16 %v8504
    %v9348 = vunpack.c.h.b16 %v8504
    %v9349 = vunpack.c.l.b16 %v8505
    %v9350 = vunpack.c.h.b16 %v8505
    %v9351 = vunpack.c.l.b16 %v8506
    %v9352 = vunpack.c.h.b16 %v8506
    %v9353 = vunpack.c.l.b16 %v8507
    %v9354 = vunpack.c.h.b16 %v8507
    %v9355 = vunpack.c.l.b16 %v8508
    %v9356 = vunpack.c.h.b16 %v8508
    %v9357 = vunpack.c.l.b16 %v8509
    %v9358 = vunpack.c.h.b16 %v8509
    %v9359 = vunpack.c.l.b16 %v8510
    %v9360 = vunpack.c.h.b16 %v8510
    %v9361 = vunpack.c.l.b16 %v8511
    %v9362 = vunpack.c.h.b16 %v8511
    %v9363 = vunpack.c.l.b16 %v8512
    %v9364 = vunpack.c.h.b16 %v8512
    %v9365 = vunpack.c.l.b16 %v8513
    %v9366 = vunpack.c.h.b16 %v8513
    %v9367 = vunpack.c.l.b16 %v8514
    %v9368 = vunpack.c.h.b16 %v8514
    %v9369 = vunpack.c.l.b16 %v8515
    %v9370 = vunpack.c.h.b16 %v8515
    %v9371 = vunpack.c.l.b16 %v8516
    %v9372 = vunpack.c.h.b16 %v8516
    %v9373 = vunpack.c.l.b16 %v8517
    %v9374 = vunpack.c.h.b16 %v8517
    %v9375 = vunpack.c.l.b16 %v8518
    %v9376 = vunpack.c.h.b16 %v8518
    %v9377 = vunpack.c.l.b16 %v8519
    %v9378 = vunpack.c.h.b16 %v8519
    %v9379 = vunpack.c.l.b16 %v8520
    %v9380 = vunpack.c.h.b16 %v8520
    %v9381 = vunpack.c.l.b16 %v8521
    %v9382 = vunpack.c.h.b16 %v8521
    %v9383 = vunpack.c.l.b16 %v8522
    %v9384 = vunpack.c.h.b16 %v8522
    %v9385 = vunpack.c.l.b16 %v8523
    %v9386 = vunpack.c.h.b16 %v8523
    %v9387 = vunpack.c.l.b16 %v8524
    %v9388 = vunpack.c.h.b16 %v8524
    %v9389 = vunpack.c.l.b16 %v8525
    %v9390 = vunpack.c.h.b16 %v8525
    %v9391 = vunpack.c.l.b16 %v8526
    %v9392 = vunpack.c.h.b16 %v8526
    %v9393 = vunpack.c.l.b16 %v8527
    %v9394 = vunpack.c.h.b16 %v8527
    %v9395 = vunpack.c.l.b16 %v8528
    %v9396 = vunpack.c.h.b16 %v8528
    %v9397 = vunpack.c.l.b16 %v8529
    %v9398 = vunpack.c.h.b16 %v8529
    %v9399 = vunpack.c.l.b16 %v8530
    %v9400 = vunpack.c.h.b16 %v8530
    %v9401 = vunpack.c.l.b16 %v8531
    %v9402 = vunpack.c.h.b16 %v8531
    %v9403 = vunpack.c.l.b16 %v8532
    %v9404 = vunpack.c.h.b16 %v8532
    %v9405 = vunpack.c.l.b16 %v8533
    %v9406 = vunpack.c.h.b16 %v8533
    %v9407 = vunpack.c.l.b16 %v8534
    %v9408 = vunpack.c.h.b16 %v8534
    %v9409 = vunpack.c.l.b16 %v8535
    %v9410 = vunpack.c.h.b16 %v8535
    %v9411 = vunpack.c.l.b16 %v8536
    %v9412 = vunpack.c.h.b16 %v8536
    %v9413 = vunpack.c.l.b16 %v8537
    %v9414 = vunpack.c.h.b16 %v8537
    %v9415 = vunpack.c.l.b16 %v8538
    %v9416 = vunpack.c.h.b16 %v8538
    %v9417 = vunpack.c.l.b16 %v8539
    %v9418 = vunpack.c.h.b16 %v8539
    %v9419 = vunpack.c.l.b16 %v8540
    %v9420 = vunpack.c.h.b16 %v8540
    %v9421 = vunpack.c.l.b16 %v8541
    %v9422 = vunpack.c.h.b16 %v8541
    %v9423 = vunpack.c.l.b16 %v8542
    %v9424 = vunpack.c.h.b16 %v8542
    %v9425 = vunpack.c.l.b16 %v8543
    %v9426 = vunpack.c.h.b16 %v8543
    %v9427 = vunpack.c.l.b16 %v8544
    %v9428 = vunpack.c.h.b16 %v8544
    %v9429 = vunpack.c.l.b16 %v8545
    %v9430 = vunpack.c.h.b16 %v8545
    %v9431 = vunpack.c.l.b16 %v8546
    %v9432 = vunpack.c.h.b16 %v8546
    %v9433 = vunpack.c.l.b16 %v8547
    %v9434 = vunpack.c.h.b16 %v8547
    %v9435 = vunpack.c.l.b16 %v8548
    %v9436 = vunpack.c.h.b16 %v8548
    %v9437 = vunpack.c.l.b16 %v8549
    %v9438 = vunpack.c.h.b16 %v8549
    %v9439 = vunpack.c.l.b16 %v8550
    %v9440 = vunpack.c.h.b16 %v8550
    %v9441 = vunpack.c.l.b16 %v8551
    %v9442 = vunpack.c.h.b16 %v8551
    %v9443 = vunpack.c.l.b16 %v8552
    %v9444 = vunpack.c.h.b16 %v8552
    %v9445 = vunpack.c.l.b16 %v8553
    %v9446 = vunpack.c.h.b16 %v8553
    %v9447 = vunpack.c.l.b16 %v8554
    %v9448 = vunpack.c.h.b16 %v8554
    %v9449 = vunpack.c.l.b16 %v8555
    %v9450 = vunpack.c.h.b16 %v8555
    %v9451 = vunpack.c.l.b16 %v8556
    %v9452 = vunpack.c.h.b16 %v8556
    %v9453 = vpack.c.b16 %v8883, %v8877
    %v9454 = vpack.c.b16 %v8884, %v8878
    %v9455 = vpack.c.b16 %v8885, %v8879
    %v9456 = vpack.c.b16 %v8886, %v8880
    %v9457 = vpack.c.b16 %v8887, %v8881
    %v9458 = vpack.c.b16 %v8888, %v8882
    %v9459 = vpack.c.b16 %v8895, %v8889
    %v9460 = vpack.c.b16 %v8896, %v8890
    %v9461 = vpack.c.b16 %v8897, %v8891
    %v9462 = vpack.c.b16 %v8898, %v8892
    %v9463 = vpack.c.b16 %v8899, %v8893
    %v9464 = vpack.c.b16 %v8900, %v8894
    %v9465 = vpack.c.b16 %v8907, %v8901
    %v9466 = vpack.c.b16 %v8908, %v8902
    %v9467 = vpack.c.b16 %v8909, %v8903
    %v9468 = vpack.c.b16 %v8910, %v8904
    %v9469 = vpack.c.b16 %v8911, %v8905
    %v9470 = vpack.c.b16 %v8912, %v8906
    %v9471 = vpack.c.b16 %v8919, %v8913
    %v9472 = vpack.c.b16 %v8920, %v8914
    %v9473 = vpack.c.b16 %v8921, %v8915
    %v9474 = vpack.c.b16 %v8922, %v8916
    %v9475 = vpack.c.b16 %v8923, %v8917
    %v9476 = vpack.c.b16 %v8924, %v8918
    %v9477 = vpack.c.b16 %v8931, %v8925
    %v9478 = vpack.c.b16 %v8932, %v8926
    %v9479 = vpack.c.b16 %v8933, %v8927
    %v9480 = vpack.c.b16 %v8934, %v8928
    %v9481 = vpack.c.b16 %v8935, %v8929
    %v9482 = vpack.c.b16 %v8936, %v8930
    %v9483 = vpack.c.b16 %v8943, %v8937
    %v9484 = vpack.c.b16 %v8944, %v8938
    %v9485 = vpack.c.b16 %v8945, %v8939
    %v9486 = vpack.c.b16 %v8946, %v8940
    %v9487 = vpack.c.b16 %v8947, %v8941
    %v9488 = vpack.c.b16 %v8948, %v8942
    %v9489 = vpack.c.b16 %v8955, %v8949
    %v9490 = vpack.c.b16 %v8956, %v8950
    %v9491 = vpack.c.b16 %v8957, %v8951
    %v9492 = vpack.c.b16 %v8958, %v8952
    %v9493 = vpack.c.b16 %v8959, %v8953
    %v9494 = vpack.c.b16 %v8960, %v8954
    %v9495 = vpack.c.b16 %v8967, %v8961
    %v9496 = vpack.c.b16 %v8968, %v8962
    %v9497 = vpack.c.b16 %v8969, %v8963
    %v9498 = vpack.c.b16 %v8970, %v8964
    %v9499 = vpack.c.b16 %v8971, %v8965
    %v9500 = vpack.c.b16 %v8972, %v8966
    %v9501 = vpack.c.b16 %v8979, %v8973
    %v9502 = vpack.c.b16 %v8980, %v8974
    %v9503 = vpack.c.b16 %v8981, %v8975
    %v9504 = vpack.c.b16 %v8982, %v8976
    %v9505 = vpack.c.b16 %v8983, %v8977
    %v9506 = vpack.c.b16 %v8984, %v8978
    %v9507 = vpack.c.b16 %v8991, %v8985
    %v9508 = vpack.c.b16 %v8992, %v8986
    %v9509 = vpack.c.b16 %v8993, %v8987
    %v9510 = vpack.c.b16 %v8994, %v8988
    %v9511 = vpack.c.b16 %v8995, %v8989
    %v9512 = vpack.c.b16 %v8996, %v8990
    %v9513 = vpack.c.b16 %v9003, %v8997
    %v9514 = vpack.c.b16 %v9004, %v8998
    %v9515 = vpack.c.b16 %v9005, %v8999
    %v9516 = vpack.c.b16 %v9006, %v9000
    %v9517 = vpack.c.b16 %v9007, %v9001
    %v9518 = vpack.c.b16 %v9008, %v9002
    %v9519 = vpack.c.b16 %v9015, %v9009
    %v9520 = vpack.c.b16 %v9016, %v9010
    %v9521 = vpack.c.b16 %v9017, %v9011
    %v9522 = vpack.c.b16 %v9018, %v9012
    %v9523 = vpack.c.b16 %v9019, %v9013
    %v9524 = vpack.c.b16 %v9020, %v9014
    %v9525 = vpack.c.b16 %v9027, %v9021
    %v9526 = vpack.c.b16 %v9028, %v9022
    %v9527 = vpack.c.b16 %v9029, %v9023
    %v9528 = vpack.c.b16 %v9030, %v9024
    %v9529 = vpack.c.b16 %v9031, %v9025
    %v9530 = vpack.c.b16 %v9032, %v9026
    %v9531 = vpack.c.b16 %v9039, %v9033
    %v9532 = vpack.c.b16 %v9040, %v9034
    %v9533 = vpack.c.b16 %v9041, %v9035
    %v9534 = vpack.c.b16 %v9042, %v9036
    %v9535 = vpack.c.b16 %v9043, %v9037
    %v9536 = vpack.c.b16 %v9044, %v9038
    %v9537 = vpack.c.b16 %v9051, %v9045
    %v9538 = vpack.c.b16 %v9052, %v9046
    %v9539 = vpack.c.b16 %v9053, %v9047
    %v9540 = vpack.c.b16 %v9054, %v9048
    %v9541 = vpack.c.b16 %v9055, %v9049
    %v9542 = vpack.c.b16 %v9056, %v9050
    %v9543 = vpack.c.b16 %v9063, %v9057
    %v9544 = vpack.c.b16 %v9064, %v9058
    %v9545 = vpack.c.b16 %v9065, %v9059
    %v9546 = vpack.c.b16 %v9066, %v9060
    %v9547 = vpack.c.b16 %v9067, %v9061
    %v9548 = vpack.c.b16 %v9068, %v9062
    %v9549 = vpack.c.b16 %v9075, %v9069
    %v9550 = vpack.c.b16 %v9076, %v9070
    %v9551 = vpack.c.b16 %v9077, %v9071
    %v9552 = vpack.c.b16 %v9078, %v9072
    %v9553 = vpack.c.b16 %v9079, %v9073
    %v9554 = vpack.c.b16 %v9080, %v9074
    %v9555 = vpack.c.b16 %v9087, %v9081
    %v9556 = vpack.c.b16 %v9088, %v9082
    %v9557 = vpack.c.b16 %v9089, %v9083
    %v9558 = vpack.c.b16 %v9090, %v9084
    %v9559 = vpack.c.b16 %v9091, %v9085
    %v9560 = vpack.c.b16 %v9092, %v9086
    %v9561 = vpack.c.b16 %v9099, %v9093
    %v9562 = vpack.c.b16 %v9100, %v9094
    %v9563 = vpack.c.b16 %v9101, %v9095
    %v9564 = vpack.c.b16 %v9102, %v9096
    %v9565 = vpack.c.b16 %v9103, %v9097
    %v9566 = vpack.c.b16 %v9104, %v9098
    %v9567 = vpack.c.b16 %v9111, %v9105
    %v9568 = vpack.c.b16 %v9112, %v9106
    %v9569 = vpack.c.b16 %v9113, %v9107
    %v9570 = vpack.c.b16 %v9114, %v9108
    %v9571 = vpack.c.b16 %v9115, %v9109
    %v9572 = vpack.c.b16 %v9116, %v9110
    %v9573 = vpack.c.b16 %v9123, %v9117
    %v9574 = vpack.c.b16 %v9124, %v9118
    %v9575 = vpack.c.b16 %v9125, %v9119
    %v9576 = vpack.c.b16 %v9126, %v9120
    %v9577 = vpack.c.b16 %v9127, %v9121
    %v9578 = vpack.c.b16 %v9128, %v9122
    %v9579 = vpack.c.b16 %v9135, %v9129
    %v9580 = vpack.c.b16 %v9136, %v9130
    %v9581 = vpack.c.b16 %v9137, %v9131
    %v9582 = vpack.c.b16 %v9138, %v9132
    %v9583 = vpack.c.b16 %v9139, %v9133
    %v9584 = vpack.c.b16 %v9140, %v9134
    %v9585 = vpack.c.b16 %v9147, %v9141
    %v9586 = vpack.c.b16 %v9148, %v9142
    %v9587 = vpack.c.b16 %v9149, %v9143
    %v9588 = vpack.c.b16 %v9150, %v9144
    %v9589 = vpack.c.b16 %v9151, %v9145
    %v9590 = vpack.c.b16 %v9152, %v9146
    %v9591 = vpack.c.b16 %v9159, %v9153
    %v9592 = vpack.c.b16 %v9160, %v9154
    %v9593 = vpack.c.b16 %v9161, %v9155
    %v9594 = vpack.c.b16 %v9162, %v9156
    %v9595 = vpack.c.b16 %v9163, %v9157
    %v9596 = vpack.c.b16 %v9164, %v9158
    %v9597 = vpack.c.b16 %v9171, %v9165
    %v9598 = vpack.c.b16 %v9172, %v9166
    %v9599 = vpack.c.b16 %v9173, %v9167
    %v9600 = vpack.c.b16 %v9174, %v9168
    %v9601 = vpack.c.b16 %v9175, %v9169
    %v9602 = vpack.c.b16 %v9176, %v9170
    %v9603 = vpack.c.b16 %v9183, %v9177
    %v9604 = vpack.c.b16 %v9184, %v9178
    %v9605 = vpack.c.b16 %v9185, %v9179
    %v9606 = vpack.c.b16 %v9186, %v9180
    %v9607 = vpack.c.b16 %v9187, %v9181
    %v9608 = vpack.c.b16 %v9188, %v9182
    %v9609 = vpack.c.b16 %v9195, %v9189
    %v9610 = vpack.c.b16 %v9196, %v9190
    %v9611 = vpack.c.b16 %v9197, %v9191
    %v9612 = vpack.c.b16 %v9198, %v9192
    %v9613 = vpack.c.b16 %v9199, %v9193
    %v9614 = vpack.c.b16 %v9200, %v9194
    %v9615 = vpack.c.b16 %v9207, %v9201
    %v9616 = vpack.c.b16 %v9208, %v9202
    %v9617 = vpack.c.b16 %v9209, %v9203
    %v9618 = vpack.c.b16 %v9210, %v9204
    %v9619 = vpack.c.b16 %v9211, %v9205
    %v9620 = vpack.c.b16 %v9212, %v9206
    %v9621 = vpack.c.b16 %v9219, %v9213
    %v9622 = vpack.c.b16 %v9220, %v9214
    %v9623 = vpack.c.b16 %v9221, %v9215
    %v9624 = vpack.c.b16 %v9222, %v9216
    %v9625 = vpack.c.b16 %v9223, %v9217
    %v9626 = vpack.c.b16 %v9224, %v9218
    %v9627 = vpack.c.b16 %v9231, %v9225
    %v9628 = vpack.c.b16 %v9232, %v9226
    %v9629 = vpack.c.b16 %v9233, %v9227
    %v9630 = vpack.c.b16 %v9234, %v9228
    %v9631 = vpack.c.b16 %v9235, %v9229
    %v9632 = vpack.c.b16 %v9236, %v9230
    %v9633 = vpack.c.b16 %v9243, %v9237
    %v9634 = vpack.c.b16 %v9244, %v9238
    %v9635 = vpack.c.b16 %v9245, %v9239
    %v9636 = vpack.c.b16 %v9246, %v9240
    %v9637 = vpack.c.b16 %v9247, %v9241
    %v9638 = vpack.c.b16 %v9248, %v9242
    %v9639 = vpack.c.b16 %v9255, %v9249
    %v9640 = vpack.c.b16 %v9256, %v9250
    %v9641 = vpack.c.b16 %v9257, %v9251
    %v9642 = vpack.c.b16 %v9258, %v9252
    %v9643 = vpack.c.b16 %v9259, %v9253
    %v9644 = vpack.c.b16 %v9260, %v9254
    %v9645 = vpack.c.b16 %v9267, %v9261
    %v9646 = vpack.c.b16 %v9268, %v9262
    %v9647 = vpack.c.b16 %v9269, %v9263
    %v9648 = vpack.c.b16 %v9270, %v9264
    %v9649 = vpack.c.b16 %v9271, %v9265
    %v9650 = vpack.c.b16 %v9272, %v9266
    %v9651 = vpack.c.b16 %v9279, %v9273
    %v9652 = vpack.c.b16 %v9280, %v9274
    %v9653 = vpack.c.b16 %v9281, %v9275
    %v9654 = vpack.c.b16 %v9282, %v9276
    %v9655 = vpack.c.b16 %v9283, %v9277
    %v9656 = vpack.c.b16 %v9284, %v9278
    %v9657 = vpack.c.b16 %v9291, %v9285
    %v9658 = vpack.c.b16 %v9292, %v9286
    %v9659 = vpack.c.b16 %v9293, %v9287
    %v9660 = vpack.c.b16 %v9294, %v9288
    %v9661 = vpack.c.b16 %v9295, %v9289
    %v9662 = vpack.c.b16 %v9296, %v9290
    %v9663 = vpack.c.b16 %v9303, %v9297
    %v9664 = vpack.c.b16 %v9304, %v9298
    %v9665 = vpack.c.b16 %v9305, %v9299
    %v9666 = vpack.c.b16 %v9306, %v9300
    %v9667 = vpack.c.b16 %v9307, %v9301
    %v9668 = vpack.c.b16 %v9308, %v9302
    %v9669 = vpack.c.b16 %v9315, %v9309
    %v9670 = vpack.c.b16 %v9316, %v9310
    %v9671 = vpack.c.b16 %v9317, %v9311
    %v9672 = vpack.c.b16 %v9318, %v9312
    %v9673 = vpack.c.b16 %v9319, %v9313
    %v9674 = vpack.c.b16 %v9320, %v9314
    %v9675 = vpack.c.b16 %v9327, %v9321
    %v9676 = vpack.c.b16 %v9328, %v9322
    %v9677 = vpack.c.b16 %v9329, %v9323
    %v9678 = vpack.c.b16 %v9330, %v9324
    %v9679 = vpack.c.b16 %v9331, %v9325
    %v9680 = vpack.c.b16 %v9332, %v9326
    %v9681 = vpack.c.b16 %v9339, %v9333
    %v9682 = vpack.c.b16 %v9340, %v9334
    %v9683 = vpack.c.b16 %v9341, %v9335
    %v9684 = vpack.c.b16 %v9342, %v9336
    %v9685 = vpack.c.b16 %v9343, %v9337
    %v9686 = vpack.c.b16 %v9344, %v9338
    %v9687 = vpack.c.b16 %v9351, %v9345
    %v9688 = vpack.c.b16 %v9352, %v9346
    %v9689 = vpack.c.b16 %v9353, %v9347
    %v9690 = vpack.c.b16 %v9354, %v9348
    %v9691 = vpack.c.b16 %v9355, %v9349
    %v9692 = vpack.c.b16 %v9356, %v9350
    %v9693 = vpack.c.b16 %v9363, %v9357
    %v9694 = vpack.c.b16 %v9364, %v9358
    %v9695 = vpack.c.b16 %v9365, %v9359
    %v9696 = vpack.c.b16 %v9366, %v9360
    %v9697 = vpack.c.b16 %v9367, %v9361
    %v9698 = vpack.c.b16 %v9368, %v9362
    %v9699 = vpack.c.b16 %v9375, %v9369
    %v9700 = vpack.c.b16 %v9376, %v9370
    %v9701 = vpack.c.b16 %v9377, %v9371
    %v9702 = vpack.c.b16 %v9378, %v9372
    %v9703 = vpack.c.b16 %v9379, %v9373
    %v9704 = vpack.c.b16 %v9380, %v9374
    %v9705 = vpack.c.b16 %v9387, %v9381
    %v9706 = vpack.c.b16 %v9388, %v9382
    %v9707 = vpack.c.b16 %v9389, %v9383
    %v9708 = vpack.c.b16 %v9390, %v9384
    %v9709 = vpack.c.b16 %v9391, %v9385
    %v9710 = vpack.c.b16 %v9392, %v9386
    %v9711 = vpack.c.b16 %v9399, %v9393
    %v9712 = vpack.c.b16 %v9400, %v9394
    %v9713 = vpack.c.b16 %v9401, %v9395
    %v9714 = vpack.c.b16 %v9402, %v9396
    %v9715 = vpack.c.b16 %v9403, %v9397
    %v9716 = vpack.c.b16 %v9404, %v9398
    %v9717 = vpack.c.b16 %v9411, %v9405
    %v9718 = vpack.c.b16 %v9412, %v9406
    %v9719 = vpack.c.b16 %v9413, %v9407
    %v9720 = vpack.c.b16 %v9414, %v9408
    %v9721 = vpack.c.b16 %v9415, %v9409
    %v9722 = vpack.c.b16 %v9416, %v9410
    %v9723 = vpack.c.b16 %v9423, %v9417
    %v9724 = vpack.c.b16 %v9424, %v9418
    %v9725 = vpack.c.b16 %v9425, %v9419
    %v9726 = vpack.c.b16 %v9426, %v9420
    %v9727 = vpack.c.b16 %v9427, %v9421
    %v9728 = vpack.c.b16 %v9428, %v9422
    %v9729 = vpack.c.b16 %v9435, %v9429
    %v9730 = vpack.c.b16 %v9436, %v9430
    %v9731 = vpack.c.b16 %v9437, %v9431
    %v9732 = vpack.c.b16 %v9438, %v9432
    %v9733 = vpack.c.b16 %v9439, %v9433
    %v9734 = vpack.c.b16 %v9440, %v9434
    %v9735 = vpack.c.b16 %v9447, %v9441
    %v9736 = vpack.c.b16 %v9448, %v9442
    %v9737 = vpack.c.b16 %v9449, %v9443
    %v9738 = vpack.c.b16 %v9450, %v9444
    %v9739 = vpack.c.b16 %v9451, %v9445
    %v9740 = vpack.c.b16 %v9452, %v9446
    %10029 = vmatprep.subr.bf16.mxu0 %v9454
    %10030 = vmatpush1.bf16.msra.mxu0 %v9453
    %10031 = vmatprep.subr.bf16.mxu0 %v9460
    %10032 = vmatpush1.bf16.msra.mxu0 %v9459
    %10033 = vmatprep.subr.bf16.mxu0 %v9466
    %10034 = vmatpush1.bf16.msra.mxu0 %v9465
    %10035 = vmatprep.subr.bf16.mxu0 %v9472
    %10036 = vmatpush1.bf16.msra.mxu0 %v9471
    %10037 = vmatprep.subr.bf16.mxu0 %v9478
    %10038 = vmatpush1.bf16.msra.mxu0 %v9477
    %10039 = vmatprep.subr.bf16.mxu0 %v9484
    %10040 = vmatpush1.bf16.msra.mxu0 %v9483
    %10041 = vmatprep.subr.bf16.mxu0 %v9490
    %10042 = vmatpush1.bf16.msra.mxu0 %v9489
    %10043 = vmatprep.subr.bf16.mxu0 %v9496
    %10044 = vmatpush1.bf16.msra.mxu0 %v9495
    %10045 = vmatprep.subr.bf16.mxu0 %v9502
    %10046 = vmatpush1.bf16.msra.mxu0 %v9501
    %10047 = vmatprep.subr.bf16.mxu0 %v9508
    %10048 = vmatpush1.bf16.msra.mxu0 %v9507
    %10049 = vmatprep.subr.bf16.mxu0 %v9514
    %10050 = vmatpush1.bf16.msra.mxu0 %v9513
    %10051 = vmatprep.subr.bf16.mxu0 %v9520
    %10052 = vmatpush1.bf16.msra.mxu0 %v9519
    %10053 = vmatprep.subr.bf16.mxu0 %v9526
    %10054 = vmatpush1.bf16.msra.mxu0 %v9525
    %10055 = vmatprep.subr.bf16.mxu0 %v9532
    %10056 = vmatpush1.bf16.msra.mxu0 %v9531
    %10057 = vmatprep.subr.bf16.mxu0 %v9538
    %10058 = vmatpush1.bf16.msra.mxu0 %v9537
    %10059 = vmatprep.subr.bf16.mxu0 %v9544
    %10060 = vmatpush1.bf16.msra.mxu0 %v9543
    %10061 = vmatprep.mubr.bf16.mxu0 %v8264
    %10062 = vmatmul.mubr.bf16.gmra.mrb[0].mxu0 %v8263
    %v10063 = vpop.f32.mrb[0].mxu0
    %v10064 = vadd.f32 %v8562, %v10063
    %v10065 = vpop.f32.mrb[0].mxu0
    %v10066 = vadd.f32 %v8566, %v10065
    %v10067 = vpop.f32.mrb[0].mxu0
    %v10068 = vpop.f32.mrb[0].mxu0
    %10069 = vdwg.mxu0
    %10070 = vmatprep.subr.bf16.mxu0 %v9550
    %10071 = vmatpush1.bf16.msra.mxu0 %v9549
    %10072 = vmatprep.subr.bf16.mxu0 %v9556
    %10073 = vmatpush1.bf16.msra.mxu0 %v9555
    %10074 = vmatprep.subr.bf16.mxu0 %v9562
    %10075 = vmatpush1.bf16.msra.mxu0 %v9561
    %10076 = vmatprep.subr.bf16.mxu0 %v9568
    %10077 = vmatpush1.bf16.msra.mxu0 %v9567
    %10078 = vmatprep.subr.bf16.mxu0 %v9574
    %10079 = vmatpush1.bf16.msra.mxu0 %v9573
    %10080 = vmatprep.subr.bf16.mxu0 %v9580
    %10081 = vmatpush1.bf16.msra.mxu0 %v9579
    %10082 = vmatprep.subr.bf16.mxu0 %v9586
    %10083 = vmatpush1.bf16.msra.mxu0 %v9585
    %10084 = vmatprep.subr.bf16.mxu0 %v9592
    %10085 = vmatpush1.bf16.msra.mxu0 %v9591
    %10086 = vmatprep.subr.bf16.mxu0 %v9598
    %10087 = vmatpush1.bf16.msra.mxu0 %v9597
    %10088 = vmatprep.subr.bf16.mxu0 %v9604
    %10089 = vmatpush1.bf16.msra.mxu0 %v9603
    %10090 = vmatprep.subr.bf16.mxu0 %v9610
    %10091 = vmatpush1.bf16.msra.mxu0 %v9609
    %10092 = vmatprep.subr.bf16.mxu0 %v9616
    %10093 = vmatpush1.bf16.msra.mxu0 %v9615
    %10094 = vmatprep.subr.bf16.mxu0 %v9622
    %10095 = vmatpush1.bf16.msra.mxu0 %v9621
    %10096 = vmatprep.subr.bf16.mxu0 %v9628
    %10097 = vmatpush1.bf16.msra.mxu0 %v9627
    %10098 = vmatprep.subr.bf16.mxu0 %v9634
    %10099 = vmatpush1.bf16.msra.mxu0 %v9633
    %10100 = vmatprep.subr.bf16.mxu0 %v9640
    %10101 = vmatpush1.bf16.msra.mxu0 %v9639
    %10102 = vmatprep.mubr.bf16.mxu0 %v8266
    %10103 = vmatmul.mubr.bf16.gmra.mrb[0].mxu0 %v8265
    %v10104 = vpop.f32.mrb[0].mxu0
    %v10105 = vadd.f32 %v10064, %v10104
    %v10106 = vpop.f32.mrb[0].mxu0
    %v10107 = vadd.f32 %v10066, %v10106
    %v10108 = vpop.f32.mrb[0].mxu0
    %v10109 = vpop.f32.mrb[0].mxu0
    %10110 = vdwg.mxu0
    %10111 = vmatprep.subr.bf16.mxu0 %v9646
    %10112 = vmatpush1.bf16.msra.mxu0 %v9645
    %10113 = vmatprep.subr.bf16.mxu0 %v9652
    %10114 = vmatpush1.bf16.msra.mxu0 %v9651
    %10115 = vmatprep.subr.bf16.mxu0 %v9658
    %10116 = vmatpush1.bf16.msra.mxu0 %v9657
    %10117 = vmatprep.subr.bf16.mxu0 %v9664
    %10118 = vmatpush1.bf16.msra.mxu0 %v9663
    %10119 = vmatprep.subr.bf16.mxu0 %v9670
    %10120 = vmatpush1.bf16.msra.mxu0 %v9669
    %10121 = vmatprep.subr.bf16.mxu0 %v9676
    %10122 = vmatpush1.bf16.msra.mxu0 %v9675
    %10123 = vmatprep.subr.bf16.mxu0 %v9682
    %10124 = vmatpush1.bf16.msra.mxu0 %v9681
    %10125 = vmatprep.subr.bf16.mxu0 %v9688
    %10126 = vmatpush1.bf16.msra.mxu0 %v9687
    %10127 = vmatprep.subr.bf16.mxu0 %v9694
    %10128 = vmatpush1.bf16.msra.mxu0 %v9693
    %10129 = vmatprep.subr.bf16.mxu0 %v9700
    %10130 = vmatpush1.bf16.msra.mxu0 %v9699
    %10131 = vmatprep.subr.bf16.mxu0 %v9706
    %10132 = vmatpush1.bf16.msra.mxu0 %v9705
    %10133 = vmatprep.subr.bf16.mxu0 %v9712
    %10134 = vmatpush1.bf16.msra.mxu0 %v9711
    %10135 = vmatprep.subr.bf16.mxu0 %v9718
    %10136 = vmatpush1.bf16.msra.mxu0 %v9717
    %10137 = vmatprep.subr.bf16.mxu0 %v9724
    %10138 = vmatpush1.bf16.msra.mxu0 %v9723
    %10139 = vmatprep.subr.bf16.mxu0 %v9730
    %10140 = vmatpush1.bf16.msra.mxu0 %v9729
    %10141 = vmatprep.subr.bf16.mxu0 %v9736
    %10142 = vmatpush1.bf16.msra.mxu0 %v9735
    %10143 = vmatprep.mubr.bf16.mxu0 %v8268
    %10144 = vmatmul.mubr.bf16.gmra.mrb[0].mxu0 %v8267
    %v10145 = vpop.f32.mrb[0].mxu0
    %v10146 = vadd.f32 %v10105, %v10145
    %v10147 = vpop.f32.mrb[0].mxu0
    %v10148 = vadd.f32 %v10107, %v10147
    %v10149 = vpop.f32.mrb[0].mxu0
    %v10150 = vpop.f32.mrb[0].mxu0
    %10151 = vdwg.mxu0
    %10152 = vmatprep.subr.bf16.mxu0 %v9456
    %10153 = vmatpush1.bf16.msra.mxu0 %v9455
    %10154 = vmatprep.subr.bf16.mxu0 %v9462
    %10155 = vmatpush1.bf16.msra.mxu0 %v9461
    %10156 = vmatprep.subr.bf16.mxu0 %v9468
    %10157 = vmatpush1.bf16.msra.mxu0 %v9467
    %10158 = vmatprep.subr.bf16.mxu0 %v9474
    %10159 = vmatpush1.bf16.msra.mxu0 %v9473
    %10160 = vmatprep.subr.bf16.mxu0 %v9480
    %10161 = vmatpush1.bf16.msra.mxu0 %v9479
    %10162 = vmatprep.subr.bf16.mxu0 %v9486
    %10163 = vmatpush1.bf16.msra.mxu0 %v9485
    %10164 = vmatprep.subr.bf16.mxu0 %v9492
    %10165 = vmatpush1.bf16.msra.mxu0 %v9491
    %10166 = vmatprep.subr.bf16.mxu0 %v9498
    %10167 = vmatpush1.bf16.msra.mxu0 %v9497
    %10168 = vmatprep.subr.bf16.mxu0 %v9504
    %10169 = vmatpush1.bf16.msra.mxu0 %v9503
    %10170 = vmatprep.subr.bf16.mxu0 %v9510
    %10171 = vmatpush1.bf16.msra.mxu0 %v9509
    %10172 = vmatprep.subr.bf16.mxu0 %v9516
    %10173 = vmatpush1.bf16.msra.mxu0 %v9515
    %10174 = vmatprep.subr.bf16.mxu0 %v9522
    %10175 = vmatpush1.bf16.msra.mxu0 %v9521
    %10176 = vmatprep.subr.bf16.mxu0 %v9528
    %10177 = vmatpush1.bf16.msra.mxu0 %v9527
    %10178 = vmatprep.subr.bf16.mxu0 %v9534
    %10179 = vmatpush1.bf16.msra.mxu0 %v9533
    %10180 = vmatprep.subr.bf16.mxu0 %v9540
    %10181 = vmatpush1.bf16.msra.mxu0 %v9539
    %10182 = vmatprep.subr.bf16.mxu0 %v9546
    %10183 = vmatpush1.bf16.msra.mxu0 %v9545
    %10184 = vmatprep.mubr.bf16.mxu0 %v8264
    %10185 = vmatmul.mubr.bf16.gmra.mrb[0].mxu0 %v8263
    %v10186 = vpop.f32.mrb[0].mxu0
    %v10187 = vadd.f32 %v8570, %v10186
    %v10188 = vpop.f32.mrb[0].mxu0
    %v10189 = vadd.f32 %v8574, %v10188
    %v10190 = vpop.f32.mrb[0].mxu0
    %v10191 = vpop.f32.mrb[0].mxu0
    %10192 = vdwg.mxu0
    %10193 = vmatprep.subr.bf16.mxu0 %v9552
    %10194 = vmatpush1.bf16.msra.mxu0 %v9551
    %10195 = vmatprep.subr.bf16.mxu0 %v9558
    %10196 = vmatpush1.bf16.msra.mxu0 %v9557
    %10197 = vmatprep.subr.bf16.mxu0 %v9564
    %10198 = vmatpush1.bf16.msra.mxu0 %v9563
    %10199 = vmatprep.subr.bf16.mxu0 %v9570
    %10200 = vmatpush1.bf16.msra.mxu0 %v9569
    %10201 = vmatprep.subr.bf16.mxu0 %v9576
    %10202 = vmatpush1.bf16.msra.mxu0 %v9575
    %10203 = vmatprep.subr.bf16.mxu0 %v9582
    %10204 = vmatpush1.bf16.msra.mxu0 %v9581
    %10205 = vmatprep.subr.bf16.mxu0 %v9588
    %10206 = vmatpush1.bf16.msra.mxu0 %v9587
    %10207 = vmatprep.subr.bf16.mxu0 %v9594
    %10208 = vmatpush1.bf16.msra.mxu0 %v9593
    %10209 = vmatprep.subr.bf16.mxu0 %v9600
    %10210 = vmatpush1.bf16.msra.mxu0 %v9599
    %10211 = vmatprep.subr.bf16.mxu0 %v9606
    %10212 = vmatpush1.bf16.msra.mxu0 %v9605
    %10213 = vmatprep.subr.bf16.mxu0 %v9612
    %10214 = vmatpush1.bf16.msra.mxu0 %v9611
    %10215 = vmatprep.subr.bf16.mxu0 %v9618
    %10216 = vmatpush1.bf16.msra.mxu0 %v9617
    %10217 = vmatprep.subr.bf16.mxu0 %v9624
    %10218 = vmatpush1.bf16.msra.mxu0 %v9623
    %10219 = vmatprep.subr.bf16.mxu0 %v9630
    %10220 = vmatpush1.bf16.msra.mxu0 %v9629
    %10221 = vmatprep.subr.bf16.mxu0 %v9636
    %10222 = vmatpush1.bf16.msra.mxu0 %v9635
    %10223 = vmatprep.subr.bf16.mxu0 %v9642
    %10224 = vmatpush1.bf16.msra.mxu0 %v9641
    %10225 = vmatprep.mubr.bf16.mxu0 %v8266
    %10226 = vmatmul.mubr.bf16.gmra.mrb[0].mxu0 %v8265
    %v10227 = vpop.f32.mrb[0].mxu0
    %v10228 = vadd.f32 %v10187, %v10227
    %v10229 = vpop.f32.mrb[0].mxu0
    %v10230 = vadd.f32 %v10189, %v10229
    %v10231 = vpop.f32.mrb[0].mxu0
    %v10232 = vpop.f32.mrb[0].mxu0
    %10233 = vdwg.mxu0
    %10234 = vmatprep.subr.bf16.mxu0 %v9648
    %10235 = vmatpush1.bf16.msra.mxu0 %v9647
    %10236 = vmatprep.subr.bf16.mxu0 %v9654
    %10237 = vmatpush1.bf16.msra.mxu0 %v9653
    %10238 = vmatprep.subr.bf16.mxu0 %v9660
    %10239 = vmatpush1.bf16.msra.mxu0 %v9659
    %10240 = vmatprep.subr.bf16.mxu0 %v9666
    %10241 = vmatpush1.bf16.msra.mxu0 %v9665
    %10242 = vmatprep.subr.bf16.mxu0 %v9672
    %10243 = vmatpush1.bf16.msra.mxu0 %v9671
    %10244 = vmatprep.subr.bf16.mxu0 %v9678
    %10245 = vmatpush1.bf16.msra.mxu0 %v9677
    %10246 = vmatprep.subr.bf16.mxu0 %v9684
    %10247 = vmatpush1.bf16.msra.mxu0 %v9683
    %10248 = vmatprep.subr.bf16.mxu0 %v9690
    %10249 = vmatpush1.bf16.msra.mxu0 %v9689
    %10250 = vmatprep.subr.bf16.mxu0 %v9696
    %10251 = vmatpush1.bf16.msra.mxu0 %v9695
    %10252 = vmatprep.subr.bf16.mxu0 %v9702
    %10253 = vmatpush1.bf16.msra.mxu0 %v9701
    %10254 = vmatprep.subr.bf16.mxu0 %v9708
    %10255 = vmatpush1.bf16.msra.mxu0 %v9707
    %10256 = vmatprep.subr.bf16.mxu0 %v9714
    %10257 = vmatpush1.bf16.msra.mxu0 %v9713
    %10258 = vmatprep.subr.bf16.mxu0 %v9720
    %10259 = vmatpush1.bf16.msra.mxu0 %v9719
    %10260 = vmatprep.subr.bf16.mxu0 %v9726
    %10261 = vmatpush1.bf16.msra.mxu0 %v9725
    %10262 = vmatprep.subr.bf16.mxu0 %v9732
    %10263 = vmatpush1.bf16.msra.mxu0 %v9731
    %10264 = vmatprep.subr.bf16.mxu0 %v9738
    %10265 = vmatpush1.bf16.msra.mxu0 %v9737
    %10266 = vmatprep.mubr.bf16.mxu0 %v8268
    %10267 = vmatmul.mubr.bf16.gmra.mrb[0].mxu0 %v8267
    %v10268 = vpop.f32.mrb[0].mxu0
    %v10269 = vadd.f32 %v10228, %v10268
    %v10270 = vpop.f32.mrb[0].mxu0
    %v10271 = vadd.f32 %v10230, %v10270
    %v10272 = vpop.f32.mrb[0].mxu0
    %v10273 = vpop.f32.mrb[0].mxu0
    %10274 = vdwg.mxu0
    %10275 = vmatprep.subr.bf16.mxu0 %v9458
    %10276 = vmatpush1.bf16.msra.mxu0 %v9457
    %10277 = vmatprep.subr.bf16.mxu0 %v9464
    %10278 = vmatpush1.bf16.msra.mxu0 %v9463
    %10279 = vmatprep.subr.bf16.mxu0 %v9470
    %10280 = vmatpush1.bf16.msra.mxu0 %v9469
    %10281 = vmatprep.subr.bf16.mxu0 %v9476
    %10282 = vmatpush1.bf16.msra.mxu0 %v9475
    %10283 = vmatprep.subr.bf16.mxu0 %v9482
    %10284 = vmatpush1.bf16.msra.mxu0 %v9481
    %10285 = vmatprep.subr.bf16.mxu0 %v9488
    %10286 = vmatpush1.bf16.msra.mxu0 %v9487
    %10287 = vmatprep.subr.bf16.mxu0 %v9494
    %10288 = vmatpush1.bf16.msra.mxu0 %v9493
    %10289 = vmatprep.subr.bf16.mxu0 %v9500
    %10290 = vmatpush1.bf16.msra.mxu0 %v9499
    %10291 = vmatprep.subr.bf16.mxu0 %v9506
    %10292 = vmatpush1.bf16.msra.mxu0 %v9505
    %10293 = vmatprep.subr.bf16.mxu0 %v9512
    %10294 = vmatpush1.bf16.msra.mxu0 %v9511
    %10295 = vmatprep.subr.bf16.mxu0 %v9518
    %10296 = vmatpush1.bf16.msra.mxu0 %v9517
    %10297 = vmatprep.subr.bf16.mxu0 %v9524
    %10298 = vmatpush1.bf16.msra.mxu0 %v9523
    %10299 = vmatprep.subr.bf16.mxu0 %v9530
    %10300 = vmatpush1.bf16.msra.mxu0 %v9529
    %10301 = vmatprep.subr.bf16.mxu0 %v9536
    %10302 = vmatpush1.bf16.msra.mxu0 %v9535
    %10303 = vmatprep.subr.bf16.mxu0 %v9542
    %10304 = vmatpush1.bf16.msra.mxu0 %v9541
    %10305 = vmatprep.subr.bf16.mxu0 %v9548
    %10306 = vmatpush1.bf16.msra.mxu0 %v9547
    %10307 = vmatprep.mubr.bf16.mxu0 %v8264
    %10308 = vmatmul.mubr.bf16.gmra.mrb[0].mxu0 %v8263
    %v10309 = vpop.f32.mrb[0].mxu0
    %v10310 = vadd.f32 %v8578, %v10309
    %v10311 = vpop.f32.mrb[0].mxu0
    %v10312 = vadd.f32 %v8582, %v10311
    %v10313 = vpop.f32.mrb[0].mxu0
    %v10314 = vpop.f32.mrb[0].mxu0
    %10315 = vdwg.mxu0
    %10316 = vmatprep.subr.bf16.mxu0 %v9554
    %10317 = vmatpush1.bf16.msra.mxu0 %v9553
    %10318 = vmatprep.subr.bf16.mxu0 %v9560
    %10319 = vmatpush1.bf16.msra.mxu0 %v9559
    %10320 = vmatprep.subr.bf16.mxu0 %v9566
    %10321 = vmatpush1.bf16.msra.mxu0 %v9565
    %10322 = vmatprep.subr.bf16.mxu0 %v9572
    %10323 = vmatpush1.bf16.msra.mxu0 %v9571
    %10324 = vmatprep.subr.bf16.mxu0 %v9578
    %10325 = vmatpush1.bf16.msra.mxu0 %v9577
    %10326 = vmatprep.subr.bf16.mxu0 %v9584
    %10327 = vmatpush1.bf16.msra.mxu0 %v9583
    %10328 = vmatprep.subr.bf16.mxu0 %v9590
    %10329 = vmatpush1.bf16.msra.mxu0 %v9589
    %10330 = vmatprep.subr.bf16.mxu0 %v9596
    %10331 = vmatpush1.bf16.msra.mxu0 %v9595
    %10332 = vmatprep.subr.bf16.mxu0 %v9602
    %10333 = vmatpush1.bf16.msra.mxu0 %v9601
    %10334 = vmatprep.subr.bf16.mxu0 %v9608
    %10335 = vmatpush1.bf16.msra.mxu0 %v9607
    %10336 = vmatprep.subr.bf16.mxu0 %v9614
    %10337 = vmatpush1.bf16.msra.mxu0 %v9613
    %10338 = vmatprep.subr.bf16.mxu0 %v9620
    %10339 = vmatpush1.bf16.msra.mxu0 %v9619
    %10340 = vmatprep.subr.bf16.mxu0 %v9626
    %10341 = vmatpush1.bf16.msra.mxu0 %v9625
    %10342 = vmatprep.subr.bf16.mxu0 %v9632
    %10343 = vmatpush1.bf16.msra.mxu0 %v9631
    %10344 = vmatprep.subr.bf16.mxu0 %v9638
    %10345 = vmatpush1.bf16.msra.mxu0 %v9637
    %10346 = vmatprep.subr.bf16.mxu0 %v9644
    %10347 = vmatpush1.bf16.msra.mxu0 %v9643
    %10348 = vmatprep.mubr.bf16.mxu0 %v8266
    %10349 = vmatmul.mubr.bf16.gmra.mrb[0].mxu0 %v8265
    %v10350 = vpop.f32.mrb[0].mxu0
    %v10351 = vadd.f32 %v10310, %v10350
    %v10352 = vpop.f32.mrb[0].mxu0
    %v10353 = vadd.f32 %v10312, %v10352
    %v10354 = vpop.f32.mrb[0].mxu0
    %v10355 = vpop.f32.mrb[0].mxu0
    %10356 = vdwg.mxu0
    %10357 = vmatprep.subr.bf16.mxu0 %v9650
    %10358 = vmatpush1.bf16.msra.mxu0 %v9649
    %10359 = vmatprep.subr.bf16.mxu0 %v9656
    %10360 = vmatpush1.bf16.msra.mxu0 %v9655
    %10361 = vmatprep.subr.bf16.mxu0 %v9662
    %10362 = vmatpush1.bf16.msra.mxu0 %v9661
    %10363 = vmatprep.subr.bf16.mxu0 %v9668
    %10364 = vmatpush1.bf16.msra.mxu0 %v9667
    %10365 = vmatprep.subr.bf16.mxu0 %v9674
    %10366 = vmatpush1.bf16.msra.mxu0 %v9673
    %10367 = vmatprep.subr.bf16.mxu0 %v9680
    %10368 = vmatpush1.bf16.msra.mxu0 %v9679
    %10369 = vmatprep.subr.bf16.mxu0 %v9686
    %10370 = vmatpush1.bf16.msra.mxu0 %v9685
    %10371 = vmatprep.subr.bf16.mxu0 %v9692
    %10372 = vmatpush1.bf16.msra.mxu0 %v9691
    %10373 = vmatprep.subr.bf16.mxu0 %v9698
    %10374 = vmatpush1.bf16.msra.mxu0 %v9697
    %10375 = vmatprep.subr.bf16.mxu0 %v9704
    %10376 = vmatpush1.bf16.msra.mxu0 %v9703
    %10377 = vmatprep.subr.bf16.mxu0 %v9710
    %10378 = vmatpush1.bf16.msra.mxu0 %v9709
    %10379 = vmatprep.subr.bf16.mxu0 %v9716
    %10380 = vmatpush1.bf16.msra.mxu0 %v9715
    %10381 = vmatprep.subr.bf16.mxu0 %v9722
    %10382 = vmatpush1.bf16.msra.mxu0 %v9721
    %10383 = vmatprep.subr.bf16.mxu0 %v9728
    %10384 = vmatpush1.bf16.msra.mxu0 %v9727
    %10385 = vmatprep.subr.bf16.mxu0 %v9734
    %10386 = vmatpush1.bf16.msra.mxu0 %v9733
    %10387 = vmatprep.subr.bf16.mxu0 %v9740
    %10388 = vmatpush1.bf16.msra.mxu0 %v9739
    %10389 = vmatprep.mubr.bf16.mxu0 %v8268
    %10390 = vmatmul.mubr.bf16.gmra.mrb[0].mxu0 %v8267
    %v10391 = vpop.f32.mrb[0].mxu0
    %v10392 = vadd.f32 %v10351, %v10391
    %v10393 = vpop.f32.mrb[0].mxu0
    %v10394 = vadd.f32 %v10353, %v10393
    %v10395 = vpop.f32.mrb[0].mxu0
    %v10396 = vpop.f32.mrb[0].mxu0
    %10397 = vdwg.mxu0
    %v10398 = vmax.f32 %v10146, 0.0
    %v10399 = vmax.f32 %v10148, 0.0
    %v10400 = vmax.f32 %v10269, 0.0
    %v10401 = vmax.f32 %v10271, 0.0
    %v10402 = vmax.f32 %v10392, 0.0
    %v10403 = vmax.f32 %v10394, 0.0
    %v10404 = vpack.c.bf16 %v10398, %v10398
    %v10405 = vpack.c.bf16 %v10399, %v10399
    %v10406 = vpack.c.bf16 %v10400, %v10400
    %v10407 = vpack.c.bf16 %v10401, %v10401
    %v10408 = vpack.c.bf16 %v10402, %v10402
    %v10409 = vpack.c.bf16 %v10403, %v10403
    %v10410 = vld [vmem:[#allocation22] sm:$0xff]
    %v10411 = vld [vmem:[#allocation22 + $0x8] sm:$0xff]
    %v10412 = vld [vmem:[#allocation22 + $0x10] sm:$0xff]
    %v10413 = vld [vmem:[#allocation22 + $0x18] sm:$0xff]
    %v10414 = vld [vmem:[#allocation22 + $0x20] sm:$0xff]
    %v10415 = vld [vmem:[#allocation22 + $0x28] sm:$0xff]
    %v10416 = vld [vmem:[#allocation22 + $0x30] sm:$0xff]
    %v10417 = vld [vmem:[#allocation22 + $0x38] sm:$0xff]
    %v10418 = vld [vmem:[#allocation22 + $0x40] sm:$0xff]
    %v10419 = vld [vmem:[#allocation22 + $0x48] sm:$0xff]
    %v10420 = vld [vmem:[#allocation22 + $0x50] sm:$0xff]
    %v10421 = vld [vmem:[#allocation22 + $0x58] sm:$0xff]
    %v10422 = vld [vmem:[#allocation22 + $0x60] sm:$0xff]
    %v10423 = vld [vmem:[#allocation22 + $0x68] sm:$0xff]
    %v10424 = vld [vmem:[#allocation22 + $0x70] sm:$0xff]
    %v10425 = vld [vmem:[#allocation22 + $0x78] sm:$0xff]
    %v10426 = vld [vmem:[#allocation22 + $0x80] sm:$0xff]
    %v10427 = vld [vmem:[#allocation22 + $0x88] sm:$0xff]
    %v10428 = vld [vmem:[#allocation22 + $0x90] sm:$0xff]
    %v10429 = vld [vmem:[#allocation22 + $0x98] sm:$0xff]
    %v10430 = vld [vmem:[#allocation22 + $0xa0] sm:$0xff]
    %v10431 = vld [vmem:[#allocation22 + $0xa8] sm:$0xff]
    %v10432 = vld [vmem:[#allocation22 + $0xb0] sm:$0xff]
    %v10433 = vld [vmem:[#allocation22 + $0xb8] sm:$0xff]
    %v10434 = vld [vmem:[#allocation22 + $0xc0] sm:$0xff]
    %v10435 = vld [vmem:[#allocation22 + $0xc8] sm:$0xff]
    %v10436 = vld [vmem:[#allocation22 + $0xd0] sm:$0xff]
    %v10437 = vld [vmem:[#allocation22 + $0xd8] sm:$0xff]
    %v10438 = vld [vmem:[#allocation22 + $0xe0] sm:$0xff]
    %v10439 = vld [vmem:[#allocation22 + $0xe8] sm:$0xff]
    %v10440 = vld [vmem:[#allocation22 + $0xf0] sm:$0xff]
    %v10441 = vld [vmem:[#allocation22 + $0xf8] sm:$0xff]
    %v10442 = vld [vmem:[#allocation22 + $0x100] sm:$0xff]
    %v10443 = vld [vmem:[#allocation22 + $0x108] sm:$0xff]
    %v10444 = vld [vmem:[#allocation22 + $0x110] sm:$0xff]
    %v10445 = vld [vmem:[#allocation22 + $0x118] sm:$0xff]
    %v10446 = vld [vmem:[#allocation22 + $0x120] sm:$0xff]
    %v10447 = vld [vmem:[#allocation22 + $0x128] sm:$0xff]
    %v10448 = vld [vmem:[#allocation22 + $0x130] sm:$0xff]
    %v10449 = vld [vmem:[#allocation22 + $0x138] sm:$0xff]
    %v10450 = vld [vmem:[#allocation22 + $0x140] sm:$0xff]
    %v10451 = vld [vmem:[#allocation22 + $0x148] sm:$0xff]
    %v10452 = vld [vmem:[#allocation22 + $0x150] sm:$0xff]
    %v10453 = vld [vmem:[#allocation22 + $0x158] sm:$0xff]
    %v10454 = vld [vmem:[#allocation22 + $0x160] sm:$0xff]
    %v10455 = vld [vmem:[#allocation22 + $0x168] sm:$0xff]
    %v10456 = vld [vmem:[#allocation22 + $0x170] sm:$0xff]
    %v10457 = vld [vmem:[#allocation22 + $0x178] sm:$0xff]
    %v10458 = vld [vmem:[#allocation22 + $0x180] sm:$0xff]
    %v10459 = vld [vmem:[#allocation22 + $0x188] sm:$0xff]
    %v10460 = vld [vmem:[#allocation22 + $0x190] sm:$0xff]
    %v10461 = vld [vmem:[#allocation22 + $0x198] sm:$0xff]
    %v10462 = vld [vmem:[#allocation22 + $0x1a0] sm:$0xff]
    %v10463 = vld [vmem:[#allocation22 + $0x1a8] sm:$0xff]
    %v10464 = vld [vmem:[#allocation22 + $0x1b0] sm:$0xff]
    %v10465 = vld [vmem:[#allocation22 + $0x1b8] sm:$0xff]
    %v10466 = vld [vmem:[#allocation22 + $0x1c0] sm:$0xff]
    %v10467 = vld [vmem:[#allocation22 + $0x1c8] sm:$0xff]
    %v10468 = vld [vmem:[#allocation22 + $0x1d0] sm:$0xff]
    %v10469 = vld [vmem:[#allocation22 + $0x1d8] sm:$0xff]
    %v10470 = vld [vmem:[#allocation22 + $0x1e0] sm:$0xff]
    %v10471 = vld [vmem:[#allocation22 + $0x1e8] sm:$0xff]
    %v10472 = vld [vmem:[#allocation22 + $0x1f0] sm:$0xff]
    %v10473 = vld [vmem:[#allocation22 + $0x1f8] sm:$0xff]
    %v10474 = vld [vmem:[#allocation22 + $0x200] sm:$0xff]
    %v10475 = vld [vmem:[#allocation22 + $0x208] sm:$0xff]
    %v10476 = vld [vmem:[#allocation22 + $0x210] sm:$0xff]
    %v10477 = vld [vmem:[#allocation22 + $0x218] sm:$0xff]
    %v10478 = vld [vmem:[#allocation22 + $0x220] sm:$0xff]
    %v10479 = vld [vmem:[#allocation22 + $0x228] sm:$0xff]
    %v10480 = vld [vmem:[#allocation22 + $0x230] sm:$0xff]
    %v10481 = vld [vmem:[#allocation22 + $0x238] sm:$0xff]
    %v10482 = vld [vmem:[#allocation22 + $0x240] sm:$0xff]
    %v10483 = vld [vmem:[#allocation22 + $0x248] sm:$0xff]
    %v10484 = vld [vmem:[#allocation22 + $0x250] sm:$0xff]
    %v10485 = vld [vmem:[#allocation22 + $0x258] sm:$0xff]
    %v10486 = vld [vmem:[#allocation22 + $0x260] sm:$0xff]
    %v10487 = vld [vmem:[#allocation22 + $0x268] sm:$0xff]
    %v10488 = vld [vmem:[#allocation22 + $0x270] sm:$0xff]
    %v10489 = vld [vmem:[#allocation22 + $0x278] sm:$0xff]
    %v10490 = vld [vmem:[#allocation22 + $0x280] sm:$0xff]
    %v10491 = vld [vmem:[#allocation22 + $0x288] sm:$0xff]
    %v10492 = vld [vmem:[#allocation22 + $0x290] sm:$0xff]
    %v10493 = vld [vmem:[#allocation22 + $0x298] sm:$0xff]
    %v10494 = vld [vmem:[#allocation22 + $0x2a0] sm:$0xff]
    %v10495 = vld [vmem:[#allocation22 + $0x2a8] sm:$0xff]
    %v10496 = vld [vmem:[#allocation22 + $0x2b0] sm:$0xff]
    %v10497 = vld [vmem:[#allocation22 + $0x2b8] sm:$0xff]
    %v10498 = vld [vmem:[#allocation22 + $0x2c0] sm:$0xff]
    %v10499 = vld [vmem:[#allocation22 + $0x2c8] sm:$0xff]
    %v10500 = vld [vmem:[#allocation22 + $0x2d0] sm:$0xff]
    %v10501 = vld [vmem:[#allocation22 + $0x2d8] sm:$0xff]
    %v10502 = vld [vmem:[#allocation22 + $0x2e0] sm:$0xff]
    %v10503 = vld [vmem:[#allocation22 + $0x2e8] sm:$0xff]
    %v10504 = vld [vmem:[#allocation22 + $0x2f0] sm:$0xff]
    %v10505 = vld [vmem:[#allocation22 + $0x2f8] sm:$0xff]
    %v10506 = vld [vmem:[#allocation22 + $0x300] sm:$0xff]
    %v10507 = vld [vmem:[#allocation22 + $0x308] sm:$0xff]
    %v10508 = vld [vmem:[#allocation22 + $0x310] sm:$0xff]
    %v10509 = vld [vmem:[#allocation22 + $0x318] sm:$0xff]
    %v10510 = vld [vmem:[#allocation22 + $0x320] sm:$0xff]
    %v10511 = vld [vmem:[#allocation22 + $0x328] sm:$0xff]
    %v10512 = vld [vmem:[#allocation22 + $0x330] sm:$0xff]
    %v10513 = vld [vmem:[#allocation22 + $0x338] sm:$0xff]
    %v10514 = vld [vmem:[#allocation22 + $0x340] sm:$0xff]
    %v10515 = vld [vmem:[#allocation22 + $0x348] sm:$0xff]
    %v10516 = vld [vmem:[#allocation22 + $0x350] sm:$0xff]
    %v10517 = vld [vmem:[#allocation22 + $0x358] sm:$0xff]
    %v10518 = vld [vmem:[#allocation22 + $0x360] sm:$0xff]
    %v10519 = vld [vmem:[#allocation22 + $0x368] sm:$0xff]
    %v10520 = vld [vmem:[#allocation22 + $0x370] sm:$0xff]
    %v10521 = vld [vmem:[#allocation22 + $0x378] sm:$0xff]
    %v10522 = vld [vmem:[#allocation22 + $0x380] sm:$0xff]
    %v10523 = vld [vmem:[#allocation22 + $0x388] sm:$0xff]
    %v10524 = vld [vmem:[#allocation22 + $0x390] sm:$0xff]
    %v10525 = vld [vmem:[#allocation22 + $0x398] sm:$0xff]
    %v10526 = vld [vmem:[#allocation22 + $0x3a0] sm:$0xff]
    %v10527 = vld [vmem:[#allocation22 + $0x3a8] sm:$0xff]
    %v10528 = vld [vmem:[#allocation22 + $0x3b0] sm:$0xff]
    %v10529 = vld [vmem:[#allocation22 + $0x3b8] sm:$0xff]
    %v10530 = vld [vmem:[#allocation22 + $0x3c0] sm:$0xff]
    %v10531 = vld [vmem:[#allocation22 + $0x3c8] sm:$0xff]
    %v10532 = vld [vmem:[#allocation22 + $0x3d0] sm:$0xff]
    %v10533 = vld [vmem:[#allocation22 + $0x3d8] sm:$0xff]
    %v10534 = vld [vmem:[#allocation22 + $0x3e0] sm:$0xff]
    %v10535 = vld [vmem:[#allocation22 + $0x3e8] sm:$0xff]
    %v10536 = vld [vmem:[#allocation22 + $0x3f0] sm:$0xff]
    %v10537 = vld [vmem:[#allocation22 + $0x3f8] sm:$0xff]
    %v10538 = vld [vmem:[#allocation22 + $0x400] sm:$0xff]
    %v10539 = vld [vmem:[#allocation22 + $0x408] sm:$0xff]
    %v10540 = vld [vmem:[#allocation22 + $0x410] sm:$0xff]
    %v10541 = vld [vmem:[#allocation22 + $0x418] sm:$0xff]
    %v10542 = vld [vmem:[#allocation22 + $0x420] sm:$0xff]
    %v10543 = vld [vmem:[#allocation22 + $0x428] sm:$0xff]
    %v10544 = vld [vmem:[#allocation22 + $0x430] sm:$0xff]
    %v10545 = vld [vmem:[#allocation22 + $0x438] sm:$0xff]
    %v10546 = vld [vmem:[#allocation22 + $0x440] sm:$0xff]
    %v10547 = vld [vmem:[#allocation22 + $0x448] sm:$0xff]
    %v10548 = vld [vmem:[#allocation22 + $0x450] sm:$0xff]
    %v10549 = vld [vmem:[#allocation22 + $0x458] sm:$0xff]
    %v10550 = vld [vmem:[#allocation22 + $0x460] sm:$0xff]
    %v10551 = vld [vmem:[#allocation22 + $0x468] sm:$0xff]
    %v10552 = vld [vmem:[#allocation22 + $0x470] sm:$0xff]
    %v10553 = vld [vmem:[#allocation22 + $0x478] sm:$0xff]
    %v10554 = vld [vmem:[#allocation22 + $0x480] sm:$0xff]
    %v10555 = vld [vmem:[#allocation22 + $0x488] sm:$0xff]
    %v10556 = vld [vmem:[#allocation22 + $0x490] sm:$0xff]
    %v10557 = vld [vmem:[#allocation22 + $0x498] sm:$0xff]
    %v10558 = vld [vmem:[#allocation22 + $0x4a0] sm:$0xff]
    %v10559 = vld [vmem:[#allocation22 + $0x4a8] sm:$0xff]
    %v10560 = vld [vmem:[#allocation22 + $0x4b0] sm:$0xff]
    %v10561 = vld [vmem:[#allocation22 + $0x4b8] sm:$0xff]
    %v10562 = vld [vmem:[#allocation22 + $0x4c0] sm:$0xff]
    %v10563 = vld [vmem:[#allocation22 + $0x4c8] sm:$0xff]
    %v10564 = vld [vmem:[#allocation22 + $0x4d0] sm:$0xff]
    %v10565 = vld [vmem:[#allocation22 + $0x4d8] sm:$0xff]
    %v10566 = vld [vmem:[#allocation22 + $0x4e0] sm:$0xff]
    %v10567 = vld [vmem:[#allocation22 + $0x4e8] sm:$0xff]
    %v10568 = vld [vmem:[#allocation22 + $0x4f0] sm:$0xff]
    %v10569 = vld [vmem:[#allocation22 + $0x4f8] sm:$0xff]
    %v10570 = vld [vmem:[#allocation22 + $0x500] sm:$0xff]
    %v10571 = vld [vmem:[#allocation22 + $0x508] sm:$0xff]
    %v10572 = vld [vmem:[#allocation22 + $0x510] sm:$0xff]
    %v10573 = vld [vmem:[#allocation22 + $0x518] sm:$0xff]
    %v10574 = vld [vmem:[#allocation22 + $0x520] sm:$0xff]
    %v10575 = vld [vmem:[#allocation22 + $0x528] sm:$0xff]
    %v10576 = vld [vmem:[#allocation22 + $0x530] sm:$0xff]
    %v10577 = vld [vmem:[#allocation22 + $0x538] sm:$0xff]
    %v10578 = vld [vmem:[#allocation22 + $0x540] sm:$0xff]
    %v10579 = vld [vmem:[#allocation22 + $0x548] sm:$0xff]
    %v10580 = vld [vmem:[#allocation22 + $0x550] sm:$0xff]
    %v10581 = vld [vmem:[#allocation22 + $0x558] sm:$0xff]
    %v10582 = vld [vmem:[#allocation22 + $0x560] sm:$0xff]
    %v10583 = vld [vmem:[#allocation22 + $0x568] sm:$0xff]
    %v10584 = vld [vmem:[#allocation22 + $0x570] sm:$0xff]
    %v10585 = vld [vmem:[#allocation22 + $0x578] sm:$0xff]
    %v10586 = vld [vmem:[#allocation22 + $0x580] sm:$0xff]
    %v10587 = vld [vmem:[#allocation22 + $0x588] sm:$0xff]
    %v10588 = vld [vmem:[#allocation22 + $0x590] sm:$0xff]
    %v10589 = vld [vmem:[#allocation22 + $0x598] sm:$0xff]
    %v10590 = vld [vmem:[#allocation22 + $0x5a0] sm:$0xff]
    %v10591 = vld [vmem:[#allocation22 + $0x5a8] sm:$0xff]
    %v10592 = vld [vmem:[#allocation22 + $0x5b0] sm:$0xff]
    %v10593 = vld [vmem:[#allocation22 + $0x5b8] sm:$0xff]
    %v10594 = vld [vmem:[#allocation22 + $0x5c0] sm:$0xff]
    %v10595 = vld [vmem:[#allocation22 + $0x5c8] sm:$0xff]
    %v10596 = vld [vmem:[#allocation22 + $0x5d0] sm:$0xff]
    %v10597 = vld [vmem:[#allocation22 + $0x5d8] sm:$0xff]
    %v10598 = vld [vmem:[#allocation22 + $0x5e0] sm:$0xff]
    %v10599 = vld [vmem:[#allocation22 + $0x5e8] sm:$0xff]
    %v10600 = vld [vmem:[#allocation22 + $0x5f0] sm:$0xff]
    %v10601 = vld [vmem:[#allocation22 + $0x5f8] sm:$0xff]
    %v10602 = vld [vmem:[#allocation22 + $0x600] sm:$0xff]
    %v10603 = vld [vmem:[#allocation22 + $0x608] sm:$0xff]
    %v10604 = vld [vmem:[#allocation22 + $0x610] sm:$0xff]
    %v10605 = vld [vmem:[#allocation22 + $0x618] sm:$0xff]
    %v10606 = vld [vmem:[#allocation22 + $0x620] sm:$0xff]
    %v10607 = vld [vmem:[#allocation22 + $0x628] sm:$0xff]
    %v10608 = vld [vmem:[#allocation22 + $0x630] sm:$0xff]
    %v10609 = vld [vmem:[#allocation22 + $0x638] sm:$0xff]
    %v10610 = vld [vmem:[#allocation22 + $0x640] sm:$0xff]
    %v10611 = vld [vmem:[#allocation22 + $0x648] sm:$0xff]
    %v10612 = vld [vmem:[#allocation22 + $0x650] sm:$0xff]
    %v10613 = vld [vmem:[#allocation22 + $0x658] sm:$0xff]
    %v10614 = vld [vmem:[#allocation22 + $0x660] sm:$0xff]
    %v10615 = vld [vmem:[#allocation22 + $0x668] sm:$0xff]
    %v10616 = vld [vmem:[#allocation22 + $0x670] sm:$0xff]
    %v10617 = vld [vmem:[#allocation22 + $0x678] sm:$0xff]
    %v10618 = vld [vmem:[#allocation22 + $0x680] sm:$0xff]
    %v10619 = vld [vmem:[#allocation22 + $0x688] sm:$0xff]
    %v10620 = vld [vmem:[#allocation22 + $0x690] sm:$0xff]
    %v10621 = vld [vmem:[#allocation22 + $0x698] sm:$0xff]
    %v10622 = vld [vmem:[#allocation22 + $0x6a0] sm:$0xff]
    %v10623 = vld [vmem:[#allocation22 + $0x6a8] sm:$0xff]
    %v10624 = vld [vmem:[#allocation22 + $0x6b0] sm:$0xff]
    %v10625 = vld [vmem:[#allocation22 + $0x6b8] sm:$0xff]
    %v10626 = vld [vmem:[#allocation22 + $0x6c0] sm:$0xff]
    %v10627 = vld [vmem:[#allocation22 + $0x6c8] sm:$0xff]
    %v10628 = vld [vmem:[#allocation22 + $0x6d0] sm:$0xff]
    %v10629 = vld [vmem:[#allocation22 + $0x6d8] sm:$0xff]
    %v10630 = vld [vmem:[#allocation22 + $0x6e0] sm:$0xff]
    %v10631 = vld [vmem:[#allocation22 + $0x6e8] sm:$0xff]
    %v10632 = vld [vmem:[#allocation22 + $0x6f0] sm:$0xff]
    %v10633 = vld [vmem:[#allocation22 + $0x6f8] sm:$0xff]
    %v10634 = vld [vmem:[#allocation22 + $0x700] sm:$0xff]
    %v10635 = vld [vmem:[#allocation22 + $0x708] sm:$0xff]
    %v10636 = vld [vmem:[#allocation22 + $0x710] sm:$0xff]
    %v10637 = vld [vmem:[#allocation22 + $0x718] sm:$0xff]
    %v10638 = vld [vmem:[#allocation22 + $0x720] sm:$0xff]
    %v10639 = vld [vmem:[#allocation22 + $0x728] sm:$0xff]
    %v10640 = vld [vmem:[#allocation22 + $0x730] sm:$0xff]
    %v10641 = vld [vmem:[#allocation22 + $0x738] sm:$0xff]
    %v10642 = vld [vmem:[#allocation22 + $0x740] sm:$0xff]
    %v10643 = vld [vmem:[#allocation22 + $0x748] sm:$0xff]
    %v10644 = vld [vmem:[#allocation22 + $0x750] sm:$0xff]
    %v10645 = vld [vmem:[#allocation22 + $0x758] sm:$0xff]
    %v10646 = vld [vmem:[#allocation22 + $0x760] sm:$0xff]
    %v10647 = vld [vmem:[#allocation22 + $0x768] sm:$0xff]
    %v10648 = vld [vmem:[#allocation22 + $0x770] sm:$0xff]
    %v10649 = vld [vmem:[#allocation22 + $0x778] sm:$0xff]
    %v10650 = vld [vmem:[#allocation22 + $0x780] sm:$0xff]
    %v10651 = vld [vmem:[#allocation22 + $0x788] sm:$0xff]
    %v10652 = vld [vmem:[#allocation22 + $0x790] sm:$0xff]
    %v10653 = vld [vmem:[#allocation22 + $0x798] sm:$0xff]
    %v10654 = vld [vmem:[#allocation22 + $0x7a0] sm:$0xff]
    %v10655 = vld [vmem:[#allocation22 + $0x7a8] sm:$0xff]
    %v10656 = vld [vmem:[#allocation22 + $0x7b0] sm:$0xff]
    %v10657 = vld [vmem:[#allocation22 + $0x7b8] sm:$0xff]
    %v10658 = vld [vmem:[#allocation22 + $0x7c0] sm:$0xff]
    %v10659 = vld [vmem:[#allocation22 + $0x7c8] sm:$0xff]
    %v10660 = vld [vmem:[#allocation22 + $0x7d0] sm:$0xff]
    %v10661 = vld [vmem:[#allocation22 + $0x7d8] sm:$0xff]
    %v10662 = vld [vmem:[#allocation22 + $0x7e0] sm:$0xff]
    %v10663 = vld [vmem:[#allocation22 + $0x7e8] sm:$0xff]
    %v10664 = vld [vmem:[#allocation22 + $0x7f0] sm:$0xff]
    %v10665 = vld [vmem:[#allocation22 + $0x7f8] sm:$0xff]
    %v10666 = vld [vmem:[#allocation22 + $0x800] sm:$0xff]
    %v10667 = vld [vmem:[#allocation22 + $0x808] sm:$0xff]
    %v10668 = vld [vmem:[#allocation22 + $0x810] sm:$0xff]
    %v10669 = vld [vmem:[#allocation22 + $0x818] sm:$0xff]
    %v10670 = vld [vmem:[#allocation22 + $0x820] sm:$0xff]
    %v10671 = vld [vmem:[#allocation22 + $0x828] sm:$0xff]
    %v10672 = vld [vmem:[#allocation22 + $0x830] sm:$0xff]
    %v10673 = vld [vmem:[#allocation22 + $0x838] sm:$0xff]
    %v10674 = vld [vmem:[#allocation22 + $0x840] sm:$0xff]
    %v10675 = vld [vmem:[#allocation22 + $0x848] sm:$0xff]
    %v10676 = vld [vmem:[#allocation22 + $0x850] sm:$0xff]
    %v10677 = vld [vmem:[#allocation22 + $0x858] sm:$0xff]
    %v10678 = vld [vmem:[#allocation22 + $0x860] sm:$0xff]
    %v10679 = vld [vmem:[#allocation22 + $0x868] sm:$0xff]
    %v10680 = vld [vmem:[#allocation22 + $0x870] sm:$0xff]
    %v10681 = vld [vmem:[#allocation22 + $0x878] sm:$0xff]
    %v10682 = vld [vmem:[#allocation22 + $0x880] sm:$0xff]
    %v10683 = vld [vmem:[#allocation22 + $0x888] sm:$0xff]
    %v10684 = vld [vmem:[#allocation22 + $0x890] sm:$0xff]
    %v10685 = vld [vmem:[#allocation22 + $0x898] sm:$0xff]
    %v10686 = vld [vmem:[#allocation22 + $0x8a0] sm:$0xff]
    %v10687 = vld [vmem:[#allocation22 + $0x8a8] sm:$0xff]
    %v10688 = vld [vmem:[#allocation22 + $0x8b0] sm:$0xff]
    %v10689 = vld [vmem:[#allocation22 + $0x8b8] sm:$0xff]
    %v10690 = vld [vmem:[#allocation22 + $0x8c0] sm:$0xff]
    %v10691 = vld [vmem:[#allocation22 + $0x8c8] sm:$0xff]
    %v10692 = vld [vmem:[#allocation22 + $0x8d0] sm:$0xff]
    %v10693 = vld [vmem:[#allocation22 + $0x8d8] sm:$0xff]
    %v10694 = vld [vmem:[#allocation22 + $0x8e0] sm:$0xff]
    %v10695 = vld [vmem:[#allocation22 + $0x8e8] sm:$0xff]
    %v10696 = vld [vmem:[#allocation22 + $0x8f0] sm:$0xff]
    %v10697 = vld [vmem:[#allocation22 + $0x8f8] sm:$0xff]
    %v10698 = vld [vmem:[#allocation24] sm:$0x3f]
    %v10700 = vlaneseq
    %v10701 = vshrl.u32 %v10700, 7
    %v10702 = vsub.s32 0, %v10701
    %v10703 = vrot.slane %v10698, %v10702
    %v10704 = vlaneseq
    %v10705 = vshrl.u32 %v10704, 7
    %v10706 = vsub.s32 1, %v10705
    %v10707 = vrot.slane %v10698, %v10706
    %v10708 = vlaneseq
    %v10709 = vshrl.u32 %v10708, 7
    %v10710 = vsub.s32 2, %v10709
    %v10711 = vrot.slane %v10698, %v10710
    %v10712 = vlaneseq
    %v10713 = vshrl.u32 %v10712, 7
    %v10714 = vsub.s32 3, %v10713
    %v10715 = vrot.slane %v10698, %v10714
    %v10716 = vlaneseq
    %v10717 = vshrl.u32 %v10716, 7
    %v10718 = vsub.s32 4, %v10717
    %v10719 = vrot.slane %v10698, %v10718
    %v10720 = vlaneseq
    %v10721 = vshrl.u32 %v10720, 7
    %v10722 = vsub.s32 5, %v10721
    %v10723 = vrot.slane %v10698, %v10722
    %v11018 = vunpack.c.l.b16 %v10410
    %v11019 = vunpack.c.h.b16 %v10410
    %v11020 = vunpack.c.l.b16 %v10411
    %v11021 = vunpack.c.h.b16 %v10411
    %v11022 = vunpack.c.l.b16 %v10412
    %v11023 = vunpack.c.h.b16 %v10412
    %v11024 = vunpack.c.l.b16 %v10413
    %v11025 = vunpack.c.h.b16 %v10413
    %v11026 = vunpack.c.l.b16 %v10414
    %v11027 = vunpack.c.h.b16 %v10414
    %v11028 = vunpack.c.l.b16 %v10415
    %v11029 = vunpack.c.h.b16 %v10415
    %v11030 = vunpack.c.l.b16 %v10416
    %v11031 = vunpack.c.h.b16 %v10416
    %v11032 = vunpack.c.l.b16 %v10417
    %v11033 = vunpack.c.h.b16 %v10417
    %v11034 = vunpack.c.l.b16 %v10418
    %v11035 = vunpack.c.h.b16 %v10418
    %v11036 = vunpack.c.l.b16 %v10419
    %v11037 = vunpack.c.h.b16 %v10419
    %v11038 = vunpack.c.l.b16 %v10420
    %v11039 = vunpack.c.h.b16 %v10420
    %v11040 = vunpack.c.l.b16 %v10421
    %v11041 = vunpack.c.h.b16 %v10421
    %v11042 = vunpack.c.l.b16 %v10422
    %v11043 = vunpack.c.h.b16 %v10422
    %v11044 = vunpack.c.l.b16 %v10423
    %v11045 = vunpack.c.h.b16 %v10423
    %v11046 = vunpack.c.l.b16 %v10424
    %v11047 = vunpack.c.h.b16 %v10424
    %v11048 = vunpack.c.l.b16 %v10425
    %v11049 = vunpack.c.h.b16 %v10425
    %v11050 = vunpack.c.l.b16 %v10426
    %v11051 = vunpack.c.h.b16 %v10426
    %v11052 = vunpack.c.l.b16 %v10427
    %v11053 = vunpack.c.h.b16 %v10427
    %v11054 = vunpack.c.l.b16 %v10428
    %v11055 = vunpack.c.h.b16 %v10428
    %v11056 = vunpack.c.l.b16 %v10429
    %v11057 = vunpack.c.h.b16 %v10429
    %v11058 = vunpack.c.l.b16 %v10430
    %v11059 = vunpack.c.h.b16 %v10430
    %v11060 = vunpack.c.l.b16 %v10431
    %v11061 = vunpack.c.h.b16 %v10431
    %v11062 = vunpack.c.l.b16 %v10432
    %v11063 = vunpack.c.h.b16 %v10432
    %v11064 = vunpack.c.l.b16 %v10433
    %v11065 = vunpack.c.h.b16 %v10433
    %v11066 = vunpack.c.l.b16 %v10434
    %v11067 = vunpack.c.h.b16 %v10434
    %v11068 = vunpack.c.l.b16 %v10435
    %v11069 = vunpack.c.h.b16 %v10435
    %v11070 = vunpack.c.l.b16 %v10436
    %v11071 = vunpack.c.h.b16 %v10436
    %v11072 = vunpack.c.l.b16 %v10437
    %v11073 = vunpack.c.h.b16 %v10437
    %v11074 = vunpack.c.l.b16 %v10438
    %v11075 = vunpack.c.h.b16 %v10438
    %v11076 = vunpack.c.l.b16 %v10439
    %v11077 = vunpack.c.h.b16 %v10439
    %v11078 = vunpack.c.l.b16 %v10440
    %v11079 = vunpack.c.h.b16 %v10440
    %v11080 = vunpack.c.l.b16 %v10441
    %v11081 = vunpack.c.h.b16 %v10441
    %v11082 = vunpack.c.l.b16 %v10442
    %v11083 = vunpack.c.h.b16 %v10442
    %v11084 = vunpack.c.l.b16 %v10443
    %v11085 = vunpack.c.h.b16 %v10443
    %v11086 = vunpack.c.l.b16 %v10444
    %v11087 = vunpack.c.h.b16 %v10444
    %v11088 = vunpack.c.l.b16 %v10445
    %v11089 = vunpack.c.h.b16 %v10445
    %v11090 = vunpack.c.l.b16 %v10446
    %v11091 = vunpack.c.h.b16 %v10446
    %v11092 = vunpack.c.l.b16 %v10447
    %v11093 = vunpack.c.h.b16 %v10447
    %v11094 = vunpack.c.l.b16 %v10448
    %v11095 = vunpack.c.h.b16 %v10448
    %v11096 = vunpack.c.l.b16 %v10449
    %v11097 = vunpack.c.h.b16 %v10449
    %v11098 = vunpack.c.l.b16 %v10450
    %v11099 = vunpack.c.h.b16 %v10450
    %v11100 = vunpack.c.l.b16 %v10451
    %v11101 = vunpack.c.h.b16 %v10451
    %v11102 = vunpack.c.l.b16 %v10452
    %v11103 = vunpack.c.h.b16 %v10452
    %v11104 = vunpack.c.l.b16 %v10453
    %v11105 = vunpack.c.h.b16 %v10453
    %v11106 = vunpack.c.l.b16 %v10454
    %v11107 = vunpack.c.h.b16 %v10454
    %v11108 = vunpack.c.l.b16 %v10455
    %v11109 = vunpack.c.h.b16 %v10455
    %v11110 = vunpack.c.l.b16 %v10456
    %v11111 = vunpack.c.h.b16 %v10456
    %v11112 = vunpack.c.l.b16 %v10457
    %v11113 = vunpack.c.h.b16 %v10457
    %v11114 = vunpack.c.l.b16 %v10458
    %v11115 = vunpack.c.h.b16 %v10458
    %v11116 = vunpack.c.l.b16 %v10459
    %v11117 = vunpack.c.h.b16 %v10459
    %v11118 = vunpack.c.l.b16 %v10460
    %v11119 = vunpack.c.h.b16 %v10460
    %v11120 = vunpack.c.l.b16 %v10461
    %v11121 = vunpack.c.h.b16 %v10461
    %v11122 = vunpack.c.l.b16 %v10462
    %v11123 = vunpack.c.h.b16 %v10462
    %v11124 = vunpack.c.l.b16 %v10463
    %v11125 = vunpack.c.h.b16 %v10463
    %v11126 = vunpack.c.l.b16 %v10464
    %v11127 = vunpack.c.h.b16 %v10464
    %v11128 = vunpack.c.l.b16 %v10465
    %v11129 = vunpack.c.h.b16 %v10465
    %v11130 = vunpack.c.l.b16 %v10466
    %v11131 = vunpack.c.h.b16 %v10466
    %v11132 = vunpack.c.l.b16 %v10467
    %v11133 = vunpack.c.h.b16 %v10467
    %v11134 = vunpack.c.l.b16 %v10468
    %v11135 = vunpack.c.h.b16 %v10468
    %v11136 = vunpack.c.l.b16 %v10469
    %v11137 = vunpack.c.h.b16 %v10469
    %v11138 = vunpack.c.l.b16 %v10470
    %v11139 = vunpack.c.h.b16 %v10470
    %v11140 = vunpack.c.l.b16 %v10471
    %v11141 = vunpack.c.h.b16 %v10471
    %v11142 = vunpack.c.l.b16 %v10472
    %v11143 = vunpack.c.h.b16 %v10472
    %v11144 = vunpack.c.l.b16 %v10473
    %v11145 = vunpack.c.h.b16 %v10473
    %v11146 = vunpack.c.l.b16 %v10474
    %v11147 = vunpack.c.h.b16 %v10474
    %v11148 = vunpack.c.l.b16 %v10475
    %v11149 = vunpack.c.h.b16 %v10475
    %v11150 = vunpack.c.l.b16 %v10476
    %v11151 = vunpack.c.h.b16 %v10476
    %v11152 = vunpack.c.l.b16 %v10477
    %v11153 = vunpack.c.h.b16 %v10477
    %v11154 = vunpack.c.l.b16 %v10478
    %v11155 = vunpack.c.h.b16 %v10478
    %v11156 = vunpack.c.l.b16 %v10479
    %v11157 = vunpack.c.h.b16 %v10479
    %v11158 = vunpack.c.l.b16 %v10480
    %v11159 = vunpack.c.h.b16 %v10480
    %v11160 = vunpack.c.l.b16 %v10481
    %v11161 = vunpack.c.h.b16 %v10481
    %v11162 = vunpack.c.l.b16 %v10482
    %v11163 = vunpack.c.h.b16 %v10482
    %v11164 = vunpack.c.l.b16 %v10483
    %v11165 = vunpack.c.h.b16 %v10483
    %v11166 = vunpack.c.l.b16 %v10484
    %v11167 = vunpack.c.h.b16 %v10484
    %v11168 = vunpack.c.l.b16 %v10485
    %v11169 = vunpack.c.h.b16 %v10485
    %v11170 = vunpack.c.l.b16 %v10486
    %v11171 = vunpack.c.h.b16 %v10486
    %v11172 = vunpack.c.l.b16 %v10487
    %v11173 = vunpack.c.h.b16 %v10487
    %v11174 = vunpack.c.l.b16 %v10488
    %v11175 = vunpack.c.h.b16 %v10488
    %v11176 = vunpack.c.l.b16 %v10489
    %v11177 = vunpack.c.h.b16 %v10489
    %v11178 = vunpack.c.l.b16 %v10490
    %v11179 = vunpack.c.h.b16 %v10490
    %v11180 = vunpack.c.l.b16 %v10491
    %v11181 = vunpack.c.h.b16 %v10491
    %v11182 = vunpack.c.l.b16 %v10492
    %v11183 = vunpack.c.h.b16 %v10492
    %v11184 = vunpack.c.l.b16 %v10493
    %v11185 = vunpack.c.h.b16 %v10493
    %v11186 = vunpack.c.l.b16 %v10494
    %v11187 = vunpack.c.h.b16 %v10494
    %v11188 = vunpack.c.l.b16 %v10495
    %v11189 = vunpack.c.h.b16 %v10495
    %v11190 = vunpack.c.l.b16 %v10496
    %v11191 = vunpack.c.h.b16 %v10496
    %v11192 = vunpack.c.l.b16 %v10497
    %v11193 = vunpack.c.h.b16 %v10497
    %v11194 = vunpack.c.l.b16 %v10498
    %v11195 = vunpack.c.h.b16 %v10498
    %v11196 = vunpack.c.l.b16 %v10499
    %v11197 = vunpack.c.h.b16 %v10499
    %v11198 = vunpack.c.l.b16 %v10500
    %v11199 = vunpack.c.h.b16 %v10500
    %v11200 = vunpack.c.l.b16 %v10501
    %v11201 = vunpack.c.h.b16 %v10501
    %v11202 = vunpack.c.l.b16 %v10502
    %v11203 = vunpack.c.h.b16 %v10502
    %v11204 = vunpack.c.l.b16 %v10503
    %v11205 = vunpack.c.h.b16 %v10503
    %v11206 = vunpack.c.l.b16 %v10504
    %v11207 = vunpack.c.h.b16 %v10504
    %v11208 = vunpack.c.l.b16 %v10505
    %v11209 = vunpack.c.h.b16 %v10505
    %v11210 = vunpack.c.l.b16 %v10506
    %v11211 = vunpack.c.h.b16 %v10506
    %v11212 = vunpack.c.l.b16 %v10507
    %v11213 = vunpack.c.h.b16 %v10507
    %v11214 = vunpack.c.l.b16 %v10508
    %v11215 = vunpack.c.h.b16 %v10508
    %v11216 = vunpack.c.l.b16 %v10509
    %v11217 = vunpack.c.h.b16 %v10509
    %v11218 = vunpack.c.l.b16 %v10510
    %v11219 = vunpack.c.h.b16 %v10510
    %v11220 = vunpack.c.l.b16 %v10511
    %v11221 = vunpack.c.h.b16 %v10511
    %v11222 = vunpack.c.l.b16 %v10512
    %v11223 = vunpack.c.h.b16 %v10512
    %v11224 = vunpack.c.l.b16 %v10513
    %v11225 = vunpack.c.h.b16 %v10513
    %v11226 = vunpack.c.l.b16 %v10514
    %v11227 = vunpack.c.h.b16 %v10514
    %v11228 = vunpack.c.l.b16 %v10515
    %v11229 = vunpack.c.h.b16 %v10515
    %v11230 = vunpack.c.l.b16 %v10516
    %v11231 = vunpack.c.h.b16 %v10516
    %v11232 = vunpack.c.l.b16 %v10517
    %v11233 = vunpack.c.h.b16 %v10517
    %v11234 = vunpack.c.l.b16 %v10518
    %v11235 = vunpack.c.h.b16 %v10518
    %v11236 = vunpack.c.l.b16 %v10519
    %v11237 = vunpack.c.h.b16 %v10519
    %v11238 = vunpack.c.l.b16 %v10520
    %v11239 = vunpack.c.h.b16 %v10520
    %v11240 = vunpack.c.l.b16 %v10521
    %v11241 = vunpack.c.h.b16 %v10521
    %v11242 = vunpack.c.l.b16 %v10522
    %v11243 = vunpack.c.h.b16 %v10522
    %v11244 = vunpack.c.l.b16 %v10523
    %v11245 = vunpack.c.h.b16 %v10523
    %v11246 = vunpack.c.l.b16 %v10524
    %v11247 = vunpack.c.h.b16 %v10524
    %v11248 = vunpack.c.l.b16 %v10525
    %v11249 = vunpack.c.h.b16 %v10525
    %v11250 = vunpack.c.l.b16 %v10526
    %v11251 = vunpack.c.h.b16 %v10526
    %v11252 = vunpack.c.l.b16 %v10527
    %v11253 = vunpack.c.h.b16 %v10527
    %v11254 = vunpack.c.l.b16 %v10528
    %v11255 = vunpack.c.h.b16 %v10528
    %v11256 = vunpack.c.l.b16 %v10529
    %v11257 = vunpack.c.h.b16 %v10529
    %v11258 = vunpack.c.l.b16 %v10530
    %v11259 = vunpack.c.h.b16 %v10530
    %v11260 = vunpack.c.l.b16 %v10531
    %v11261 = vunpack.c.h.b16 %v10531
    %v11262 = vunpack.c.l.b16 %v10532
    %v11263 = vunpack.c.h.b16 %v10532
    %v11264 = vunpack.c.l.b16 %v10533
    %v11265 = vunpack.c.h.b16 %v10533
    %v11266 = vunpack.c.l.b16 %v10534
    %v11267 = vunpack.c.h.b16 %v10534
    %v11268 = vunpack.c.l.b16 %v10535
    %v11269 = vunpack.c.h.b16 %v10535
    %v11270 = vunpack.c.l.b16 %v10536
    %v11271 = vunpack.c.h.b16 %v10536
    %v11272 = vunpack.c.l.b16 %v10537
    %v11273 = vunpack.c.h.b16 %v10537
    %v11274 = vunpack.c.l.b16 %v10538
    %v11275 = vunpack.c.h.b16 %v10538
    %v11276 = vunpack.c.l.b16 %v10539
    %v11277 = vunpack.c.h.b16 %v10539
    %v11278 = vunpack.c.l.b16 %v10540
    %v11279 = vunpack.c.h.b16 %v10540
    %v11280 = vunpack.c.l.b16 %v10541
    %v11281 = vunpack.c.h.b16 %v10541
    %v11282 = vunpack.c.l.b16 %v10542
    %v11283 = vunpack.c.h.b16 %v10542
    %v11284 = vunpack.c.l.b16 %v10543
    %v11285 = vunpack.c.h.b16 %v10543
    %v11286 = vunpack.c.l.b16 %v10544
    %v11287 = vunpack.c.h.b16 %v10544
    %v11288 = vunpack.c.l.b16 %v10545
    %v11289 = vunpack.c.h.b16 %v10545
    %v11290 = vunpack.c.l.b16 %v10546
    %v11291 = vunpack.c.h.b16 %v10546
    %v11292 = vunpack.c.l.b16 %v10547
    %v11293 = vunpack.c.h.b16 %v10547
    %v11294 = vunpack.c.l.b16 %v10548
    %v11295 = vunpack.c.h.b16 %v10548
    %v11296 = vunpack.c.l.b16 %v10549
    %v11297 = vunpack.c.h.b16 %v10549
    %v11298 = vunpack.c.l.b16 %v10550
    %v11299 = vunpack.c.h.b16 %v10550
    %v11300 = vunpack.c.l.b16 %v10551
    %v11301 = vunpack.c.h.b16 %v10551
    %v11302 = vunpack.c.l.b16 %v10552
    %v11303 = vunpack.c.h.b16 %v10552
    %v11304 = vunpack.c.l.b16 %v10553
    %v11305 = vunpack.c.h.b16 %v10553
    %v11306 = vunpack.c.l.b16 %v10554
    %v11307 = vunpack.c.h.b16 %v10554
    %v11308 = vunpack.c.l.b16 %v10555
    %v11309 = vunpack.c.h.b16 %v10555
    %v11310 = vunpack.c.l.b16 %v10556
    %v11311 = vunpack.c.h.b16 %v10556
    %v11312 = vunpack.c.l.b16 %v10557
    %v11313 = vunpack.c.h.b16 %v10557
    %v11314 = vunpack.c.l.b16 %v10558
    %v11315 = vunpack.c.h.b16 %v10558
    %v11316 = vunpack.c.l.b16 %v10559
    %v11317 = vunpack.c.h.b16 %v10559
    %v11318 = vunpack.c.l.b16 %v10560
    %v11319 = vunpack.c.h.b16 %v10560
    %v11320 = vunpack.c.l.b16 %v10561
    %v11321 = vunpack.c.h.b16 %v10561
    %v11322 = vunpack.c.l.b16 %v10562
    %v11323 = vunpack.c.h.b16 %v10562
    %v11324 = vunpack.c.l.b16 %v10563
    %v11325 = vunpack.c.h.b16 %v10563
    %v11326 = vunpack.c.l.b16 %v10564
    %v11327 = vunpack.c.h.b16 %v10564
    %v11328 = vunpack.c.l.b16 %v10565
    %v11329 = vunpack.c.h.b16 %v10565
    %v11330 = vunpack.c.l.b16 %v10566
    %v11331 = vunpack.c.h.b16 %v10566
    %v11332 = vunpack.c.l.b16 %v10567
    %v11333 = vunpack.c.h.b16 %v10567
    %v11334 = vunpack.c.l.b16 %v10568
    %v11335 = vunpack.c.h.b16 %v10568
    %v11336 = vunpack.c.l.b16 %v10569
    %v11337 = vunpack.c.h.b16 %v10569
    %v11338 = vunpack.c.l.b16 %v10570
    %v11339 = vunpack.c.h.b16 %v10570
    %v11340 = vunpack.c.l.b16 %v10571
    %v11341 = vunpack.c.h.b16 %v10571
    %v11342 = vunpack.c.l.b16 %v10572
    %v11343 = vunpack.c.h.b16 %v10572
    %v11344 = vunpack.c.l.b16 %v10573
    %v11345 = vunpack.c.h.b16 %v10573
    %v11346 = vunpack.c.l.b16 %v10574
    %v11347 = vunpack.c.h.b16 %v10574
    %v11348 = vunpack.c.l.b16 %v10575
    %v11349 = vunpack.c.h.b16 %v10575
    %v11350 = vunpack.c.l.b16 %v10576
    %v11351 = vunpack.c.h.b16 %v10576
    %v11352 = vunpack.c.l.b16 %v10577
    %v11353 = vunpack.c.h.b16 %v10577
    %v11354 = vunpack.c.l.b16 %v10578
    %v11355 = vunpack.c.h.b16 %v10578
    %v11356 = vunpack.c.l.b16 %v10579
    %v11357 = vunpack.c.h.b16 %v10579
    %v11358 = vunpack.c.l.b16 %v10580
    %v11359 = vunpack.c.h.b16 %v10580
    %v11360 = vunpack.c.l.b16 %v10581
    %v11361 = vunpack.c.h.b16 %v10581
    %v11362 = vunpack.c.l.b16 %v10582
    %v11363 = vunpack.c.h.b16 %v10582
    %v11364 = vunpack.c.l.b16 %v10583
    %v11365 = vunpack.c.h.b16 %v10583
    %v11366 = vunpack.c.l.b16 %v10584
    %v11367 = vunpack.c.h.b16 %v10584
    %v11368 = vunpack.c.l.b16 %v10585
    %v11369 = vunpack.c.h.b16 %v10585
    %v11370 = vunpack.c.l.b16 %v10586
    %v11371 = vunpack.c.h.b16 %v10586
    %v11372 = vunpack.c.l.b16 %v10587
    %v11373 = vunpack.c.h.b16 %v10587
    %v11374 = vunpack.c.l.b16 %v10588
    %v11375 = vunpack.c.h.b16 %v10588
    %v11376 = vunpack.c.l.b16 %v10589
    %v11377 = vunpack.c.h.b16 %v10589
    %v11378 = vunpack.c.l.b16 %v10590
    %v11379 = vunpack.c.h.b16 %v10590
    %v11380 = vunpack.c.l.b16 %v10591
    %v11381 = vunpack.c.h.b16 %v10591
    %v11382 = vunpack.c.l.b16 %v10592
    %v11383 = vunpack.c.h.b16 %v10592
    %v11384 = vunpack.c.l.b16 %v10593
    %v11385 = vunpack.c.h.b16 %v10593
    %v11386 = vunpack.c.l.b16 %v10594
    %v11387 = vunpack.c.h.b16 %v10594
    %v11388 = vunpack.c.l.b16 %v10595
    %v11389 = vunpack.c.h.b16 %v10595
    %v11390 = vunpack.c.l.b16 %v10596
    %v11391 = vunpack.c.h.b16 %v10596
    %v11392 = vunpack.c.l.b16 %v10597
    %v11393 = vunpack.c.h.b16 %v10597
    %v11394 = vunpack.c.l.b16 %v10598
    %v11395 = vunpack.c.h.b16 %v10598
    %v11396 = vunpack.c.l.b16 %v10599
    %v11397 = vunpack.c.h.b16 %v10599
    %v11398 = vunpack.c.l.b16 %v10600
    %v11399 = vunpack.c.h.b16 %v10600
    %v11400 = vunpack.c.l.b16 %v10601
    %v11401 = vunpack.c.h.b16 %v10601
    %v11402 = vunpack.c.l.b16 %v10602
    %v11403 = vunpack.c.h.b16 %v10602
    %v11404 = vunpack.c.l.b16 %v10603
    %v11405 = vunpack.c.h.b16 %v10603
    %v11406 = vunpack.c.l.b16 %v10604
    %v11407 = vunpack.c.h.b16 %v10604
    %v11408 = vunpack.c.l.b16 %v10605
    %v11409 = vunpack.c.h.b16 %v10605
    %v11410 = vunpack.c.l.b16 %v10606
    %v11411 = vunpack.c.h.b16 %v10606
    %v11412 = vunpack.c.l.b16 %v10607
    %v11413 = vunpack.c.h.b16 %v10607
    %v11414 = vunpack.c.l.b16 %v10608
    %v11415 = vunpack.c.h.b16 %v10608
    %v11416 = vunpack.c.l.b16 %v10609
    %v11417 = vunpack.c.h.b16 %v10609
    %v11418 = vunpack.c.l.b16 %v10610
    %v11419 = vunpack.c.h.b16 %v10610
    %v11420 = vunpack.c.l.b16 %v10611
    %v11421 = vunpack.c.h.b16 %v10611
    %v11422 = vunpack.c.l.b16 %v10612
    %v11423 = vunpack.c.h.b16 %v10612
    %v11424 = vunpack.c.l.b16 %v10613
    %v11425 = vunpack.c.h.b16 %v10613
    %v11426 = vunpack.c.l.b16 %v10614
    %v11427 = vunpack.c.h.b16 %v10614
    %v11428 = vunpack.c.l.b16 %v10615
    %v11429 = vunpack.c.h.b16 %v10615
    %v11430 = vunpack.c.l.b16 %v10616
    %v11431 = vunpack.c.h.b16 %v10616
    %v11432 = vunpack.c.l.b16 %v10617
    %v11433 = vunpack.c.h.b16 %v10617
    %v11434 = vunpack.c.l.b16 %v10618
    %v11435 = vunpack.c.h.b16 %v10618
    %v11436 = vunpack.c.l.b16 %v10619
    %v11437 = vunpack.c.h.b16 %v10619
    %v11438 = vunpack.c.l.b16 %v10620
    %v11439 = vunpack.c.h.b16 %v10620
    %v11440 = vunpack.c.l.b16 %v10621
    %v11441 = vunpack.c.h.b16 %v10621
    %v11442 = vunpack.c.l.b16 %v10622
    %v11443 = vunpack.c.h.b16 %v10622
    %v11444 = vunpack.c.l.b16 %v10623
    %v11445 = vunpack.c.h.b16 %v10623
    %v11446 = vunpack.c.l.b16 %v10624
    %v11447 = vunpack.c.h.b16 %v10624
    %v11448 = vunpack.c.l.b16 %v10625
    %v11449 = vunpack.c.h.b16 %v10625
    %v11450 = vunpack.c.l.b16 %v10626
    %v11451 = vunpack.c.h.b16 %v10626
    %v11452 = vunpack.c.l.b16 %v10627
    %v11453 = vunpack.c.h.b16 %v10627
    %v11454 = vunpack.c.l.b16 %v10628
    %v11455 = vunpack.c.h.b16 %v10628
    %v11456 = vunpack.c.l.b16 %v10629
    %v11457 = vunpack.c.h.b16 %v10629
    %v11458 = vunpack.c.l.b16 %v10630
    %v11459 = vunpack.c.h.b16 %v10630
    %v11460 = vunpack.c.l.b16 %v10631
    %v11461 = vunpack.c.h.b16 %v10631
    %v11462 = vunpack.c.l.b16 %v10632
    %v11463 = vunpack.c.h.b16 %v10632
    %v11464 = vunpack.c.l.b16 %v10633
    %v11465 = vunpack.c.h.b16 %v10633
    %v11466 = vunpack.c.l.b16 %v10634
    %v11467 = vunpack.c.h.b16 %v10634
    %v11468 = vunpack.c.l.b16 %v10635
    %v11469 = vunpack.c.h.b16 %v10635
    %v11470 = vunpack.c.l.b16 %v10636
    %v11471 = vunpack.c.h.b16 %v10636
    %v11472 = vunpack.c.l.b16 %v10637
    %v11473 = vunpack.c.h.b16 %v10637
    %v11474 = vunpack.c.l.b16 %v10638
    %v11475 = vunpack.c.h.b16 %v10638
    %v11476 = vunpack.c.l.b16 %v10639
    %v11477 = vunpack.c.h.b16 %v10639
    %v11478 = vunpack.c.l.b16 %v10640
    %v11479 = vunpack.c.h.b16 %v10640
    %v11480 = vunpack.c.l.b16 %v10641
    %v11481 = vunpack.c.h.b16 %v10641
    %v11482 = vunpack.c.l.b16 %v10642
    %v11483 = vunpack.c.h.b16 %v10642
    %v11484 = vunpack.c.l.b16 %v10643
    %v11485 = vunpack.c.h.b16 %v10643
    %v11486 = vunpack.c.l.b16 %v10644
    %v11487 = vunpack.c.h.b16 %v10644
    %v11488 = vunpack.c.l.b16 %v10645
    %v11489 = vunpack.c.h.b16 %v10645
    %v11490 = vunpack.c.l.b16 %v10646
    %v11491 = vunpack.c.h.b16 %v10646
    %v11492 = vunpack.c.l.b16 %v10647
    %v11493 = vunpack.c.h.b16 %v10647
    %v11494 = vunpack.c.l.b16 %v10648
    %v11495 = vunpack.c.h.b16 %v10648
    %v11496 = vunpack.c.l.b16 %v10649
    %v11497 = vunpack.c.h.b16 %v10649
    %v11498 = vunpack.c.l.b16 %v10650
    %v11499 = vunpack.c.h.b16 %v10650
    %v11500 = vunpack.c.l.b16 %v10651
    %v11501 = vunpack.c.h.b16 %v10651
    %v11502 = vunpack.c.l.b16 %v10652
    %v11503 = vunpack.c.h.b16 %v10652
    %v11504 = vunpack.c.l.b16 %v10653
    %v11505 = vunpack.c.h.b16 %v10653
    %v11506 = vunpack.c.l.b16 %v10654
    %v11507 = vunpack.c.h.b16 %v10654
    %v11508 = vunpack.c.l.b16 %v10655
    %v11509 = vunpack.c.h.b16 %v10655
    %v11510 = vunpack.c.l.b16 %v10656
    %v11511 = vunpack.c.h.b16 %v10656
    %v11512 = vunpack.c.l.b16 %v10657
    %v11513 = vunpack.c.h.b16 %v10657
    %v11514 = vunpack.c.l.b16 %v10658
    %v11515 = vunpack.c.h.b16 %v10658
    %v11516 = vunpack.c.l.b16 %v10659
    %v11517 = vunpack.c.h.b16 %v10659
    %v11518 = vunpack.c.l.b16 %v10660
    %v11519 = vunpack.c.h.b16 %v10660
    %v11520 = vunpack.c.l.b16 %v10661
    %v11521 = vunpack.c.h.b16 %v10661
    %v11522 = vunpack.c.l.b16 %v10662
    %v11523 = vunpack.c.h.b16 %v10662
    %v11524 = vunpack.c.l.b16 %v10663
    %v11525 = vunpack.c.h.b16 %v10663
    %v11526 = vunpack.c.l.b16 %v10664
    %v11527 = vunpack.c.h.b16 %v10664
    %v11528 = vunpack.c.l.b16 %v10665
    %v11529 = vunpack.c.h.b16 %v10665
    %v11530 = vunpack.c.l.b16 %v10666
    %v11531 = vunpack.c.h.b16 %v10666
    %v11532 = vunpack.c.l.b16 %v10667
    %v11533 = vunpack.c.h.b16 %v10667
    %v11534 = vunpack.c.l.b16 %v10668
    %v11535 = vunpack.c.h.b16 %v10668
    %v11536 = vunpack.c.l.b16 %v10669
    %v11537 = vunpack.c.h.b16 %v10669
    %v11538 = vunpack.c.l.b16 %v10670
    %v11539 = vunpack.c.h.b16 %v10670
    %v11540 = vunpack.c.l.b16 %v10671
    %v11541 = vunpack.c.h.b16 %v10671
    %v11542 = vunpack.c.l.b16 %v10672
    %v11543 = vunpack.c.h.b16 %v10672
    %v11544 = vunpack.c.l.b16 %v10673
    %v11545 = vunpack.c.h.b16 %v10673
    %v11546 = vunpack.c.l.b16 %v10674
    %v11547 = vunpack.c.h.b16 %v10674
    %v11548 = vunpack.c.l.b16 %v10675
    %v11549 = vunpack.c.h.b16 %v10675
    %v11550 = vunpack.c.l.b16 %v10676
    %v11551 = vunpack.c.h.b16 %v10676
    %v11552 = vunpack.c.l.b16 %v10677
    %v11553 = vunpack.c.h.b16 %v10677
    %v11554 = vunpack.c.l.b16 %v10678
    %v11555 = vunpack.c.h.b16 %v10678
    %v11556 = vunpack.c.l.b16 %v10679
    %v11557 = vunpack.c.h.b16 %v10679
    %v11558 = vunpack.c.l.b16 %v10680
    %v11559 = vunpack.c.h.b16 %v10680
    %v11560 = vunpack.c.l.b16 %v10681
    %v11561 = vunpack.c.h.b16 %v10681
    %v11562 = vunpack.c.l.b16 %v10682
    %v11563 = vunpack.c.h.b16 %v10682
    %v11564 = vunpack.c.l.b16 %v10683
    %v11565 = vunpack.c.h.b16 %v10683
    %v11566 = vunpack.c.l.b16 %v10684
    %v11567 = vunpack.c.h.b16 %v10684
    %v11568 = vunpack.c.l.b16 %v10685
    %v11569 = vunpack.c.h.b16 %v10685
    %v11570 = vunpack.c.l.b16 %v10686
    %v11571 = vunpack.c.h.b16 %v10686
    %v11572 = vunpack.c.l.b16 %v10687
    %v11573 = vunpack.c.h.b16 %v10687
    %v11574 = vunpack.c.l.b16 %v10688
    %v11575 = vunpack.c.h.b16 %v10688
    %v11576 = vunpack.c.l.b16 %v10689
    %v11577 = vunpack.c.h.b16 %v10689
    %v11578 = vunpack.c.l.b16 %v10690
    %v11579 = vunpack.c.h.b16 %v10690
    %v11580 = vunpack.c.l.b16 %v10691
    %v11581 = vunpack.c.h.b16 %v10691
    %v11582 = vunpack.c.l.b16 %v10692
    %v11583 = vunpack.c.h.b16 %v10692
    %v11584 = vunpack.c.l.b16 %v10693
    %v11585 = vunpack.c.h.b16 %v10693
    %v11586 = vunpack.c.l.b16 %v10694
    %v11587 = vunpack.c.h.b16 %v10694
    %v11588 = vunpack.c.l.b16 %v10695
    %v11589 = vunpack.c.h.b16 %v10695
    %v11590 = vunpack.c.l.b16 %v10696
    %v11591 = vunpack.c.h.b16 %v10696
    %v11592 = vunpack.c.l.b16 %v10697
    %v11593 = vunpack.c.h.b16 %v10697
    %v11594 = vpack.c.b16 %v11024, %v11018
    %v11595 = vpack.c.b16 %v11025, %v11019
    %v11596 = vpack.c.b16 %v11026, %v11020
    %v11597 = vpack.c.b16 %v11027, %v11021
    %v11598 = vpack.c.b16 %v11028, %v11022
    %v11599 = vpack.c.b16 %v11029, %v11023
    %v11600 = vpack.c.b16 %v11036, %v11030
    %v11601 = vpack.c.b16 %v11037, %v11031
    %v11602 = vpack.c.b16 %v11038, %v11032
    %v11603 = vpack.c.b16 %v11039, %v11033
    %v11604 = vpack.c.b16 %v11040, %v11034
    %v11605 = vpack.c.b16 %v11041, %v11035
    %v11606 = vpack.c.b16 %v11048, %v11042
    %v11607 = vpack.c.b16 %v11049, %v11043
    %v11608 = vpack.c.b16 %v11050, %v11044
    %v11609 = vpack.c.b16 %v11051, %v11045
    %v11610 = vpack.c.b16 %v11052, %v11046
    %v11611 = vpack.c.b16 %v11053, %v11047
    %v11612 = vpack.c.b16 %v11060, %v11054
    %v11613 = vpack.c.b16 %v11061, %v11055
    %v11614 = vpack.c.b16 %v11062, %v11056
    %v11615 = vpack.c.b16 %v11063, %v11057
    %v11616 = vpack.c.b16 %v11064, %v11058
    %v11617 = vpack.c.b16 %v11065, %v11059
    %v11618 = vpack.c.b16 %v11072, %v11066
    %v11619 = vpack.c.b16 %v11073, %v11067
    %v11620 = vpack.c.b16 %v11074, %v11068
    %v11621 = vpack.c.b16 %v11075, %v11069
    %v11622 = vpack.c.b16 %v11076, %v11070
    %v11623 = vpack.c.b16 %v11077, %v11071
    %v11624 = vpack.c.b16 %v11084, %v11078
    %v11625 = vpack.c.b16 %v11085, %v11079
    %v11626 = vpack.c.b16 %v11086, %v11080
    %v11627 = vpack.c.b16 %v11087, %v11081
    %v11628 = vpack.c.b16 %v11088, %v11082
    %v11629 = vpack.c.b16 %v11089, %v11083
    %v11630 = vpack.c.b16 %v11096, %v11090
    %v11631 = vpack.c.b16 %v11097, %v11091
    %v11632 = vpack.c.b16 %v11098, %v11092
    %v11633 = vpack.c.b16 %v11099, %v11093
    %v11634 = vpack.c.b16 %v11100, %v11094
    %v11635 = vpack.c.b16 %v11101, %v11095
    %v11636 = vpack.c.b16 %v11108, %v11102
    %v11637 = vpack.c.b16 %v11109, %v11103
    %v11638 = vpack.c.b16 %v11110, %v11104
    %v11639 = vpack.c.b16 %v11111, %v11105
    %v11640 = vpack.c.b16 %v11112, %v11106
    %v11641 = vpack.c.b16 %v11113, %v11107
    %v11642 = vpack.c.b16 %v11120, %v11114
    %v11643 = vpack.c.b16 %v11121, %v11115
    %v11644 = vpack.c.b16 %v11122, %v11116
    %v11645 = vpack.c.b16 %v11123, %v11117
    %v11646 = vpack.c.b16 %v11124, %v11118
    %v11647 = vpack.c.b16 %v11125, %v11119
    %v11648 = vpack.c.b16 %v11132, %v11126
    %v11649 = vpack.c.b16 %v11133, %v11127
    %v11650 = vpack.c.b16 %v11134, %v11128
    %v11651 = vpack.c.b16 %v11135, %v11129
    %v11652 = vpack.c.b16 %v11136, %v11130
    %v11653 = vpack.c.b16 %v11137, %v11131
    %v11654 = vpack.c.b16 %v11144, %v11138
    %v11655 = vpack.c.b16 %v11145, %v11139
    %v11656 = vpack.c.b16 %v11146, %v11140
    %v11657 = vpack.c.b16 %v11147, %v11141
    %v11658 = vpack.c.b16 %v11148, %v11142
    %v11659 = vpack.c.b16 %v11149, %v11143
    %v11660 = vpack.c.b16 %v11156, %v11150
    %v11661 = vpack.c.b16 %v11157, %v11151
    %v11662 = vpack.c.b16 %v11158, %v11152
    %v11663 = vpack.c.b16 %v11159, %v11153
    %v11664 = vpack.c.b16 %v11160, %v11154
    %v11665 = vpack.c.b16 %v11161, %v11155
    %v11666 = vpack.c.b16 %v11168, %v11162
    %v11667 = vpack.c.b16 %v11169, %v11163
    %v11668 = vpack.c.b16 %v11170, %v11164
    %v11669 = vpack.c.b16 %v11171, %v11165
    %v11670 = vpack.c.b16 %v11172, %v11166
    %v11671 = vpack.c.b16 %v11173, %v11167
    %v11672 = vpack.c.b16 %v11180, %v11174
    %v11673 = vpack.c.b16 %v11181, %v11175
    %v11674 = vpack.c.b16 %v11182, %v11176
    %v11675 = vpack.c.b16 %v11183, %v11177
    %v11676 = vpack.c.b16 %v11184, %v11178
    %v11677 = vpack.c.b16 %v11185, %v11179
    %v11678 = vpack.c.b16 %v11192, %v11186
    %v11679 = vpack.c.b16 %v11193, %v11187
    %v11680 = vpack.c.b16 %v11194, %v11188
    %v11681 = vpack.c.b16 %v11195, %v11189
    %v11682 = vpack.c.b16 %v11196, %v11190
    %v11683 = vpack.c.b16 %v11197, %v11191
    %v11684 = vpack.c.b16 %v11204, %v11198
    %v11685 = vpack.c.b16 %v11205, %v11199
    %v11686 = vpack.c.b16 %v11206, %v11200
    %v11687 = vpack.c.b16 %v11207, %v11201
    %v11688 = vpack.c.b16 %v11208, %v11202
    %v11689 = vpack.c.b16 %v11209, %v11203
    %v11690 = vpack.c.b16 %v11216, %v11210
    %v11691 = vpack.c.b16 %v11217, %v11211
    %v11692 = vpack.c.b16 %v11218, %v11212
    %v11693 = vpack.c.b16 %v11219, %v11213
    %v11694 = vpack.c.b16 %v11220, %v11214
    %v11695 = vpack.c.b16 %v11221, %v11215
    %v11696 = vpack.c.b16 %v11228, %v11222
    %v11697 = vpack.c.b16 %v11229, %v11223
    %v11698 = vpack.c.b16 %v11230, %v11224
    %v11699 = vpack.c.b16 %v11231, %v11225
    %v11700 = vpack.c.b16 %v11232, %v11226
    %v11701 = vpack.c.b16 %v11233, %v11227
    %v11702 = vpack.c.b16 %v11240, %v11234
    %v11703 = vpack.c.b16 %v11241, %v11235
    %v11704 = vpack.c.b16 %v11242, %v11236
    %v11705 = vpack.c.b16 %v11243, %v11237
    %v11706 = vpack.c.b16 %v11244, %v11238
    %v11707 = vpack.c.b16 %v11245, %v11239
    %v11708 = vpack.c.b16 %v11252, %v11246
    %v11709 = vpack.c.b16 %v11253, %v11247
    %v11710 = vpack.c.b16 %v11254, %v11248
    %v11711 = vpack.c.b16 %v11255, %v11249
    %v11712 = vpack.c.b16 %v11256, %v11250
    %v11713 = vpack.c.b16 %v11257, %v11251
    %v11714 = vpack.c.b16 %v11264, %v11258
    %v11715 = vpack.c.b16 %v11265, %v11259
    %v11716 = vpack.c.b16 %v11266, %v11260
    %v11717 = vpack.c.b16 %v11267, %v11261
    %v11718 = vpack.c.b16 %v11268, %v11262
    %v11719 = vpack.c.b16 %v11269, %v11263
    %v11720 = vpack.c.b16 %v11276, %v11270
    %v11721 = vpack.c.b16 %v11277, %v11271
    %v11722 = vpack.c.b16 %v11278, %v11272
    %v11723 = vpack.c.b16 %v11279, %v11273
    %v11724 = vpack.c.b16 %v11280, %v11274
    %v11725 = vpack.c.b16 %v11281, %v11275
    %v11726 = vpack.c.b16 %v11288, %v11282
    %v11727 = vpack.c.b16 %v11289, %v11283
    %v11728 = vpack.c.b16 %v11290, %v11284
    %v11729 = vpack.c.b16 %v11291, %v11285
    %v11730 = vpack.c.b16 %v11292, %v11286
    %v11731 = vpack.c.b16 %v11293, %v11287
    %v11732 = vpack.c.b16 %v11300, %v11294
    %v11733 = vpack.c.b16 %v11301, %v11295
    %v11734 = vpack.c.b16 %v11302, %v11296
    %v11735 = vpack.c.b16 %v11303, %v11297
    %v11736 = vpack.c.b16 %v11304, %v11298
    %v11737 = vpack.c.b16 %v11305, %v11299
    %v11738 = vpack.c.b16 %v11312, %v11306
    %v11739 = vpack.c.b16 %v11313, %v11307
    %v11740 = vpack.c.b16 %v11314, %v11308
    %v11741 = vpack.c.b16 %v11315, %v11309
    %v11742 = vpack.c.b16 %v11316, %v11310
    %v11743 = vpack.c.b16 %v11317, %v11311
    %v11744 = vpack.c.b16 %v11324, %v11318
    %v11745 = vpack.c.b16 %v11325, %v11319
    %v11746 = vpack.c.b16 %v11326, %v11320
    %v11747 = vpack.c.b16 %v11327, %v11321
    %v11748 = vpack.c.b16 %v11328, %v11322
    %v11749 = vpack.c.b16 %v11329, %v11323
    %v11750 = vpack.c.b16 %v11336, %v11330
    %v11751 = vpack.c.b16 %v11337, %v11331
    %v11752 = vpack.c.b16 %v11338, %v11332
    %v11753 = vpack.c.b16 %v11339, %v11333
    %v11754 = vpack.c.b16 %v11340, %v11334
    %v11755 = vpack.c.b16 %v11341, %v11335
    %v11756 = vpack.c.b16 %v11348, %v11342
    %v11757 = vpack.c.b16 %v11349, %v11343
    %v11758 = vpack.c.b16 %v11350, %v11344
    %v11759 = vpack.c.b16 %v11351, %v11345
    %v11760 = vpack.c.b16 %v11352, %v11346
    %v11761 = vpack.c.b16 %v11353, %v11347
    %v11762 = vpack.c.b16 %v11360, %v11354
    %v11763 = vpack.c.b16 %v11361, %v11355
    %v11764 = vpack.c.b16 %v11362, %v11356
    %v11765 = vpack.c.b16 %v11363, %v11357
    %v11766 = vpack.c.b16 %v11364, %v11358
    %v11767 = vpack.c.b16 %v11365, %v11359
    %v11768 = vpack.c.b16 %v11372, %v11366
    %v11769 = vpack.c.b16 %v11373, %v11367
    %v11770 = vpack.c.b16 %v11374, %v11368
    %v11771 = vpack.c.b16 %v11375, %v11369
    %v11772 = vpack.c.b16 %v11376, %v11370
    %v11773 = vpack.c.b16 %v11377, %v11371
    %v11774 = vpack.c.b16 %v11384, %v11378
    %v11775 = vpack.c.b16 %v11385, %v11379
    %v11776 = vpack.c.b16 %v11386, %v11380
    %v11777 = vpack.c.b16 %v11387, %v11381
    %v11778 = vpack.c.b16 %v11388, %v11382
    %v11779 = vpack.c.b16 %v11389, %v11383
    %v11780 = vpack.c.b16 %v11396, %v11390
    %v11781 = vpack.c.b16 %v11397, %v11391
    %v11782 = vpack.c.b16 %v11398, %v11392
    %v11783 = vpack.c.b16 %v11399, %v11393
    %v11784 = vpack.c.b16 %v11400, %v11394
    %v11785 = vpack.c.b16 %v11401, %v11395
    %v11786 = vpack.c.b16 %v11408, %v11402
    %v11787 = vpack.c.b16 %v11409, %v11403
    %v11788 = vpack.c.b16 %v11410, %v11404
    %v11789 = vpack.c.b16 %v11411, %v11405
    %v11790 = vpack.c.b16 %v11412, %v11406
    %v11791 = vpack.c.b16 %v11413, %v11407
    %v11792 = vpack.c.b16 %v11420, %v11414
    %v11793 = vpack.c.b16 %v11421, %v11415
    %v11794 = vpack.c.b16 %v11422, %v11416
    %v11795 = vpack.c.b16 %v11423, %v11417
    %v11796 = vpack.c.b16 %v11424, %v11418
    %v11797 = vpack.c.b16 %v11425, %v11419
    %v11798 = vpack.c.b16 %v11432, %v11426
    %v11799 = vpack.c.b16 %v11433, %v11427
    %v11800 = vpack.c.b16 %v11434, %v11428
    %v11801 = vpack.c.b16 %v11435, %v11429
    %v11802 = vpack.c.b16 %v11436, %v11430
    %v11803 = vpack.c.b16 %v11437, %v11431
    %v11804 = vpack.c.b16 %v11444, %v11438
    %v11805 = vpack.c.b16 %v11445, %v11439
    %v11806 = vpack.c.b16 %v11446, %v11440
    %v11807 = vpack.c.b16 %v11447, %v11441
    %v11808 = vpack.c.b16 %v11448, %v11442
    %v11809 = vpack.c.b16 %v11449, %v11443
    %v11810 = vpack.c.b16 %v11456, %v11450
    %v11811 = vpack.c.b16 %v11457, %v11451
    %v11812 = vpack.c.b16 %v11458, %v11452
    %v11813 = vpack.c.b16 %v11459, %v11453
    %v11814 = vpack.c.b16 %v11460, %v11454
    %v11815 = vpack.c.b16 %v11461, %v11455
    %v11816 = vpack.c.b16 %v11468, %v11462
    %v11817 = vpack.c.b16 %v11469, %v11463
    %v11818 = vpack.c.b16 %v11470, %v11464
    %v11819 = vpack.c.b16 %v11471, %v11465
    %v11820 = vpack.c.b16 %v11472, %v11466
    %v11821 = vpack.c.b16 %v11473, %v11467
    %v11822 = vpack.c.b16 %v11480, %v11474
    %v11823 = vpack.c.b16 %v11481, %v11475
    %v11824 = vpack.c.b16 %v11482, %v11476
    %v11825 = vpack.c.b16 %v11483, %v11477
    %v11826 = vpack.c.b16 %v11484, %v11478
    %v11827 = vpack.c.b16 %v11485, %v11479
    %v11828 = vpack.c.b16 %v11492, %v11486
    %v11829 = vpack.c.b16 %v11493, %v11487
    %v11830 = vpack.c.b16 %v11494, %v11488
    %v11831 = vpack.c.b16 %v11495, %v11489
    %v11832 = vpack.c.b16 %v11496, %v11490
    %v11833 = vpack.c.b16 %v11497, %v11491
    %v11834 = vpack.c.b16 %v11504, %v11498
    %v11835 = vpack.c.b16 %v11505, %v11499
    %v11836 = vpack.c.b16 %v11506, %v11500
    %v11837 = vpack.c.b16 %v11507, %v11501
    %v11838 = vpack.c.b16 %v11508, %v11502
    %v11839 = vpack.c.b16 %v11509, %v11503
    %v11840 = vpack.c.b16 %v11516, %v11510
    %v11841 = vpack.c.b16 %v11517, %v11511
    %v11842 = vpack.c.b16 %v11518, %v11512
    %v11843 = vpack.c.b16 %v11519, %v11513
    %v11844 = vpack.c.b16 %v11520, %v11514
    %v11845 = vpack.c.b16 %v11521, %v11515
    %v11846 = vpack.c.b16 %v11528, %v11522
    %v11847 = vpack.c.b16 %v11529, %v11523
    %v11848 = vpack.c.b16 %v11530, %v11524
    %v11849 = vpack.c.b16 %v11531, %v11525
    %v11850 = vpack.c.b16 %v11532, %v11526
    %v11851 = vpack.c.b16 %v11533, %v11527
    %v11852 = vpack.c.b16 %v11540, %v11534
    %v11853 = vpack.c.b16 %v11541, %v11535
    %v11854 = vpack.c.b16 %v11542, %v11536
    %v11855 = vpack.c.b16 %v11543, %v11537
    %v11856 = vpack.c.b16 %v11544, %v11538
    %v11857 = vpack.c.b16 %v11545, %v11539
    %v11858 = vpack.c.b16 %v11552, %v11546
    %v11859 = vpack.c.b16 %v11553, %v11547
    %v11860 = vpack.c.b16 %v11554, %v11548
    %v11861 = vpack.c.b16 %v11555, %v11549
    %v11862 = vpack.c.b16 %v11556, %v11550
    %v11863 = vpack.c.b16 %v11557, %v11551
    %v11864 = vpack.c.b16 %v11564, %v11558
    %v11865 = vpack.c.b16 %v11565, %v11559
    %v11866 = vpack.c.b16 %v11566, %v11560
    %v11867 = vpack.c.b16 %v11567, %v11561
    %v11868 = vpack.c.b16 %v11568, %v11562
    %v11869 = vpack.c.b16 %v11569, %v11563
    %v11870 = vpack.c.b16 %v11576, %v11570
    %v11871 = vpack.c.b16 %v11577, %v11571
    %v11872 = vpack.c.b16 %v11578, %v11572
    %v11873 = vpack.c.b16 %v11579, %v11573
    %v11874 = vpack.c.b16 %v11580, %v11574
    %v11875 = vpack.c.b16 %v11581, %v11575
    %v11876 = vpack.c.b16 %v11588, %v11582
    %v11877 = vpack.c.b16 %v11589, %v11583
    %v11878 = vpack.c.b16 %v11590, %v11584
    %v11879 = vpack.c.b16 %v11591, %v11585
    %v11880 = vpack.c.b16 %v11592, %v11586
    %v11881 = vpack.c.b16 %v11593, %v11587
    %12170 = vmatprep.subr.bf16.mxu0 %v11595
    %12171 = vmatpush1.bf16.msra.mxu0 %v11594
    %12172 = vmatprep.subr.bf16.mxu0 %v11601
    %12173 = vmatpush1.bf16.msra.mxu0 %v11600
    %12174 = vmatprep.subr.bf16.mxu0 %v11607
    %12175 = vmatpush1.bf16.msra.mxu0 %v11606
    %12176 = vmatprep.subr.bf16.mxu0 %v11613
    %12177 = vmatpush1.bf16.msra.mxu0 %v11612
    %12178 = vmatprep.subr.bf16.mxu0 %v11619
    %12179 = vmatpush1.bf16.msra.mxu0 %v11618
    %12180 = vmatprep.subr.bf16.mxu0 %v11625
    %12181 = vmatpush1.bf16.msra.mxu0 %v11624
    %12182 = vmatprep.subr.bf16.mxu0 %v11631
    %12183 = vmatpush1.bf16.msra.mxu0 %v11630
    %12184 = vmatprep.subr.bf16.mxu0 %v11637
    %12185 = vmatpush1.bf16.msra.mxu0 %v11636
    %12186 = vmatprep.subr.bf16.mxu0 %v11643
    %12187 = vmatpush1.bf16.msra.mxu0 %v11642
    %12188 = vmatprep.subr.bf16.mxu0 %v11649
    %12189 = vmatpush1.bf16.msra.mxu0 %v11648
    %12190 = vmatprep.subr.bf16.mxu0 %v11655
    %12191 = vmatpush1.bf16.msra.mxu0 %v11654
    %12192 = vmatprep.subr.bf16.mxu0 %v11661
    %12193 = vmatpush1.bf16.msra.mxu0 %v11660
    %12194 = vmatprep.subr.bf16.mxu0 %v11667
    %12195 = vmatpush1.bf16.msra.mxu0 %v11666
    %12196 = vmatprep.subr.bf16.mxu0 %v11673
    %12197 = vmatpush1.bf16.msra.mxu0 %v11672
    %12198 = vmatprep.subr.bf16.mxu0 %v11679
    %12199 = vmatpush1.bf16.msra.mxu0 %v11678
    %12200 = vmatprep.subr.bf16.mxu0 %v11685
    %12201 = vmatpush1.bf16.msra.mxu0 %v11684
    %12202 = vmatprep.mubr.bf16.mxu0 %v10405
    %12203 = vmatmul.mubr.bf16.gmra.mrb[0].mxu0 %v10404
    %v12204 = vpop.f32.mrb[0].mxu0
    %v12205 = vadd.f32 %v10703, %v12204
    %v12206 = vpop.f32.mrb[0].mxu0
    %v12207 = vadd.f32 %v10707, %v12206
    %v12208 = vpop.f32.mrb[0].mxu0
    %v12209 = vpop.f32.mrb[0].mxu0
    %12210 = vdwg.mxu0
    %12211 = vmatprep.subr.bf16.mxu0 %v11691
    %12212 = vmatpush1.bf16.msra.mxu0 %v11690
    %12213 = vmatprep.subr.bf16.mxu0 %v11697
    %12214 = vmatpush1.bf16.msra.mxu0 %v11696
    %12215 = vmatprep.subr.bf16.mxu0 %v11703
    %12216 = vmatpush1.bf16.msra.mxu0 %v11702
    %12217 = vmatprep.subr.bf16.mxu0 %v11709
    %12218 = vmatpush1.bf16.msra.mxu0 %v11708
    %12219 = vmatprep.subr.bf16.mxu0 %v11715
    %12220 = vmatpush1.bf16.msra.mxu0 %v11714
    %12221 = vmatprep.subr.bf16.mxu0 %v11721
    %12222 = vmatpush1.bf16.msra.mxu0 %v11720
    %12223 = vmatprep.subr.bf16.mxu0 %v11727
    %12224 = vmatpush1.bf16.msra.mxu0 %v11726
    %12225 = vmatprep.subr.bf16.mxu0 %v11733
    %12226 = vmatpush1.bf16.msra.mxu0 %v11732
    %12227 = vmatprep.subr.bf16.mxu0 %v11739
    %12228 = vmatpush1.bf16.msra.mxu0 %v11738
    %12229 = vmatprep.subr.bf16.mxu0 %v11745
    %12230 = vmatpush1.bf16.msra.mxu0 %v11744
    %12231 = vmatprep.subr.bf16.mxu0 %v11751
    %12232 = vmatpush1.bf16.msra.mxu0 %v11750
    %12233 = vmatprep.subr.bf16.mxu0 %v11757
    %12234 = vmatpush1.bf16.msra.mxu0 %v11756
    %12235 = vmatprep.subr.bf16.mxu0 %v11763
    %12236 = vmatpush1.bf16.msra.mxu0 %v11762
    %12237 = vmatprep.subr.bf16.mxu0 %v11769
    %12238 = vmatpush1.bf16.msra.mxu0 %v11768
    %12239 = vmatprep.subr.bf16.mxu0 %v11775
    %12240 = vmatpush1.bf16.msra.mxu0 %v11774
    %12241 = vmatprep.subr.bf16.mxu0 %v11781
    %12242 = vmatpush1.bf16.msra.mxu0 %v11780
    %12243 = vmatprep.mubr.bf16.mxu0 %v10407
    %12244 = vmatmul.mubr.bf16.gmra.mrb[0].mxu0 %v10406
    %v12245 = vpop.f32.mrb[0].mxu0
    %v12246 = vadd.f32 %v12205, %v12245
    %v12247 = vpop.f32.mrb[0].mxu0
    %v12248 = vadd.f32 %v12207, %v12247
    %v12249 = vpop.f32.mrb[0].mxu0
    %v12250 = vpop.f32.mrb[0].mxu0
    %12251 = vdwg.mxu0
    %12252 = vmatprep.subr.bf16.mxu0 %v11787
    %12253 = vmatpush1.bf16.msra.mxu0 %v11786
    %12254 = vmatprep.subr.bf16.mxu0 %v11793
    %12255 = vmatpush1.bf16.msra.mxu0 %v11792
    %12256 = vmatprep.subr.bf16.mxu0 %v11799
    %12257 = vmatpush1.bf16.msra.mxu0 %v11798
    %12258 = vmatprep.subr.bf16.mxu0 %v11805
    %12259 = vmatpush1.bf16.msra.mxu0 %v11804
    %12260 = vmatprep.subr.bf16.mxu0 %v11811
    %12261 = vmatpush1.bf16.msra.mxu0 %v11810
    %12262 = vmatprep.subr.bf16.mxu0 %v11817
    %12263 = vmatpush1.bf16.msra.mxu0 %v11816
    %12264 = vmatprep.subr.bf16.mxu0 %v11823
    %12265 = vmatpush1.bf16.msra.mxu0 %v11822
    %12266 = vmatprep.subr.bf16.mxu0 %v11829
    %12267 = vmatpush1.bf16.msra.mxu0 %v11828
    %12268 = vmatprep.subr.bf16.mxu0 %v11835
    %12269 = vmatpush1.bf16.msra.mxu0 %v11834
    %12270 = vmatprep.subr.bf16.mxu0 %v11841
    %12271 = vmatpush1.bf16.msra.mxu0 %v11840
    %12272 = vmatprep.subr.bf16.mxu0 %v11847
    %12273 = vmatpush1.bf16.msra.mxu0 %v11846
    %12274 = vmatprep.subr.bf16.mxu0 %v11853
    %12275 = vmatpush1.bf16.msra.mxu0 %v11852
    %12276 = vmatprep.subr.bf16.mxu0 %v11859
    %12277 = vmatpush1.bf16.msra.mxu0 %v11858
    %12278 = vmatprep.subr.bf16.mxu0 %v11865
    %12279 = vmatpush1.bf16.msra.mxu0 %v11864
    %12280 = vmatprep.subr.bf16.mxu0 %v11871
    %12281 = vmatpush1.bf16.msra.mxu0 %v11870
    %12282 = vmatprep.subr.bf16.mxu0 %v11877
    %12283 = vmatpush1.bf16.msra.mxu0 %v11876
    %12284 = vmatprep.mubr.bf16.mxu0 %v10409
    %12285 = vmatmul.mubr.bf16.gmra.mrb[0].mxu0 %v10408
    %v12286 = vpop.f32.mrb[0].mxu0
    %v12287 = vadd.f32 %v12246, %v12286
    %v12288 = vpop.f32.mrb[0].mxu0
    %v12289 = vadd.f32 %v12248, %v12288
    %v12290 = vpop.f32.mrb[0].mxu0
    %v12291 = vpop.f32.mrb[0].mxu0
    %12292 = vdwg.mxu0
    %12293 = vmatprep.subr.bf16.mxu0 %v11597
    %12294 = vmatpush1.bf16.msra.mxu0 %v11596
    %12295 = vmatprep.subr.bf16.mxu0 %v11603
    %12296 = vmatpush1.bf16.msra.mxu0 %v11602
    %12297 = vmatprep.subr.bf16.mxu0 %v11609
    %12298 = vmatpush1.bf16.msra.mxu0 %v11608
    %12299 = vmatprep.subr.bf16.mxu0 %v11615
    %12300 = vmatpush1.bf16.msra.mxu0 %v11614
    %12301 = vmatprep.subr.bf16.mxu0 %v11621
    %12302 = vmatpush1.bf16.msra.mxu0 %v11620
    %12303 = vmatprep.subr.bf16.mxu0 %v11627
    %12304 = vmatpush1.bf16.msra.mxu0 %v11626
    %12305 = vmatprep.subr.bf16.mxu0 %v11633
    %12306 = vmatpush1.bf16.msra.mxu0 %v11632
    %12307 = vmatprep.subr.bf16.mxu0 %v11639
    %12308 = vmatpush1.bf16.msra.mxu0 %v11638
    %12309 = vmatprep.subr.bf16.mxu0 %v11645
    %12310 = vmatpush1.bf16.msra.mxu0 %v11644
    %12311 = vmatprep.subr.bf16.mxu0 %v11651
    %12312 = vmatpush1.bf16.msra.mxu0 %v11650
    %12313 = vmatprep.subr.bf16.mxu0 %v11657
    %12314 = vmatpush1.bf16.msra.mxu0 %v11656
    %12315 = vmatprep.subr.bf16.mxu0 %v11663
    %12316 = vmatpush1.bf16.msra.mxu0 %v11662
    %12317 = vmatprep.subr.bf16.mxu0 %v11669
    %12318 = vmatpush1.bf16.msra.mxu0 %v11668
    %12319 = vmatprep.subr.bf16.mxu0 %v11675
    %12320 = vmatpush1.bf16.msra.mxu0 %v11674
    %12321 = vmatprep.subr.bf16.mxu0 %v11681
    %12322 = vmatpush1.bf16.msra.mxu0 %v11680
    %12323 = vmatprep.subr.bf16.mxu0 %v11687
    %12324 = vmatpush1.bf16.msra.mxu0 %v11686
    %12325 = vmatprep.mubr.bf16.mxu0 %v10405
    %12326 = vmatmul.mubr.bf16.gmra.mrb[0].mxu0 %v10404
    %v12327 = vpop.f32.mrb[0].mxu0
    %v12328 = vadd.f32 %v10711, %v12327
    %v12329 = vpop.f32.mrb[0].mxu0
    %v12330 = vadd.f32 %v10715, %v12329
    %v12331 = vpop.f32.mrb[0].mxu0
    %v12332 = vpop.f32.mrb[0].mxu0
    %12333 = vdwg.mxu0
    %12334 = vmatprep.subr.bf16.mxu0 %v11693
    %12335 = vmatpush1.bf16.msra.mxu0 %v11692
    %12336 = vmatprep.subr.bf16.mxu0 %v11699
    %12337 = vmatpush1.bf16.msra.mxu0 %v11698
    %12338 = vmatprep.subr.bf16.mxu0 %v11705
    %12339 = vmatpush1.bf16.msra.mxu0 %v11704
    %12340 = vmatprep.subr.bf16.mxu0 %v11711
    %12341 = vmatpush1.bf16.msra.mxu0 %v11710
    %12342 = vmatprep.subr.bf16.mxu0 %v11717
    %12343 = vmatpush1.bf16.msra.mxu0 %v11716
    %12344 = vmatprep.subr.bf16.mxu0 %v11723
    %12345 = vmatpush1.bf16.msra.mxu0 %v11722
    %12346 = vmatprep.subr.bf16.mxu0 %v11729
    %12347 = vmatpush1.bf16.msra.mxu0 %v11728
    %12348 = vmatprep.subr.bf16.mxu0 %v11735
    %12349 = vmatpush1.bf16.msra.mxu0 %v11734
    %12350 = vmatprep.subr.bf16.mxu0 %v11741
    %12351 = vmatpush1.bf16.msra.mxu0 %v11740
    %12352 = vmatprep.subr.bf16.mxu0 %v11747
    %12353 = vmatpush1.bf16.msra.mxu0 %v11746
    %12354 = vmatprep.subr.bf16.mxu0 %v11753
    %12355 = vmatpush1.bf16.msra.mxu0 %v11752
    %12356 = vmatprep.subr.bf16.mxu0 %v11759
    %12357 = vmatpush1.bf16.msra.mxu0 %v11758
    %12358 = vmatprep.subr.bf16.mxu0 %v11765
    %12359 = vmatpush1.bf16.msra.mxu0 %v11764
    %12360 = vmatprep.subr.bf16.mxu0 %v11771
    %12361 = vmatpush1.bf16.msra.mxu0 %v11770
    %12362 = vmatprep.subr.bf16.mxu0 %v11777
    %12363 = vmatpush1.bf16.msra.mxu0 %v11776
    %12364 = vmatprep.subr.bf16.mxu0 %v11783
    %12365 = vmatpush1.bf16.msra.mxu0 %v11782
    %12366 = vmatprep.mubr.bf16.mxu0 %v10407
    %12367 = vmatmul.mubr.bf16.gmra.mrb[0].mxu0 %v10406
    %v12368 = vpop.f32.mrb[0].mxu0
    %v12369 = vadd.f32 %v12328, %v12368
    %v12370 = vpop.f32.mrb[0].mxu0
    %v12371 = vadd.f32 %v12330, %v12370
    %v12372 = vpop.f32.mrb[0].mxu0
    %v12373 = vpop.f32.mrb[0].mxu0
    %12374 = vdwg.mxu0
    %12375 = vmatprep.subr.bf16.mxu0 %v11789
    %12376 = vmatpush1.bf16.msra.mxu0 %v11788
    %12377 = vmatprep.subr.bf16.mxu0 %v11795
    %12378 = vmatpush1.bf16.msra.mxu0 %v11794
    %12379 = vmatprep.subr.bf16.mxu0 %v11801
    %12380 = vmatpush1.bf16.msra.mxu0 %v11800
    %12381 = vmatprep.subr.bf16.mxu0 %v11807
    %12382 = vmatpush1.bf16.msra.mxu0 %v11806
    %12383 = vmatprep.subr.bf16.mxu0 %v11813
    %12384 = vmatpush1.bf16.msra.mxu0 %v11812
    %12385 = vmatprep.subr.bf16.mxu0 %v11819
    %12386 = vmatpush1.bf16.msra.mxu0 %v11818
    %12387 = vmatprep.subr.bf16.mxu0 %v11825
    %12388 = vmatpush1.bf16.msra.mxu0 %v11824
    %12389 = vmatprep.subr.bf16.mxu0 %v11831
    %12390 = vmatpush1.bf16.msra.mxu0 %v11830
    %12391 = vmatprep.subr.bf16.mxu0 %v11837
    %12392 = vmatpush1.bf16.msra.mxu0 %v11836
    %12393 = vmatprep.subr.bf16.mxu0 %v11843
    %12394 = vmatpush1.bf16.msra.mxu0 %v11842
    %12395 = vmatprep.subr.bf16.mxu0 %v11849
    %12396 = vmatpush1.bf16.msra.mxu0 %v11848
    %12397 = vmatprep.subr.bf16.mxu0 %v11855
    %12398 = vmatpush1.bf16.msra.mxu0 %v11854
    %12399 = vmatprep.subr.bf16.mxu0 %v11861
    %12400 = vmatpush1.bf16.msra.mxu0 %v11860
    %12401 = vmatprep.subr.bf16.mxu0 %v11867
    %12402 = vmatpush1.bf16.msra.mxu0 %v11866
    %12403 = vmatprep.subr.bf16.mxu0 %v11873
    %12404 = vmatpush1.bf16.msra.mxu0 %v11872
    %12405 = vmatprep.subr.bf16.mxu0 %v11879
    %12406 = vmatpush1.bf16.msra.mxu0 %v11878
    %12407 = vmatprep.mubr.bf16.mxu0 %v10409
    %12408 = vmatmul.mubr.bf16.gmra.mrb[0].mxu0 %v10408
    %v12409 = vpop.f32.mrb[0].mxu0
    %v12410 = vadd.f32 %v12369, %v12409
    %v12411 = vpop.f32.mrb[0].mxu0
    %v12412 = vadd.f32 %v12371, %v12411
    %v12413 = vpop.f32.mrb[0].mxu0
    %v12414 = vpop.f32.mrb[0].mxu0
    %12415 = vdwg.mxu0
    %12416 = vmatprep.subr.bf16.mxu0 %v11599
    %12417 = vmatpush1.bf16.msra.mxu0 %v11598
    %12418 = vmatprep.subr.bf16.mxu0 %v11605
    %12419 = vmatpush1.bf16.msra.mxu0 %v11604
    %12420 = vmatprep.subr.bf16.mxu0 %v11611
    %12421 = vmatpush1.bf16.msra.mxu0 %v11610
    %12422 = vmatprep.subr.bf16.mxu0 %v11617
    %12423 = vmatpush1.bf16.msra.mxu0 %v11616
    %12424 = vmatprep.subr.bf16.mxu0 %v11623
    %12425 = vmatpush1.bf16.msra.mxu0 %v11622
    %12426 = vmatprep.subr.bf16.mxu0 %v11629
    %12427 = vmatpush1.bf16.msra.mxu0 %v11628
    %12428 = vmatprep.subr.bf16.mxu0 %v11635
    %12429 = vmatpush1.bf16.msra.mxu0 %v11634
    %12430 = vmatprep.subr.bf16.mxu0 %v11641
    %12431 = vmatpush1.bf16.msra.mxu0 %v11640
    %12432 = vmatprep.subr.bf16.mxu0 %v11647
    %12433 = vmatpush1.bf16.msra.mxu0 %v11646
    %12434 = vmatprep.subr.bf16.mxu0 %v11653
    %12435 = vmatpush1.bf16.msra.mxu0 %v11652
    %12436 = vmatprep.subr.bf16.mxu0 %v11659
    %12437 = vmatpush1.bf16.msra.mxu0 %v11658
    %12438 = vmatprep.subr.bf16.mxu0 %v11665
    %12439 = vmatpush1.bf16.msra.mxu0 %v11664
    %12440 = vmatprep.subr.bf16.mxu0 %v11671
    %12441 = vmatpush1.bf16.msra.mxu0 %v11670
    %12442 = vmatprep.subr.bf16.mxu0 %v11677
    %12443 = vmatpush1.bf16.msra.mxu0 %v11676
    %12444 = vmatprep.subr.bf16.mxu0 %v11683
    %12445 = vmatpush1.bf16.msra.mxu0 %v11682
    %12446 = vmatprep.subr.bf16.mxu0 %v11689
    %12447 = vmatpush1.bf16.msra.mxu0 %v11688
    %12448 = vmatprep.mubr.bf16.mxu0 %v10405
    %12449 = vmatmul.mubr.bf16.gmra.mrb[0].mxu0 %v10404
    %v12450 = vpop.f32.mrb[0].mxu0
    %v12451 = vadd.f32 %v10719, %v12450
    %v12452 = vpop.f32.mrb[0].mxu0
    %v12453 = vadd.f32 %v10723, %v12452
    %v12454 = vpop.f32.mrb[0].mxu0
    %v12455 = vpop.f32.mrb[0].mxu0
    %12456 = vdwg.mxu0
    %12457 = vmatprep.subr.bf16.mxu0 %v11695
    %12458 = vmatpush1.bf16.msra.mxu0 %v11694
    %12459 = vmatprep.subr.bf16.mxu0 %v11701
    %12460 = vmatpush1.bf16.msra.mxu0 %v11700
    %12461 = vmatprep.subr.bf16.mxu0 %v11707
    %12462 = vmatpush1.bf16.msra.mxu0 %v11706
    %12463 = vmatprep.subr.bf16.mxu0 %v11713
    %12464 = vmatpush1.bf16.msra.mxu0 %v11712
    %12465 = vmatprep.subr.bf16.mxu0 %v11719
    %12466 = vmatpush1.bf16.msra.mxu0 %v11718
    %12467 = vmatprep.subr.bf16.mxu0 %v11725
    %12468 = vmatpush1.bf16.msra.mxu0 %v11724
    %12469 = vmatprep.subr.bf16.mxu0 %v11731
    %12470 = vmatpush1.bf16.msra.mxu0 %v11730
    %12471 = vmatprep.subr.bf16.mxu0 %v11737
    %12472 = vmatpush1.bf16.msra.mxu0 %v11736
    %12473 = vmatprep.subr.bf16.mxu0 %v11743
    %12474 = vmatpush1.bf16.msra.mxu0 %v11742
    %12475 = vmatprep.subr.bf16.mxu0 %v11749
    %12476 = vmatpush1.bf16.msra.mxu0 %v11748
    %12477 = vmatprep.subr.bf16.mxu0 %v11755
    %12478 = vmatpush1.bf16.msra.mxu0 %v11754
    %12479 = vmatprep.subr.bf16.mxu0 %v11761
    %12480 = vmatpush1.bf16.msra.mxu0 %v11760
    %12481 = vmatprep.subr.bf16.mxu0 %v11767
    %12482 = vmatpush1.bf16.msra.mxu0 %v11766
    %12483 = vmatprep.subr.bf16.mxu0 %v11773
    %12484 = vmatpush1.bf16.msra.mxu0 %v11772
    %12485 = vmatprep.subr.bf16.mxu0 %v11779
    %12486 = vmatpush1.bf16.msra.mxu0 %v11778
    %12487 = vmatprep.subr.bf16.mxu0 %v11785
    %12488 = vmatpush1.bf16.msra.mxu0 %v11784
    %12489 = vmatprep.mubr.bf16.mxu0 %v10407
    %12490 = vmatmul.mubr.bf16.gmra.mrb[0].mxu0 %v10406
    %v12491 = vpop.f32.mrb[0].mxu0
    %v12492 = vadd.f32 %v12451, %v12491
    %v12493 = vpop.f32.mrb[0].mxu0
    %v12494 = vadd.f32 %v12453, %v12493
    %v12495 = vpop.f32.mrb[0].mxu0
    %v12496 = vpop.f32.mrb[0].mxu0
    %12497 = vdwg.mxu0
    %12498 = vmatprep.subr.bf16.mxu0 %v11791
    %12499 = vmatpush1.bf16.msra.mxu0 %v11790
    %12500 = vmatprep.subr.bf16.mxu0 %v11797
    %12501 = vmatpush1.bf16.msra.mxu0 %v11796
    %12502 = vmatprep.subr.bf16.mxu0 %v11803
    %12503 = vmatpush1.bf16.msra.mxu0 %v11802
    %12504 = vmatprep.subr.bf16.mxu0 %v11809
    %12505 = vmatpush1.bf16.msra.mxu0 %v11808
    %12506 = vmatprep.subr.bf16.mxu0 %v11815
    %12507 = vmatpush1.bf16.msra.mxu0 %v11814
    %12508 = vmatprep.subr.bf16.mxu0 %v11821
    %12509 = vmatpush1.bf16.msra.mxu0 %v11820
    %12510 = vmatprep.subr.bf16.mxu0 %v11827
    %12511 = vmatpush1.bf16.msra.mxu0 %v11826
    %12512 = vmatprep.subr.bf16.mxu0 %v11833
    %12513 = vmatpush1.bf16.msra.mxu0 %v11832
    %12514 = vmatprep.subr.bf16.mxu0 %v11839
    %12515 = vmatpush1.bf16.msra.mxu0 %v11838
    %12516 = vmatprep.subr.bf16.mxu0 %v11845
    %12517 = vmatpush1.bf16.msra.mxu0 %v11844
    %12518 = vmatprep.subr.bf16.mxu0 %v11851
    %12519 = vmatpush1.bf16.msra.mxu0 %v11850
    %12520 = vmatprep.subr.bf16.mxu0 %v11857
    %12521 = vmatpush1.bf16.msra.mxu0 %v11856
    %12522 = vmatprep.subr.bf16.mxu0 %v11863
    %12523 = vmatpush1.bf16.msra.mxu0 %v11862
    %12524 = vmatprep.subr.bf16.mxu0 %v11869
    %12525 = vmatpush1.bf16.msra.mxu0 %v11868
    %12526 = vmatprep.subr.bf16.mxu0 %v11875
    %12527 = vmatpush1.bf16.msra.mxu0 %v11874
    %12528 = vmatprep.subr.bf16.mxu0 %v11881
    %12529 = vmatpush1.bf16.msra.mxu0 %v11880
    %12530 = vmatprep.mubr.bf16.mxu0 %v10409
    %12531 = vmatmul.mubr.bf16.gmra.mrb[0].mxu0 %v10408
    %v12532 = vpop.f32.mrb[0].mxu0
    %v12533 = vadd.f32 %v12492, %v12532
    %v12534 = vpop.f32.mrb[0].mxu0
    %v12535 = vadd.f32 %v12494, %v12534
    %v12536 = vpop.f32.mrb[0].mxu0
    %v12537 = vpop.f32.mrb[0].mxu0
    %12538 = vdwg.mxu0
    %v12545 = vcombine.low %v12287, %v12289
    %v12546 = vcombine.low %v12410, %v12412
    %v12548 = vunpack.c.l.s4 1983009808
    %v12549 = vunpack.c.0.s8 %v12548
    %v12550 = vlaneseq
    %v12551 = vshrl.u32 %v12550, 7
    %v12552 = vsub.s32 %v12549, %v12551
    %v12553 = vrot.slane %v12545, %v12552
    %v12555 = vunpack.c.l.s4 1983009808
    %v12556 = vunpack.c.0.s8 %v12555
    %v12557 = vlaneseq
    %v12558 = vshrl.u32 %v12557, 7
    %v12559 = vsub.s32 %v12556, %v12558
    %v12560 = vrot.slane %v12546, %v12559
    %v12561 = vcombine.low %v12553, %v12560
    %v12562 = vcombine.low %v12533, %v12535
    %v12564 = vunpack.c.l.s4 1983009808
    %v12565 = vunpack.c.0.s8 %v12564
    %v12566 = vlaneseq
    %v12567 = vshrl.u32 %v12566, 7
    %v12568 = vsub.s32 %v12565, %v12567
    %v12569 = vrot.slane %v12562, %v12568
    %12572 = vst [vmem:[%s15] sm:$0xff] %v12561
    %12573 = vst [vmem:[%s15 + $0x8] sm:$0xf] %v12569
    // Predicated region
    $region122: #{decoder_forward.1} parent=1 // pred_check
      _
    $region123: #{decoder_forward.1} parent=1 // pred_check_branch
      %12575 = sbr.rel (0) target = $region125
    $region124: #{decoder_forward.1} parent=1 // pred_region
      _
    $region125: #{decoder_forward.1} parent=1 // pred_fallthru
      _
    // Predicated region
    $region126: #{decoder_forward.1} parent=1 // pred_check
      _
    $region127: #{decoder_forward.1} parent=1 // pred_check_branch
      %12577 = sbr.rel (0) target = $region129
    $region128: #{decoder_forward.1} parent=1 // pred_region
      _
    $region129: #{decoder_forward.1} parent=1 // pred_fallthru
      _
    %12578 = vsyncpa [#allocation3], 1
    %12579 = vsyncpa [#allocation5], 1
    %12580 = vsyncpa [#allocation8], 1
    %12581 = vsyncpa [#allocation11], 1
    %12582 = vsyncpa [#allocation14], 1
    %12583 = vsyncpa [#allocation17], 1
    %12584 = vsyncpa [#allocation20], 1
    %12585 = vsyncpa [#allocation23], 1

</llo_original>
